<compile_context>
chip_gen: v7x
topology: tpu7x:2x2x1
jax: 0.10.0
libtpu: 0.0.40
codegen_flags: <defaults>
</compile_context>

<pallas_src>
import math

import jax
import jax.numpy as jnp
from jax import lax
from jax.experimental import pallas as pl
from jax.experimental.pallas import tpu as pltpu

# ---- scaled-down architecture constants (original values in parentheses) ----
B = 2            # batch
BP = 8           # batch padded to a full (8,128)-tile sublane group
C_IN = 4         # conv in-channels (PyTorch: input_length)
L = 16           # raw sequence length          (orig 15000)
LP = L // 2      # pooled length = fc_proj in   (orig 7500)
S = 32           # conv out-channels -> LSTM sequence length
H = 32           # fc_proj out / LSTM hidden    (orig 256)
H2 = H // 2      # (orig 128)
H4 = H // 4      # (orig 64)
G = 4 * H        # LSTM gate width (one direction) = 128

# ---- (1, 512) bias / row-vector slab lane layout ----
OFF_BG = 0                # fused LSTM gate bias [b_fwd | b_rev], width 2G
OFF_CB = 2 * G            # conv bias,  width S
OFF_PB = OFF_CB + S       # proj bias,  width H
OFF_F1B = OFF_PB + H      # fc1 bias,   width H
OFF_F2B = OFF_F1B + H     # fc2 bias,   width H2
OFF_F3B = OFF_F2B + H2    # fc3 bias,   width H4
OFF_F4W = OFF_F3B + H4    # fc4 weight row, width H4
OFF_F4B = OFF_F4W + H4    # fc4 bias,   width 1
BIAS_W = 512

# ---- (H, 128) fc-head weight slab lane layout ----
HOFF_1A = 0               # fc1 weight half applied to h_fwd, width H
HOFF_1B = H               # fc1 weight half applied to h_rev, width H
HOFF_2 = 2 * H            # fc2 weight, width H2
HOFF_3 = 2 * H + H2       # fc3 weight (rows [:H2] valid), width H4
HEAD_W = 128


def _sentiment_kernel(
    xpad_ref,     # (BP, L+2, C_IN)  NLC input, length zero-padded for k=3 'same'
    convw_ref,    # (3*C_IN, S)      conv taps stacked row-wise (tap-major)
    projw_ref,    # (LP, H)
    lstmw_ref,    # (H, 3G)  [W_ih_fwd^T | W_ih_rev^T | W_hh_fwd^T]
    headw_ref,    # (H, HEAD_W) fc-head weight slab
    bias_ref,     # (1, BIAS_W) bias / fc4-row slab
    out_ref,      # (BP, 1)
    gates_ref,    # scratch VMEM (S*BP, 2G): per-timestep input-projected gates
):
    f32 = jnp.float32

    # ---- Conv1d(C_IN -> S, k=3, 'same') + ReLU: three shifted-tap matmuls ----
    acc = None
    for k in range(3):
        tap = jnp.dot(xpad_ref[:, pl.ds(k, L), :],
                      convw_ref[pl.ds(k * C_IN, C_IN), :],
                      preferred_element_type=f32)
        acc = tap if acc is None else acc + tap
    y = jnp.maximum(acc + bias_ref[:, pl.ds(OFF_CB, S)], 0.0)       # (BP, L, S)

    # ---- MaxPool1d(kernel_size=2) along length ----
    pooled = jnp.max(y.reshape(BP, LP, 2, S), axis=2)               # (BP, LP, S)

    # ---- fc_proj: Linear(LP -> H) contracting the pooled-length dim ----
    s = lax.dot_general(pooled, projw_ref[...],
                        (((1,), (0,)), ((), ())),
                        preferred_element_type=f32)                 # (BP, S, H)
    s = s + bias_ref[:, pl.ds(OFF_PB, H)]

    # ---- hoisted LSTM input projection, BOTH directions in one 256-wide
    # matmul; stored timestep-major so each step reads an aligned (BP, G) row.
    wih = lstmw_ref[:, pl.ds(0, 2 * G)]                             # (H, 2G)
    whh_f = lstmw_ref[:, pl.ds(2 * G, G)]                           # (H, G)
    x_flat = jnp.swapaxes(s, 0, 1).reshape(S * BP, H)               # t-major
    gates_ref[...] = (jnp.dot(x_flat, wih, preferred_element_type=f32)
                      + bias_ref[:, pl.ds(OFF_BG, 2 * G)])          # (S*BP, 2G)

    # ---- forward recurrence, fully unrolled (static aligned slices) ----
    h = jnp.zeros((BP, H), f32)
    c = jnp.zeros((BP, H), f32)
    for t in range(S):
        g = (gates_ref[pl.ds(t * BP, BP), pl.ds(0, G)]
             + jnp.dot(h, whh_f, preferred_element_type=f32))       # (BP, G)
        sg = jax.nn.sigmoid(g)       # one full-width EUP pass
        tg = jnp.tanh(g)             # one full-width EUP pass
        # PyTorch gate order: i, f, g, o
        i_g = sg[:, 0 * H:1 * H]
        f_g = sg[:, 1 * H:2 * H]
        g_g = tg[:, 2 * H:3 * H]
        o_g = sg[:, 3 * H:4 * H]
        c = f_g * c + i_g * g_g
        h = o_g * jnp.tanh(c)
    h_fwd = h

    # ---- reverse direction: lstm_out[:, -1, :] for the reverse LSTM is its
    # FIRST step from zero state on s[:, -1, :]; h0 == 0 kills the W_hh term,
    # c0 == 0 kills the f-gate term, so one cell evaluation is exact. ----
    g_r = gates_ref[pl.ds((S - 1) * BP, BP), pl.ds(G, G)]           # (BP, G)
    sgr = jax.nn.sigmoid(g_r)
    tgr = jnp.tanh(g_r)
    h_rev = sgr[:, 3 * H:4 * H] * jnp.tanh(sgr[:, 0 * H:1 * H]
                                           * tgr[:, 2 * H:3 * H])

    # ---- fc head (dropout p=0.4 identity at inference); the [h_fwd, h_rev]
    # concat is replaced by two matmuls with the split fc1 weight halves. ----
    z = jnp.maximum(
        jnp.dot(h_fwd, headw_ref[:, pl.ds(HOFF_1A, H)], preferred_element_type=f32)
        + jnp.dot(h_rev, headw_ref[:, pl.ds(HOFF_1B, H)], preferred_element_type=f32)
        + bias_ref[:, pl.ds(OFF_F1B, H)], 0.0)
    z = jnp.maximum(
        jnp.dot(z, headw_ref[:, pl.ds(HOFF_2, H2)], preferred_element_type=f32)
        + bias_ref[:, pl.ds(OFF_F2B, H2)], 0.0)
    z = jnp.maximum(
        jnp.dot(z, headw_ref[pl.ds(0, H2), pl.ds(HOFF_3, H4)],
                preferred_element_type=f32)
        + bias_ref[:, pl.ds(OFF_F3B, H4)], 0.0)
    # fc4 (H4 -> 1): VPU multiply + lane reduction instead of an N=1 MXU matmul.
    logit = (jnp.sum(z * bias_ref[:, pl.ds(OFF_F4W, H4)], axis=-1, keepdims=True)
             + bias_ref[:, pl.ds(OFF_F4B, 1)])                      # (BP, 1)
    out_ref[...] = jax.nn.sigmoid(logit)


def init_params(key):
    """Deterministic PyTorch-style uniform(-1/sqrt(fan_in), 1/sqrt(fan_in)) init."""
    def uniform(k, shape, fan_in):
        bound = 1.0 / math.sqrt(float(fan_in))
        return jax.random.uniform(k, shape, jnp.float32, -bound, bound)

    ks = jax.random.split(key, 20)
    p = {}
    p["conv_w"] = uniform(ks[0], (S, C_IN, 3), C_IN * 3)   # PyTorch (out, in, k)
    p["conv_b"] = uniform(ks[1], (S,), C_IN * 3)
    p["proj_w"] = uniform(ks[2], (H, LP), LP)              # (out, in)
    p["proj_b"] = uniform(ks[3], (H,), LP)
    p["w_ih_f"] = uniform(ks[4], (4 * H, H), H)
    p["w_hh_f"] = uniform(ks[5], (4 * H, H), H)
    p["b_ih_f"] = uniform(ks[6], (4 * H,), H)
    p["b_hh_f"] = uniform(ks[7], (4 * H,), H)
    p["w_ih_r"] = uniform(ks[8], (4 * H, H), H)
    p["w_hh_r"] = uniform(ks[9], (4 * H, H), H)   # unused: only lstm_out[:,-1,:] read
    p["b_ih_r"] = uniform(ks[10], (4 * H,), H)
    p["b_hh_r"] = uniform(ks[11], (4 * H,), H)
    p["fc1_w"] = uniform(ks[12], (H, 2 * H), 2 * H)
    p["fc1_b"] = uniform(ks[13], (H,), 2 * H)
    p["fc2_w"] = uniform(ks[14], (H2, H), H)
    p["fc2_b"] = uniform(ks[15], (H2,), H)
    p["fc3_w"] = uniform(ks[16], (H4, H2), H2)
    p["fc3_b"] = uniform(ks[17], (H4,), H2)
    p["fc4_w"] = uniform(ks[18], (1, H4), H4)
    p["fc4_b"] = uniform(ks[19], (1,), H4)
    return p


@jax.jit
def sentiment_forward(x_ncl, p):
    """x_ncl: (B, C_IN, L) in PyTorch NCL layout. Returns (B, 1) probabilities."""
    # glue: layout transpose, batch pad to a full sublane group, length pad for
    # the k=3 'same' conv, and weight packing into a handful of slabs.
    x = jnp.transpose(x_ncl, (0, 2, 1))                               # NLC
    x_pad = jnp.pad(x, ((0, BP - B), (1, 1), (0, 0)))                 # (BP, L+2, C_IN)

    conv_w = jnp.transpose(p["conv_w"], (2, 1, 0)).reshape(3 * C_IN, S)
    proj_w = p["proj_w"].T                                            # (LP, H)

    # LSTM weight slab: [W_ih_fwd^T | W_ih_rev^T | W_hh_fwd^T] -> (H, 3G)
    lstm_w = jnp.concatenate([p["w_ih_f"].T, p["w_ih_r"].T, p["w_hh_f"].T], axis=1)

    # fc-head weight slab (H, HEAD_W)
    fc1_wt = p["fc1_w"].T                                             # (2H, H)
    head_w = jnp.zeros((H, HEAD_W), jnp.float32)
    head_w = head_w.at[:, HOFF_1A:HOFF_1A + H].set(fc1_wt[:H])        # fwd half
    head_w = head_w.at[:, HOFF_1B:HOFF_1B + H].set(fc1_wt[H:])        # rev half
    head_w = head_w.at[:, HOFF_2:HOFF_2 + H2].set(p["fc2_w"].T)
    head_w = head_w.at[:H2, HOFF_3:HOFF_3 + H4].set(p["fc3_w"].T)

    # bias / row-vector slab (1, BIAS_W)
    bias = jnp.zeros((1, BIAS_W), jnp.float32)
    bias = bias.at[0, OFF_BG:OFF_BG + G].set(p["b_ih_f"] + p["b_hh_f"])
    bias = bias.at[0, OFF_BG + G:OFF_BG + 2 * G].set(p["b_ih_r"] + p["b_hh_r"])
    bias = bias.at[0, OFF_CB:OFF_CB + S].set(p["conv_b"])
    bias = bias.at[0, OFF_PB:OFF_PB + H].set(p["proj_b"])
    bias = bias.at[0, OFF_F1B:OFF_F1B + H].set(p["fc1_b"])
    bias = bias.at[0, OFF_F2B:OFF_F2B + H2].set(p["fc2_b"])
    bias = bias.at[0, OFF_F3B:OFF_F3B + H4].set(p["fc3_b"])
    bias = bias.at[0, OFF_F4W:OFF_F4W + H4].set(p["fc4_w"][0])
    bias = bias.at[0, OFF_F4B:OFF_F4B + 1].set(p["fc4_b"])

    inputs = (x_pad, conv_w, proj_w, lstm_w, head_w, bias)            # 6 operands
    vmem_spec = pl.BlockSpec(memory_space=pltpu.MemorySpace.VMEM)
    out = pl.pallas_call(
        _sentiment_kernel,
        out_shape=jax.ShapeDtypeStruct((BP, 1), jnp.float32),
        in_specs=[vmem_spec] * len(inputs),
        out_specs=vmem_spec,
        scratch_shapes=[pltpu.VMEM((S * BP, 2 * G), jnp.float32)],
    )(*inputs)
    return out[:B]


if __name__ == "__main__":
    key = jax.random.PRNGKey(0)
    kx, kp = jax.random.split(key)
    x = jax.random.normal(kx, (B, C_IN, L), jnp.float32)   # PyTorch NCL input
    params = init_params(kp)

    out = sentiment_forward(x, params)
    out = jax.block_until_ready(out)

    assert out.shape == (B, 1), out.shape
    assert bool(jnp.all((out >= 0.0) & (out <= 1.0)))
    print("KERNEL_OK")
</pallas_src>

<mosaic_0001>
module attributes {stable_mosaic.version = 11 : i64} {
  func.func @_sentiment_kernel(%arg0: memref<8x18x4xf32, #tpu.memory_space<vmem>>, %arg1: memref<12x32xf32, #tpu.memory_space<vmem>>, %arg2: memref<8x32xf32, #tpu.memory_space<vmem>>, %arg3: memref<32x384xf32, #tpu.memory_space<vmem>>, %arg4: memref<32x128xf32, #tpu.memory_space<vmem>>, %arg5: memref<1x512xf32, #tpu.memory_space<vmem>>, %arg6: memref<8x1xf32, #tpu.memory_space<vmem>>, %arg7: memref<256x256xf32, #tpu.memory_space<vmem>>) attributes {dimension_semantics = [], scalar_prefetch = 0 : i64, scratch_operands = 1 : i64, tpu.core_type = #tpu.core_type<tc>} {
    %c0 = arith.constant 0 : index
    %c0_0 = arith.constant 0 : index
    %c0_1 = arith.constant 0 : index
    %0 = vector.load %arg0[%c0, %c0_0, %c0_1] : memref<8x18x4xf32, #tpu.memory_space<vmem>>, vector<8x16x4xf32>
    %c0_2 = arith.constant 0 : index
    %c0_3 = arith.constant 0 : index
    %1 = vector.load %arg1[%c0_2, %c0_3] : memref<12x32xf32, #tpu.memory_space<vmem>>, vector<4x32xf32>
    %cst = arith.constant dense<0.000000e+00> : vector<8x16x32xf32>
    %2 = tpu.matmul %0, %1, %cst {dimension_numbers = #tpu.dot_dimension_numbers<[2], [0], [0, 1], [1], [0, 0, 0, 1, 1, 1], [], []>} : vector<8x16x4xf32>, vector<4x32xf32>, vector<8x16x32xf32> -> vector<8x16x32xf32>
    %c0_4 = arith.constant 0 : index
    %c1 = arith.constant 1 : index
    %c0_5 = arith.constant 0 : index
    %3 = vector.load %arg0[%c0_4, %c1, %c0_5] : memref<8x18x4xf32, #tpu.memory_space<vmem>>, vector<8x16x4xf32>
    %c4 = arith.constant 4 : index
    %c0_6 = arith.constant 0 : index
    %4 = vector.load %arg1[%c4, %c0_6] : memref<12x32xf32, #tpu.memory_space<vmem>>, vector<4x32xf32>
    %cst_7 = arith.constant dense<0.000000e+00> : vector<8x16x32xf32>
    %5 = tpu.matmul %3, %4, %cst_7 {dimension_numbers = #tpu.dot_dimension_numbers<[2], [0], [0, 1], [1], [0, 0, 0, 1, 1, 1], [], []>} : vector<8x16x4xf32>, vector<4x32xf32>, vector<8x16x32xf32> -> vector<8x16x32xf32>
    %6 = arith.addf %2, %5 : vector<8x16x32xf32>
    %c0_8 = arith.constant 0 : index
    %c2 = arith.constant 2 : index
    %c0_9 = arith.constant 0 : index
    %7 = vector.load %arg0[%c0_8, %c2, %c0_9] : memref<8x18x4xf32, #tpu.memory_space<vmem>>, vector<8x16x4xf32>
    %c8 = arith.constant 8 : index
    %c0_10 = arith.constant 0 : index
    %8 = vector.load %arg1[%c8, %c0_10] : memref<12x32xf32, #tpu.memory_space<vmem>>, vector<4x32xf32>
    %cst_11 = arith.constant dense<0.000000e+00> : vector<8x16x32xf32>
    %9 = tpu.matmul %7, %8, %cst_11 {dimension_numbers = #tpu.dot_dimension_numbers<[2], [0], [0, 1], [1], [0, 0, 0, 1, 1, 1], [], []>} : vector<8x16x4xf32>, vector<4x32xf32>, vector<8x16x32xf32> -> vector<8x16x32xf32>
    %10 = arith.addf %6, %9 : vector<8x16x32xf32>
    %c0_12 = arith.constant 0 : index
    %c256 = arith.constant 256 : index
    %11 = vector.load %arg5[%c0_12, %c256] : memref<1x512xf32, #tpu.memory_space<vmem>>, vector<1x32xf32>
    %12 = vector.shape_cast %11 : vector<1x32xf32> to vector<1x1x32xf32>
    %13 = vector.broadcast %12 : vector<1x1x32xf32> to vector<8x16x32xf32>
    %14 = arith.addf %10, %13 : vector<8x16x32xf32>
    %cst_13 = arith.constant 0.000000e+00 : f32
    %15 = vector.broadcast %cst_13 : f32 to vector<8x16x32xf32>
    %16 = arith.maximumf %14, %15 : vector<8x16x32xf32>
    %17 = vector.shape_cast %16 : vector<8x16x32xf32> to vector<8x8x2x32xf32>
    %cst_14 = arith.constant dense<0xFF800000> : vector<8x8x32xf32>
    %18 = vector.multi_reduction <maximumf>, %17, %cst_14 [2] : vector<8x8x2x32xf32> to vector<8x8x32xf32>
    %c0_15 = arith.constant 0 : index
    %c0_16 = arith.constant 0 : index
    %19 = vector.load %arg2[%c0_15, %c0_16] : memref<8x32xf32, #tpu.memory_space<vmem>>, vector<8x32xf32>
    %cst_17 = arith.constant dense<0.000000e+00> : vector<8x32x32xf32>
    %20 = tpu.matmul %18, %19, %cst_17 {dimension_numbers = #tpu.dot_dimension_numbers<[1], [0], [0, 2], [1], [0, 0, 0, 2, 1, 1], [], []>} : vector<8x8x32xf32>, vector<8x32xf32>, vector<8x32x32xf32> -> vector<8x32x32xf32>
    %c0_18 = arith.constant 0 : index
    %c288 = arith.constant 288 : index
    %21 = vector.load %arg5[%c0_18, %c288] : memref<1x512xf32, #tpu.memory_space<vmem>>, vector<1x32xf32>
    %22 = vector.shape_cast %21 : vector<1x32xf32> to vector<1x1x32xf32>
    %23 = vector.broadcast %22 : vector<1x1x32xf32> to vector<8x32x32xf32>
    %24 = arith.addf %20, %23 : vector<8x32x32xf32>
    %c0_19 = arith.constant 0 : index
    %c0_20 = arith.constant 0 : index
    %25 = vector.load %arg3[%c0_19, %c0_20] : memref<32x384xf32, #tpu.memory_space<vmem>>, vector<32x256xf32>
    %c0_21 = arith.constant 0 : index
    %c256_22 = arith.constant 256 : index
    %26 = vector.load %arg3[%c0_21, %c256_22] : memref<32x384xf32, #tpu.memory_space<vmem>>, vector<32x128xf32>
    %27 = tpu.transpose %24, [1, 0, 2] : vector<8x32x32xf32> -> vector<32x8x32xf32>
    %28 = vector.shape_cast %27 : vector<32x8x32xf32> to vector<256x32xf32>
    %cst_23 = arith.constant dense<0.000000e+00> : vector<256x256xf32>
    %29 = tpu.matmul %28, %25, %cst_23 {dimension_numbers = #tpu.dot_dimension_numbers<[1], [0], [0], [1], [0, 0, 1, 1], [], []>} : vector<256x32xf32>, vector<32x256xf32>, vector<256x256xf32> -> vector<256x256xf32>
    %c0_24 = arith.constant 0 : index
    %c0_25 = arith.constant 0 : index
    %30 = vector.load %arg5[%c0_24, %c0_25] : memref<1x512xf32, #tpu.memory_space<vmem>>, vector<1x256xf32>
    %31 = vector.broadcast %30 : vector<1x256xf32> to vector<256x256xf32>
    %32 = arith.addf %29, %31 : vector<256x256xf32>
    %c0_26 = arith.constant 0 : index
    %c0_27 = arith.constant 0 : index
    %33 = vector.load %arg7[%c0_26, %c0_27] : memref<256x256xf32, #tpu.memory_space<vmem>>, vector<256x256xf32>
    tpu.vector_store %arg7[%c0_26, %c0_27], %32 {strides = array<i32>} : memref<256x256xf32, #tpu.memory_space<vmem>>, vector<256x256xf32>,
    %cst_28 = arith.constant 0.000000e+00 : f32
    %34 = vector.broadcast %cst_28 : f32 to vector<8x32xf32>
    %cst_29 = arith.constant 0.000000e+00 : f32
    %35 = vector.broadcast %cst_29 : f32 to vector<8x32xf32>
    %c0_30 = arith.constant 0 : index
    %c0_31 = arith.constant 0 : index
    %36 = vector.load %arg7[%c0_30, %c0_31] : memref<256x256xf32, #tpu.memory_space<vmem>>, vector<8x128xf32>
    %cst_32 = arith.constant dense<0.000000e+00> : vector<8x128xf32>
    %37 = tpu.matmul %34, %26, %cst_32 {dimension_numbers = #tpu.dot_dimension_numbers<[1], [0], [0], [1], [0, 0, 1, 1], [], []>} : vector<8x32xf32>, vector<32x128xf32>, vector<8x128xf32> -> vector<8x128xf32>
    %38 = arith.addf %36, %37 : vector<8x128xf32>
    %39 = arith.negf %38 : vector<8x128xf32>
    %40 = math.exp %39 : vector<8x128xf32>
    %cst_33 = arith.constant 1.000000e+00 : f32
    %41 = vector.broadcast %cst_33 : f32 to vector<8x128xf32>
    %42 = arith.addf %41, %40 : vector<8x128xf32>
    %43 = arith.divf %41, %42 : vector<8x128xf32>
    %44 = math.tanh %38 : vector<8x128xf32>
    %45 = vector.extract_strided_slice %43 {offsets = [0, 0], sizes = [8, 32], strides = [1, 1]} : vector<8x128xf32> to vector<8x32xf32>
    %46 = vector.extract_strided_slice %43 {offsets = [0, 32], sizes = [8, 32], strides = [1, 1]} : vector<8x128xf32> to vector<8x32xf32>
    %47 = vector.extract_strided_slice %44 {offsets = [0, 64], sizes = [8, 32], strides = [1, 1]} : vector<8x128xf32> to vector<8x32xf32>
    %48 = vector.extract_strided_slice %43 {offsets = [0, 96], sizes = [8, 32], strides = [1, 1]} : vector<8x128xf32> to vector<8x32xf32>
    %49 = arith.mulf %46, %35 : vector<8x32xf32>
    %50 = arith.mulf %45, %47 : vector<8x32xf32>
    %51 = arith.addf %49, %50 : vector<8x32xf32>
    %52 = math.tanh %51 : vector<8x32xf32>
    %53 = arith.mulf %48, %52 : vector<8x32xf32>
    %c8_34 = arith.constant 8 : index
    %c0_35 = arith.constant 0 : index
    %54 = vector.load %arg7[%c8_34, %c0_35] : memref<256x256xf32, #tpu.memory_space<vmem>>, vector<8x128xf32>
    %cst_36 = arith.constant dense<0.000000e+00> : vector<8x128xf32>
    %55 = tpu.matmul %53, %26, %cst_36 {dimension_numbers = #tpu.dot_dimension_numbers<[1], [0], [0], [1], [0, 0, 1, 1], [], []>} : vector<8x32xf32>, vector<32x128xf32>, vector<8x128xf32> -> vector<8x128xf32>
    %56 = arith.addf %54, %55 : vector<8x128xf32>
    %57 = arith.negf %56 : vector<8x128xf32>
    %58 = math.exp %57 : vector<8x128xf32>
    %cst_37 = arith.constant 1.000000e+00 : f32
    %59 = vector.broadcast %cst_37 : f32 to vector<8x128xf32>
    %60 = arith.addf %59, %58 : vector<8x128xf32>
    %61 = arith.divf %59, %60 : vector<8x128xf32>
    %62 = math.tanh %56 : vector<8x128xf32>
    %63 = vector.extract_strided_slice %61 {offsets = [0, 0], sizes = [8, 32], strides = [1, 1]} : vector<8x128xf32> to vector<8x32xf32>
    %64 = vector.extract_strided_slice %61 {offsets = [0, 32], sizes = [8, 32], strides = [1, 1]} : vector<8x128xf32> to vector<8x32xf32>
    %65 = vector.extract_strided_slice %62 {offsets = [0, 64], sizes = [8, 32], strides = [1, 1]} : vector<8x128xf32> to vector<8x32xf32>
    %66 = vector.extract_strided_slice %61 {offsets = [0, 96], sizes = [8, 32], strides = [1, 1]} : vector<8x128xf32> to vector<8x32xf32>
    %67 = arith.mulf %64, %51 : vector<8x32xf32>
    %68 = arith.mulf %63, %65 : vector<8x32xf32>
    %69 = arith.addf %67, %68 : vector<8x32xf32>
    %70 = math.tanh %69 : vector<8x32xf32>
    %71 = arith.mulf %66, %70 : vector<8x32xf32>
    %c16 = arith.constant 16 : index
    %c0_38 = arith.constant 0 : index
    %72 = vector.load %arg7[%c16, %c0_38] : memref<256x256xf32, #tpu.memory_space<vmem>>, vector<8x128xf32>
    %cst_39 = arith.constant dense<0.000000e+00> : vector<8x128xf32>
    %73 = tpu.matmul %71, %26, %cst_39 {dimension_numbers = #tpu.dot_dimension_numbers<[1], [0], [0], [1], [0, 0, 1, 1], [], []>} : vector<8x32xf32>, vector<32x128xf32>, vector<8x128xf32> -> vector<8x128xf32>
    %74 = arith.addf %72, %73 : vector<8x128xf32>
    %75 = arith.negf %74 : vector<8x128xf32>
    %76 = math.exp %75 : vector<8x128xf32>
    %cst_40 = arith.constant 1.000000e+00 : f32
    %77 = vector.broadcast %cst_40 : f32 to vector<8x128xf32>
    %78 = arith.addf %77, %76 : vector<8x128xf32>
    %79 = arith.divf %77, %78 : vector<8x128xf32>
    %80 = math.tanh %74 : vector<8x128xf32>
    %81 = vector.extract_strided_slice %79 {offsets = [0, 0], sizes = [8, 32], strides = [1, 1]} : vector<8x128xf32> to vector<8x32xf32>
    %82 = vector.extract_strided_slice %79 {offsets = [0, 32], sizes = [8, 32], strides = [1, 1]} : vector<8x128xf32> to vector<8x32xf32>
    %83 = vector.extract_strided_slice %80 {offsets = [0, 64], sizes = [8, 32], strides = [1, 1]} : vector<8x128xf32> to vector<8x32xf32>
    %84 = vector.extract_strided_slice %79 {offsets = [0, 96], sizes = [8, 32], strides = [1, 1]} : vector<8x128xf32> to vector<8x32xf32>
    %85 = arith.mulf %82, %69 : vector<8x32xf32>
    %86 = arith.mulf %81, %83 : vector<8x32xf32>
    %87 = arith.addf %85, %86 : vector<8x32xf32>
    %88 = math.tanh %87 : vector<8x32xf32>
    %89 = arith.mulf %84, %88 : vector<8x32xf32>
    %c24 = arith.constant 24 : index
    %c0_41 = arith.constant 0 : index
    %90 = vector.load %arg7[%c24, %c0_41] : memref<256x256xf32, #tpu.memory_space<vmem>>, vector<8x128xf32>
    %cst_42 = arith.constant dense<0.000000e+00> : vector<8x128xf32>
    %91 = tpu.matmul %89, %26, %cst_42 {dimension_numbers = #tpu.dot_dimension_numbers<[1], [0], [0], [1], [0, 0, 1, 1], [], []>} : vector<8x32xf32>, vector<32x128xf32>, vector<8x128xf32> -> vector<8x128xf32>
    %92 = arith.addf %90, %91 : vector<8x128xf32>
    %93 = arith.negf %92 : vector<8x128xf32>
    %94 = math.exp %93 : vector<8x128xf32>
    %cst_43 = arith.constant 1.000000e+00 : f32
    %95 = vector.broadcast %cst_43 : f32 to vector<8x128xf32>
    %96 = arith.addf %95, %94 : vector<8x128xf32>
    %97 = arith.divf %95, %96 : vector<8x128xf32>
    %98 = math.tanh %92 : vector<8x128xf32>
    %99 = vector.extract_strided_slice %97 {offsets = [0, 0], sizes = [8, 32], strides = [1, 1]} : vector<8x128xf32> to vector<8x32xf32>
    %100 = vector.extract_strided_slice %97 {offsets = [0, 32], sizes = [8, 32], strides = [1, 1]} : vector<8x128xf32> to vector<8x32xf32>
    %101 = vector.extract_strided_slice %98 {offsets = [0, 64], sizes = [8, 32], strides = [1, 1]} : vector<8x128xf32> to vector<8x32xf32>
    %102 = vector.extract_strided_slice %97 {offsets = [0, 96], sizes = [8, 32], strides = [1, 1]} : vector<8x128xf32> to vector<8x32xf32>
    %103 = arith.mulf %100, %87 : vector<8x32xf32>
    %104 = arith.mulf %99, %101 : vector<8x32xf32>
    %105 = arith.addf %103, %104 : vector<8x32xf32>
    %106 = math.tanh %105 : vector<8x32xf32>
    %107 = arith.mulf %102, %106 : vector<8x32xf32>
    %c32 = arith.constant 32 : index
    %c0_44 = arith.constant 0 : index
    %108 = vector.load %arg7[%c32, %c0_44] : memref<256x256xf32, #tpu.memory_space<vmem>>, vector<8x128xf32>
    %cst_45 = arith.constant dense<0.000000e+00> : vector<8x128xf32>
    %109 = tpu.matmul %107, %26, %cst_45 {dimension_numbers = #tpu.dot_dimension_numbers<[1], [0], [0], [1], [0, 0, 1, 1], [], []>} : vector<8x32xf32>, vector<32x128xf32>, vector<8x128xf32> -> vector<8x128xf32>
    %110 = arith.addf %108, %109 : vector<8x128xf32>
    %111 = arith.negf %110 : vector<8x128xf32>
    %112 = math.exp %111 : vector<8x128xf32>
    %cst_46 = arith.constant 1.000000e+00 : f32
    %113 = vector.broadcast %cst_46 : f32 to vector<8x128xf32>
    %114 = arith.addf %113, %112 : vector<8x128xf32>
    %115 = arith.divf %113, %114 : vector<8x128xf32>
    %116 = math.tanh %110 : vector<8x128xf32>
    %117 = vector.extract_strided_slice %115 {offsets = [0, 0], sizes = [8, 32], strides = [1, 1]} : vector<8x128xf32> to vector<8x32xf32>
    %118 = vector.extract_strided_slice %115 {offsets = [0, 32], sizes = [8, 32], strides = [1, 1]} : vector<8x128xf32> to vector<8x32xf32>
    %119 = vector.extract_strided_slice %116 {offsets = [0, 64], sizes = [8, 32], strides = [1, 1]} : vector<8x128xf32> to vector<8x32xf32>
    %120 = vector.extract_strided_slice %115 {offsets = [0, 96], sizes = [8, 32], strides = [1, 1]} : vector<8x128xf32> to vector<8x32xf32>
    %121 = arith.mulf %118, %105 : vector<8x32xf32>
    %122 = arith.mulf %117, %119 : vector<8x32xf32>
    %123 = arith.addf %121, %122 : vector<8x32xf32>
    %124 = math.tanh %123 : vector<8x32xf32>
    %125 = arith.mulf %120, %124 : vector<8x32xf32>
    %c40 = arith.constant 40 : index
    %c0_47 = arith.constant 0 : index
    %126 = vector.load %arg7[%c40, %c0_47] : memref<256x256xf32, #tpu.memory_space<vmem>>, vector<8x128xf32>
    %cst_48 = arith.constant dense<0.000000e+00> : vector<8x128xf32>
    %127 = tpu.matmul %125, %26, %cst_48 {dimension_numbers = #tpu.dot_dimension_numbers<[1], [0], [0], [1], [0, 0, 1, 1], [], []>} : vector<8x32xf32>, vector<32x128xf32>, vector<8x128xf32> -> vector<8x128xf32>
    %128 = arith.addf %126, %127 : vector<8x128xf32>
    %129 = arith.negf %128 : vector<8x128xf32>
    %130 = math.exp %129 : vector<8x128xf32>
    %cst_49 = arith.constant 1.000000e+00 : f32
    %131 = vector.broadcast %cst_49 : f32 to vector<8x128xf32>
    %132 = arith.addf %131, %130 : vector<8x128xf32>
    %133 = arith.divf %131, %132 : vector<8x128xf32>
    %134 = math.tanh %128 : vector<8x128xf32>
    %135 = vector.extract_strided_slice %133 {offsets = [0, 0], sizes = [8, 32], strides = [1, 1]} : vector<8x128xf32> to vector<8x32xf32>
    %136 = vector.extract_strided_slice %133 {offsets = [0, 32], sizes = [8, 32], strides = [1, 1]} : vector<8x128xf32> to vector<8x32xf32>
    %137 = vector.extract_strided_slice %134 {offsets = [0, 64], sizes = [8, 32], strides = [1, 1]} : vector<8x128xf32> to vector<8x32xf32>
    %138 = vector.extract_strided_slice %133 {offsets = [0, 96], sizes = [8, 32], strides = [1, 1]} : vector<8x128xf32> to vector<8x32xf32>
    %139 = arith.mulf %136, %123 : vector<8x32xf32>
    %140 = arith.mulf %135, %137 : vector<8x32xf32>
    %141 = arith.addf %139, %140 : vector<8x32xf32>
    %142 = math.tanh %141 : vector<8x32xf32>
    %143 = arith.mulf %138, %142 : vector<8x32xf32>
    %c48 = arith.constant 48 : index
    %c0_50 = arith.constant 0 : index
    %144 = vector.load %arg7[%c48, %c0_50] : memref<256x256xf32, #tpu.memory_space<vmem>>, vector<8x128xf32>
    %cst_51 = arith.constant dense<0.000000e+00> : vector<8x128xf32>
    %145 = tpu.matmul %143, %26, %cst_51 {dimension_numbers = #tpu.dot_dimension_numbers<[1], [0], [0], [1], [0, 0, 1, 1], [], []>} : vector<8x32xf32>, vector<32x128xf32>, vector<8x128xf32> -> vector<8x128xf32>
    %146 = arith.addf %144, %145 : vector<8x128xf32>
    %147 = arith.negf %146 : vector<8x128xf32>
    %148 = math.exp %147 : vector<8x128xf32>
    %cst_52 = arith.constant 1.000000e+00 : f32
    %149 = vector.broadcast %cst_52 : f32 to vector<8x128xf32>
    %150 = arith.addf %149, %148 : vector<8x128xf32>
    %151 = arith.divf %149, %150 : vector<8x128xf32>
    %152 = math.tanh %146 : vector<8x128xf32>
    %153 = vector.extract_strided_slice %151 {offsets = [0, 0], sizes = [8, 32], strides = [1, 1]} : vector<8x128xf32> to vector<8x32xf32>
    %154 = vector.extract_strided_slice %151 {offsets = [0, 32], sizes = [8, 32], strides = [1, 1]} : vector<8x128xf32> to vector<8x32xf32>
    %155 = vector.extract_strided_slice %152 {offsets = [0, 64], sizes = [8, 32], strides = [1, 1]} : vector<8x128xf32> to vector<8x32xf32>
    %156 = vector.extract_strided_slice %151 {offsets = [0, 96], sizes = [8, 32], strides = [1, 1]} : vector<8x128xf32> to vector<8x32xf32>
    %157 = arith.mulf %154, %141 : vector<8x32xf32>
    %158 = arith.mulf %153, %155 : vector<8x32xf32>
    %159 = arith.addf %157, %158 : vector<8x32xf32>
    %160 = math.tanh %159 : vector<8x32xf32>
    %161 = arith.mulf %156, %160 : vector<8x32xf32>
    %c56 = arith.constant 56 : index
    %c0_53 = arith.constant 0 : index
    %162 = vector.load %arg7[%c56, %c0_53] : memref<256x256xf32, #tpu.memory_space<vmem>>, vector<8x128xf32>
    %cst_54 = arith.constant dense<0.000000e+00> : vector<8x128xf32>
    %163 = tpu.matmul %161, %26, %cst_54 {dimension_numbers = #tpu.dot_dimension_numbers<[1], [0], [0], [1], [0, 0, 1, 1], [], []>} : vector<8x32xf32>, vector<32x128xf32>, vector<8x128xf32> -> vector<8x128xf32>
    %164 = arith.addf %162, %163 : vector<8x128xf32>
    %165 = arith.negf %164 : vector<8x128xf32>
    %166 = math.exp %165 : vector<8x128xf32>
    %cst_55 = arith.constant 1.000000e+00 : f32
    %167 = vector.broadcast %cst_55 : f32 to vector<8x128xf32>
    %168 = arith.addf %167, %166 : vector<8x128xf32>
    %169 = arith.divf %167, %168 : vector<8x128xf32>
    %170 = math.tanh %164 : vector<8x128xf32>
    %171 = vector.extract_strided_slice %169 {offsets = [0, 0], sizes = [8, 32], strides = [1, 1]} : vector<8x128xf32> to vector<8x32xf32>
    %172 = vector.extract_strided_slice %169 {offsets = [0, 32], sizes = [8, 32], strides = [1, 1]} : vector<8x128xf32> to vector<8x32xf32>
    %173 = vector.extract_strided_slice %170 {offsets = [0, 64], sizes = [8, 32], strides = [1, 1]} : vector<8x128xf32> to vector<8x32xf32>
    %174 = vector.extract_strided_slice %169 {offsets = [0, 96], sizes = [8, 32], strides = [1, 1]} : vector<8x128xf32> to vector<8x32xf32>
    %175 = arith.mulf %172, %159 : vector<8x32xf32>
    %176 = arith.mulf %171, %173 : vector<8x32xf32>
    %177 = arith.addf %175, %176 : vector<8x32xf32>
    %178 = math.tanh %177 : vector<8x32xf32>
    %179 = arith.mulf %174, %178 : vector<8x32xf32>
    %c64 = arith.constant 64 : index
    %c0_56 = arith.constant 0 : index
    %180 = vector.load %arg7[%c64, %c0_56] : memref<256x256xf32, #tpu.memory_space<vmem>>, vector<8x128xf32>
    %cst_57 = arith.constant dense<0.000000e+00> : vector<8x128xf32>
    %181 = tpu.matmul %179, %26, %cst_57 {dimension_numbers = #tpu.dot_dimension_numbers<[1], [0], [0], [1], [0, 0, 1, 1], [], []>} : vector<8x32xf32>, vector<32x128xf32>, vector<8x128xf32> -> vector<8x128xf32>
    %182 = arith.addf %180, %181 : vector<8x128xf32>
    %183 = arith.negf %182 : vector<8x128xf32>
    %184 = math.exp %183 : vector<8x128xf32>
    %cst_58 = arith.constant 1.000000e+00 : f32
    %185 = vector.broadcast %cst_58 : f32 to vector<8x128xf32>
    %186 = arith.addf %185, %184 : vector<8x128xf32>
    %187 = arith.divf %185, %186 : vector<8x128xf32>
    %188 = math.tanh %182 : vector<8x128xf32>
    %189 = vector.extract_strided_slice %187 {offsets = [0, 0], sizes = [8, 32], strides = [1, 1]} : vector<8x128xf32> to vector<8x32xf32>
    %190 = vector.extract_strided_slice %187 {offsets = [0, 32], sizes = [8, 32], strides = [1, 1]} : vector<8x128xf32> to vector<8x32xf32>
    %191 = vector.extract_strided_slice %188 {offsets = [0, 64], sizes = [8, 32], strides = [1, 1]} : vector<8x128xf32> to vector<8x32xf32>
    %192 = vector.extract_strided_slice %187 {offsets = [0, 96], sizes = [8, 32], strides = [1, 1]} : vector<8x128xf32> to vector<8x32xf32>
    %193 = arith.mulf %190, %177 : vector<8x32xf32>
    %194 = arith.mulf %189, %191 : vector<8x32xf32>
    %195 = arith.addf %193, %194 : vector<8x32xf32>
    %196 = math.tanh %195 : vector<8x32xf32>
    %197 = arith.mulf %192, %196 : vector<8x32xf32>
    %c72 = arith.constant 72 : index
    %c0_59 = arith.constant 0 : index
    %198 = vector.load %arg7[%c72, %c0_59] : memref<256x256xf32, #tpu.memory_space<vmem>>, vector<8x128xf32>
    %cst_60 = arith.constant dense<0.000000e+00> : vector<8x128xf32>
    %199 = tpu.matmul %197, %26, %cst_60 {dimension_numbers = #tpu.dot_dimension_numbers<[1], [0], [0], [1], [0, 0, 1, 1], [], []>} : vector<8x32xf32>, vector<32x128xf32>, vector<8x128xf32> -> vector<8x128xf32>
    %200 = arith.addf %198, %199 : vector<8x128xf32>
    %201 = arith.negf %200 : vector<8x128xf32>
    %202 = math.exp %201 : vector<8x128xf32>
    %cst_61 = arith.constant 1.000000e+00 : f32
    %203 = vector.broadcast %cst_61 : f32 to vector<8x128xf32>
    %204 = arith.addf %203, %202 : vector<8x128xf32>
    %205 = arith.divf %203, %204 : vector<8x128xf32>
    %206 = math.tanh %200 : vector<8x128xf32>
    %207 = vector.extract_strided_slice %205 {offsets = [0, 0], sizes = [8, 32], strides = [1, 1]} : vector<8x128xf32> to vector<8x32xf32>
    %208 = vector.extract_strided_slice %205 {offsets = [0, 32], sizes = [8, 32], strides = [1, 1]} : vector<8x128xf32> to vector<8x32xf32>
    %209 = vector.extract_strided_slice %206 {offsets = [0, 64], sizes = [8, 32], strides = [1, 1]} : vector<8x128xf32> to vector<8x32xf32>
    %210 = vector.extract_strided_slice %205 {offsets = [0, 96], sizes = [8, 32], strides = [1, 1]} : vector<8x128xf32> to vector<8x32xf32>
    %211 = arith.mulf %208, %195 : vector<8x32xf32>
    %212 = arith.mulf %207, %209 : vector<8x32xf32>
    %213 = arith.addf %211, %212 : vector<8x32xf32>
    %214 = math.tanh %213 : vector<8x32xf32>
    %215 = arith.mulf %210, %214 : vector<8x32xf32>
    %c80 = arith.constant 80 : index
    %c0_62 = arith.constant 0 : index
    %216 = vector.load %arg7[%c80, %c0_62] : memref<256x256xf32, #tpu.memory_space<vmem>>, vector<8x128xf32>
    %cst_63 = arith.constant dense<0.000000e+00> : vector<8x128xf32>
    %217 = tpu.matmul %215, %26, %cst_63 {dimension_numbers = #tpu.dot_dimension_numbers<[1], [0], [0], [1], [0, 0, 1, 1], [], []>} : vector<8x32xf32>, vector<32x128xf32>, vector<8x128xf32> -> vector<8x128xf32>
    %218 = arith.addf %216, %217 : vector<8x128xf32>
    %219 = arith.negf %218 : vector<8x128xf32>
    %220 = math.exp %219 : vector<8x128xf32>
    %cst_64 = arith.constant 1.000000e+00 : f32
    %221 = vector.broadcast %cst_64 : f32 to vector<8x128xf32>
    %222 = arith.addf %221, %220 : vector<8x128xf32>
    %223 = arith.divf %221, %222 : vector<8x128xf32>
    %224 = math.tanh %218 : vector<8x128xf32>
    %225 = vector.extract_strided_slice %223 {offsets = [0, 0], sizes = [8, 32], strides = [1, 1]} : vector<8x128xf32> to vector<8x32xf32>
    %226 = vector.extract_strided_slice %223 {offsets = [0, 32], sizes = [8, 32], strides = [1, 1]} : vector<8x128xf32> to vector<8x32xf32>
    %227 = vector.extract_strided_slice %224 {offsets = [0, 64], sizes = [8, 32], strides = [1, 1]} : vector<8x128xf32> to vector<8x32xf32>
    %228 = vector.extract_strided_slice %223 {offsets = [0, 96], sizes = [8, 32], strides = [1, 1]} : vector<8x128xf32> to vector<8x32xf32>
    %229 = arith.mulf %226, %213 : vector<8x32xf32>
    %230 = arith.mulf %225, %227 : vector<8x32xf32>
    %231 = arith.addf %229, %230 : vector<8x32xf32>
    %232 = math.tanh %231 : vector<8x32xf32>
    %233 = arith.mulf %228, %232 : vector<8x32xf32>
    %c88 = arith.constant 88 : index
    %c0_65 = arith.constant 0 : index
    %234 = vector.load %arg7[%c88, %c0_65] : memref<256x256xf32, #tpu.memory_space<vmem>>, vector<8x128xf32>
    %cst_66 = arith.constant dense<0.000000e+00> : vector<8x128xf32>
    %235 = tpu.matmul %233, %26, %cst_66 {dimension_numbers = #tpu.dot_dimension_numbers<[1], [0], [0], [1], [0, 0, 1, 1], [], []>} : vector<8x32xf32>, vector<32x128xf32>, vector<8x128xf32> -> vector<8x128xf32>
    %236 = arith.addf %234, %235 : vector<8x128xf32>
    %237 = arith.negf %236 : vector<8x128xf32>
    %238 = math.exp %237 : vector<8x128xf32>
    %cst_67 = arith.constant 1.000000e+00 : f32
    %239 = vector.broadcast %cst_67 : f32 to vector<8x128xf32>
    %240 = arith.addf %239, %238 : vector<8x128xf32>
    %241 = arith.divf %239, %240 : vector<8x128xf32>
    %242 = math.tanh %236 : vector<8x128xf32>
    %243 = vector.extract_strided_slice %241 {offsets = [0, 0], sizes = [8, 32], strides = [1, 1]} : vector<8x128xf32> to vector<8x32xf32>
    %244 = vector.extract_strided_slice %241 {offsets = [0, 32], sizes = [8, 32], strides = [1, 1]} : vector<8x128xf32> to vector<8x32xf32>
    %245 = vector.extract_strided_slice %242 {offsets = [0, 64], sizes = [8, 32], strides = [1, 1]} : vector<8x128xf32> to vector<8x32xf32>
    %246 = vector.extract_strided_slice %241 {offsets = [0, 96], sizes = [8, 32], strides = [1, 1]} : vector<8x128xf32> to vector<8x32xf32>
    %247 = arith.mulf %244, %231 : vector<8x32xf32>
    %248 = arith.mulf %243, %245 : vector<8x32xf32>
    %249 = arith.addf %247, %248 : vector<8x32xf32>
    %250 = math.tanh %249 : vector<8x32xf32>
    %251 = arith.mulf %246, %250 : vector<8x32xf32>
    %c96 = arith.constant 96 : index
    %c0_68 = arith.constant 0 : index
    %252 = vector.load %arg7[%c96, %c0_68] : memref<256x256xf32, #tpu.memory_space<vmem>>, vector<8x128xf32>
    %cst_69 = arith.constant dense<0.000000e+00> : vector<8x128xf32>
    %253 = tpu.matmul %251, %26, %cst_69 {dimension_numbers = #tpu.dot_dimension_numbers<[1], [0], [0], [1], [0, 0, 1, 1], [], []>} : vector<8x32xf32>, vector<32x128xf32>, vector<8x128xf32> -> vector<8x128xf32>
    %254 = arith.addf %252, %253 : vector<8x128xf32>
    %255 = arith.negf %254 : vector<8x128xf32>
    %256 = math.exp %255 : vector<8x128xf32>
    %cst_70 = arith.constant 1.000000e+00 : f32
    %257 = vector.broadcast %cst_70 : f32 to vector<8x128xf32>
    %258 = arith.addf %257, %256 : vector<8x128xf32>
    %259 = arith.divf %257, %258 : vector<8x128xf32>
    %260 = math.tanh %254 : vector<8x128xf32>
    %261 = vector.extract_strided_slice %259 {offsets = [0, 0], sizes = [8, 32], strides = [1, 1]} : vector<8x128xf32> to vector<8x32xf32>
    %262 = vector.extract_strided_slice %259 {offsets = [0, 32], sizes = [8, 32], strides = [1, 1]} : vector<8x128xf32> to vector<8x32xf32>
    %263 = vector.extract_strided_slice %260 {offsets = [0, 64], sizes = [8, 32], strides = [1, 1]} : vector<8x128xf32> to vector<8x32xf32>
    %264 = vector.extract_strided_slice %259 {offsets = [0, 96], sizes = [8, 32], strides = [1, 1]} : vector<8x128xf32> to vector<8x32xf32>
    %265 = arith.mulf %262, %249 : vector<8x32xf32>
    %266 = arith.mulf %261, %263 : vector<8x32xf32>
    %267 = arith.addf %265, %266 : vector<8x32xf32>
    %268 = math.tanh %267 : vector<8x32xf32>
    %269 = arith.mulf %264, %268 : vector<8x32xf32>
    %c104 = arith.constant 104 : index
    %c0_71 = arith.constant 0 : index
    %270 = vector.load %arg7[%c104, %c0_71] : memref<256x256xf32, #tpu.memory_space<vmem>>, vector<8x128xf32>
    %cst_72 = arith.constant dense<0.000000e+00> : vector<8x128xf32>
    %271 = tpu.matmul %269, %26, %cst_72 {dimension_numbers = #tpu.dot_dimension_numbers<[1], [0], [0], [1], [0, 0, 1, 1], [], []>} : vector<8x32xf32>, vector<32x128xf32>, vector<8x128xf32> -> vector<8x128xf32>
    %272 = arith.addf %270, %271 : vector<8x128xf32>
    %273 = arith.negf %272 : vector<8x128xf32>
    %274 = math.exp %273 : vector<8x128xf32>
    %cst_73 = arith.constant 1.000000e+00 : f32
    %275 = vector.broadcast %cst_73 : f32 to vector<8x128xf32>
    %276 = arith.addf %275, %274 : vector<8x128xf32>
    %277 = arith.divf %275, %276 : vector<8x128xf32>
    %278 = math.tanh %272 : vector<8x128xf32>
    %279 = vector.extract_strided_slice %277 {offsets = [0, 0], sizes = [8, 32], strides = [1, 1]} : vector<8x128xf32> to vector<8x32xf32>
    %280 = vector.extract_strided_slice %277 {offsets = [0, 32], sizes = [8, 32], strides = [1, 1]} : vector<8x128xf32> to vector<8x32xf32>
    %281 = vector.extract_strided_slice %278 {offsets = [0, 64], sizes = [8, 32], strides = [1, 1]} : vector<8x128xf32> to vector<8x32xf32>
    %282 = vector.extract_strided_slice %277 {offsets = [0, 96], sizes = [8, 32], strides = [1, 1]} : vector<8x128xf32> to vector<8x32xf32>
    %283 = arith.mulf %280, %267 : vector<8x32xf32>
    %284 = arith.mulf %279, %281 : vector<8x32xf32>
    %285 = arith.addf %283, %284 : vector<8x32xf32>
    %286 = math.tanh %285 : vector<8x32xf32>
    %287 = arith.mulf %282, %286 : vector<8x32xf32>
    %c112 = arith.constant 112 : index
    %c0_74 = arith.constant 0 : index
    %288 = vector.load %arg7[%c112, %c0_74] : memref<256x256xf32, #tpu.memory_space<vmem>>, vector<8x128xf32>
    %cst_75 = arith.constant dense<0.000000e+00> : vector<8x128xf32>
    %289 = tpu.matmul %287, %26, %cst_75 {dimension_numbers = #tpu.dot_dimension_numbers<[1], [0], [0], [1], [0, 0, 1, 1], [], []>} : vector<8x32xf32>, vector<32x128xf32>, vector<8x128xf32> -> vector<8x128xf32>
    %290 = arith.addf %288, %289 : vector<8x128xf32>
    %291 = arith.negf %290 : vector<8x128xf32>
    %292 = math.exp %291 : vector<8x128xf32>
    %cst_76 = arith.constant 1.000000e+00 : f32
    %293 = vector.broadcast %cst_76 : f32 to vector<8x128xf32>
    %294 = arith.addf %293, %292 : vector<8x128xf32>
    %295 = arith.divf %293, %294 : vector<8x128xf32>
    %296 = math.tanh %290 : vector<8x128xf32>
    %297 = vector.extract_strided_slice %295 {offsets = [0, 0], sizes = [8, 32], strides = [1, 1]} : vector<8x128xf32> to vector<8x32xf32>
    %298 = vector.extract_strided_slice %295 {offsets = [0, 32], sizes = [8, 32], strides = [1, 1]} : vector<8x128xf32> to vector<8x32xf32>
    %299 = vector.extract_strided_slice %296 {offsets = [0, 64], sizes = [8, 32], strides = [1, 1]} : vector<8x128xf32> to vector<8x32xf32>
    %300 = vector.extract_strided_slice %295 {offsets = [0, 96], sizes = [8, 32], strides = [1, 1]} : vector<8x128xf32> to vector<8x32xf32>
    %301 = arith.mulf %298, %285 : vector<8x32xf32>
    %302 = arith.mulf %297, %299 : vector<8x32xf32>
    %303 = arith.addf %301, %302 : vector<8x32xf32>
    %304 = math.tanh %303 : vector<8x32xf32>
    %305 = arith.mulf %300, %304 : vector<8x32xf32>
    %c120 = arith.constant 120 : index
    %c0_77 = arith.constant 0 : index
    %306 = vector.load %arg7[%c120, %c0_77] : memref<256x256xf32, #tpu.memory_space<vmem>>, vector<8x128xf32>
    %cst_78 = arith.constant dense<0.000000e+00> : vector<8x128xf32>
    %307 = tpu.matmul %305, %26, %cst_78 {dimension_numbers = #tpu.dot_dimension_numbers<[1], [0], [0], [1], [0, 0, 1, 1], [], []>} : vector<8x32xf32>, vector<32x128xf32>, vector<8x128xf32> -> vector<8x128xf32>
    %308 = arith.addf %306, %307 : vector<8x128xf32>
    %309 = arith.negf %308 : vector<8x128xf32>
    %310 = math.exp %309 : vector<8x128xf32>
    %cst_79 = arith.constant 1.000000e+00 : f32
    %311 = vector.broadcast %cst_79 : f32 to vector<8x128xf32>
    %312 = arith.addf %311, %310 : vector<8x128xf32>
    %313 = arith.divf %311, %312 : vector<8x128xf32>
    %314 = math.tanh %308 : vector<8x128xf32>
    %315 = vector.extract_strided_slice %313 {offsets = [0, 0], sizes = [8, 32], strides = [1, 1]} : vector<8x128xf32> to vector<8x32xf32>
    %316 = vector.extract_strided_slice %313 {offsets = [0, 32], sizes = [8, 32], strides = [1, 1]} : vector<8x128xf32> to vector<8x32xf32>
    %317 = vector.extract_strided_slice %314 {offsets = [0, 64], sizes = [8, 32], strides = [1, 1]} : vector<8x128xf32> to vector<8x32xf32>
    %318 = vector.extract_strided_slice %313 {offsets = [0, 96], sizes = [8, 32], strides = [1, 1]} : vector<8x128xf32> to vector<8x32xf32>
    %319 = arith.mulf %316, %303 : vector<8x32xf32>
    %320 = arith.mulf %315, %317 : vector<8x32xf32>
    %321 = arith.addf %319, %320 : vector<8x32xf32>
    %322 = math.tanh %321 : vector<8x32xf32>
    %323 = arith.mulf %318, %322 : vector<8x32xf32>
    %c128 = arith.constant 128 : index
    %c0_80 = arith.constant 0 : index
    %324 = vector.load %arg7[%c128, %c0_80] : memref<256x256xf32, #tpu.memory_space<vmem>>, vector<8x128xf32>
    %cst_81 = arith.constant dense<0.000000e+00> : vector<8x128xf32>
    %325 = tpu.matmul %323, %26, %cst_81 {dimension_numbers = #tpu.dot_dimension_numbers<[1], [0], [0], [1], [0, 0, 1, 1], [], []>} : vector<8x32xf32>, vector<32x128xf32>, vector<8x128xf32> -> vector<8x128xf32>
    %326 = arith.addf %324, %325 : vector<8x128xf32>
    %327 = arith.negf %326 : vector<8x128xf32>
    %328 = math.exp %327 : vector<8x128xf32>
    %cst_82 = arith.constant 1.000000e+00 : f32
    %329 = vector.broadcast %cst_82 : f32 to vector<8x128xf32>
    %330 = arith.addf %329, %328 : vector<8x128xf32>
    %331 = arith.divf %329, %330 : vector<8x128xf32>
    %332 = math.tanh %326 : vector<8x128xf32>
    %333 = vector.extract_strided_slice %331 {offsets = [0, 0], sizes = [8, 32], strides = [1, 1]} : vector<8x128xf32> to vector<8x32xf32>
    %334 = vector.extract_strided_slice %331 {offsets = [0, 32], sizes = [8, 32], strides = [1, 1]} : vector<8x128xf32> to vector<8x32xf32>
    %335 = vector.extract_strided_slice %332 {offsets = [0, 64], sizes = [8, 32], strides = [1, 1]} : vector<8x128xf32> to vector<8x32xf32>
    %336 = vector.extract_strided_slice %331 {offsets = [0, 96], sizes = [8, 32], strides = [1, 1]} : vector<8x128xf32> to vector<8x32xf32>
    %337 = arith.mulf %334, %321 : vector<8x32xf32>
    %338 = arith.mulf %333, %335 : vector<8x32xf32>
    %339 = arith.addf %337, %338 : vector<8x32xf32>
    %340 = math.tanh %339 : vector<8x32xf32>
    %341 = arith.mulf %336, %340 : vector<8x32xf32>
    %c136 = arith.constant 136 : index
    %c0_83 = arith.constant 0 : index
    %342 = vector.load %arg7[%c136, %c0_83] : memref<256x256xf32, #tpu.memory_space<vmem>>, vector<8x128xf32>
    %cst_84 = arith.constant dense<0.000000e+00> : vector<8x128xf32>
    %343 = tpu.matmul %341, %26, %cst_84 {dimension_numbers = #tpu.dot_dimension_numbers<[1], [0], [0], [1], [0, 0, 1, 1], [], []>} : vector<8x32xf32>, vector<32x128xf32>, vector<8x128xf32> -> vector<8x128xf32>
    %344 = arith.addf %342, %343 : vector<8x128xf32>
    %345 = arith.negf %344 : vector<8x128xf32>
    %346 = math.exp %345 : vector<8x128xf32>
    %cst_85 = arith.constant 1.000000e+00 : f32
    %347 = vector.broadcast %cst_85 : f32 to vector<8x128xf32>
    %348 = arith.addf %347, %346 : vector<8x128xf32>
    %349 = arith.divf %347, %348 : vector<8x128xf32>
    %350 = math.tanh %344 : vector<8x128xf32>
    %351 = vector.extract_strided_slice %349 {offsets = [0, 0], sizes = [8, 32], strides = [1, 1]} : vector<8x128xf32> to vector<8x32xf32>
    %352 = vector.extract_strided_slice %349 {offsets = [0, 32], sizes = [8, 32], strides = [1, 1]} : vector<8x128xf32> to vector<8x32xf32>
    %353 = vector.extract_strided_slice %350 {offsets = [0, 64], sizes = [8, 32], strides = [1, 1]} : vector<8x128xf32> to vector<8x32xf32>
    %354 = vector.extract_strided_slice %349 {offsets = [0, 96], sizes = [8, 32], strides = [1, 1]} : vector<8x128xf32> to vector<8x32xf32>
    %355 = arith.mulf %352, %339 : vector<8x32xf32>
    %356 = arith.mulf %351, %353 : vector<8x32xf32>
    %357 = arith.addf %355, %356 : vector<8x32xf32>
    %358 = math.tanh %357 : vector<8x32xf32>
    %359 = arith.mulf %354, %358 : vector<8x32xf32>
    %c144 = arith.constant 144 : index
    %c0_86 = arith.constant 0 : index
    %360 = vector.load %arg7[%c144, %c0_86] : memref<256x256xf32, #tpu.memory_space<vmem>>, vector<8x128xf32>
    %cst_87 = arith.constant dense<0.000000e+00> : vector<8x128xf32>
    %361 = tpu.matmul %359, %26, %cst_87 {dimension_numbers = #tpu.dot_dimension_numbers<[1], [0], [0], [1], [0, 0, 1, 1], [], []>} : vector<8x32xf32>, vector<32x128xf32>, vector<8x128xf32> -> vector<8x128xf32>
    %362 = arith.addf %360, %361 : vector<8x128xf32>
    %363 = arith.negf %362 : vector<8x128xf32>
    %364 = math.exp %363 : vector<8x128xf32>
    %cst_88 = arith.constant 1.000000e+00 : f32
    %365 = vector.broadcast %cst_88 : f32 to vector<8x128xf32>
    %366 = arith.addf %365, %364 : vector<8x128xf32>
    %367 = arith.divf %365, %366 : vector<8x128xf32>
    %368 = math.tanh %362 : vector<8x128xf32>
    %369 = vector.extract_strided_slice %367 {offsets = [0, 0], sizes = [8, 32], strides = [1, 1]} : vector<8x128xf32> to vector<8x32xf32>
    %370 = vector.extract_strided_slice %367 {offsets = [0, 32], sizes = [8, 32], strides = [1, 1]} : vector<8x128xf32> to vector<8x32xf32>
    %371 = vector.extract_strided_slice %368 {offsets = [0, 64], sizes = [8, 32], strides = [1, 1]} : vector<8x128xf32> to vector<8x32xf32>
    %372 = vector.extract_strided_slice %367 {offsets = [0, 96], sizes = [8, 32], strides = [1, 1]} : vector<8x128xf32> to vector<8x32xf32>
    %373 = arith.mulf %370, %357 : vector<8x32xf32>
    %374 = arith.mulf %369, %371 : vector<8x32xf32>
    %375 = arith.addf %373, %374 : vector<8x32xf32>
    %376 = math.tanh %375 : vector<8x32xf32>
    %377 = arith.mulf %372, %376 : vector<8x32xf32>
    %c152 = arith.constant 152 : index
    %c0_89 = arith.constant 0 : index
    %378 = vector.load %arg7[%c152, %c0_89] : memref<256x256xf32, #tpu.memory_space<vmem>>, vector<8x128xf32>
    %cst_90 = arith.constant dense<0.000000e+00> : vector<8x128xf32>
    %379 = tpu.matmul %377, %26, %cst_90 {dimension_numbers = #tpu.dot_dimension_numbers<[1], [0], [0], [1], [0, 0, 1, 1], [], []>} : vector<8x32xf32>, vector<32x128xf32>, vector<8x128xf32> -> vector<8x128xf32>
    %380 = arith.addf %378, %379 : vector<8x128xf32>
    %381 = arith.negf %380 : vector<8x128xf32>
    %382 = math.exp %381 : vector<8x128xf32>
    %cst_91 = arith.constant 1.000000e+00 : f32
    %383 = vector.broadcast %cst_91 : f32 to vector<8x128xf32>
    %384 = arith.addf %383, %382 : vector<8x128xf32>
    %385 = arith.divf %383, %384 : vector<8x128xf32>
    %386 = math.tanh %380 : vector<8x128xf32>
    %387 = vector.extract_strided_slice %385 {offsets = [0, 0], sizes = [8, 32], strides = [1, 1]} : vector<8x128xf32> to vector<8x32xf32>
    %388 = vector.extract_strided_slice %385 {offsets = [0, 32], sizes = [8, 32], strides = [1, 1]} : vector<8x128xf32> to vector<8x32xf32>
    %389 = vector.extract_strided_slice %386 {offsets = [0, 64], sizes = [8, 32], strides = [1, 1]} : vector<8x128xf32> to vector<8x32xf32>
    %390 = vector.extract_strided_slice %385 {offsets = [0, 96], sizes = [8, 32], strides = [1, 1]} : vector<8x128xf32> to vector<8x32xf32>
    %391 = arith.mulf %388, %375 : vector<8x32xf32>
    %392 = arith.mulf %387, %389 : vector<8x32xf32>
    %393 = arith.addf %391, %392 : vector<8x32xf32>
    %394 = math.tanh %393 : vector<8x32xf32>
    %395 = arith.mulf %390, %394 : vector<8x32xf32>
    %c160 = arith.constant 160 : index
    %c0_92 = arith.constant 0 : index
    %396 = vector.load %arg7[%c160, %c0_92] : memref<256x256xf32, #tpu.memory_space<vmem>>, vector<8x128xf32>
    %cst_93 = arith.constant dense<0.000000e+00> : vector<8x128xf32>
    %397 = tpu.matmul %395, %26, %cst_93 {dimension_numbers = #tpu.dot_dimension_numbers<[1], [0], [0], [1], [0, 0, 1, 1], [], []>} : vector<8x32xf32>, vector<32x128xf32>, vector<8x128xf32> -> vector<8x128xf32>
    %398 = arith.addf %396, %397 : vector<8x128xf32>
    %399 = arith.negf %398 : vector<8x128xf32>
    %400 = math.exp %399 : vector<8x128xf32>
    %cst_94 = arith.constant 1.000000e+00 : f32
    %401 = vector.broadcast %cst_94 : f32 to vector<8x128xf32>
    %402 = arith.addf %401, %400 : vector<8x128xf32>
    %403 = arith.divf %401, %402 : vector<8x128xf32>
    %404 = math.tanh %398 : vector<8x128xf32>
    %405 = vector.extract_strided_slice %403 {offsets = [0, 0], sizes = [8, 32], strides = [1, 1]} : vector<8x128xf32> to vector<8x32xf32>
    %406 = vector.extract_strided_slice %403 {offsets = [0, 32], sizes = [8, 32], strides = [1, 1]} : vector<8x128xf32> to vector<8x32xf32>
    %407 = vector.extract_strided_slice %404 {offsets = [0, 64], sizes = [8, 32], strides = [1, 1]} : vector<8x128xf32> to vector<8x32xf32>
    %408 = vector.extract_strided_slice %403 {offsets = [0, 96], sizes = [8, 32], strides = [1, 1]} : vector<8x128xf32> to vector<8x32xf32>
    %409 = arith.mulf %406, %393 : vector<8x32xf32>
    %410 = arith.mulf %405, %407 : vector<8x32xf32>
    %411 = arith.addf %409, %410 : vector<8x32xf32>
    %412 = math.tanh %411 : vector<8x32xf32>
    %413 = arith.mulf %408, %412 : vector<8x32xf32>
    %c168 = arith.constant 168 : index
    %c0_95 = arith.constant 0 : index
    %414 = vector.load %arg7[%c168, %c0_95] : memref<256x256xf32, #tpu.memory_space<vmem>>, vector<8x128xf32>
    %cst_96 = arith.constant dense<0.000000e+00> : vector<8x128xf32>
    %415 = tpu.matmul %413, %26, %cst_96 {dimension_numbers = #tpu.dot_dimension_numbers<[1], [0], [0], [1], [0, 0, 1, 1], [], []>} : vector<8x32xf32>, vector<32x128xf32>, vector<8x128xf32> -> vector<8x128xf32>
    %416 = arith.addf %414, %415 : vector<8x128xf32>
    %417 = arith.negf %416 : vector<8x128xf32>
    %418 = math.exp %417 : vector<8x128xf32>
    %cst_97 = arith.constant 1.000000e+00 : f32
    %419 = vector.broadcast %cst_97 : f32 to vector<8x128xf32>
    %420 = arith.addf %419, %418 : vector<8x128xf32>
    %421 = arith.divf %419, %420 : vector<8x128xf32>
    %422 = math.tanh %416 : vector<8x128xf32>
    %423 = vector.extract_strided_slice %421 {offsets = [0, 0], sizes = [8, 32], strides = [1, 1]} : vector<8x128xf32> to vector<8x32xf32>
    %424 = vector.extract_strided_slice %421 {offsets = [0, 32], sizes = [8, 32], strides = [1, 1]} : vector<8x128xf32> to vector<8x32xf32>
    %425 = vector.extract_strided_slice %422 {offsets = [0, 64], sizes = [8, 32], strides = [1, 1]} : vector<8x128xf32> to vector<8x32xf32>
    %426 = vector.extract_strided_slice %421 {offsets = [0, 96], sizes = [8, 32], strides = [1, 1]} : vector<8x128xf32> to vector<8x32xf32>
    %427 = arith.mulf %424, %411 : vector<8x32xf32>
    %428 = arith.mulf %423, %425 : vector<8x32xf32>
    %429 = arith.addf %427, %428 : vector<8x32xf32>
    %430 = math.tanh %429 : vector<8x32xf32>
    %431 = arith.mulf %426, %430 : vector<8x32xf32>
    %c176 = arith.constant 176 : index
    %c0_98 = arith.constant 0 : index
    %432 = vector.load %arg7[%c176, %c0_98] : memref<256x256xf32, #tpu.memory_space<vmem>>, vector<8x128xf32>
    %cst_99 = arith.constant dense<0.000000e+00> : vector<8x128xf32>
    %433 = tpu.matmul %431, %26, %cst_99 {dimension_numbers = #tpu.dot_dimension_numbers<[1], [0], [0], [1], [0, 0, 1, 1], [], []>} : vector<8x32xf32>, vector<32x128xf32>, vector<8x128xf32> -> vector<8x128xf32>
    %434 = arith.addf %432, %433 : vector<8x128xf32>
    %435 = arith.negf %434 : vector<8x128xf32>
    %436 = math.exp %435 : vector<8x128xf32>
    %cst_100 = arith.constant 1.000000e+00 : f32
    %437 = vector.broadcast %cst_100 : f32 to vector<8x128xf32>
    %438 = arith.addf %437, %436 : vector<8x128xf32>
    %439 = arith.divf %437, %438 : vector<8x128xf32>
    %440 = math.tanh %434 : vector<8x128xf32>
    %441 = vector.extract_strided_slice %439 {offsets = [0, 0], sizes = [8, 32], strides = [1, 1]} : vector<8x128xf32> to vector<8x32xf32>
    %442 = vector.extract_strided_slice %439 {offsets = [0, 32], sizes = [8, 32], strides = [1, 1]} : vector<8x128xf32> to vector<8x32xf32>
    %443 = vector.extract_strided_slice %440 {offsets = [0, 64], sizes = [8, 32], strides = [1, 1]} : vector<8x128xf32> to vector<8x32xf32>
    %444 = vector.extract_strided_slice %439 {offsets = [0, 96], sizes = [8, 32], strides = [1, 1]} : vector<8x128xf32> to vector<8x32xf32>
    %445 = arith.mulf %442, %429 : vector<8x32xf32>
    %446 = arith.mulf %441, %443 : vector<8x32xf32>
    %447 = arith.addf %445, %446 : vector<8x32xf32>
    %448 = math.tanh %447 : vector<8x32xf32>
    %449 = arith.mulf %444, %448 : vector<8x32xf32>
    %c184 = arith.constant 184 : index
    %c0_101 = arith.constant 0 : index
    %450 = vector.load %arg7[%c184, %c0_101] : memref<256x256xf32, #tpu.memory_space<vmem>>, vector<8x128xf32>
    %cst_102 = arith.constant dense<0.000000e+00> : vector<8x128xf32>
    %451 = tpu.matmul %449, %26, %cst_102 {dimension_numbers = #tpu.dot_dimension_numbers<[1], [0], [0], [1], [0, 0, 1, 1], [], []>} : vector<8x32xf32>, vector<32x128xf32>, vector<8x128xf32> -> vector<8x128xf32>
    %452 = arith.addf %450, %451 : vector<8x128xf32>
    %453 = arith.negf %452 : vector<8x128xf32>
    %454 = math.exp %453 : vector<8x128xf32>
    %cst_103 = arith.constant 1.000000e+00 : f32
    %455 = vector.broadcast %cst_103 : f32 to vector<8x128xf32>
    %456 = arith.addf %455, %454 : vector<8x128xf32>
    %457 = arith.divf %455, %456 : vector<8x128xf32>
    %458 = math.tanh %452 : vector<8x128xf32>
    %459 = vector.extract_strided_slice %457 {offsets = [0, 0], sizes = [8, 32], strides = [1, 1]} : vector<8x128xf32> to vector<8x32xf32>
    %460 = vector.extract_strided_slice %457 {offsets = [0, 32], sizes = [8, 32], strides = [1, 1]} : vector<8x128xf32> to vector<8x32xf32>
    %461 = vector.extract_strided_slice %458 {offsets = [0, 64], sizes = [8, 32], strides = [1, 1]} : vector<8x128xf32> to vector<8x32xf32>
    %462 = vector.extract_strided_slice %457 {offsets = [0, 96], sizes = [8, 32], strides = [1, 1]} : vector<8x128xf32> to vector<8x32xf32>
    %463 = arith.mulf %460, %447 : vector<8x32xf32>
    %464 = arith.mulf %459, %461 : vector<8x32xf32>
    %465 = arith.addf %463, %464 : vector<8x32xf32>
    %466 = math.tanh %465 : vector<8x32xf32>
    %467 = arith.mulf %462, %466 : vector<8x32xf32>
    %c192 = arith.constant 192 : index
    %c0_104 = arith.constant 0 : index
    %468 = vector.load %arg7[%c192, %c0_104] : memref<256x256xf32, #tpu.memory_space<vmem>>, vector<8x128xf32>
    %cst_105 = arith.constant dense<0.000000e+00> : vector<8x128xf32>
    %469 = tpu.matmul %467, %26, %cst_105 {dimension_numbers = #tpu.dot_dimension_numbers<[1], [0], [0], [1], [0, 0, 1, 1], [], []>} : vector<8x32xf32>, vector<32x128xf32>, vector<8x128xf32> -> vector<8x128xf32>
    %470 = arith.addf %468, %469 : vector<8x128xf32>
    %471 = arith.negf %470 : vector<8x128xf32>
    %472 = math.exp %471 : vector<8x128xf32>
    %cst_106 = arith.constant 1.000000e+00 : f32
    %473 = vector.broadcast %cst_106 : f32 to vector<8x128xf32>
    %474 = arith.addf %473, %472 : vector<8x128xf32>
    %475 = arith.divf %473, %474 : vector<8x128xf32>
    %476 = math.tanh %470 : vector<8x128xf32>
    %477 = vector.extract_strided_slice %475 {offsets = [0, 0], sizes = [8, 32], strides = [1, 1]} : vector<8x128xf32> to vector<8x32xf32>
    %478 = vector.extract_strided_slice %475 {offsets = [0, 32], sizes = [8, 32], strides = [1, 1]} : vector<8x128xf32> to vector<8x32xf32>
    %479 = vector.extract_strided_slice %476 {offsets = [0, 64], sizes = [8, 32], strides = [1, 1]} : vector<8x128xf32> to vector<8x32xf32>
    %480 = vector.extract_strided_slice %475 {offsets = [0, 96], sizes = [8, 32], strides = [1, 1]} : vector<8x128xf32> to vector<8x32xf32>
    %481 = arith.mulf %478, %465 : vector<8x32xf32>
    %482 = arith.mulf %477, %479 : vector<8x32xf32>
    %483 = arith.addf %481, %482 : vector<8x32xf32>
    %484 = math.tanh %483 : vector<8x32xf32>
    %485 = arith.mulf %480, %484 : vector<8x32xf32>
    %c200 = arith.constant 200 : index
    %c0_107 = arith.constant 0 : index
    %486 = vector.load %arg7[%c200, %c0_107] : memref<256x256xf32, #tpu.memory_space<vmem>>, vector<8x128xf32>
    %cst_108 = arith.constant dense<0.000000e+00> : vector<8x128xf32>
    %487 = tpu.matmul %485, %26, %cst_108 {dimension_numbers = #tpu.dot_dimension_numbers<[1], [0], [0], [1], [0, 0, 1, 1], [], []>} : vector<8x32xf32>, vector<32x128xf32>, vector<8x128xf32> -> vector<8x128xf32>
    %488 = arith.addf %486, %487 : vector<8x128xf32>
    %489 = arith.negf %488 : vector<8x128xf32>
    %490 = math.exp %489 : vector<8x128xf32>
    %cst_109 = arith.constant 1.000000e+00 : f32
    %491 = vector.broadcast %cst_109 : f32 to vector<8x128xf32>
    %492 = arith.addf %491, %490 : vector<8x128xf32>
    %493 = arith.divf %491, %492 : vector<8x128xf32>
    %494 = math.tanh %488 : vector<8x128xf32>
    %495 = vector.extract_strided_slice %493 {offsets = [0, 0], sizes = [8, 32], strides = [1, 1]} : vector<8x128xf32> to vector<8x32xf32>
    %496 = vector.extract_strided_slice %493 {offsets = [0, 32], sizes = [8, 32], strides = [1, 1]} : vector<8x128xf32> to vector<8x32xf32>
    %497 = vector.extract_strided_slice %494 {offsets = [0, 64], sizes = [8, 32], strides = [1, 1]} : vector<8x128xf32> to vector<8x32xf32>
    %498 = vector.extract_strided_slice %493 {offsets = [0, 96], sizes = [8, 32], strides = [1, 1]} : vector<8x128xf32> to vector<8x32xf32>
    %499 = arith.mulf %496, %483 : vector<8x32xf32>
    %500 = arith.mulf %495, %497 : vector<8x32xf32>
    %501 = arith.addf %499, %500 : vector<8x32xf32>
    %502 = math.tanh %501 : vector<8x32xf32>
    %503 = arith.mulf %498, %502 : vector<8x32xf32>
    %c208 = arith.constant 208 : index
    %c0_110 = arith.constant 0 : index
    %504 = vector.load %arg7[%c208, %c0_110] : memref<256x256xf32, #tpu.memory_space<vmem>>, vector<8x128xf32>
    %cst_111 = arith.constant dense<0.000000e+00> : vector<8x128xf32>
    %505 = tpu.matmul %503, %26, %cst_111 {dimension_numbers = #tpu.dot_dimension_numbers<[1], [0], [0], [1], [0, 0, 1, 1], [], []>} : vector<8x32xf32>, vector<32x128xf32>, vector<8x128xf32> -> vector<8x128xf32>
    %506 = arith.addf %504, %505 : vector<8x128xf32>
    %507 = arith.negf %506 : vector<8x128xf32>
    %508 = math.exp %507 : vector<8x128xf32>
    %cst_112 = arith.constant 1.000000e+00 : f32
    %509 = vector.broadcast %cst_112 : f32 to vector<8x128xf32>
    %510 = arith.addf %509, %508 : vector<8x128xf32>
    %511 = arith.divf %509, %510 : vector<8x128xf32>
    %512 = math.tanh %506 : vector<8x128xf32>
    %513 = vector.extract_strided_slice %511 {offsets = [0, 0], sizes = [8, 32], strides = [1, 1]} : vector<8x128xf32> to vector<8x32xf32>
    %514 = vector.extract_strided_slice %511 {offsets = [0, 32], sizes = [8, 32], strides = [1, 1]} : vector<8x128xf32> to vector<8x32xf32>
    %515 = vector.extract_strided_slice %512 {offsets = [0, 64], sizes = [8, 32], strides = [1, 1]} : vector<8x128xf32> to vector<8x32xf32>
    %516 = vector.extract_strided_slice %511 {offsets = [0, 96], sizes = [8, 32], strides = [1, 1]} : vector<8x128xf32> to vector<8x32xf32>
    %517 = arith.mulf %514, %501 : vector<8x32xf32>
    %518 = arith.mulf %513, %515 : vector<8x32xf32>
    %519 = arith.addf %517, %518 : vector<8x32xf32>
    %520 = math.tanh %519 : vector<8x32xf32>
    %521 = arith.mulf %516, %520 : vector<8x32xf32>
    %c216 = arith.constant 216 : index
    %c0_113 = arith.constant 0 : index
    %522 = vector.load %arg7[%c216, %c0_113] : memref<256x256xf32, #tpu.memory_space<vmem>>, vector<8x128xf32>
    %cst_114 = arith.constant dense<0.000000e+00> : vector<8x128xf32>
    %523 = tpu.matmul %521, %26, %cst_114 {dimension_numbers = #tpu.dot_dimension_numbers<[1], [0], [0], [1], [0, 0, 1, 1], [], []>} : vector<8x32xf32>, vector<32x128xf32>, vector<8x128xf32> -> vector<8x128xf32>
    %524 = arith.addf %522, %523 : vector<8x128xf32>
    %525 = arith.negf %524 : vector<8x128xf32>
    %526 = math.exp %525 : vector<8x128xf32>
    %cst_115 = arith.constant 1.000000e+00 : f32
    %527 = vector.broadcast %cst_115 : f32 to vector<8x128xf32>
    %528 = arith.addf %527, %526 : vector<8x128xf32>
    %529 = arith.divf %527, %528 : vector<8x128xf32>
    %530 = math.tanh %524 : vector<8x128xf32>
    %531 = vector.extract_strided_slice %529 {offsets = [0, 0], sizes = [8, 32], strides = [1, 1]} : vector<8x128xf32> to vector<8x32xf32>
    %532 = vector.extract_strided_slice %529 {offsets = [0, 32], sizes = [8, 32], strides = [1, 1]} : vector<8x128xf32> to vector<8x32xf32>
    %533 = vector.extract_strided_slice %530 {offsets = [0, 64], sizes = [8, 32], strides = [1, 1]} : vector<8x128xf32> to vector<8x32xf32>
    %534 = vector.extract_strided_slice %529 {offsets = [0, 96], sizes = [8, 32], strides = [1, 1]} : vector<8x128xf32> to vector<8x32xf32>
    %535 = arith.mulf %532, %519 : vector<8x32xf32>
    %536 = arith.mulf %531, %533 : vector<8x32xf32>
    %537 = arith.addf %535, %536 : vector<8x32xf32>
    %538 = math.tanh %537 : vector<8x32xf32>
    %539 = arith.mulf %534, %538 : vector<8x32xf32>
    %c224 = arith.constant 224 : index
    %c0_116 = arith.constant 0 : index
    %540 = vector.load %arg7[%c224, %c0_116] : memref<256x256xf32, #tpu.memory_space<vmem>>, vector<8x128xf32>
    %cst_117 = arith.constant dense<0.000000e+00> : vector<8x128xf32>
    %541 = tpu.matmul %539, %26, %cst_117 {dimension_numbers = #tpu.dot_dimension_numbers<[1], [0], [0], [1], [0, 0, 1, 1], [], []>} : vector<8x32xf32>, vector<32x128xf32>, vector<8x128xf32> -> vector<8x128xf32>
    %542 = arith.addf %540, %541 : vector<8x128xf32>
    %543 = arith.negf %542 : vector<8x128xf32>
    %544 = math.exp %543 : vector<8x128xf32>
    %cst_118 = arith.constant 1.000000e+00 : f32
    %545 = vector.broadcast %cst_118 : f32 to vector<8x128xf32>
    %546 = arith.addf %545, %544 : vector<8x128xf32>
    %547 = arith.divf %545, %546 : vector<8x128xf32>
    %548 = math.tanh %542 : vector<8x128xf32>
    %549 = vector.extract_strided_slice %547 {offsets = [0, 0], sizes = [8, 32], strides = [1, 1]} : vector<8x128xf32> to vector<8x32xf32>
    %550 = vector.extract_strided_slice %547 {offsets = [0, 32], sizes = [8, 32], strides = [1, 1]} : vector<8x128xf32> to vector<8x32xf32>
    %551 = vector.extract_strided_slice %548 {offsets = [0, 64], sizes = [8, 32], strides = [1, 1]} : vector<8x128xf32> to vector<8x32xf32>
    %552 = vector.extract_strided_slice %547 {offsets = [0, 96], sizes = [8, 32], strides = [1, 1]} : vector<8x128xf32> to vector<8x32xf32>
    %553 = arith.mulf %550, %537 : vector<8x32xf32>
    %554 = arith.mulf %549, %551 : vector<8x32xf32>
    %555 = arith.addf %553, %554 : vector<8x32xf32>
    %556 = math.tanh %555 : vector<8x32xf32>
    %557 = arith.mulf %552, %556 : vector<8x32xf32>
    %c232 = arith.constant 232 : index
    %c0_119 = arith.constant 0 : index
    %558 = vector.load %arg7[%c232, %c0_119] : memref<256x256xf32, #tpu.memory_space<vmem>>, vector<8x128xf32>
    %cst_120 = arith.constant dense<0.000000e+00> : vector<8x128xf32>
    %559 = tpu.matmul %557, %26, %cst_120 {dimension_numbers = #tpu.dot_dimension_numbers<[1], [0], [0], [1], [0, 0, 1, 1], [], []>} : vector<8x32xf32>, vector<32x128xf32>, vector<8x128xf32> -> vector<8x128xf32>
    %560 = arith.addf %558, %559 : vector<8x128xf32>
    %561 = arith.negf %560 : vector<8x128xf32>
    %562 = math.exp %561 : vector<8x128xf32>
    %cst_121 = arith.constant 1.000000e+00 : f32
    %563 = vector.broadcast %cst_121 : f32 to vector<8x128xf32>
    %564 = arith.addf %563, %562 : vector<8x128xf32>
    %565 = arith.divf %563, %564 : vector<8x128xf32>
    %566 = math.tanh %560 : vector<8x128xf32>
    %567 = vector.extract_strided_slice %565 {offsets = [0, 0], sizes = [8, 32], strides = [1, 1]} : vector<8x128xf32> to vector<8x32xf32>
    %568 = vector.extract_strided_slice %565 {offsets = [0, 32], sizes = [8, 32], strides = [1, 1]} : vector<8x128xf32> to vector<8x32xf32>
    %569 = vector.extract_strided_slice %566 {offsets = [0, 64], sizes = [8, 32], strides = [1, 1]} : vector<8x128xf32> to vector<8x32xf32>
    %570 = vector.extract_strided_slice %565 {offsets = [0, 96], sizes = [8, 32], strides = [1, 1]} : vector<8x128xf32> to vector<8x32xf32>
    %571 = arith.mulf %568, %555 : vector<8x32xf32>
    %572 = arith.mulf %567, %569 : vector<8x32xf32>
    %573 = arith.addf %571, %572 : vector<8x32xf32>
    %574 = math.tanh %573 : vector<8x32xf32>
    %575 = arith.mulf %570, %574 : vector<8x32xf32>
    %c240 = arith.constant 240 : index
    %c0_122 = arith.constant 0 : index
    %576 = vector.load %arg7[%c240, %c0_122] : memref<256x256xf32, #tpu.memory_space<vmem>>, vector<8x128xf32>
    %cst_123 = arith.constant dense<0.000000e+00> : vector<8x128xf32>
    %577 = tpu.matmul %575, %26, %cst_123 {dimension_numbers = #tpu.dot_dimension_numbers<[1], [0], [0], [1], [0, 0, 1, 1], [], []>} : vector<8x32xf32>, vector<32x128xf32>, vector<8x128xf32> -> vector<8x128xf32>
    %578 = arith.addf %576, %577 : vector<8x128xf32>
    %579 = arith.negf %578 : vector<8x128xf32>
    %580 = math.exp %579 : vector<8x128xf32>
    %cst_124 = arith.constant 1.000000e+00 : f32
    %581 = vector.broadcast %cst_124 : f32 to vector<8x128xf32>
    %582 = arith.addf %581, %580 : vector<8x128xf32>
    %583 = arith.divf %581, %582 : vector<8x128xf32>
    %584 = math.tanh %578 : vector<8x128xf32>
    %585 = vector.extract_strided_slice %583 {offsets = [0, 0], sizes = [8, 32], strides = [1, 1]} : vector<8x128xf32> to vector<8x32xf32>
    %586 = vector.extract_strided_slice %583 {offsets = [0, 32], sizes = [8, 32], strides = [1, 1]} : vector<8x128xf32> to vector<8x32xf32>
    %587 = vector.extract_strided_slice %584 {offsets = [0, 64], sizes = [8, 32], strides = [1, 1]} : vector<8x128xf32> to vector<8x32xf32>
    %588 = vector.extract_strided_slice %583 {offsets = [0, 96], sizes = [8, 32], strides = [1, 1]} : vector<8x128xf32> to vector<8x32xf32>
    %589 = arith.mulf %586, %573 : vector<8x32xf32>
    %590 = arith.mulf %585, %587 : vector<8x32xf32>
    %591 = arith.addf %589, %590 : vector<8x32xf32>
    %592 = math.tanh %591 : vector<8x32xf32>
    %593 = arith.mulf %588, %592 : vector<8x32xf32>
    %c248 = arith.constant 248 : index
    %c0_125 = arith.constant 0 : index
    %594 = vector.load %arg7[%c248, %c0_125] : memref<256x256xf32, #tpu.memory_space<vmem>>, vector<8x128xf32>
    %cst_126 = arith.constant dense<0.000000e+00> : vector<8x128xf32>
    %595 = tpu.matmul %593, %26, %cst_126 {dimension_numbers = #tpu.dot_dimension_numbers<[1], [0], [0], [1], [0, 0, 1, 1], [], []>} : vector<8x32xf32>, vector<32x128xf32>, vector<8x128xf32> -> vector<8x128xf32>
    %596 = arith.addf %594, %595 : vector<8x128xf32>
    %597 = arith.negf %596 : vector<8x128xf32>
    %598 = math.exp %597 : vector<8x128xf32>
    %cst_127 = arith.constant 1.000000e+00 : f32
    %599 = vector.broadcast %cst_127 : f32 to vector<8x128xf32>
    %600 = arith.addf %599, %598 : vector<8x128xf32>
    %601 = arith.divf %599, %600 : vector<8x128xf32>
    %602 = math.tanh %596 : vector<8x128xf32>
    %603 = vector.extract_strided_slice %601 {offsets = [0, 0], sizes = [8, 32], strides = [1, 1]} : vector<8x128xf32> to vector<8x32xf32>
    %604 = vector.extract_strided_slice %601 {offsets = [0, 32], sizes = [8, 32], strides = [1, 1]} : vector<8x128xf32> to vector<8x32xf32>
    %605 = vector.extract_strided_slice %602 {offsets = [0, 64], sizes = [8, 32], strides = [1, 1]} : vector<8x128xf32> to vector<8x32xf32>
    %606 = vector.extract_strided_slice %601 {offsets = [0, 96], sizes = [8, 32], strides = [1, 1]} : vector<8x128xf32> to vector<8x32xf32>
    %607 = arith.mulf %604, %591 : vector<8x32xf32>
    %608 = arith.mulf %603, %605 : vector<8x32xf32>
    %609 = arith.addf %607, %608 : vector<8x32xf32>
    %610 = math.tanh %609 : vector<8x32xf32>
    %611 = arith.mulf %606, %610 : vector<8x32xf32>
    %c248_128 = arith.constant 248 : index
    %c128_129 = arith.constant 128 : index
    %612 = vector.load %arg7[%c248_128, %c128_129] : memref<256x256xf32, #tpu.memory_space<vmem>>, vector<8x128xf32>
    %613 = arith.negf %612 : vector<8x128xf32>
    %614 = math.exp %613 : vector<8x128xf32>
    %cst_130 = arith.constant 1.000000e+00 : f32
    %615 = vector.broadcast %cst_130 : f32 to vector<8x128xf32>
    %616 = arith.addf %615, %614 : vector<8x128xf32>
    %617 = arith.divf %615, %616 : vector<8x128xf32>
    %618 = math.tanh %612 : vector<8x128xf32>
    %619 = vector.extract_strided_slice %617 {offsets = [0, 96], sizes = [8, 32], strides = [1, 1]} : vector<8x128xf32> to vector<8x32xf32>
    %620 = vector.extract_strided_slice %617 {offsets = [0, 0], sizes = [8, 32], strides = [1, 1]} : vector<8x128xf32> to vector<8x32xf32>
    %621 = vector.extract_strided_slice %618 {offsets = [0, 64], sizes = [8, 32], strides = [1, 1]} : vector<8x128xf32> to vector<8x32xf32>
    %622 = arith.mulf %620, %621 : vector<8x32xf32>
    %623 = math.tanh %622 : vector<8x32xf32>
    %624 = arith.mulf %619, %623 : vector<8x32xf32>
    %c0_131 = arith.constant 0 : index
    %c0_132 = arith.constant 0 : index
    %625 = vector.load %arg4[%c0_131, %c0_132] : memref<32x128xf32, #tpu.memory_space<vmem>>, vector<32x32xf32>
    %cst_133 = arith.constant dense<0.000000e+00> : vector<8x32xf32>
    %626 = tpu.matmul %611, %625, %cst_133 {dimension_numbers = #tpu.dot_dimension_numbers<[1], [0], [0], [1], [0, 0, 1, 1], [], []>} : vector<8x32xf32>, vector<32x32xf32>, vector<8x32xf32> -> vector<8x32xf32>
    %c0_134 = arith.constant 0 : index
    %c32_135 = arith.constant 32 : index
    %627 = vector.load %arg4[%c0_134, %c32_135] : memref<32x128xf32, #tpu.memory_space<vmem>>, vector<32x32xf32>
    %cst_136 = arith.constant dense<0.000000e+00> : vector<8x32xf32>
    %628 = tpu.matmul %624, %627, %cst_136 {dimension_numbers = #tpu.dot_dimension_numbers<[1], [0], [0], [1], [0, 0, 1, 1], [], []>} : vector<8x32xf32>, vector<32x32xf32>, vector<8x32xf32> -> vector<8x32xf32>
    %629 = arith.addf %626, %628 : vector<8x32xf32>
    %c0_137 = arith.constant 0 : index
    %c320 = arith.constant 320 : index
    %630 = vector.load %arg5[%c0_137, %c320] : memref<1x512xf32, #tpu.memory_space<vmem>>, vector<1x32xf32>
    %631 = vector.broadcast %630 : vector<1x32xf32> to vector<8x32xf32>
    %632 = arith.addf %629, %631 : vector<8x32xf32>
    %cst_138 = arith.constant 0.000000e+00 : f32
    %633 = vector.broadcast %cst_138 : f32 to vector<8x32xf32>
    %634 = arith.maximumf %632, %633 : vector<8x32xf32>
    %c0_139 = arith.constant 0 : index
    %c64_140 = arith.constant 64 : index
    %635 = vector.load %arg4[%c0_139, %c64_140] : memref<32x128xf32, #tpu.memory_space<vmem>>, vector<32x16xf32>
    %cst_141 = arith.constant dense<0.000000e+00> : vector<8x16xf32>
    %636 = tpu.matmul %634, %635, %cst_141 {dimension_numbers = #tpu.dot_dimension_numbers<[1], [0], [0], [1], [0, 0, 1, 1], [], []>} : vector<8x32xf32>, vector<32x16xf32>, vector<8x16xf32> -> vector<8x16xf32>
    %c0_142 = arith.constant 0 : index
    %c352 = arith.constant 352 : index
    %637 = vector.load %arg5[%c0_142, %c352] : memref<1x512xf32, #tpu.memory_space<vmem>>, vector<1x16xf32>
    %638 = vector.broadcast %637 : vector<1x16xf32> to vector<8x16xf32>
    %639 = arith.addf %636, %638 : vector<8x16xf32>
    %cst_143 = arith.constant 0.000000e+00 : f32
    %640 = vector.broadcast %cst_143 : f32 to vector<8x16xf32>
    %641 = arith.maximumf %639, %640 : vector<8x16xf32>
    %c0_144 = arith.constant 0 : index
    %c80_145 = arith.constant 80 : index
    %642 = vector.load %arg4[%c0_144, %c80_145] : memref<32x128xf32, #tpu.memory_space<vmem>>, vector<16x8xf32>
    %cst_146 = arith.constant dense<0.000000e+00> : vector<8x8xf32>
    %643 = tpu.matmul %641, %642, %cst_146 {dimension_numbers = #tpu.dot_dimension_numbers<[1], [0], [0], [1], [0, 0, 1, 1], [], []>} : vector<8x16xf32>, vector<16x8xf32>, vector<8x8xf32> -> vector<8x8xf32>
    %c0_147 = arith.constant 0 : index
    %c368 = arith.constant 368 : index
    %644 = vector.load %arg5[%c0_147, %c368] : memref<1x512xf32, #tpu.memory_space<vmem>>, vector<1x8xf32>
    %645 = vector.broadcast %644 : vector<1x8xf32> to vector<8x8xf32>
    %646 = arith.addf %643, %645 : vector<8x8xf32>
    %cst_148 = arith.constant 0.000000e+00 : f32
    %647 = vector.broadcast %cst_148 : f32 to vector<8x8xf32>
    %648 = arith.maximumf %646, %647 : vector<8x8xf32>
    %c0_149 = arith.constant 0 : index
    %c376 = arith.constant 376 : index
    %649 = vector.load %arg5[%c0_149, %c376] : memref<1x512xf32, #tpu.memory_space<vmem>>, vector<1x8xf32>
    %650 = vector.broadcast %649 : vector<1x8xf32> to vector<8x8xf32>
    %651 = arith.mulf %648, %650 : vector<8x8xf32>
    %cst_150 = arith.constant dense<0.000000e+00> : vector<8xf32>
    %652 = vector.multi_reduction <add>, %651, %cst_150 [1] : vector<8x8xf32> to vector<8xf32>
    %653 = vector.shape_cast %652 : vector<8xf32> to vector<8x1xf32>
    %c0_151 = arith.constant 0 : index
    %c384 = arith.constant 384 : index
    %654 = vector.load %arg5[%c0_151, %c384] : memref<1x512xf32, #tpu.memory_space<vmem>>, vector<1x1xf32>
    %655 = vector.broadcast %654 : vector<1x1xf32> to vector<8x1xf32>
    %656 = arith.addf %653, %655 : vector<8x1xf32>
    %657 = arith.negf %656 : vector<8x1xf32>
    %658 = math.exp %657 : vector<8x1xf32>
    %cst_152 = arith.constant 1.000000e+00 : f32
    %659 = vector.broadcast %cst_152 : f32 to vector<8x1xf32>
    %660 = arith.addf %659, %658 : vector<8x1xf32>
    %661 = arith.divf %659, %660 : vector<8x1xf32>
    %c0_153 = arith.constant 0 : index
    %c0_154 = arith.constant 0 : index
    %662 = vector.load %arg6[%c0_153, %c0_154] : memref<8x1xf32, #tpu.memory_space<vmem>>, vector<8x1xf32>
    tpu.vector_store %arg6[%c0_153, %c0_154], %661 {strides = array<i32>} : memref<8x1xf32, #tpu.memory_space<vmem>>, vector<8x1xf32>,
    return
  }
}

</mosaic_0001>

<llo_original>
// kernel: sentiment_forward.1
$region0: #{sentiment_forward.1}
  #allocation0 [shape = 'u32[]', space=smem, size = 0x4, offset = 0x4, fixed_abs, tag = 'smem constant byte address 0x4 - core index']
  #allocation1 [shape = 'u32[144,128]{1,0:T(1,128)}', space=vmem, size = 0x12000, scoped, tag = 'internal scratch']
  #allocation2 [shape = 'f32[256,256]{1,0:T(8,128)}', space=vmem, size = 0x40000, scoped, tag = 'scratch operand']
  %s0 = inlined_call_operand.vmem [shape: f32[8,18,4], index: 0, kind: input, shape index: {}]
  %s1 = inlined_call_operand.vmem [shape: f32[12,32], index: 1, kind: input, shape index: {}]
  %s2 = inlined_call_operand.vmem [shape: f32[8,32], index: 2, kind: input, shape index: {}]
  %s3 = inlined_call_operand.vmem [shape: f32[32,384], index: 3, kind: input, shape index: {}]
  %s4 = inlined_call_operand.vmem [shape: f32[32,128], index: 4, kind: input, shape index: {}]
  %s5 = inlined_call_operand.vmem [shape: f32[1,512], index: 5, kind: input, shape index: {}]
  %s6 = inlined_call_operand.vmem [shape: f32[8,1], index: 6, kind: output, shape index: {}]
  %s7 = sld [smem:[#allocation0]]
  $region34: #{sentiment_forward.1} parent=0
    _
  %s9 = ssub.s32 1, %s7
  %s10 = scalar_select 0, %s9, %s7
  // Predicated region
  $region2: #{sentiment_forward.1} parent=0 // pred_check
    _
  $region3: #{sentiment_forward.1} parent=0 // pred_check_branch
    %12 = sbr.rel (0) target = $region5
  $region4: #{sentiment_forward.1} parent=0 // pred_region
    _
  $region5: #{sentiment_forward.1} parent=0 // pred_fallthru
    _
  // Predicated region
  $region6: #{sentiment_forward.1} parent=0 // pred_check
    _
  $region7: #{sentiment_forward.1} parent=0 // pred_check_branch
    %14 = sbr.rel (0) target = $region9
  $region8: #{sentiment_forward.1} parent=0 // pred_region
    _
  $region9: #{sentiment_forward.1} parent=0 // pred_fallthru
    _
  // Predicated region
  $region10: #{sentiment_forward.1} parent=0 // pred_check
    _
  $region11: #{sentiment_forward.1} parent=0 // pred_check_branch
    %16 = sbr.rel (0) target = $region13
  $region12: #{sentiment_forward.1} parent=0 // pred_region
    _
  $region13: #{sentiment_forward.1} parent=0 // pred_fallthru
    _
  // Predicated region
  $region14: #{sentiment_forward.1} parent=0 // pred_check
    _
  $region15: #{sentiment_forward.1} parent=0 // pred_check_branch
    %18 = sbr.rel (0) target = $region17
  $region16: #{sentiment_forward.1} parent=0 // pred_region
    _
  $region17: #{sentiment_forward.1} parent=0 // pred_fallthru
    _
  // Predicated region
  $region18: #{sentiment_forward.1} parent=0 // pred_check
    _
  $region19: #{sentiment_forward.1} parent=0 // pred_check_branch
    %20 = sbr.rel (0) target = $region21
  $region20: #{sentiment_forward.1} parent=0 // pred_region
    _
  $region21: #{sentiment_forward.1} parent=0 // pred_fallthru
    _
  // Predicated region
  $region22: #{sentiment_forward.1} parent=0 // pred_check
    _
  $region23: #{sentiment_forward.1} parent=0 // pred_check_branch
    %22 = sbr.rel (0) target = $region25
  $region24: #{sentiment_forward.1} parent=0 // pred_region
    _
  $region25: #{sentiment_forward.1} parent=0 // pred_fallthru
    _
  %v23 = vld [vmem:[%s0] sm:$0xff]
  %v24 = vld [vmem:[%s0 + $0x8] sm:$0xff]
  %v25 = vld [vmem:[%s0 + $0x18] sm:$0xff]
  %v26 = vld [vmem:[%s0 + $0x20] sm:$0xff]
  %v27 = vld [vmem:[%s0 + $0x30] sm:$0xff]
  %v28 = vld [vmem:[%s0 + $0x38] sm:$0xff]
  %v29 = vld [vmem:[%s0 + $0x48] sm:$0xff]
  %v30 = vld [vmem:[%s0 + $0x50] sm:$0xff]
  %v31 = vld [vmem:[%s0 + $0x60] sm:$0xff]
  %v32 = vld [vmem:[%s0 + $0x68] sm:$0xff]
  %v33 = vld [vmem:[%s0 + $0x78] sm:$0xff]
  %v34 = vld [vmem:[%s0 + $0x80] sm:$0xff]
  %v35 = vld [vmem:[%s0 + $0x90] sm:$0xff]
  %v36 = vld [vmem:[%s0 + $0x98] sm:$0xff]
  %v37 = vld [vmem:[%s0 + $0xa8] sm:$0xff]
  %v38 = vld [vmem:[%s0 + $0xb0] sm:$0xff]
  %v39 = vld [vmem:[%s1] sm:$0xf]
  %v40 = vld [vmem:[%s0 + $0x1] sm:$0xff]
  %v41 = vld [vmem:[%s0 + $0x9] sm:$0xff]
  %v42 = vld [vmem:[%s0 + $0x19] sm:$0xff]
  %v43 = vld [vmem:[%s0 + $0x21] sm:$0xff]
  %v44 = vld [vmem:[%s0 + $0x31] sm:$0xff]
  %v45 = vld [vmem:[%s0 + $0x39] sm:$0xff]
  %v46 = vld [vmem:[%s0 + $0x49] sm:$0xff]
  %v47 = vld [vmem:[%s0 + $0x51] sm:$0xff]
  %v48 = vld [vmem:[%s0 + $0x61] sm:$0xff]
  %v49 = vld [vmem:[%s0 + $0x69] sm:$0xff]
  %v50 = vld [vmem:[%s0 + $0x79] sm:$0xff]
  %v51 = vld [vmem:[%s0 + $0x81] sm:$0xff]
  %v52 = vld [vmem:[%s0 + $0x91] sm:$0xff]
  %v53 = vld [vmem:[%s0 + $0x99] sm:$0xff]
  %v54 = vld [vmem:[%s0 + $0xa9] sm:$0xff]
  %v55 = vld [vmem:[%s0 + $0xb1] sm:$0xff]
  %v56 = vld [vmem:[%s1 + $0x4] sm:$0xf]
  %vm57 = vcmask 31744
  %v59 = vsel %vm57, %v40, 0
  %v62 = vsel %vm57, %v41, 0
  %v65 = vsel %vm57, %v42, 0
  %v68 = vsel %vm57, %v43, 0
  %v71 = vsel %vm57, %v44, 0
  %v74 = vsel %vm57, %v45, 0
  %v77 = vsel %vm57, %v46, 0
  %v80 = vsel %vm57, %v47, 0
  %v83 = vsel %vm57, %v48, 0
  %v86 = vsel %vm57, %v49, 0
  %v89 = vsel %vm57, %v50, 0
  %v92 = vsel %vm57, %v51, 0
  %v95 = vsel %vm57, %v52, 0
  %v98 = vsel %vm57, %v53, 0
  %v101 = vsel %vm57, %v54, 0
  %v104 = vsel %vm57, %v55, 0
  %vm106 = vcmask 1043456
  %v108 = vsel %vm106, %v56, 0
  %110 = vmatprep.subr.mxu0 0.0
  %111 = vmatpush1.msra.mxu0 %v108
  %112 = vmatprep.subr.mxu0 0.0
  %113 = vmatpush1.msra.mxu0 0.0
  %114 = vmatprep.subr.mxu0 0.0
  %115 = vmatpush1.msra.mxu0 0.0
  %116 = vmatprep.subr.mxu0 0.0
  %117 = vmatpush1.msra.mxu0 0.0
  %118 = vmatprep.subr.mxu0 0.0
  %119 = vmatpush1.msra.mxu0 0.0
  %120 = vmatprep.subr.mxu0 0.0
  %121 = vmatpush1.msra.mxu0 0.0
  %122 = vmatprep.subr.mxu0 0.0
  %123 = vmatpush1.msra.mxu0 0.0
  %124 = vmatprep.subr.mxu0 0.0
  %125 = vmatpush1.msra.mxu0 0.0
  %126 = vmatprep.subr.mxu0 0.0
  %127 = vmatpush1.msra.mxu0 0.0
  %128 = vmatprep.subr.mxu0 0.0
  %129 = vmatpush1.msra.mxu0 0.0
  %130 = vmatprep.subr.mxu0 0.0
  %131 = vmatpush1.msra.mxu0 0.0
  %132 = vmatprep.subr.mxu0 0.0
  %133 = vmatpush1.msra.mxu0 0.0
  %134 = vmatprep.subr.mxu0 0.0
  %135 = vmatpush1.msra.mxu0 0.0
  %136 = vmatprep.subr.mxu0 0.0
  %137 = vmatpush1.msra.mxu0 0.0
  %138 = vmatprep.subr.mxu0 0.0
  %139 = vmatpush1.msra.mxu0 0.0
  %140 = vmatprep.subr.mxu0 0.0
  %141 = vmatpush1.msra.mxu0 0.0
  %142 = vmatprep.subr.mxu0 0.0
  %143 = vmatpush1.msra.mxu0 0.0
  %144 = vmatprep.subr.mxu0 0.0
  %145 = vmatpush1.msra.mxu0 0.0
  %146 = vmatprep.subr.mxu0 0.0
  %147 = vmatpush1.msra.mxu0 0.0
  %148 = vmatprep.subr.mxu0 0.0
  %149 = vmatpush1.msra.mxu0 0.0
  %150 = vmatprep.subr.mxu0 0.0
  %151 = vmatpush1.msra.mxu0 0.0
  %152 = vmatprep.subr.mxu0 0.0
  %153 = vmatpush1.msra.mxu0 0.0
  %154 = vmatprep.subr.mxu0 0.0
  %155 = vmatpush1.msra.mxu0 0.0
  %156 = vmatprep.subr.mxu0 0.0
  %157 = vmatpush1.msra.mxu0 0.0
  %158 = vmatprep.subr.mxu0 0.0
  %159 = vmatpush1.msra.mxu0 0.0
  %160 = vmatprep.subr.mxu0 0.0
  %161 = vmatpush1.msra.mxu0 0.0
  %162 = vmatprep.subr.mxu0 0.0
  %163 = vmatpush1.msra.mxu0 0.0
  %164 = vmatprep.subr.mxu0 0.0
  %165 = vmatpush1.msra.mxu0 0.0
  %166 = vmatprep.subr.mxu0 0.0
  %167 = vmatpush1.msra.mxu0 0.0
  %168 = vmatprep.subr.mxu0 0.0
  %169 = vmatpush1.msra.mxu0 0.0
  %170 = vmatprep.subr.mxu0 0.0
  %171 = vmatpush1.msra.mxu0 0.0
  %172 = vmatprep.subr.mxu0 0.0
  %173 = vmatpush1.msra.mxu0 0.0
  %174 = vmatprep.mubr.f32.mxu0 0.0
  %175 = vmatmul.mubr.f32.gmra.mrb[0].mxu0 %v59
  %v176 = vpop.f32.mrb[0].mxu0
  %v177 = vadd.f32 0.0, %v176
  %v178 = vpop.f32.mrb[0].mxu0
  %179 = vmatprep.mubr.f32.mxu0 0.0
  %180 = vmatmul.mubr.f32.gmra.mrb[0].mxu0 %v62
  %v181 = vpop.f32.mrb[0].mxu0
  %v182 = vadd.f32 0.0, %v181
  %v183 = vpop.f32.mrb[0].mxu0
  %184 = vmatprep.mubr.f32.mxu0 0.0
  %185 = vmatmul.mubr.f32.gmra.mrb[0].mxu0 %v65
  %v186 = vpop.f32.mrb[0].mxu0
  %v187 = vadd.f32 0.0, %v186
  %v188 = vpop.f32.mrb[0].mxu0
  %189 = vmatprep.mubr.f32.mxu0 0.0
  %190 = vmatmul.mubr.f32.gmra.mrb[0].mxu0 %v68
  %v191 = vpop.f32.mrb[0].mxu0
  %v192 = vadd.f32 0.0, %v191
  %v193 = vpop.f32.mrb[0].mxu0
  %194 = vmatprep.mubr.f32.mxu0 0.0
  %195 = vmatmul.mubr.f32.gmra.mrb[0].mxu0 %v71
  %v196 = vpop.f32.mrb[0].mxu0
  %v197 = vadd.f32 0.0, %v196
  %v198 = vpop.f32.mrb[0].mxu0
  %199 = vmatprep.mubr.f32.mxu0 0.0
  %200 = vmatmul.mubr.f32.gmra.mrb[0].mxu0 %v74
  %v201 = vpop.f32.mrb[0].mxu0
  %v202 = vadd.f32 0.0, %v201
  %v203 = vpop.f32.mrb[0].mxu0
  %204 = vmatprep.mubr.f32.mxu0 0.0
  %205 = vmatmul.mubr.f32.gmra.mrb[0].mxu0 %v77
  %v206 = vpop.f32.mrb[0].mxu0
  %v207 = vadd.f32 0.0, %v206
  %v208 = vpop.f32.mrb[0].mxu0
  %209 = vmatprep.mubr.f32.mxu0 0.0
  %210 = vmatmul.mubr.f32.gmra.mrb[0].mxu0 %v80
  %v211 = vpop.f32.mrb[0].mxu0
  %v212 = vadd.f32 0.0, %v211
  %v213 = vpop.f32.mrb[0].mxu0
  %214 = vmatprep.mubr.f32.mxu0 0.0
  %215 = vmatmul.mubr.f32.gmra.mrb[0].mxu0 %v83
  %v216 = vpop.f32.mrb[0].mxu0
  %v217 = vadd.f32 0.0, %v216
  %v218 = vpop.f32.mrb[0].mxu0
  %219 = vmatprep.mubr.f32.mxu0 0.0
  %220 = vmatmul.mubr.f32.gmra.mrb[0].mxu0 %v86
  %v221 = vpop.f32.mrb[0].mxu0
  %v222 = vadd.f32 0.0, %v221
  %v223 = vpop.f32.mrb[0].mxu0
  %224 = vmatprep.mubr.f32.mxu0 0.0
  %225 = vmatmul.mubr.f32.gmra.mrb[0].mxu0 %v89
  %v226 = vpop.f32.mrb[0].mxu0
  %v227 = vadd.f32 0.0, %v226
  %v228 = vpop.f32.mrb[0].mxu0
  %229 = vmatprep.mubr.f32.mxu0 0.0
  %230 = vmatmul.mubr.f32.gmra.mrb[0].mxu0 %v92
  %v231 = vpop.f32.mrb[0].mxu0
  %v232 = vadd.f32 0.0, %v231
  %v233 = vpop.f32.mrb[0].mxu0
  %234 = vmatprep.mubr.f32.mxu0 0.0
  %235 = vmatmul.mubr.f32.gmra.mrb[0].mxu0 %v95
  %v236 = vpop.f32.mrb[0].mxu0
  %v237 = vadd.f32 0.0, %v236
  %v238 = vpop.f32.mrb[0].mxu0
  %239 = vmatprep.mubr.f32.mxu0 0.0
  %240 = vmatmul.mubr.f32.gmra.mrb[0].mxu0 %v98
  %v241 = vpop.f32.mrb[0].mxu0
  %v242 = vadd.f32 0.0, %v241
  %v243 = vpop.f32.mrb[0].mxu0
  %244 = vmatprep.mubr.f32.mxu0 0.0
  %245 = vmatmul.mubr.f32.gmra.mrb[0].mxu0 %v101
  %v246 = vpop.f32.mrb[0].mxu0
  %v247 = vadd.f32 0.0, %v246
  %v248 = vpop.f32.mrb[0].mxu0
  %249 = vmatprep.mubr.f32.mxu0 0.0
  %250 = vmatmul.mubr.f32.gmra.mrb[0].mxu0 %v104
  %v251 = vpop.f32.mrb[0].mxu0
  %v252 = vadd.f32 0.0, %v251
  %v253 = vpop.f32.mrb[0].mxu0
  %254 = vdwg.mxu0
  %v256 = vsel %vm57, %v23, 0
  %v259 = vsel %vm57, %v24, 0
  %v262 = vsel %vm57, %v25, 0
  %v265 = vsel %vm57, %v26, 0
  %v268 = vsel %vm57, %v27, 0
  %v271 = vsel %vm57, %v28, 0
  %v274 = vsel %vm57, %v29, 0
  %v277 = vsel %vm57, %v30, 0
  %v280 = vsel %vm57, %v31, 0
  %v283 = vsel %vm57, %v32, 0
  %v286 = vsel %vm57, %v33, 0
  %v289 = vsel %vm57, %v34, 0
  %v292 = vsel %vm57, %v35, 0
  %v295 = vsel %vm57, %v36, 0
  %v298 = vsel %vm57, %v37, 0
  %v301 = vsel %vm57, %v38, 0
  %v304 = vsel %vm106, %v39, 0
  %306 = vmatprep.subr.mxu0 0.0
  %307 = vmatpush1.msra.mxu0 %v304
  %308 = vmatprep.subr.mxu0 0.0
  %309 = vmatpush1.msra.mxu0 0.0
  %310 = vmatprep.subr.mxu0 0.0
  %311 = vmatpush1.msra.mxu0 0.0
  %312 = vmatprep.subr.mxu0 0.0
  %313 = vmatpush1.msra.mxu0 0.0
  %314 = vmatprep.subr.mxu0 0.0
  %315 = vmatpush1.msra.mxu0 0.0
  %316 = vmatprep.subr.mxu0 0.0
  %317 = vmatpush1.msra.mxu0 0.0
  %318 = vmatprep.subr.mxu0 0.0
  %319 = vmatpush1.msra.mxu0 0.0
  %320 = vmatprep.subr.mxu0 0.0
  %321 = vmatpush1.msra.mxu0 0.0
  %322 = vmatprep.subr.mxu0 0.0
  %323 = vmatpush1.msra.mxu0 0.0
  %324 = vmatprep.subr.mxu0 0.0
  %325 = vmatpush1.msra.mxu0 0.0
  %326 = vmatprep.subr.mxu0 0.0
  %327 = vmatpush1.msra.mxu0 0.0
  %328 = vmatprep.subr.mxu0 0.0
  %329 = vmatpush1.msra.mxu0 0.0
  %330 = vmatprep.subr.mxu0 0.0
  %331 = vmatpush1.msra.mxu0 0.0
  %332 = vmatprep.subr.mxu0 0.0
  %333 = vmatpush1.msra.mxu0 0.0
  %334 = vmatprep.subr.mxu0 0.0
  %335 = vmatpush1.msra.mxu0 0.0
  %336 = vmatprep.subr.mxu0 0.0
  %337 = vmatpush1.msra.mxu0 0.0
  %338 = vmatprep.subr.mxu0 0.0
  %339 = vmatpush1.msra.mxu0 0.0
  %340 = vmatprep.subr.mxu0 0.0
  %341 = vmatpush1.msra.mxu0 0.0
  %342 = vmatprep.subr.mxu0 0.0
  %343 = vmatpush1.msra.mxu0 0.0
  %344 = vmatprep.subr.mxu0 0.0
  %345 = vmatpush1.msra.mxu0 0.0
  %346 = vmatprep.subr.mxu0 0.0
  %347 = vmatpush1.msra.mxu0 0.0
  %348 = vmatprep.subr.mxu0 0.0
  %349 = vmatpush1.msra.mxu0 0.0
  %350 = vmatprep.subr.mxu0 0.0
  %351 = vmatpush1.msra.mxu0 0.0
  %352 = vmatprep.subr.mxu0 0.0
  %353 = vmatpush1.msra.mxu0 0.0
  %354 = vmatprep.subr.mxu0 0.0
  %355 = vmatpush1.msra.mxu0 0.0
  %356 = vmatprep.subr.mxu0 0.0
  %357 = vmatpush1.msra.mxu0 0.0
  %358 = vmatprep.subr.mxu0 0.0
  %359 = vmatpush1.msra.mxu0 0.0
  %360 = vmatprep.subr.mxu0 0.0
  %361 = vmatpush1.msra.mxu0 0.0
  %362 = vmatprep.subr.mxu0 0.0
  %363 = vmatpush1.msra.mxu0 0.0
  %364 = vmatprep.subr.mxu0 0.0
  %365 = vmatpush1.msra.mxu0 0.0
  %366 = vmatprep.subr.mxu0 0.0
  %367 = vmatpush1.msra.mxu0 0.0
  %368 = vmatprep.subr.mxu0 0.0
  %369 = vmatpush1.msra.mxu0 0.0
  %370 = vmatprep.mubr.f32.mxu0 0.0
  %371 = vmatmul.mubr.f32.gmra.mrb[0].mxu0 %v256
  %v372 = vpop.f32.mrb[0].mxu0
  %v373 = vadd.f32 %v177, %v372
  %v374 = vpop.f32.mrb[0].mxu0
  %375 = vmatprep.mubr.f32.mxu0 0.0
  %376 = vmatmul.mubr.f32.gmra.mrb[0].mxu0 %v259
  %v377 = vpop.f32.mrb[0].mxu0
  %v378 = vadd.f32 %v182, %v377
  %v379 = vpop.f32.mrb[0].mxu0
  %380 = vmatprep.mubr.f32.mxu0 0.0
  %381 = vmatmul.mubr.f32.gmra.mrb[0].mxu0 %v262
  %v382 = vpop.f32.mrb[0].mxu0
  %v383 = vadd.f32 %v187, %v382
  %v384 = vpop.f32.mrb[0].mxu0
  %385 = vmatprep.mubr.f32.mxu0 0.0
  %386 = vmatmul.mubr.f32.gmra.mrb[0].mxu0 %v265
  %v387 = vpop.f32.mrb[0].mxu0
  %v388 = vadd.f32 %v192, %v387
  %v389 = vpop.f32.mrb[0].mxu0
  %390 = vmatprep.mubr.f32.mxu0 0.0
  %391 = vmatmul.mubr.f32.gmra.mrb[0].mxu0 %v268
  %v392 = vpop.f32.mrb[0].mxu0
  %v393 = vadd.f32 %v197, %v392
  %v394 = vpop.f32.mrb[0].mxu0
  %395 = vmatprep.mubr.f32.mxu0 0.0
  %396 = vmatmul.mubr.f32.gmra.mrb[0].mxu0 %v271
  %v397 = vpop.f32.mrb[0].mxu0
  %v398 = vadd.f32 %v202, %v397
  %v399 = vpop.f32.mrb[0].mxu0
  %400 = vmatprep.mubr.f32.mxu0 0.0
  %401 = vmatmul.mubr.f32.gmra.mrb[0].mxu0 %v274
  %v402 = vpop.f32.mrb[0].mxu0
  %v403 = vadd.f32 %v207, %v402
  %v404 = vpop.f32.mrb[0].mxu0
  %405 = vmatprep.mubr.f32.mxu0 0.0
  %406 = vmatmul.mubr.f32.gmra.mrb[0].mxu0 %v277
  %v407 = vpop.f32.mrb[0].mxu0
  %v408 = vadd.f32 %v212, %v407
  %v409 = vpop.f32.mrb[0].mxu0
  %410 = vmatprep.mubr.f32.mxu0 0.0
  %411 = vmatmul.mubr.f32.gmra.mrb[0].mxu0 %v280
  %v412 = vpop.f32.mrb[0].mxu0
  %v413 = vadd.f32 %v217, %v412
  %v414 = vpop.f32.mrb[0].mxu0
  %415 = vmatprep.mubr.f32.mxu0 0.0
  %416 = vmatmul.mubr.f32.gmra.mrb[0].mxu0 %v283
  %v417 = vpop.f32.mrb[0].mxu0
  %v418 = vadd.f32 %v222, %v417
  %v419 = vpop.f32.mrb[0].mxu0
  %420 = vmatprep.mubr.f32.mxu0 0.0
  %421 = vmatmul.mubr.f32.gmra.mrb[0].mxu0 %v286
  %v422 = vpop.f32.mrb[0].mxu0
  %v423 = vadd.f32 %v227, %v422
  %v424 = vpop.f32.mrb[0].mxu0
  %425 = vmatprep.mubr.f32.mxu0 0.0
  %426 = vmatmul.mubr.f32.gmra.mrb[0].mxu0 %v289
  %v427 = vpop.f32.mrb[0].mxu0
  %v428 = vadd.f32 %v232, %v427
  %v429 = vpop.f32.mrb[0].mxu0
  %430 = vmatprep.mubr.f32.mxu0 0.0
  %431 = vmatmul.mubr.f32.gmra.mrb[0].mxu0 %v292
  %v432 = vpop.f32.mrb[0].mxu0
  %v433 = vadd.f32 %v237, %v432
  %v434 = vpop.f32.mrb[0].mxu0
  %435 = vmatprep.mubr.f32.mxu0 0.0
  %436 = vmatmul.mubr.f32.gmra.mrb[0].mxu0 %v295
  %v437 = vpop.f32.mrb[0].mxu0
  %v438 = vadd.f32 %v242, %v437
  %v439 = vpop.f32.mrb[0].mxu0
  %440 = vmatprep.mubr.f32.mxu0 0.0
  %441 = vmatmul.mubr.f32.gmra.mrb[0].mxu0 %v298
  %v442 = vpop.f32.mrb[0].mxu0
  %v443 = vadd.f32 %v247, %v442
  %v444 = vpop.f32.mrb[0].mxu0
  %445 = vmatprep.mubr.f32.mxu0 0.0
  %446 = vmatmul.mubr.f32.gmra.mrb[0].mxu0 %v301
  %v447 = vpop.f32.mrb[0].mxu0
  %v448 = vadd.f32 %v252, %v447
  %v449 = vpop.f32.mrb[0].mxu0
  %450 = vdwg.mxu0
  %v451 = vld [vmem:[%s0 + $0x2] sm:$0xff]
  %v452 = vld [vmem:[%s0 + $0xa] sm:$0xff]
  %v453 = vld [vmem:[%s0 + $0x1a] sm:$0xff]
  %v454 = vld [vmem:[%s0 + $0x22] sm:$0xff]
  %v455 = vld [vmem:[%s0 + $0x32] sm:$0xff]
  %v456 = vld [vmem:[%s0 + $0x3a] sm:$0xff]
  %v457 = vld [vmem:[%s0 + $0x4a] sm:$0xff]
  %v458 = vld [vmem:[%s0 + $0x52] sm:$0xff]
  %v459 = vld [vmem:[%s0 + $0x62] sm:$0xff]
  %v460 = vld [vmem:[%s0 + $0x6a] sm:$0xff]
  %v461 = vld [vmem:[%s0 + $0x7a] sm:$0xff]
  %v462 = vld [vmem:[%s0 + $0x82] sm:$0xff]
  %v463 = vld [vmem:[%s0 + $0x92] sm:$0xff]
  %v464 = vld [vmem:[%s0 + $0x9a] sm:$0xff]
  %v465 = vld [vmem:[%s0 + $0xaa] sm:$0xff]
  %v466 = vld [vmem:[%s0 + $0xb2] sm:$0xff]
  %v467 = vld [vmem:[%s1 + $0x8] sm:$0xf]
  %v469 = vsel %vm57, %v451, 0
  %v472 = vsel %vm57, %v452, 0
  %v475 = vsel %vm57, %v453, 0
  %v478 = vsel %vm57, %v454, 0
  %v481 = vsel %vm57, %v455, 0
  %v484 = vsel %vm57, %v456, 0
  %v487 = vsel %vm57, %v457, 0
  %v490 = vsel %vm57, %v458, 0
  %v493 = vsel %vm57, %v459, 0
  %v496 = vsel %vm57, %v460, 0
  %v499 = vsel %vm57, %v461, 0
  %v502 = vsel %vm57, %v462, 0
  %v505 = vsel %vm57, %v463, 0
  %v508 = vsel %vm57, %v464, 0
  %v511 = vsel %vm57, %v465, 0
  %v514 = vsel %vm57, %v466, 0
  %v517 = vsel %vm106, %v467, 0
  %519 = vmatprep.subr.mxu0 0.0
  %520 = vmatpush1.msra.mxu0 %v517
  %521 = vmatprep.subr.mxu0 0.0
  %522 = vmatpush1.msra.mxu0 0.0
  %523 = vmatprep.subr.mxu0 0.0
  %524 = vmatpush1.msra.mxu0 0.0
  %525 = vmatprep.subr.mxu0 0.0
  %526 = vmatpush1.msra.mxu0 0.0
  %527 = vmatprep.subr.mxu0 0.0
  %528 = vmatpush1.msra.mxu0 0.0
  %529 = vmatprep.subr.mxu0 0.0
  %530 = vmatpush1.msra.mxu0 0.0
  %531 = vmatprep.subr.mxu0 0.0
  %532 = vmatpush1.msra.mxu0 0.0
  %533 = vmatprep.subr.mxu0 0.0
  %534 = vmatpush1.msra.mxu0 0.0
  %535 = vmatprep.subr.mxu0 0.0
  %536 = vmatpush1.msra.mxu0 0.0
  %537 = vmatprep.subr.mxu0 0.0
  %538 = vmatpush1.msra.mxu0 0.0
  %539 = vmatprep.subr.mxu0 0.0
  %540 = vmatpush1.msra.mxu0 0.0
  %541 = vmatprep.subr.mxu0 0.0
  %542 = vmatpush1.msra.mxu0 0.0
  %543 = vmatprep.subr.mxu0 0.0
  %544 = vmatpush1.msra.mxu0 0.0
  %545 = vmatprep.subr.mxu0 0.0
  %546 = vmatpush1.msra.mxu0 0.0
  %547 = vmatprep.subr.mxu0 0.0
  %548 = vmatpush1.msra.mxu0 0.0
  %549 = vmatprep.subr.mxu0 0.0
  %550 = vmatpush1.msra.mxu0 0.0
  %551 = vmatprep.subr.mxu0 0.0
  %552 = vmatpush1.msra.mxu0 0.0
  %553 = vmatprep.subr.mxu0 0.0
  %554 = vmatpush1.msra.mxu0 0.0
  %555 = vmatprep.subr.mxu0 0.0
  %556 = vmatpush1.msra.mxu0 0.0
  %557 = vmatprep.subr.mxu0 0.0
  %558 = vmatpush1.msra.mxu0 0.0
  %559 = vmatprep.subr.mxu0 0.0
  %560 = vmatpush1.msra.mxu0 0.0
  %561 = vmatprep.subr.mxu0 0.0
  %562 = vmatpush1.msra.mxu0 0.0
  %563 = vmatprep.subr.mxu0 0.0
  %564 = vmatpush1.msra.mxu0 0.0
  %565 = vmatprep.subr.mxu0 0.0
  %566 = vmatpush1.msra.mxu0 0.0
  %567 = vmatprep.subr.mxu0 0.0
  %568 = vmatpush1.msra.mxu0 0.0
  %569 = vmatprep.subr.mxu0 0.0
  %570 = vmatpush1.msra.mxu0 0.0
  %571 = vmatprep.subr.mxu0 0.0
  %572 = vmatpush1.msra.mxu0 0.0
  %573 = vmatprep.subr.mxu0 0.0
  %574 = vmatpush1.msra.mxu0 0.0
  %575 = vmatprep.subr.mxu0 0.0
  %576 = vmatpush1.msra.mxu0 0.0
  %577 = vmatprep.subr.mxu0 0.0
  %578 = vmatpush1.msra.mxu0 0.0
  %579 = vmatprep.subr.mxu0 0.0
  %580 = vmatpush1.msra.mxu0 0.0
  %581 = vmatprep.subr.mxu0 0.0
  %582 = vmatpush1.msra.mxu0 0.0
  %583 = vmatprep.mubr.f32.mxu0 0.0
  %584 = vmatmul.mubr.f32.gmra.mrb[0].mxu0 %v469
  %v585 = vpop.f32.mrb[0].mxu0
  %v586 = vadd.f32 0.0, %v585
  %v587 = vpop.f32.mrb[0].mxu0
  %588 = vmatprep.mubr.f32.mxu0 0.0
  %589 = vmatmul.mubr.f32.gmra.mrb[0].mxu0 %v472
  %v590 = vpop.f32.mrb[0].mxu0
  %v591 = vadd.f32 0.0, %v590
  %v592 = vpop.f32.mrb[0].mxu0
  %593 = vmatprep.mubr.f32.mxu0 0.0
  %594 = vmatmul.mubr.f32.gmra.mrb[0].mxu0 %v475
  %v595 = vpop.f32.mrb[0].mxu0
  %v596 = vadd.f32 0.0, %v595
  %v597 = vpop.f32.mrb[0].mxu0
  %598 = vmatprep.mubr.f32.mxu0 0.0
  %599 = vmatmul.mubr.f32.gmra.mrb[0].mxu0 %v478
  %v600 = vpop.f32.mrb[0].mxu0
  %v601 = vadd.f32 0.0, %v600
  %v602 = vpop.f32.mrb[0].mxu0
  %603 = vmatprep.mubr.f32.mxu0 0.0
  %604 = vmatmul.mubr.f32.gmra.mrb[0].mxu0 %v481
  %v605 = vpop.f32.mrb[0].mxu0
  %v606 = vadd.f32 0.0, %v605
  %v607 = vpop.f32.mrb[0].mxu0
  %608 = vmatprep.mubr.f32.mxu0 0.0
  %609 = vmatmul.mubr.f32.gmra.mrb[0].mxu0 %v484
  %v610 = vpop.f32.mrb[0].mxu0
  %v611 = vadd.f32 0.0, %v610
  %v612 = vpop.f32.mrb[0].mxu0
  %613 = vmatprep.mubr.f32.mxu0 0.0
  %614 = vmatmul.mubr.f32.gmra.mrb[0].mxu0 %v487
  %v615 = vpop.f32.mrb[0].mxu0
  %v616 = vadd.f32 0.0, %v615
  %v617 = vpop.f32.mrb[0].mxu0
  %618 = vmatprep.mubr.f32.mxu0 0.0
  %619 = vmatmul.mubr.f32.gmra.mrb[0].mxu0 %v490
  %v620 = vpop.f32.mrb[0].mxu0
  %v621 = vadd.f32 0.0, %v620
  %v622 = vpop.f32.mrb[0].mxu0
  %623 = vmatprep.mubr.f32.mxu0 0.0
  %624 = vmatmul.mubr.f32.gmra.mrb[0].mxu0 %v493
  %v625 = vpop.f32.mrb[0].mxu0
  %v626 = vadd.f32 0.0, %v625
  %v627 = vpop.f32.mrb[0].mxu0
  %628 = vmatprep.mubr.f32.mxu0 0.0
  %629 = vmatmul.mubr.f32.gmra.mrb[0].mxu0 %v496
  %v630 = vpop.f32.mrb[0].mxu0
  %v631 = vadd.f32 0.0, %v630
  %v632 = vpop.f32.mrb[0].mxu0
  %633 = vmatprep.mubr.f32.mxu0 0.0
  %634 = vmatmul.mubr.f32.gmra.mrb[0].mxu0 %v499
  %v635 = vpop.f32.mrb[0].mxu0
  %v636 = vadd.f32 0.0, %v635
  %v637 = vpop.f32.mrb[0].mxu0
  %638 = vmatprep.mubr.f32.mxu0 0.0
  %639 = vmatmul.mubr.f32.gmra.mrb[0].mxu0 %v502
  %v640 = vpop.f32.mrb[0].mxu0
  %v641 = vadd.f32 0.0, %v640
  %v642 = vpop.f32.mrb[0].mxu0
  %643 = vmatprep.mubr.f32.mxu0 0.0
  %644 = vmatmul.mubr.f32.gmra.mrb[0].mxu0 %v505
  %v645 = vpop.f32.mrb[0].mxu0
  %v646 = vadd.f32 0.0, %v645
  %v647 = vpop.f32.mrb[0].mxu0
  %648 = vmatprep.mubr.f32.mxu0 0.0
  %649 = vmatmul.mubr.f32.gmra.mrb[0].mxu0 %v508
  %v650 = vpop.f32.mrb[0].mxu0
  %v651 = vadd.f32 0.0, %v650
  %v652 = vpop.f32.mrb[0].mxu0
  %653 = vmatprep.mubr.f32.mxu0 0.0
  %654 = vmatmul.mubr.f32.gmra.mrb[0].mxu0 %v511
  %v655 = vpop.f32.mrb[0].mxu0
  %v656 = vadd.f32 0.0, %v655
  %v657 = vpop.f32.mrb[0].mxu0
  %658 = vmatprep.mubr.f32.mxu0 0.0
  %659 = vmatmul.mubr.f32.gmra.mrb[0].mxu0 %v514
  %v660 = vpop.f32.mrb[0].mxu0
  %v661 = vadd.f32 0.0, %v660
  %v662 = vpop.f32.mrb[0].mxu0
  %663 = vdwg.mxu0
  %v664 = vadd.f32 %v373, %v586
  %v665 = vadd.f32 %v378, %v591
  %v666 = vadd.f32 %v383, %v596
  %v667 = vadd.f32 %v388, %v601
  %v668 = vadd.f32 %v393, %v606
  %v669 = vadd.f32 %v398, %v611
  %v670 = vadd.f32 %v403, %v616
  %v671 = vadd.f32 %v408, %v621
  %v672 = vadd.f32 %v413, %v626
  %v673 = vadd.f32 %v418, %v631
  %v674 = vadd.f32 %v423, %v636
  %v675 = vadd.f32 %v428, %v641
  %v676 = vadd.f32 %v433, %v646
  %v677 = vadd.f32 %v438, %v651
  %v678 = vadd.f32 %v443, %v656
  %v679 = vadd.f32 %v448, %v661
  %v680 = vld [vmem:[%s5 + $0x2] sm:$0x1]
  %v682 = vlaneseq
  %v683 = vshrl.u32 %v682, 7
  %v684 = vsub.s32 0, %v683
  %v685 = vrot.slane %v680, %v684
  %v687 = vadd.f32 %v664, %v685
  %v688 = vadd.f32 %v665, %v685
  %v689 = vadd.f32 %v666, %v685
  %v690 = vadd.f32 %v667, %v685
  %v691 = vadd.f32 %v668, %v685
  %v692 = vadd.f32 %v669, %v685
  %v693 = vadd.f32 %v670, %v685
  %v694 = vadd.f32 %v671, %v685
  %v695 = vadd.f32 %v672, %v685
  %v696 = vadd.f32 %v673, %v685
  %v697 = vadd.f32 %v674, %v685
  %v698 = vadd.f32 %v675, %v685
  %v699 = vadd.f32 %v676, %v685
  %v700 = vadd.f32 %v677, %v685
  %v701 = vadd.f32 %v678, %v685
  %v702 = vadd.f32 %v679, %v685
  %v703 = vmax.f32 %v687, 0.0
  %v704 = vmax.f32 %v688, 0.0
  %v705 = vmax.f32 %v689, 0.0
  %v706 = vmax.f32 %v690, 0.0
  %v707 = vmax.f32 %v691, 0.0
  %v708 = vmax.f32 %v692, 0.0
  %v709 = vmax.f32 %v693, 0.0
  %v710 = vmax.f32 %v694, 0.0
  %v711 = vmax.f32 %v695, 0.0
  %v712 = vmax.f32 %v696, 0.0
  %v713 = vmax.f32 %v697, 0.0
  %v714 = vmax.f32 %v698, 0.0
  %v715 = vmax.f32 %v699, 0.0
  %v716 = vmax.f32 %v700, 0.0
  %v717 = vmax.f32 %v701, 0.0
  %v718 = vmax.f32 %v702, 0.0
  %v735 = vcombine.high %v703, %v703
  %v737 = vunpack.c.l.s4 1983009808
  %v738 = vunpack.c.0.s8 %v737
  %v739 = vlaneseq
  %v740 = vshrl.u32 %v739, 7
  %v741 = vsub.s32 %v738, %v740
  %v742 = vrot.slane %v703, %v741
  %v744 = vunpack.c.l.s4 1983009808
  %v745 = vunpack.c.0.s8 %v744
  %v746 = vlaneseq
  %v747 = vshrl.u32 %v746, 7
  %v748 = vsub.s32 %v745, %v747
  %v749 = vrot.slane %v735, %v748
  %v750 = vcombine.high %v742, %v742
  %v751 = vcombine.high %v749, %v749
  %v752 = vcombine.high %v704, %v704
  %v754 = vunpack.c.l.s4 1983009808
  %v755 = vunpack.c.0.s8 %v754
  %v756 = vlaneseq
  %v757 = vshrl.u32 %v756, 7
  %v758 = vsub.s32 %v755, %v757
  %v759 = vrot.slane %v704, %v758
  %v761 = vunpack.c.l.s4 1983009808
  %v762 = vunpack.c.0.s8 %v761
  %v763 = vlaneseq
  %v764 = vshrl.u32 %v763, 7
  %v765 = vsub.s32 %v762, %v764
  %v766 = vrot.slane %v752, %v765
  %v767 = vcombine.high %v759, %v759
  %v768 = vcombine.high %v766, %v766
  %v769 = vcombine.high %v705, %v705
  %v771 = vunpack.c.l.s4 1983009808
  %v772 = vunpack.c.0.s8 %v771
  %v773 = vlaneseq
  %v774 = vshrl.u32 %v773, 7
  %v775 = vsub.s32 %v772, %v774
  %v776 = vrot.slane %v705, %v775
  %v778 = vunpack.c.l.s4 1983009808
  %v779 = vunpack.c.0.s8 %v778
  %v780 = vlaneseq
  %v781 = vshrl.u32 %v780, 7
  %v782 = vsub.s32 %v779, %v781
  %v783 = vrot.slane %v769, %v782
  %v784 = vcombine.high %v776, %v776
  %v785 = vcombine.high %v783, %v783
  %v786 = vcombine.high %v706, %v706
  %v788 = vunpack.c.l.s4 1983009808
  %v789 = vunpack.c.0.s8 %v788
  %v790 = vlaneseq
  %v791 = vshrl.u32 %v790, 7
  %v792 = vsub.s32 %v789, %v791
  %v793 = vrot.slane %v706, %v792
  %v795 = vunpack.c.l.s4 1983009808
  %v796 = vunpack.c.0.s8 %v795
  %v797 = vlaneseq
  %v798 = vshrl.u32 %v797, 7
  %v799 = vsub.s32 %v796, %v798
  %v800 = vrot.slane %v786, %v799
  %v801 = vcombine.high %v793, %v793
  %v802 = vcombine.high %v800, %v800
  %v803 = vcombine.high %v707, %v707
  %v805 = vunpack.c.l.s4 1983009808
  %v806 = vunpack.c.0.s8 %v805
  %v807 = vlaneseq
  %v808 = vshrl.u32 %v807, 7
  %v809 = vsub.s32 %v806, %v808
  %v810 = vrot.slane %v707, %v809
  %v812 = vunpack.c.l.s4 1983009808
  %v813 = vunpack.c.0.s8 %v812
  %v814 = vlaneseq
  %v815 = vshrl.u32 %v814, 7
  %v816 = vsub.s32 %v813, %v815
  %v817 = vrot.slane %v803, %v816
  %v818 = vcombine.high %v810, %v810
  %v819 = vcombine.high %v817, %v817
  %v820 = vcombine.high %v708, %v708
  %v822 = vunpack.c.l.s4 1983009808
  %v823 = vunpack.c.0.s8 %v822
  %v824 = vlaneseq
  %v825 = vshrl.u32 %v824, 7
  %v826 = vsub.s32 %v823, %v825
  %v827 = vrot.slane %v708, %v826
  %v829 = vunpack.c.l.s4 1983009808
  %v830 = vunpack.c.0.s8 %v829
  %v831 = vlaneseq
  %v832 = vshrl.u32 %v831, 7
  %v833 = vsub.s32 %v830, %v832
  %v834 = vrot.slane %v820, %v833
  %v835 = vcombine.high %v827, %v827
  %v836 = vcombine.high %v834, %v834
  %v837 = vcombine.high %v709, %v709
  %v839 = vunpack.c.l.s4 1983009808
  %v840 = vunpack.c.0.s8 %v839
  %v841 = vlaneseq
  %v842 = vshrl.u32 %v841, 7
  %v843 = vsub.s32 %v840, %v842
  %v844 = vrot.slane %v709, %v843
  %v846 = vunpack.c.l.s4 1983009808
  %v847 = vunpack.c.0.s8 %v846
  %v848 = vlaneseq
  %v849 = vshrl.u32 %v848, 7
  %v850 = vsub.s32 %v847, %v849
  %v851 = vrot.slane %v837, %v850
  %v852 = vcombine.high %v844, %v844
  %v853 = vcombine.high %v851, %v851
  %v854 = vcombine.high %v710, %v710
  %v856 = vunpack.c.l.s4 1983009808
  %v857 = vunpack.c.0.s8 %v856
  %v858 = vlaneseq
  %v859 = vshrl.u32 %v858, 7
  %v860 = vsub.s32 %v857, %v859
  %v861 = vrot.slane %v710, %v860
  %v863 = vunpack.c.l.s4 1983009808
  %v864 = vunpack.c.0.s8 %v863
  %v865 = vlaneseq
  %v866 = vshrl.u32 %v865, 7
  %v867 = vsub.s32 %v864, %v866
  %v868 = vrot.slane %v854, %v867
  %v869 = vcombine.high %v861, %v861
  %v870 = vcombine.high %v868, %v868
  %v871 = vcombine.high %v711, %v711
  %v873 = vunpack.c.l.s4 1983009808
  %v874 = vunpack.c.0.s8 %v873
  %v875 = vlaneseq
  %v876 = vshrl.u32 %v875, 7
  %v877 = vsub.s32 %v874, %v876
  %v878 = vrot.slane %v711, %v877
  %v880 = vunpack.c.l.s4 1983009808
  %v881 = vunpack.c.0.s8 %v880
  %v882 = vlaneseq
  %v883 = vshrl.u32 %v882, 7
  %v884 = vsub.s32 %v881, %v883
  %v885 = vrot.slane %v871, %v884
  %v886 = vcombine.high %v878, %v878
  %v887 = vcombine.high %v885, %v885
  %v888 = vcombine.high %v712, %v712
  %v890 = vunpack.c.l.s4 1983009808
  %v891 = vunpack.c.0.s8 %v890
  %v892 = vlaneseq
  %v893 = vshrl.u32 %v892, 7
  %v894 = vsub.s32 %v891, %v893
  %v895 = vrot.slane %v712, %v894
  %v897 = vunpack.c.l.s4 1983009808
  %v898 = vunpack.c.0.s8 %v897
  %v899 = vlaneseq
  %v900 = vshrl.u32 %v899, 7
  %v901 = vsub.s32 %v898, %v900
  %v902 = vrot.slane %v888, %v901
  %v903 = vcombine.high %v895, %v895
  %v904 = vcombine.high %v902, %v902
  %v905 = vcombine.high %v713, %v713
  %v907 = vunpack.c.l.s4 1983009808
  %v908 = vunpack.c.0.s8 %v907
  %v909 = vlaneseq
  %v910 = vshrl.u32 %v909, 7
  %v911 = vsub.s32 %v908, %v910
  %v912 = vrot.slane %v713, %v911
  %v914 = vunpack.c.l.s4 1983009808
  %v915 = vunpack.c.0.s8 %v914
  %v916 = vlaneseq
  %v917 = vshrl.u32 %v916, 7
  %v918 = vsub.s32 %v915, %v917
  %v919 = vrot.slane %v905, %v918
  %v920 = vcombine.high %v912, %v912
  %v921 = vcombine.high %v919, %v919
  %v922 = vcombine.high %v714, %v714
  %v924 = vunpack.c.l.s4 1983009808
  %v925 = vunpack.c.0.s8 %v924
  %v926 = vlaneseq
  %v927 = vshrl.u32 %v926, 7
  %v928 = vsub.s32 %v925, %v927
  %v929 = vrot.slane %v714, %v928
  %v931 = vunpack.c.l.s4 1983009808
  %v932 = vunpack.c.0.s8 %v931
  %v933 = vlaneseq
  %v934 = vshrl.u32 %v933, 7
  %v935 = vsub.s32 %v932, %v934
  %v936 = vrot.slane %v922, %v935
  %v937 = vcombine.high %v929, %v929
  %v938 = vcombine.high %v936, %v936
  %v939 = vcombine.high %v715, %v715
  %v941 = vunpack.c.l.s4 1983009808
  %v942 = vunpack.c.0.s8 %v941
  %v943 = vlaneseq
  %v944 = vshrl.u32 %v943, 7
  %v945 = vsub.s32 %v942, %v944
  %v946 = vrot.slane %v715, %v945
  %v948 = vunpack.c.l.s4 1983009808
  %v949 = vunpack.c.0.s8 %v948
  %v950 = vlaneseq
  %v951 = vshrl.u32 %v950, 7
  %v952 = vsub.s32 %v949, %v951
  %v953 = vrot.slane %v939, %v952
  %v954 = vcombine.high %v946, %v946
  %v955 = vcombine.high %v953, %v953
  %v956 = vcombine.high %v716, %v716
  %v958 = vunpack.c.l.s4 1983009808
  %v959 = vunpack.c.0.s8 %v958
  %v960 = vlaneseq
  %v961 = vshrl.u32 %v960, 7
  %v962 = vsub.s32 %v959, %v961
  %v963 = vrot.slane %v716, %v962
  %v965 = vunpack.c.l.s4 1983009808
  %v966 = vunpack.c.0.s8 %v965
  %v967 = vlaneseq
  %v968 = vshrl.u32 %v967, 7
  %v969 = vsub.s32 %v966, %v968
  %v970 = vrot.slane %v956, %v969
  %v971 = vcombine.high %v963, %v963
  %v972 = vcombine.high %v970, %v970
  %v973 = vcombine.high %v717, %v717
  %v975 = vunpack.c.l.s4 1983009808
  %v976 = vunpack.c.0.s8 %v975
  %v977 = vlaneseq
  %v978 = vshrl.u32 %v977, 7
  %v979 = vsub.s32 %v976, %v978
  %v980 = vrot.slane %v717, %v979
  %v982 = vunpack.c.l.s4 1983009808
  %v983 = vunpack.c.0.s8 %v982
  %v984 = vlaneseq
  %v985 = vshrl.u32 %v984, 7
  %v986 = vsub.s32 %v983, %v985
  %v987 = vrot.slane %v973, %v986
  %v988 = vcombine.high %v980, %v980
  %v989 = vcombine.high %v987, %v987
  %v990 = vcombine.high %v718, %v718
  %v992 = vunpack.c.l.s4 1983009808
  %v993 = vunpack.c.0.s8 %v992
  %v994 = vlaneseq
  %v995 = vshrl.u32 %v994, 7
  %v996 = vsub.s32 %v993, %v995
  %v997 = vrot.slane %v718, %v996
  %v999 = vunpack.c.l.s4 1983009808
  %v1000 = vunpack.c.0.s8 %v999
  %v1001 = vlaneseq
  %v1002 = vshrl.u32 %v1001, 7
  %v1003 = vsub.s32 %v1000, %v1002
  %v1004 = vrot.slane %v990, %v1003
  %v1005 = vcombine.high %v997, %v997
  %v1006 = vcombine.high %v1004, %v1004
  %vm1071 = vcmask 254976
  %v1072 = vsel %vm1071, %v742, -inf
  %v1073 = vrot.slane %v1072, 4
  %v1074 = vmax.f32 %v1072, %v1073
  %v1075 = vrot.slane %v1074, 2
  %v1076 = vmax.f32 %v1074, %v1075
  %v1077 = vrot.slane %v1076, 1
  %v1078 = vmax.f32 %v1076, %v1077
  %v1079 = vsel %vm1071, %v750, -inf
  %v1080 = vrot.slane %v1079, 4
  %v1081 = vmax.f32 %v1079, %v1080
  %v1082 = vrot.slane %v1081, 2
  %v1083 = vmax.f32 %v1081, %v1082
  %v1084 = vrot.slane %v1083, 1
  %v1085 = vmax.f32 %v1083, %v1084
  %v1086 = vsel %vm1071, %v749, -inf
  %v1087 = vrot.slane %v1086, 4
  %v1088 = vmax.f32 %v1086, %v1087
  %v1089 = vrot.slane %v1088, 2
  %v1090 = vmax.f32 %v1088, %v1089
  %v1091 = vrot.slane %v1090, 1
  %v1092 = vmax.f32 %v1090, %v1091
  %v1093 = vsel %vm1071, %v751, -inf
  %v1094 = vrot.slane %v1093, 4
  %v1095 = vmax.f32 %v1093, %v1094
  %v1096 = vrot.slane %v1095, 2
  %v1097 = vmax.f32 %v1095, %v1096
  %v1098 = vrot.slane %v1097, 1
  %v1099 = vmax.f32 %v1097, %v1098
  %v1100 = vsel %vm1071, %v759, -inf
  %v1101 = vrot.slane %v1100, 4
  %v1102 = vmax.f32 %v1100, %v1101
  %v1103 = vrot.slane %v1102, 2
  %v1104 = vmax.f32 %v1102, %v1103
  %v1105 = vrot.slane %v1104, 1
  %v1106 = vmax.f32 %v1104, %v1105
  %v1107 = vsel %vm1071, %v767, -inf
  %v1108 = vrot.slane %v1107, 4
  %v1109 = vmax.f32 %v1107, %v1108
  %v1110 = vrot.slane %v1109, 2
  %v1111 = vmax.f32 %v1109, %v1110
  %v1112 = vrot.slane %v1111, 1
  %v1113 = vmax.f32 %v1111, %v1112
  %v1114 = vsel %vm1071, %v766, -inf
  %v1115 = vrot.slane %v1114, 4
  %v1116 = vmax.f32 %v1114, %v1115
  %v1117 = vrot.slane %v1116, 2
  %v1118 = vmax.f32 %v1116, %v1117
  %v1119 = vrot.slane %v1118, 1
  %v1120 = vmax.f32 %v1118, %v1119
  %v1121 = vsel %vm1071, %v768, -inf
  %v1122 = vrot.slane %v1121, 4
  %v1123 = vmax.f32 %v1121, %v1122
  %v1124 = vrot.slane %v1123, 2
  %v1125 = vmax.f32 %v1123, %v1124
  %v1126 = vrot.slane %v1125, 1
  %v1127 = vmax.f32 %v1125, %v1126
  %v1128 = vsel %vm1071, %v776, -inf
  %v1129 = vrot.slane %v1128, 4
  %v1130 = vmax.f32 %v1128, %v1129
  %v1131 = vrot.slane %v1130, 2
  %v1132 = vmax.f32 %v1130, %v1131
  %v1133 = vrot.slane %v1132, 1
  %v1134 = vmax.f32 %v1132, %v1133
  %v1135 = vsel %vm1071, %v784, -inf
  %v1136 = vrot.slane %v1135, 4
  %v1137 = vmax.f32 %v1135, %v1136
  %v1138 = vrot.slane %v1137, 2
  %v1139 = vmax.f32 %v1137, %v1138
  %v1140 = vrot.slane %v1139, 1
  %v1141 = vmax.f32 %v1139, %v1140
  %v1142 = vsel %vm1071, %v783, -inf
  %v1143 = vrot.slane %v1142, 4
  %v1144 = vmax.f32 %v1142, %v1143
  %v1145 = vrot.slane %v1144, 2
  %v1146 = vmax.f32 %v1144, %v1145
  %v1147 = vrot.slane %v1146, 1
  %v1148 = vmax.f32 %v1146, %v1147
  %v1149 = vsel %vm1071, %v785, -inf
  %v1150 = vrot.slane %v1149, 4
  %v1151 = vmax.f32 %v1149, %v1150
  %v1152 = vrot.slane %v1151, 2
  %v1153 = vmax.f32 %v1151, %v1152
  %v1154 = vrot.slane %v1153, 1
  %v1155 = vmax.f32 %v1153, %v1154
  %v1156 = vsel %vm1071, %v793, -inf
  %v1157 = vrot.slane %v1156, 4
  %v1158 = vmax.f32 %v1156, %v1157
  %v1159 = vrot.slane %v1158, 2
  %v1160 = vmax.f32 %v1158, %v1159
  %v1161 = vrot.slane %v1160, 1
  %v1162 = vmax.f32 %v1160, %v1161
  %v1163 = vsel %vm1071, %v801, -inf
  %v1164 = vrot.slane %v1163, 4
  %v1165 = vmax.f32 %v1163, %v1164
  %v1166 = vrot.slane %v1165, 2
  %v1167 = vmax.f32 %v1165, %v1166
  %v1168 = vrot.slane %v1167, 1
  %v1169 = vmax.f32 %v1167, %v1168
  %v1170 = vsel %vm1071, %v800, -inf
  %v1171 = vrot.slane %v1170, 4
  %v1172 = vmax.f32 %v1170, %v1171
  %v1173 = vrot.slane %v1172, 2
  %v1174 = vmax.f32 %v1172, %v1173
  %v1175 = vrot.slane %v1174, 1
  %v1176 = vmax.f32 %v1174, %v1175
  %v1177 = vsel %vm1071, %v802, -inf
  %v1178 = vrot.slane %v1177, 4
  %v1179 = vmax.f32 %v1177, %v1178
  %v1180 = vrot.slane %v1179, 2
  %v1181 = vmax.f32 %v1179, %v1180
  %v1182 = vrot.slane %v1181, 1
  %v1183 = vmax.f32 %v1181, %v1182
  %v1184 = vsel %vm1071, %v810, -inf
  %v1185 = vrot.slane %v1184, 4
  %v1186 = vmax.f32 %v1184, %v1185
  %v1187 = vrot.slane %v1186, 2
  %v1188 = vmax.f32 %v1186, %v1187
  %v1189 = vrot.slane %v1188, 1
  %v1190 = vmax.f32 %v1188, %v1189
  %v1191 = vsel %vm1071, %v818, -inf
  %v1192 = vrot.slane %v1191, 4
  %v1193 = vmax.f32 %v1191, %v1192
  %v1194 = vrot.slane %v1193, 2
  %v1195 = vmax.f32 %v1193, %v1194
  %v1196 = vrot.slane %v1195, 1
  %v1197 = vmax.f32 %v1195, %v1196
  %v1198 = vsel %vm1071, %v817, -inf
  %v1199 = vrot.slane %v1198, 4
  %v1200 = vmax.f32 %v1198, %v1199
  %v1201 = vrot.slane %v1200, 2
  %v1202 = vmax.f32 %v1200, %v1201
  %v1203 = vrot.slane %v1202, 1
  %v1204 = vmax.f32 %v1202, %v1203
  %v1205 = vsel %vm1071, %v819, -inf
  %v1206 = vrot.slane %v1205, 4
  %v1207 = vmax.f32 %v1205, %v1206
  %v1208 = vrot.slane %v1207, 2
  %v1209 = vmax.f32 %v1207, %v1208
  %v1210 = vrot.slane %v1209, 1
  %v1211 = vmax.f32 %v1209, %v1210
  %v1212 = vsel %vm1071, %v827, -inf
  %v1213 = vrot.slane %v1212, 4
  %v1214 = vmax.f32 %v1212, %v1213
  %v1215 = vrot.slane %v1214, 2
  %v1216 = vmax.f32 %v1214, %v1215
  %v1217 = vrot.slane %v1216, 1
  %v1218 = vmax.f32 %v1216, %v1217
  %v1219 = vsel %vm1071, %v835, -inf
  %v1220 = vrot.slane %v1219, 4
  %v1221 = vmax.f32 %v1219, %v1220
  %v1222 = vrot.slane %v1221, 2
  %v1223 = vmax.f32 %v1221, %v1222
  %v1224 = vrot.slane %v1223, 1
  %v1225 = vmax.f32 %v1223, %v1224
  %v1226 = vsel %vm1071, %v834, -inf
  %v1227 = vrot.slane %v1226, 4
  %v1228 = vmax.f32 %v1226, %v1227
  %v1229 = vrot.slane %v1228, 2
  %v1230 = vmax.f32 %v1228, %v1229
  %v1231 = vrot.slane %v1230, 1
  %v1232 = vmax.f32 %v1230, %v1231
  %v1233 = vsel %vm1071, %v836, -inf
  %v1234 = vrot.slane %v1233, 4
  %v1235 = vmax.f32 %v1233, %v1234
  %v1236 = vrot.slane %v1235, 2
  %v1237 = vmax.f32 %v1235, %v1236
  %v1238 = vrot.slane %v1237, 1
  %v1239 = vmax.f32 %v1237, %v1238
  %v1240 = vsel %vm1071, %v844, -inf
  %v1241 = vrot.slane %v1240, 4
  %v1242 = vmax.f32 %v1240, %v1241
  %v1243 = vrot.slane %v1242, 2
  %v1244 = vmax.f32 %v1242, %v1243
  %v1245 = vrot.slane %v1244, 1
  %v1246 = vmax.f32 %v1244, %v1245
  %v1247 = vsel %vm1071, %v852, -inf
  %v1248 = vrot.slane %v1247, 4
  %v1249 = vmax.f32 %v1247, %v1248
  %v1250 = vrot.slane %v1249, 2
  %v1251 = vmax.f32 %v1249, %v1250
  %v1252 = vrot.slane %v1251, 1
  %v1253 = vmax.f32 %v1251, %v1252
  %v1254 = vsel %vm1071, %v851, -inf
  %v1255 = vrot.slane %v1254, 4
  %v1256 = vmax.f32 %v1254, %v1255
  %v1257 = vrot.slane %v1256, 2
  %v1258 = vmax.f32 %v1256, %v1257
  %v1259 = vrot.slane %v1258, 1
  %v1260 = vmax.f32 %v1258, %v1259
  %v1261 = vsel %vm1071, %v853, -inf
  %v1262 = vrot.slane %v1261, 4
  %v1263 = vmax.f32 %v1261, %v1262
  %v1264 = vrot.slane %v1263, 2
  %v1265 = vmax.f32 %v1263, %v1264
  %v1266 = vrot.slane %v1265, 1
  %v1267 = vmax.f32 %v1265, %v1266
  %v1268 = vsel %vm1071, %v861, -inf
  %v1269 = vrot.slane %v1268, 4
  %v1270 = vmax.f32 %v1268, %v1269
  %v1271 = vrot.slane %v1270, 2
  %v1272 = vmax.f32 %v1270, %v1271
  %v1273 = vrot.slane %v1272, 1
  %v1274 = vmax.f32 %v1272, %v1273
  %v1275 = vsel %vm1071, %v869, -inf
  %v1276 = vrot.slane %v1275, 4
  %v1277 = vmax.f32 %v1275, %v1276
  %v1278 = vrot.slane %v1277, 2
  %v1279 = vmax.f32 %v1277, %v1278
  %v1280 = vrot.slane %v1279, 1
  %v1281 = vmax.f32 %v1279, %v1280
  %v1282 = vsel %vm1071, %v868, -inf
  %v1283 = vrot.slane %v1282, 4
  %v1284 = vmax.f32 %v1282, %v1283
  %v1285 = vrot.slane %v1284, 2
  %v1286 = vmax.f32 %v1284, %v1285
  %v1287 = vrot.slane %v1286, 1
  %v1288 = vmax.f32 %v1286, %v1287
  %v1289 = vsel %vm1071, %v870, -inf
  %v1290 = vrot.slane %v1289, 4
  %v1291 = vmax.f32 %v1289, %v1290
  %v1292 = vrot.slane %v1291, 2
  %v1293 = vmax.f32 %v1291, %v1292
  %v1294 = vrot.slane %v1293, 1
  %v1295 = vmax.f32 %v1293, %v1294
  %v1296 = vsel %vm1071, %v878, -inf
  %v1297 = vrot.slane %v1296, 4
  %v1298 = vmax.f32 %v1296, %v1297
  %v1299 = vrot.slane %v1298, 2
  %v1300 = vmax.f32 %v1298, %v1299
  %v1301 = vrot.slane %v1300, 1
  %v1302 = vmax.f32 %v1300, %v1301
  %v1303 = vsel %vm1071, %v886, -inf
  %v1304 = vrot.slane %v1303, 4
  %v1305 = vmax.f32 %v1303, %v1304
  %v1306 = vrot.slane %v1305, 2
  %v1307 = vmax.f32 %v1305, %v1306
  %v1308 = vrot.slane %v1307, 1
  %v1309 = vmax.f32 %v1307, %v1308
  %v1310 = vsel %vm1071, %v885, -inf
  %v1311 = vrot.slane %v1310, 4
  %v1312 = vmax.f32 %v1310, %v1311
  %v1313 = vrot.slane %v1312, 2
  %v1314 = vmax.f32 %v1312, %v1313
  %v1315 = vrot.slane %v1314, 1
  %v1316 = vmax.f32 %v1314, %v1315
  %v1317 = vsel %vm1071, %v887, -inf
  %v1318 = vrot.slane %v1317, 4
  %v1319 = vmax.f32 %v1317, %v1318
  %v1320 = vrot.slane %v1319, 2
  %v1321 = vmax.f32 %v1319, %v1320
  %v1322 = vrot.slane %v1321, 1
  %v1323 = vmax.f32 %v1321, %v1322
  %v1324 = vsel %vm1071, %v895, -inf
  %v1325 = vrot.slane %v1324, 4
  %v1326 = vmax.f32 %v1324, %v1325
  %v1327 = vrot.slane %v1326, 2
  %v1328 = vmax.f32 %v1326, %v1327
  %v1329 = vrot.slane %v1328, 1
  %v1330 = vmax.f32 %v1328, %v1329
  %v1331 = vsel %vm1071, %v903, -inf
  %v1332 = vrot.slane %v1331, 4
  %v1333 = vmax.f32 %v1331, %v1332
  %v1334 = vrot.slane %v1333, 2
  %v1335 = vmax.f32 %v1333, %v1334
  %v1336 = vrot.slane %v1335, 1
  %v1337 = vmax.f32 %v1335, %v1336
  %v1338 = vsel %vm1071, %v902, -inf
  %v1339 = vrot.slane %v1338, 4
  %v1340 = vmax.f32 %v1338, %v1339
  %v1341 = vrot.slane %v1340, 2
  %v1342 = vmax.f32 %v1340, %v1341
  %v1343 = vrot.slane %v1342, 1
  %v1344 = vmax.f32 %v1342, %v1343
  %v1345 = vsel %vm1071, %v904, -inf
  %v1346 = vrot.slane %v1345, 4
  %v1347 = vmax.f32 %v1345, %v1346
  %v1348 = vrot.slane %v1347, 2
  %v1349 = vmax.f32 %v1347, %v1348
  %v1350 = vrot.slane %v1349, 1
  %v1351 = vmax.f32 %v1349, %v1350
  %v1352 = vsel %vm1071, %v912, -inf
  %v1353 = vrot.slane %v1352, 4
  %v1354 = vmax.f32 %v1352, %v1353
  %v1355 = vrot.slane %v1354, 2
  %v1356 = vmax.f32 %v1354, %v1355
  %v1357 = vrot.slane %v1356, 1
  %v1358 = vmax.f32 %v1356, %v1357
  %v1359 = vsel %vm1071, %v920, -inf
  %v1360 = vrot.slane %v1359, 4
  %v1361 = vmax.f32 %v1359, %v1360
  %v1362 = vrot.slane %v1361, 2
  %v1363 = vmax.f32 %v1361, %v1362
  %v1364 = vrot.slane %v1363, 1
  %v1365 = vmax.f32 %v1363, %v1364
  %v1366 = vsel %vm1071, %v919, -inf
  %v1367 = vrot.slane %v1366, 4
  %v1368 = vmax.f32 %v1366, %v1367
  %v1369 = vrot.slane %v1368, 2
  %v1370 = vmax.f32 %v1368, %v1369
  %v1371 = vrot.slane %v1370, 1
  %v1372 = vmax.f32 %v1370, %v1371
  %v1373 = vsel %vm1071, %v921, -inf
  %v1374 = vrot.slane %v1373, 4
  %v1375 = vmax.f32 %v1373, %v1374
  %v1376 = vrot.slane %v1375, 2
  %v1377 = vmax.f32 %v1375, %v1376
  %v1378 = vrot.slane %v1377, 1
  %v1379 = vmax.f32 %v1377, %v1378
  %v1380 = vsel %vm1071, %v929, -inf
  %v1381 = vrot.slane %v1380, 4
  %v1382 = vmax.f32 %v1380, %v1381
  %v1383 = vrot.slane %v1382, 2
  %v1384 = vmax.f32 %v1382, %v1383
  %v1385 = vrot.slane %v1384, 1
  %v1386 = vmax.f32 %v1384, %v1385
  %v1387 = vsel %vm1071, %v937, -inf
  %v1388 = vrot.slane %v1387, 4
  %v1389 = vmax.f32 %v1387, %v1388
  %v1390 = vrot.slane %v1389, 2
  %v1391 = vmax.f32 %v1389, %v1390
  %v1392 = vrot.slane %v1391, 1
  %v1393 = vmax.f32 %v1391, %v1392
  %v1394 = vsel %vm1071, %v936, -inf
  %v1395 = vrot.slane %v1394, 4
  %v1396 = vmax.f32 %v1394, %v1395
  %v1397 = vrot.slane %v1396, 2
  %v1398 = vmax.f32 %v1396, %v1397
  %v1399 = vrot.slane %v1398, 1
  %v1400 = vmax.f32 %v1398, %v1399
  %v1401 = vsel %vm1071, %v938, -inf
  %v1402 = vrot.slane %v1401, 4
  %v1403 = vmax.f32 %v1401, %v1402
  %v1404 = vrot.slane %v1403, 2
  %v1405 = vmax.f32 %v1403, %v1404
  %v1406 = vrot.slane %v1405, 1
  %v1407 = vmax.f32 %v1405, %v1406
  %v1408 = vsel %vm1071, %v946, -inf
  %v1409 = vrot.slane %v1408, 4
  %v1410 = vmax.f32 %v1408, %v1409
  %v1411 = vrot.slane %v1410, 2
  %v1412 = vmax.f32 %v1410, %v1411
  %v1413 = vrot.slane %v1412, 1
  %v1414 = vmax.f32 %v1412, %v1413
  %v1415 = vsel %vm1071, %v954, -inf
  %v1416 = vrot.slane %v1415, 4
  %v1417 = vmax.f32 %v1415, %v1416
  %v1418 = vrot.slane %v1417, 2
  %v1419 = vmax.f32 %v1417, %v1418
  %v1420 = vrot.slane %v1419, 1
  %v1421 = vmax.f32 %v1419, %v1420
  %v1422 = vsel %vm1071, %v953, -inf
  %v1423 = vrot.slane %v1422, 4
  %v1424 = vmax.f32 %v1422, %v1423
  %v1425 = vrot.slane %v1424, 2
  %v1426 = vmax.f32 %v1424, %v1425
  %v1427 = vrot.slane %v1426, 1
  %v1428 = vmax.f32 %v1426, %v1427
  %v1429 = vsel %vm1071, %v955, -inf
  %v1430 = vrot.slane %v1429, 4
  %v1431 = vmax.f32 %v1429, %v1430
  %v1432 = vrot.slane %v1431, 2
  %v1433 = vmax.f32 %v1431, %v1432
  %v1434 = vrot.slane %v1433, 1
  %v1435 = vmax.f32 %v1433, %v1434
  %v1436 = vsel %vm1071, %v963, -inf
  %v1437 = vrot.slane %v1436, 4
  %v1438 = vmax.f32 %v1436, %v1437
  %v1439 = vrot.slane %v1438, 2
  %v1440 = vmax.f32 %v1438, %v1439
  %v1441 = vrot.slane %v1440, 1
  %v1442 = vmax.f32 %v1440, %v1441
  %v1443 = vsel %vm1071, %v971, -inf
  %v1444 = vrot.slane %v1443, 4
  %v1445 = vmax.f32 %v1443, %v1444
  %v1446 = vrot.slane %v1445, 2
  %v1447 = vmax.f32 %v1445, %v1446
  %v1448 = vrot.slane %v1447, 1
  %v1449 = vmax.f32 %v1447, %v1448
  %v1450 = vsel %vm1071, %v970, -inf
  %v1451 = vrot.slane %v1450, 4
  %v1452 = vmax.f32 %v1450, %v1451
  %v1453 = vrot.slane %v1452, 2
  %v1454 = vmax.f32 %v1452, %v1453
  %v1455 = vrot.slane %v1454, 1
  %v1456 = vmax.f32 %v1454, %v1455
  %v1457 = vsel %vm1071, %v972, -inf
  %v1458 = vrot.slane %v1457, 4
  %v1459 = vmax.f32 %v1457, %v1458
  %v1460 = vrot.slane %v1459, 2
  %v1461 = vmax.f32 %v1459, %v1460
  %v1462 = vrot.slane %v1461, 1
  %v1463 = vmax.f32 %v1461, %v1462
  %v1464 = vsel %vm1071, %v980, -inf
  %v1465 = vrot.slane %v1464, 4
  %v1466 = vmax.f32 %v1464, %v1465
  %v1467 = vrot.slane %v1466, 2
  %v1468 = vmax.f32 %v1466, %v1467
  %v1469 = vrot.slane %v1468, 1
  %v1470 = vmax.f32 %v1468, %v1469
  %v1471 = vsel %vm1071, %v988, -inf
  %v1472 = vrot.slane %v1471, 4
  %v1473 = vmax.f32 %v1471, %v1472
  %v1474 = vrot.slane %v1473, 2
  %v1475 = vmax.f32 %v1473, %v1474
  %v1476 = vrot.slane %v1475, 1
  %v1477 = vmax.f32 %v1475, %v1476
  %v1478 = vsel %vm1071, %v987, -inf
  %v1479 = vrot.slane %v1478, 4
  %v1480 = vmax.f32 %v1478, %v1479
  %v1481 = vrot.slane %v1480, 2
  %v1482 = vmax.f32 %v1480, %v1481
  %v1483 = vrot.slane %v1482, 1
  %v1484 = vmax.f32 %v1482, %v1483
  %v1485 = vsel %vm1071, %v989, -inf
  %v1486 = vrot.slane %v1485, 4
  %v1487 = vmax.f32 %v1485, %v1486
  %v1488 = vrot.slane %v1487, 2
  %v1489 = vmax.f32 %v1487, %v1488
  %v1490 = vrot.slane %v1489, 1
  %v1491 = vmax.f32 %v1489, %v1490
  %v1492 = vsel %vm1071, %v997, -inf
  %v1493 = vrot.slane %v1492, 4
  %v1494 = vmax.f32 %v1492, %v1493
  %v1495 = vrot.slane %v1494, 2
  %v1496 = vmax.f32 %v1494, %v1495
  %v1497 = vrot.slane %v1496, 1
  %v1498 = vmax.f32 %v1496, %v1497
  %v1499 = vsel %vm1071, %v1005, -inf
  %v1500 = vrot.slane %v1499, 4
  %v1501 = vmax.f32 %v1499, %v1500
  %v1502 = vrot.slane %v1501, 2
  %v1503 = vmax.f32 %v1501, %v1502
  %v1504 = vrot.slane %v1503, 1
  %v1505 = vmax.f32 %v1503, %v1504
  %v1506 = vsel %vm1071, %v1004, -inf
  %v1507 = vrot.slane %v1506, 4
  %v1508 = vmax.f32 %v1506, %v1507
  %v1509 = vrot.slane %v1508, 2
  %v1510 = vmax.f32 %v1508, %v1509
  %v1511 = vrot.slane %v1510, 1
  %v1512 = vmax.f32 %v1510, %v1511
  %v1513 = vsel %vm1071, %v1006, -inf
  %v1514 = vrot.slane %v1513, 4
  %v1515 = vmax.f32 %v1513, %v1514
  %v1516 = vrot.slane %v1515, 2
  %v1517 = vmax.f32 %v1515, %v1516
  %v1518 = vrot.slane %v1517, 1
  %v1519 = vmax.f32 %v1517, %v1518
  %v1520 = vld [vmem:[%s2] sm:$0xff]
  %vm1585 = vcmask 1041409
  %v1586 = vsel %vm1585, %v1085, %v1078
  %vm1587 = vcmask 1042434
  %v1588 = vsel %vm1587, %v1092, %v1586
  %vm1589 = vcmask 1043459
  %v1590 = vsel %vm1589, %v1099, %v1588
  %vm1591 = vcmask 1044484
  %v1592 = vsel %vm1591, %v1106, %v1590
  %vm1593 = vcmask 1045509
  %v1594 = vsel %vm1593, %v1113, %v1592
  %vm1595 = vcmask 1046534
  %v1596 = vsel %vm1595, %v1120, %v1594
  %vm1597 = vcmask 1047559
  %v1598 = vsel %vm1597, %v1127, %v1596
  %v1599 = vsel %vm1585, %v1141, %v1134
  %v1600 = vsel %vm1587, %v1148, %v1599
  %v1601 = vsel %vm1589, %v1155, %v1600
  %v1602 = vsel %vm1591, %v1162, %v1601
  %v1603 = vsel %vm1593, %v1169, %v1602
  %v1604 = vsel %vm1595, %v1176, %v1603
  %v1605 = vsel %vm1597, %v1183, %v1604
  %v1606 = vsel %vm1585, %v1197, %v1190
  %v1607 = vsel %vm1587, %v1204, %v1606
  %v1608 = vsel %vm1589, %v1211, %v1607
  %v1609 = vsel %vm1591, %v1218, %v1608
  %v1610 = vsel %vm1593, %v1225, %v1609
  %v1611 = vsel %vm1595, %v1232, %v1610
  %v1612 = vsel %vm1597, %v1239, %v1611
  %v1613 = vsel %vm1585, %v1253, %v1246
  %v1614 = vsel %vm1587, %v1260, %v1613
  %v1615 = vsel %vm1589, %v1267, %v1614
  %v1616 = vsel %vm1591, %v1274, %v1615
  %v1617 = vsel %vm1593, %v1281, %v1616
  %v1618 = vsel %vm1595, %v1288, %v1617
  %v1619 = vsel %vm1597, %v1295, %v1618
  %v1620 = vsel %vm1585, %v1309, %v1302
  %v1621 = vsel %vm1587, %v1316, %v1620
  %v1622 = vsel %vm1589, %v1323, %v1621
  %v1623 = vsel %vm1591, %v1330, %v1622
  %v1624 = vsel %vm1593, %v1337, %v1623
  %v1625 = vsel %vm1595, %v1344, %v1624
  %v1626 = vsel %vm1597, %v1351, %v1625
  %v1627 = vsel %vm1585, %v1365, %v1358
  %v1628 = vsel %vm1587, %v1372, %v1627
  %v1629 = vsel %vm1589, %v1379, %v1628
  %v1630 = vsel %vm1591, %v1386, %v1629
  %v1631 = vsel %vm1593, %v1393, %v1630
  %v1632 = vsel %vm1595, %v1400, %v1631
  %v1633 = vsel %vm1597, %v1407, %v1632
  %v1634 = vsel %vm1585, %v1421, %v1414
  %v1635 = vsel %vm1587, %v1428, %v1634
  %v1636 = vsel %vm1589, %v1435, %v1635
  %v1637 = vsel %vm1591, %v1442, %v1636
  %v1638 = vsel %vm1593, %v1449, %v1637
  %v1639 = vsel %vm1595, %v1456, %v1638
  %v1640 = vsel %vm1597, %v1463, %v1639
  %v1641 = vsel %vm1585, %v1477, %v1470
  %v1642 = vsel %vm1587, %v1484, %v1641
  %v1643 = vsel %vm1589, %v1491, %v1642
  %v1644 = vsel %vm1591, %v1498, %v1643
  %v1645 = vsel %vm1593, %v1505, %v1644
  %v1646 = vsel %vm1595, %v1512, %v1645
  %v1647 = vsel %vm1597, %v1519, %v1646
  %1656 = vxpose.xlu0.b32.start [1/16] %v1598, 128
  %1657 = vxpose.xlu0.b32.cont [2/16] 0.0, 128
  %1658 = vxpose.xlu0.b32.cont [3/16] 0.0, 128
  %1659 = vxpose.xlu0.b32.cont [4/16] 0.0, 128
  %1660 = vxpose.xlu0.b32.cont [5/16] 0.0, 128
  %1661 = vxpose.xlu0.b32.cont [6/16] 0.0, 128
  %1662 = vxpose.xlu0.b32.cont [7/16] 0.0, 128
  %1663 = vxpose.xlu0.b32.cont [8/16] 0.0, 128
  %1664 = vxpose.xlu0.b32.cont [9/16] 0.0, 128
  %1665 = vxpose.xlu0.b32.cont [10/16] 0.0, 128
  %1666 = vxpose.xlu0.b32.cont [11/16] 0.0, 128
  %1667 = vxpose.xlu0.b32.cont [12/16] 0.0, 128
  %1668 = vxpose.xlu0.b32.cont [13/16] 0.0, 128
  %1669 = vxpose.xlu0.b32.cont [14/16] 0.0, 128
  %1670 = vxpose.xlu0.b32.cont [15/16] 0.0, 128
  %1671 = vxpose.xlu0.b32.end [16/16] 0.0, 128
  %v1672 = vpop.trf.xlu0
  %v1673 = vpop.trf.xlu0
  %v1674 = vpop.trf.xlu0
  %v1675 = vpop.trf.xlu0
  %v1676 = vpop.trf.xlu0
  %v1677 = vpop.trf.xlu0
  %v1678 = vpop.trf.xlu0
  %v1679 = vpop.trf.xlu0
  %v1680 = vpop.trf.xlu0
  %v1681 = vpop.trf.xlu0
  %v1682 = vpop.trf.xlu0
  %v1683 = vpop.trf.xlu0
  %v1684 = vpop.trf.xlu0
  %v1685 = vpop.trf.xlu0
  %v1686 = vpop.trf.xlu0
  %v1687 = vpop.trf.xlu0
  %1688 = vxpose.xlu0.b32.start [1/16] %v1605, 128
  %1689 = vxpose.xlu0.b32.cont [2/16] 0.0, 128
  %1690 = vxpose.xlu0.b32.cont [3/16] 0.0, 128
  %1691 = vxpose.xlu0.b32.cont [4/16] 0.0, 128
  %1692 = vxpose.xlu0.b32.cont [5/16] 0.0, 128
  %1693 = vxpose.xlu0.b32.cont [6/16] 0.0, 128
  %1694 = vxpose.xlu0.b32.cont [7/16] 0.0, 128
  %1695 = vxpose.xlu0.b32.cont [8/16] 0.0, 128
  %1696 = vxpose.xlu0.b32.cont [9/16] 0.0, 128
  %1697 = vxpose.xlu0.b32.cont [10/16] 0.0, 128
  %1698 = vxpose.xlu0.b32.cont [11/16] 0.0, 128
  %1699 = vxpose.xlu0.b32.cont [12/16] 0.0, 128
  %1700 = vxpose.xlu0.b32.cont [13/16] 0.0, 128
  %1701 = vxpose.xlu0.b32.cont [14/16] 0.0, 128
  %1702 = vxpose.xlu0.b32.cont [15/16] 0.0, 128
  %1703 = vxpose.xlu0.b32.end [16/16] 0.0, 128
  %v1704 = vpop.trf.xlu0
  %v1705 = vpop.trf.xlu0
  %v1706 = vpop.trf.xlu0
  %v1707 = vpop.trf.xlu0
  %v1708 = vpop.trf.xlu0
  %v1709 = vpop.trf.xlu0
  %v1710 = vpop.trf.xlu0
  %v1711 = vpop.trf.xlu0
  %v1712 = vpop.trf.xlu0
  %v1713 = vpop.trf.xlu0
  %v1714 = vpop.trf.xlu0
  %v1715 = vpop.trf.xlu0
  %v1716 = vpop.trf.xlu0
  %v1717 = vpop.trf.xlu0
  %v1718 = vpop.trf.xlu0
  %v1719 = vpop.trf.xlu0
  %1720 = vxpose.xlu0.b32.start [1/16] %v1612, 128
  %1721 = vxpose.xlu0.b32.cont [2/16] 0.0, 128
  %1722 = vxpose.xlu0.b32.cont [3/16] 0.0, 128
  %1723 = vxpose.xlu0.b32.cont [4/16] 0.0, 128
  %1724 = vxpose.xlu0.b32.cont [5/16] 0.0, 128
  %1725 = vxpose.xlu0.b32.cont [6/16] 0.0, 128
  %1726 = vxpose.xlu0.b32.cont [7/16] 0.0, 128
  %1727 = vxpose.xlu0.b32.cont [8/16] 0.0, 128
  %1728 = vxpose.xlu0.b32.cont [9/16] 0.0, 128
  %1729 = vxpose.xlu0.b32.cont [10/16] 0.0, 128
  %1730 = vxpose.xlu0.b32.cont [11/16] 0.0, 128
  %1731 = vxpose.xlu0.b32.cont [12/16] 0.0, 128
  %1732 = vxpose.xlu0.b32.cont [13/16] 0.0, 128
  %1733 = vxpose.xlu0.b32.cont [14/16] 0.0, 128
  %1734 = vxpose.xlu0.b32.cont [15/16] 0.0, 128
  %1735 = vxpose.xlu0.b32.end [16/16] 0.0, 128
  %v1736 = vpop.trf.xlu0
  %v1737 = vpop.trf.xlu0
  %v1738 = vpop.trf.xlu0
  %v1739 = vpop.trf.xlu0
  %v1740 = vpop.trf.xlu0
  %v1741 = vpop.trf.xlu0
  %v1742 = vpop.trf.xlu0
  %v1743 = vpop.trf.xlu0
  %v1744 = vpop.trf.xlu0
  %v1745 = vpop.trf.xlu0
  %v1746 = vpop.trf.xlu0
  %v1747 = vpop.trf.xlu0
  %v1748 = vpop.trf.xlu0
  %v1749 = vpop.trf.xlu0
  %v1750 = vpop.trf.xlu0
  %v1751 = vpop.trf.xlu0
  %1752 = vxpose.xlu0.b32.start [1/16] %v1619, 128
  %1753 = vxpose.xlu0.b32.cont [2/16] 0.0, 128
  %1754 = vxpose.xlu0.b32.cont [3/16] 0.0, 128
  %1755 = vxpose.xlu0.b32.cont [4/16] 0.0, 128
  %1756 = vxpose.xlu0.b32.cont [5/16] 0.0, 128
  %1757 = vxpose.xlu0.b32.cont [6/16] 0.0, 128
  %1758 = vxpose.xlu0.b32.cont [7/16] 0.0, 128
  %1759 = vxpose.xlu0.b32.cont [8/16] 0.0, 128
  %1760 = vxpose.xlu0.b32.cont [9/16] 0.0, 128
  %1761 = vxpose.xlu0.b32.cont [10/16] 0.0, 128
  %1762 = vxpose.xlu0.b32.cont [11/16] 0.0, 128
  %1763 = vxpose.xlu0.b32.cont [12/16] 0.0, 128
  %1764 = vxpose.xlu0.b32.cont [13/16] 0.0, 128
  %1765 = vxpose.xlu0.b32.cont [14/16] 0.0, 128
  %1766 = vxpose.xlu0.b32.cont [15/16] 0.0, 128
  %1767 = vxpose.xlu0.b32.end [16/16] 0.0, 128
  %v1768 = vpop.trf.xlu0
  %v1769 = vpop.trf.xlu0
  %v1770 = vpop.trf.xlu0
  %v1771 = vpop.trf.xlu0
  %v1772 = vpop.trf.xlu0
  %v1773 = vpop.trf.xlu0
  %v1774 = vpop.trf.xlu0
  %v1775 = vpop.trf.xlu0
  %v1776 = vpop.trf.xlu0
  %v1777 = vpop.trf.xlu0
  %v1778 = vpop.trf.xlu0
  %v1779 = vpop.trf.xlu0
  %v1780 = vpop.trf.xlu0
  %v1781 = vpop.trf.xlu0
  %v1782 = vpop.trf.xlu0
  %v1783 = vpop.trf.xlu0
  %1784 = vxpose.xlu0.b32.start [1/16] %v1626, 128
  %1785 = vxpose.xlu0.b32.cont [2/16] 0.0, 128
  %1786 = vxpose.xlu0.b32.cont [3/16] 0.0, 128
  %1787 = vxpose.xlu0.b32.cont [4/16] 0.0, 128
  %1788 = vxpose.xlu0.b32.cont [5/16] 0.0, 128
  %1789 = vxpose.xlu0.b32.cont [6/16] 0.0, 128
  %1790 = vxpose.xlu0.b32.cont [7/16] 0.0, 128
  %1791 = vxpose.xlu0.b32.cont [8/16] 0.0, 128
  %1792 = vxpose.xlu0.b32.cont [9/16] 0.0, 128
  %1793 = vxpose.xlu0.b32.cont [10/16] 0.0, 128
  %1794 = vxpose.xlu0.b32.cont [11/16] 0.0, 128
  %1795 = vxpose.xlu0.b32.cont [12/16] 0.0, 128
  %1796 = vxpose.xlu0.b32.cont [13/16] 0.0, 128
  %1797 = vxpose.xlu0.b32.cont [14/16] 0.0, 128
  %1798 = vxpose.xlu0.b32.cont [15/16] 0.0, 128
  %1799 = vxpose.xlu0.b32.end [16/16] 0.0, 128
  %v1800 = vpop.trf.xlu0
  %v1801 = vpop.trf.xlu0
  %v1802 = vpop.trf.xlu0
  %v1803 = vpop.trf.xlu0
  %v1804 = vpop.trf.xlu0
  %v1805 = vpop.trf.xlu0
  %v1806 = vpop.trf.xlu0
  %v1807 = vpop.trf.xlu0
  %v1808 = vpop.trf.xlu0
  %v1809 = vpop.trf.xlu0
  %v1810 = vpop.trf.xlu0
  %v1811 = vpop.trf.xlu0
  %v1812 = vpop.trf.xlu0
  %v1813 = vpop.trf.xlu0
  %v1814 = vpop.trf.xlu0
  %v1815 = vpop.trf.xlu0
  %1816 = vxpose.xlu0.b32.start [1/16] %v1633, 128
  %1817 = vxpose.xlu0.b32.cont [2/16] 0.0, 128
  %1818 = vxpose.xlu0.b32.cont [3/16] 0.0, 128
  %1819 = vxpose.xlu0.b32.cont [4/16] 0.0, 128
  %1820 = vxpose.xlu0.b32.cont [5/16] 0.0, 128
  %1821 = vxpose.xlu0.b32.cont [6/16] 0.0, 128
  %1822 = vxpose.xlu0.b32.cont [7/16] 0.0, 128
  %1823 = vxpose.xlu0.b32.cont [8/16] 0.0, 128
  %1824 = vxpose.xlu0.b32.cont [9/16] 0.0, 128
  %1825 = vxpose.xlu0.b32.cont [10/16] 0.0, 128
  %1826 = vxpose.xlu0.b32.cont [11/16] 0.0, 128
  %1827 = vxpose.xlu0.b32.cont [12/16] 0.0, 128
  %1828 = vxpose.xlu0.b32.cont [13/16] 0.0, 128
  %1829 = vxpose.xlu0.b32.cont [14/16] 0.0, 128
  %1830 = vxpose.xlu0.b32.cont [15/16] 0.0, 128
  %1831 = vxpose.xlu0.b32.end [16/16] 0.0, 128
  %v1832 = vpop.trf.xlu0
  %v1833 = vpop.trf.xlu0
  %v1834 = vpop.trf.xlu0
  %v1835 = vpop.trf.xlu0
  %v1836 = vpop.trf.xlu0
  %v1837 = vpop.trf.xlu0
  %v1838 = vpop.trf.xlu0
  %v1839 = vpop.trf.xlu0
  %v1840 = vpop.trf.xlu0
  %v1841 = vpop.trf.xlu0
  %v1842 = vpop.trf.xlu0
  %v1843 = vpop.trf.xlu0
  %v1844 = vpop.trf.xlu0
  %v1845 = vpop.trf.xlu0
  %v1846 = vpop.trf.xlu0
  %v1847 = vpop.trf.xlu0
  %1848 = vxpose.xlu0.b32.start [1/16] %v1640, 128
  %1849 = vxpose.xlu0.b32.cont [2/16] 0.0, 128
  %1850 = vxpose.xlu0.b32.cont [3/16] 0.0, 128
  %1851 = vxpose.xlu0.b32.cont [4/16] 0.0, 128
  %1852 = vxpose.xlu0.b32.cont [5/16] 0.0, 128
  %1853 = vxpose.xlu0.b32.cont [6/16] 0.0, 128
  %1854 = vxpose.xlu0.b32.cont [7/16] 0.0, 128
  %1855 = vxpose.xlu0.b32.cont [8/16] 0.0, 128
  %1856 = vxpose.xlu0.b32.cont [9/16] 0.0, 128
  %1857 = vxpose.xlu0.b32.cont [10/16] 0.0, 128
  %1858 = vxpose.xlu0.b32.cont [11/16] 0.0, 128
  %1859 = vxpose.xlu0.b32.cont [12/16] 0.0, 128
  %1860 = vxpose.xlu0.b32.cont [13/16] 0.0, 128
  %1861 = vxpose.xlu0.b32.cont [14/16] 0.0, 128
  %1862 = vxpose.xlu0.b32.cont [15/16] 0.0, 128
  %1863 = vxpose.xlu0.b32.end [16/16] 0.0, 128
  %v1864 = vpop.trf.xlu0
  %v1865 = vpop.trf.xlu0
  %v1866 = vpop.trf.xlu0
  %v1867 = vpop.trf.xlu0
  %v1868 = vpop.trf.xlu0
  %v1869 = vpop.trf.xlu0
  %v1870 = vpop.trf.xlu0
  %v1871 = vpop.trf.xlu0
  %v1872 = vpop.trf.xlu0
  %v1873 = vpop.trf.xlu0
  %v1874 = vpop.trf.xlu0
  %v1875 = vpop.trf.xlu0
  %v1876 = vpop.trf.xlu0
  %v1877 = vpop.trf.xlu0
  %v1878 = vpop.trf.xlu0
  %v1879 = vpop.trf.xlu0
  %1880 = vxpose.xlu0.b32.start [1/16] %v1647, 128
  %1881 = vxpose.xlu0.b32.cont [2/16] 0.0, 128
  %1882 = vxpose.xlu0.b32.cont [3/16] 0.0, 128
  %1883 = vxpose.xlu0.b32.cont [4/16] 0.0, 128
  %1884 = vxpose.xlu0.b32.cont [5/16] 0.0, 128
  %1885 = vxpose.xlu0.b32.cont [6/16] 0.0, 128
  %1886 = vxpose.xlu0.b32.cont [7/16] 0.0, 128
  %1887 = vxpose.xlu0.b32.cont [8/16] 0.0, 128
  %1888 = vxpose.xlu0.b32.cont [9/16] 0.0, 128
  %1889 = vxpose.xlu0.b32.cont [10/16] 0.0, 128
  %1890 = vxpose.xlu0.b32.cont [11/16] 0.0, 128
  %1891 = vxpose.xlu0.b32.cont [12/16] 0.0, 128
  %1892 = vxpose.xlu0.b32.cont [13/16] 0.0, 128
  %1893 = vxpose.xlu0.b32.cont [14/16] 0.0, 128
  %1894 = vxpose.xlu0.b32.cont [15/16] 0.0, 128
  %1895 = vxpose.xlu0.b32.end [16/16] 0.0, 128
  %v1896 = vpop.trf.xlu0
  %v1897 = vpop.trf.xlu0
  %v1898 = vpop.trf.xlu0
  %v1899 = vpop.trf.xlu0
  %v1900 = vpop.trf.xlu0
  %v1901 = vpop.trf.xlu0
  %v1902 = vpop.trf.xlu0
  %v1903 = vpop.trf.xlu0
  %v1904 = vpop.trf.xlu0
  %v1905 = vpop.trf.xlu0
  %v1906 = vpop.trf.xlu0
  %v1907 = vpop.trf.xlu0
  %v1908 = vpop.trf.xlu0
  %v1909 = vpop.trf.xlu0
  %v1910 = vpop.trf.xlu0
  %v1911 = vpop.trf.xlu0
  %1912 = vrot.lane.b32.xlu0 %v685, 96
  %v1913 = vpop.permute.xlu0 %1912
  %vm1915 = vcmask 64512
  %v1917 = vsel %vm1915, %v1672, 0
  %v1920 = vsel %vm1915, %v1673, 0
  %v1923 = vsel %vm1915, %v1674, 0
  %v1926 = vsel %vm1915, %v1675, 0
  %v1929 = vsel %vm1915, %v1704, 0
  %v1932 = vsel %vm1915, %v1705, 0
  %v1935 = vsel %vm1915, %v1706, 0
  %v1938 = vsel %vm1915, %v1707, 0
  %v1941 = vsel %vm1915, %v1736, 0
  %v1944 = vsel %vm1915, %v1737, 0
  %v1947 = vsel %vm1915, %v1738, 0
  %v1950 = vsel %vm1915, %v1739, 0
  %v1953 = vsel %vm1915, %v1768, 0
  %v1956 = vsel %vm1915, %v1769, 0
  %v1959 = vsel %vm1915, %v1770, 0
  %v1962 = vsel %vm1915, %v1771, 0
  %v1965 = vsel %vm1915, %v1800, 0
  %v1968 = vsel %vm1915, %v1801, 0
  %v1971 = vsel %vm1915, %v1802, 0
  %v1974 = vsel %vm1915, %v1803, 0
  %v1977 = vsel %vm1915, %v1832, 0
  %v1980 = vsel %vm1915, %v1833, 0
  %v1983 = vsel %vm1915, %v1834, 0
  %v1986 = vsel %vm1915, %v1835, 0
  %v1989 = vsel %vm1915, %v1864, 0
  %v1992 = vsel %vm1915, %v1865, 0
  %v1995 = vsel %vm1915, %v1866, 0
  %v1998 = vsel %vm1915, %v1867, 0
  %v2001 = vsel %vm1915, %v1896, 0
  %v2004 = vsel %vm1915, %v1897, 0
  %v2007 = vsel %vm1915, %v1898, 0
  %v2010 = vsel %vm1915, %v1899, 0
  %2012 = vmatprep.subr.mxu0 0.0
  %2013 = vmatpush1.msra.mxu0 %v1520
  %2014 = vmatprep.subr.mxu0 0.0
  %2015 = vmatpush1.msra.mxu0 0.0
  %2016 = vmatprep.subr.mxu0 0.0
  %2017 = vmatpush1.msra.mxu0 0.0
  %2018 = vmatprep.subr.mxu0 0.0
  %2019 = vmatpush1.msra.mxu0 0.0
  %2020 = vmatprep.subr.mxu0 0.0
  %2021 = vmatpush1.msra.mxu0 0.0
  %2022 = vmatprep.subr.mxu0 0.0
  %2023 = vmatpush1.msra.mxu0 0.0
  %2024 = vmatprep.subr.mxu0 0.0
  %2025 = vmatpush1.msra.mxu0 0.0
  %2026 = vmatprep.subr.mxu0 0.0
  %2027 = vmatpush1.msra.mxu0 0.0
  %2028 = vmatprep.subr.mxu0 0.0
  %2029 = vmatpush1.msra.mxu0 0.0
  %2030 = vmatprep.subr.mxu0 0.0
  %2031 = vmatpush1.msra.mxu0 0.0
  %2032 = vmatprep.subr.mxu0 0.0
  %2033 = vmatpush1.msra.mxu0 0.0
  %2034 = vmatprep.subr.mxu0 0.0
  %2035 = vmatpush1.msra.mxu0 0.0
  %2036 = vmatprep.subr.mxu0 0.0
  %2037 = vmatpush1.msra.mxu0 0.0
  %2038 = vmatprep.subr.mxu0 0.0
  %2039 = vmatpush1.msra.mxu0 0.0
  %2040 = vmatprep.subr.mxu0 0.0
  %2041 = vmatpush1.msra.mxu0 0.0
  %2042 = vmatprep.subr.mxu0 0.0
  %2043 = vmatpush1.msra.mxu0 0.0
  %2044 = vmatprep.subr.mxu0 0.0
  %2045 = vmatpush1.msra.mxu0 0.0
  %2046 = vmatprep.subr.mxu0 0.0
  %2047 = vmatpush1.msra.mxu0 0.0
  %2048 = vmatprep.subr.mxu0 0.0
  %2049 = vmatpush1.msra.mxu0 0.0
  %2050 = vmatprep.subr.mxu0 0.0
  %2051 = vmatpush1.msra.mxu0 0.0
  %2052 = vmatprep.subr.mxu0 0.0
  %2053 = vmatpush1.msra.mxu0 0.0
  %2054 = vmatprep.subr.mxu0 0.0
  %2055 = vmatpush1.msra.mxu0 0.0
  %2056 = vmatprep.subr.mxu0 0.0
  %2057 = vmatpush1.msra.mxu0 0.0
  %2058 = vmatprep.subr.mxu0 0.0
  %2059 = vmatpush1.msra.mxu0 0.0
  %2060 = vmatprep.subr.mxu0 0.0
  %2061 = vmatpush1.msra.mxu0 0.0
  %2062 = vmatprep.subr.mxu0 0.0
  %2063 = vmatpush1.msra.mxu0 0.0
  %2064 = vmatprep.subr.mxu0 0.0
  %2065 = vmatpush1.msra.mxu0 0.0
  %2066 = vmatprep.subr.mxu0 0.0
  %2067 = vmatpush1.msra.mxu0 0.0
  %2068 = vmatprep.subr.mxu0 0.0
  %2069 = vmatpush1.msra.mxu0 0.0
  %2070 = vmatprep.subr.mxu0 0.0
  %2071 = vmatpush1.msra.mxu0 0.0
  %2072 = vmatprep.subr.mxu0 0.0
  %2073 = vmatpush1.msra.mxu0 0.0
  %2074 = vmatprep.subr.mxu0 0.0
  %2075 = vmatpush1.msra.mxu0 0.0
  %2076 = vmatprep.mubr.f32.mxu0 0.0
  %2077 = vmatmul.mubr.f32.gmra.mrb[0].mxu0 %v1917
  %v2078 = vpop.f32.mrb[0].mxu0
  %v2079 = vadd.f32 %v1913, %v2078
  %v2080 = vpop.f32.mrb[0].mxu0
  %2081 = vmatprep.mubr.f32.mxu0 0.0
  %2082 = vmatmul.mubr.f32.gmra.mrb[0].mxu0 %v1920
  %v2083 = vpop.f32.mrb[0].mxu0
  %v2084 = vadd.f32 %v1913, %v2083
  %v2085 = vpop.f32.mrb[0].mxu0
  %2086 = vmatprep.mubr.f32.mxu0 0.0
  %2087 = vmatmul.mubr.f32.gmra.mrb[0].mxu0 %v1923
  %v2088 = vpop.f32.mrb[0].mxu0
  %v2089 = vadd.f32 %v1913, %v2088
  %v2090 = vpop.f32.mrb[0].mxu0
  %2091 = vmatprep.mubr.f32.mxu0 0.0
  %2092 = vmatmul.mubr.f32.gmra.mrb[0].mxu0 %v1926
  %v2093 = vpop.f32.mrb[0].mxu0
  %v2094 = vadd.f32 %v1913, %v2093
  %v2095 = vpop.f32.mrb[0].mxu0
  %2096 = vmatprep.mubr.f32.mxu0 0.0
  %2097 = vmatmul.mubr.f32.gmra.mrb[0].mxu0 %v1929
  %v2098 = vpop.f32.mrb[0].mxu0
  %v2099 = vadd.f32 %v1913, %v2098
  %v2100 = vpop.f32.mrb[0].mxu0
  %2101 = vmatprep.mubr.f32.mxu0 0.0
  %2102 = vmatmul.mubr.f32.gmra.mrb[0].mxu0 %v1932
  %v2103 = vpop.f32.mrb[0].mxu0
  %v2104 = vadd.f32 %v1913, %v2103
  %v2105 = vpop.f32.mrb[0].mxu0
  %2106 = vmatprep.mubr.f32.mxu0 0.0
  %2107 = vmatmul.mubr.f32.gmra.mrb[0].mxu0 %v1935
  %v2108 = vpop.f32.mrb[0].mxu0
  %v2109 = vadd.f32 %v1913, %v2108
  %v2110 = vpop.f32.mrb[0].mxu0
  %2111 = vmatprep.mubr.f32.mxu0 0.0
  %2112 = vmatmul.mubr.f32.gmra.mrb[0].mxu0 %v1938
  %v2113 = vpop.f32.mrb[0].mxu0
  %v2114 = vadd.f32 %v1913, %v2113
  %v2115 = vpop.f32.mrb[0].mxu0
  %2116 = vmatprep.mubr.f32.mxu0 0.0
  %2117 = vmatmul.mubr.f32.gmra.mrb[0].mxu0 %v1941
  %v2118 = vpop.f32.mrb[0].mxu0
  %v2119 = vadd.f32 %v1913, %v2118
  %v2120 = vpop.f32.mrb[0].mxu0
  %2121 = vmatprep.mubr.f32.mxu0 0.0
  %2122 = vmatmul.mubr.f32.gmra.mrb[0].mxu0 %v1944
  %v2123 = vpop.f32.mrb[0].mxu0
  %v2124 = vadd.f32 %v1913, %v2123
  %v2125 = vpop.f32.mrb[0].mxu0
  %2126 = vmatprep.mubr.f32.mxu0 0.0
  %2127 = vmatmul.mubr.f32.gmra.mrb[0].mxu0 %v1947
  %v2128 = vpop.f32.mrb[0].mxu0
  %v2129 = vadd.f32 %v1913, %v2128
  %v2130 = vpop.f32.mrb[0].mxu0
  %2131 = vmatprep.mubr.f32.mxu0 0.0
  %2132 = vmatmul.mubr.f32.gmra.mrb[0].mxu0 %v1950
  %v2133 = vpop.f32.mrb[0].mxu0
  %v2134 = vadd.f32 %v1913, %v2133
  %v2135 = vpop.f32.mrb[0].mxu0
  %2136 = vmatprep.mubr.f32.mxu0 0.0
  %2137 = vmatmul.mubr.f32.gmra.mrb[0].mxu0 %v1953
  %v2138 = vpop.f32.mrb[0].mxu0
  %v2139 = vadd.f32 %v1913, %v2138
  %v2140 = vpop.f32.mrb[0].mxu0
  %2141 = vmatprep.mubr.f32.mxu0 0.0
  %2142 = vmatmul.mubr.f32.gmra.mrb[0].mxu0 %v1956
  %v2143 = vpop.f32.mrb[0].mxu0
  %v2144 = vadd.f32 %v1913, %v2143
  %v2145 = vpop.f32.mrb[0].mxu0
  %2146 = vmatprep.mubr.f32.mxu0 0.0
  %2147 = vmatmul.mubr.f32.gmra.mrb[0].mxu0 %v1959
  %v2148 = vpop.f32.mrb[0].mxu0
  %v2149 = vadd.f32 %v1913, %v2148
  %v2150 = vpop.f32.mrb[0].mxu0
  %2151 = vmatprep.mubr.f32.mxu0 0.0
  %2152 = vmatmul.mubr.f32.gmra.mrb[0].mxu0 %v1962
  %v2153 = vpop.f32.mrb[0].mxu0
  %v2154 = vadd.f32 %v1913, %v2153
  %v2155 = vpop.f32.mrb[0].mxu0
  %2156 = vmatprep.mubr.f32.mxu0 0.0
  %2157 = vmatmul.mubr.f32.gmra.mrb[0].mxu0 %v1965
  %v2158 = vpop.f32.mrb[0].mxu0
  %v2159 = vadd.f32 %v1913, %v2158
  %v2160 = vpop.f32.mrb[0].mxu0
  %2161 = vmatprep.mubr.f32.mxu0 0.0
  %2162 = vmatmul.mubr.f32.gmra.mrb[0].mxu0 %v1968
  %v2163 = vpop.f32.mrb[0].mxu0
  %v2164 = vadd.f32 %v1913, %v2163
  %v2165 = vpop.f32.mrb[0].mxu0
  %2166 = vmatprep.mubr.f32.mxu0 0.0
  %2167 = vmatmul.mubr.f32.gmra.mrb[0].mxu0 %v1971
  %v2168 = vpop.f32.mrb[0].mxu0
  %v2169 = vadd.f32 %v1913, %v2168
  %v2170 = vpop.f32.mrb[0].mxu0
  %2171 = vmatprep.mubr.f32.mxu0 0.0
  %2172 = vmatmul.mubr.f32.gmra.mrb[0].mxu0 %v1974
  %v2173 = vpop.f32.mrb[0].mxu0
  %v2174 = vadd.f32 %v1913, %v2173
  %v2175 = vpop.f32.mrb[0].mxu0
  %2176 = vmatprep.mubr.f32.mxu0 0.0
  %2177 = vmatmul.mubr.f32.gmra.mrb[0].mxu0 %v1977
  %v2178 = vpop.f32.mrb[0].mxu0
  %v2179 = vadd.f32 %v1913, %v2178
  %v2180 = vpop.f32.mrb[0].mxu0
  %2181 = vmatprep.mubr.f32.mxu0 0.0
  %2182 = vmatmul.mubr.f32.gmra.mrb[0].mxu0 %v1980
  %v2183 = vpop.f32.mrb[0].mxu0
  %v2184 = vadd.f32 %v1913, %v2183
  %v2185 = vpop.f32.mrb[0].mxu0
  %2186 = vmatprep.mubr.f32.mxu0 0.0
  %2187 = vmatmul.mubr.f32.gmra.mrb[0].mxu0 %v1983
  %v2188 = vpop.f32.mrb[0].mxu0
  %v2189 = vadd.f32 %v1913, %v2188
  %v2190 = vpop.f32.mrb[0].mxu0
  %2191 = vmatprep.mubr.f32.mxu0 0.0
  %2192 = vmatmul.mubr.f32.gmra.mrb[0].mxu0 %v1986
  %v2193 = vpop.f32.mrb[0].mxu0
  %v2194 = vadd.f32 %v1913, %v2193
  %v2195 = vpop.f32.mrb[0].mxu0
  %2196 = vmatprep.mubr.f32.mxu0 0.0
  %2197 = vmatmul.mubr.f32.gmra.mrb[0].mxu0 %v1989
  %v2198 = vpop.f32.mrb[0].mxu0
  %v2199 = vadd.f32 %v1913, %v2198
  %v2200 = vpop.f32.mrb[0].mxu0
  %2201 = vmatprep.mubr.f32.mxu0 0.0
  %2202 = vmatmul.mubr.f32.gmra.mrb[0].mxu0 %v1992
  %v2203 = vpop.f32.mrb[0].mxu0
  %v2204 = vadd.f32 %v1913, %v2203
  %v2205 = vpop.f32.mrb[0].mxu0
  %2206 = vmatprep.mubr.f32.mxu0 0.0
  %2207 = vmatmul.mubr.f32.gmra.mrb[0].mxu0 %v1995
  %v2208 = vpop.f32.mrb[0].mxu0
  %v2209 = vadd.f32 %v1913, %v2208
  %v2210 = vpop.f32.mrb[0].mxu0
  %2211 = vmatprep.mubr.f32.mxu0 0.0
  %2212 = vmatmul.mubr.f32.gmra.mrb[0].mxu0 %v1998
  %v2213 = vpop.f32.mrb[0].mxu0
  %v2214 = vadd.f32 %v1913, %v2213
  %v2215 = vpop.f32.mrb[0].mxu0
  %2216 = vmatprep.mubr.f32.mxu0 0.0
  %2217 = vmatmul.mubr.f32.gmra.mrb[0].mxu0 %v2001
  %v2218 = vpop.f32.mrb[0].mxu0
  %v2219 = vadd.f32 %v1913, %v2218
  %v2220 = vpop.f32.mrb[0].mxu0
  %2221 = vmatprep.mubr.f32.mxu0 0.0
  %2222 = vmatmul.mubr.f32.gmra.mrb[0].mxu0 %v2004
  %v2223 = vpop.f32.mrb[0].mxu0
  %v2224 = vadd.f32 %v1913, %v2223
  %v2225 = vpop.f32.mrb[0].mxu0
  %2226 = vmatprep.mubr.f32.mxu0 0.0
  %2227 = vmatmul.mubr.f32.gmra.mrb[0].mxu0 %v2007
  %v2228 = vpop.f32.mrb[0].mxu0
  %v2229 = vadd.f32 %v1913, %v2228
  %v2230 = vpop.f32.mrb[0].mxu0
  %2231 = vmatprep.mubr.f32.mxu0 0.0
  %2232 = vmatmul.mubr.f32.gmra.mrb[0].mxu0 %v2010
  %v2233 = vpop.f32.mrb[0].mxu0
  %v2234 = vadd.f32 %v1913, %v2233
  %v2235 = vpop.f32.mrb[0].mxu0
  %2236 = vdwg.mxu0
  %v2237 = vld [vmem:[%s3] sm:$0xff]
  %v2238 = vld [vmem:[%s3 + $0x8] sm:$0xff]
  %v2239 = vld [vmem:[%s3 + $0x18] sm:$0xff]
  %v2240 = vld [vmem:[%s3 + $0x20] sm:$0xff]
  %v2241 = vld [vmem:[%s3 + $0x30] sm:$0xff]
  %v2242 = vld [vmem:[%s3 + $0x38] sm:$0xff]
  %v2243 = vld [vmem:[%s3 + $0x48] sm:$0xff]
  %v2244 = vld [vmem:[%s3 + $0x50] sm:$0xff]
  %v2245 = vld [vmem:[%s3 + $0x10] sm:$0xff]
  %v2246 = vld [vmem:[%s3 + $0x28] sm:$0xff]
  %v2247 = vld [vmem:[%s3 + $0x40] sm:$0xff]
  %v2248 = vld [vmem:[%s3 + $0x58] sm:$0xff]
  %v2249 = vcombine.low %v2079, %v2119
  %v2250 = vcombine.high %v2079, %v2119
  %v2252 = vunpack.c.l.s4 1983009808
  %v2253 = vunpack.c.0.s8 %v2252
  %v2254 = vlaneseq
  %v2255 = vshrl.u32 %v2254, 7
  %v2256 = vsub.s32 %v2253, %v2255
  %v2257 = vrot.slane %v2249, %v2256
  %v2259 = vunpack.c.l.s4 1983009808
  %v2260 = vunpack.c.0.s8 %v2259
  %v2261 = vlaneseq
  %v2262 = vshrl.u32 %v2261, 7
  %v2263 = vsub.s32 %v2260, %v2262
  %v2264 = vrot.slane %v2250, %v2263
  %v2265 = vcombine.low %v2099, %v2139
  %v2266 = vcombine.high %v2099, %v2139
  %v2268 = vunpack.c.l.s4 1983009808
  %v2269 = vunpack.c.0.s8 %v2268
  %v2270 = vlaneseq
  %v2271 = vshrl.u32 %v2270, 7
  %v2272 = vsub.s32 %v2269, %v2271
  %v2273 = vrot.slane %v2265, %v2272
  %v2275 = vunpack.c.l.s4 1983009808
  %v2276 = vunpack.c.0.s8 %v2275
  %v2277 = vlaneseq
  %v2278 = vshrl.u32 %v2277, 7
  %v2279 = vsub.s32 %v2276, %v2278
  %v2280 = vrot.slane %v2266, %v2279
  %v2281 = vcombine.low %v2159, %v2199
  %v2282 = vcombine.high %v2159, %v2199
  %v2284 = vunpack.c.l.s4 1983009808
  %v2285 = vunpack.c.0.s8 %v2284
  %v2286 = vlaneseq
  %v2287 = vshrl.u32 %v2286, 7
  %v2288 = vsub.s32 %v2285, %v2287
  %v2289 = vrot.slane %v2281, %v2288
  %v2291 = vunpack.c.l.s4 1983009808
  %v2292 = vunpack.c.0.s8 %v2291
  %v2293 = vlaneseq
  %v2294 = vshrl.u32 %v2293, 7
  %v2295 = vsub.s32 %v2292, %v2294
  %v2296 = vrot.slane %v2282, %v2295
  %v2297 = vcombine.low %v2179, %v2219
  %v2298 = vcombine.high %v2179, %v2219
  %v2300 = vunpack.c.l.s4 1983009808
  %v2301 = vunpack.c.0.s8 %v2300
  %v2302 = vlaneseq
  %v2303 = vshrl.u32 %v2302, 7
  %v2304 = vsub.s32 %v2301, %v2303
  %v2305 = vrot.slane %v2297, %v2304
  %v2307 = vunpack.c.l.s4 1983009808
  %v2308 = vunpack.c.0.s8 %v2307
  %v2309 = vlaneseq
  %v2310 = vshrl.u32 %v2309, 7
  %v2311 = vsub.s32 %v2308, %v2310
  %v2312 = vrot.slane %v2298, %v2311
  %v2313 = vcombine.low %v2257, %v2273
  %v2314 = vcombine.high %v2257, %v2273
  %v2316 = vunpack.c.l.s4 1934713408
  %v2317 = vunpack.c.0.s8 %v2316
  %v2318 = vlaneseq
  %v2319 = vshrl.u32 %v2318, 7
  %v2320 = vsub.s32 %v2317, %v2319
  %v2321 = vrot.slane %v2313, %v2320
  %v2323 = vunpack.c.l.s4 1934713408
  %v2324 = vunpack.c.0.s8 %v2323
  %v2325 = vlaneseq
  %v2326 = vshrl.u32 %v2325, 7
  %v2327 = vsub.s32 %v2324, %v2326
  %v2328 = vrot.slane %v2314, %v2327
  %v2329 = vcombine.low %v2264, %v2280
  %v2330 = vcombine.high %v2264, %v2280
  %v2332 = vunpack.c.l.s4 1934713408
  %v2333 = vunpack.c.0.s8 %v2332
  %v2334 = vlaneseq
  %v2335 = vshrl.u32 %v2334, 7
  %v2336 = vsub.s32 %v2333, %v2335
  %v2337 = vrot.slane %v2329, %v2336
  %v2339 = vunpack.c.l.s4 1934713408
  %v2340 = vunpack.c.0.s8 %v2339
  %v2341 = vlaneseq
  %v2342 = vshrl.u32 %v2341, 7
  %v2343 = vsub.s32 %v2340, %v2342
  %v2344 = vrot.slane %v2330, %v2343
  %v2345 = vcombine.low %v2289, %v2305
  %v2346 = vcombine.high %v2289, %v2305
  %v2348 = vunpack.c.l.s4 1934713408
  %v2349 = vunpack.c.0.s8 %v2348
  %v2350 = vlaneseq
  %v2351 = vshrl.u32 %v2350, 7
  %v2352 = vsub.s32 %v2349, %v2351
  %v2353 = vrot.slane %v2345, %v2352
  %v2355 = vunpack.c.l.s4 1934713408
  %v2356 = vunpack.c.0.s8 %v2355
  %v2357 = vlaneseq
  %v2358 = vshrl.u32 %v2357, 7
  %v2359 = vsub.s32 %v2356, %v2358
  %v2360 = vrot.slane %v2346, %v2359
  %v2361 = vcombine.low %v2296, %v2312
  %v2362 = vcombine.high %v2296, %v2312
  %v2364 = vunpack.c.l.s4 1934713408
  %v2365 = vunpack.c.0.s8 %v2364
  %v2366 = vlaneseq
  %v2367 = vshrl.u32 %v2366, 7
  %v2368 = vsub.s32 %v2365, %v2367
  %v2369 = vrot.slane %v2361, %v2368
  %v2371 = vunpack.c.l.s4 1934713408
  %v2372 = vunpack.c.0.s8 %v2371
  %v2373 = vlaneseq
  %v2374 = vshrl.u32 %v2373, 7
  %v2375 = vsub.s32 %v2372, %v2374
  %v2376 = vrot.slane %v2362, %v2375
  %v2377 = vcombine.low %v2321, %v2353
  %v2378 = vcombine.high %v2321, %v2353
  %v2379 = vcombine.low %v2328, %v2360
  %v2380 = vcombine.high %v2328, %v2360
  %v2381 = vcombine.low %v2337, %v2369
  %v2382 = vcombine.high %v2337, %v2369
  %v2383 = vcombine.low %v2344, %v2376
  %v2384 = vcombine.high %v2344, %v2376
  %v2385 = vcombine.low %v2084, %v2124
  %v2386 = vcombine.high %v2084, %v2124
  %v2388 = vunpack.c.l.s4 1983009808
  %v2389 = vunpack.c.0.s8 %v2388
  %v2390 = vlaneseq
  %v2391 = vshrl.u32 %v2390, 7
  %v2392 = vsub.s32 %v2389, %v2391
  %v2393 = vrot.slane %v2385, %v2392
  %v2395 = vunpack.c.l.s4 1983009808
  %v2396 = vunpack.c.0.s8 %v2395
  %v2397 = vlaneseq
  %v2398 = vshrl.u32 %v2397, 7
  %v2399 = vsub.s32 %v2396, %v2398
  %v2400 = vrot.slane %v2386, %v2399
  %v2401 = vcombine.low %v2104, %v2144
  %v2402 = vcombine.high %v2104, %v2144
  %v2404 = vunpack.c.l.s4 1983009808
  %v2405 = vunpack.c.0.s8 %v2404
  %v2406 = vlaneseq
  %v2407 = vshrl.u32 %v2406, 7
  %v2408 = vsub.s32 %v2405, %v2407
  %v2409 = vrot.slane %v2401, %v2408
  %v2411 = vunpack.c.l.s4 1983009808
  %v2412 = vunpack.c.0.s8 %v2411
  %v2413 = vlaneseq
  %v2414 = vshrl.u32 %v2413, 7
  %v2415 = vsub.s32 %v2412, %v2414
  %v2416 = vrot.slane %v2402, %v2415
  %v2417 = vcombine.low %v2164, %v2204
  %v2418 = vcombine.high %v2164, %v2204
  %v2420 = vunpack.c.l.s4 1983009808
  %v2421 = vunpack.c.0.s8 %v2420
  %v2422 = vlaneseq
  %v2423 = vshrl.u32 %v2422, 7
  %v2424 = vsub.s32 %v2421, %v2423
  %v2425 = vrot.slane %v2417, %v2424
  %v2427 = vunpack.c.l.s4 1983009808
  %v2428 = vunpack.c.0.s8 %v2427
  %v2429 = vlaneseq
  %v2430 = vshrl.u32 %v2429, 7
  %v2431 = vsub.s32 %v2428, %v2430
  %v2432 = vrot.slane %v2418, %v2431
  %v2433 = vcombine.low %v2184, %v2224
  %v2434 = vcombine.high %v2184, %v2224
  %v2436 = vunpack.c.l.s4 1983009808
  %v2437 = vunpack.c.0.s8 %v2436
  %v2438 = vlaneseq
  %v2439 = vshrl.u32 %v2438, 7
  %v2440 = vsub.s32 %v2437, %v2439
  %v2441 = vrot.slane %v2433, %v2440
  %v2443 = vunpack.c.l.s4 1983009808
  %v2444 = vunpack.c.0.s8 %v2443
  %v2445 = vlaneseq
  %v2446 = vshrl.u32 %v2445, 7
  %v2447 = vsub.s32 %v2444, %v2446
  %v2448 = vrot.slane %v2434, %v2447
  %v2449 = vcombine.low %v2393, %v2409
  %v2450 = vcombine.high %v2393, %v2409
  %v2452 = vunpack.c.l.s4 1934713408
  %v2453 = vunpack.c.0.s8 %v2452
  %v2454 = vlaneseq
  %v2455 = vshrl.u32 %v2454, 7
  %v2456 = vsub.s32 %v2453, %v2455
  %v2457 = vrot.slane %v2449, %v2456
  %v2459 = vunpack.c.l.s4 1934713408
  %v2460 = vunpack.c.0.s8 %v2459
  %v2461 = vlaneseq
  %v2462 = vshrl.u32 %v2461, 7
  %v2463 = vsub.s32 %v2460, %v2462
  %v2464 = vrot.slane %v2450, %v2463
  %v2465 = vcombine.low %v2400, %v2416
  %v2466 = vcombine.high %v2400, %v2416
  %v2468 = vunpack.c.l.s4 1934713408
  %v2469 = vunpack.c.0.s8 %v2468
  %v2470 = vlaneseq
  %v2471 = vshrl.u32 %v2470, 7
  %v2472 = vsub.s32 %v2469, %v2471
  %v2473 = vrot.slane %v2465, %v2472
  %v2475 = vunpack.c.l.s4 1934713408
  %v2476 = vunpack.c.0.s8 %v2475
  %v2477 = vlaneseq
  %v2478 = vshrl.u32 %v2477, 7
  %v2479 = vsub.s32 %v2476, %v2478
  %v2480 = vrot.slane %v2466, %v2479
  %v2481 = vcombine.low %v2425, %v2441
  %v2482 = vcombine.high %v2425, %v2441
  %v2484 = vunpack.c.l.s4 1934713408
  %v2485 = vunpack.c.0.s8 %v2484
  %v2486 = vlaneseq
  %v2487 = vshrl.u32 %v2486, 7
  %v2488 = vsub.s32 %v2485, %v2487
  %v2489 = vrot.slane %v2481, %v2488
  %v2491 = vunpack.c.l.s4 1934713408
  %v2492 = vunpack.c.0.s8 %v2491
  %v2493 = vlaneseq
  %v2494 = vshrl.u32 %v2493, 7
  %v2495 = vsub.s32 %v2492, %v2494
  %v2496 = vrot.slane %v2482, %v2495
  %v2497 = vcombine.low %v2432, %v2448
  %v2498 = vcombine.high %v2432, %v2448
  %v2500 = vunpack.c.l.s4 1934713408
  %v2501 = vunpack.c.0.s8 %v2500
  %v2502 = vlaneseq
  %v2503 = vshrl.u32 %v2502, 7
  %v2504 = vsub.s32 %v2501, %v2503
  %v2505 = vrot.slane %v2497, %v2504
  %v2507 = vunpack.c.l.s4 1934713408
  %v2508 = vunpack.c.0.s8 %v2507
  %v2509 = vlaneseq
  %v2510 = vshrl.u32 %v2509, 7
  %v2511 = vsub.s32 %v2508, %v2510
  %v2512 = vrot.slane %v2498, %v2511
  %v2513 = vcombine.low %v2457, %v2489
  %v2514 = vcombine.high %v2457, %v2489
  %v2515 = vcombine.low %v2464, %v2496
  %v2516 = vcombine.high %v2464, %v2496
  %v2517 = vcombine.low %v2473, %v2505
  %v2518 = vcombine.high %v2473, %v2505
  %v2519 = vcombine.low %v2480, %v2512
  %v2520 = vcombine.high %v2480, %v2512
  %v2521 = vcombine.low %v2089, %v2129
  %v2522 = vcombine.high %v2089, %v2129
  %v2524 = vunpack.c.l.s4 1983009808
  %v2525 = vunpack.c.0.s8 %v2524
  %v2526 = vlaneseq
  %v2527 = vshrl.u32 %v2526, 7
  %v2528 = vsub.s32 %v2525, %v2527
  %v2529 = vrot.slane %v2521, %v2528
  %v2531 = vunpack.c.l.s4 1983009808
  %v2532 = vunpack.c.0.s8 %v2531
  %v2533 = vlaneseq
  %v2534 = vshrl.u32 %v2533, 7
  %v2535 = vsub.s32 %v2532, %v2534
  %v2536 = vrot.slane %v2522, %v2535
  %v2537 = vcombine.low %v2109, %v2149
  %v2538 = vcombine.high %v2109, %v2149
  %v2540 = vunpack.c.l.s4 1983009808
  %v2541 = vunpack.c.0.s8 %v2540
  %v2542 = vlaneseq
  %v2543 = vshrl.u32 %v2542, 7
  %v2544 = vsub.s32 %v2541, %v2543
  %v2545 = vrot.slane %v2537, %v2544
  %v2547 = vunpack.c.l.s4 1983009808
  %v2548 = vunpack.c.0.s8 %v2547
  %v2549 = vlaneseq
  %v2550 = vshrl.u32 %v2549, 7
  %v2551 = vsub.s32 %v2548, %v2550
  %v2552 = vrot.slane %v2538, %v2551
  %v2553 = vcombine.low %v2169, %v2209
  %v2554 = vcombine.high %v2169, %v2209
  %v2556 = vunpack.c.l.s4 1983009808
  %v2557 = vunpack.c.0.s8 %v2556
  %v2558 = vlaneseq
  %v2559 = vshrl.u32 %v2558, 7
  %v2560 = vsub.s32 %v2557, %v2559
  %v2561 = vrot.slane %v2553, %v2560
  %v2563 = vunpack.c.l.s4 1983009808
  %v2564 = vunpack.c.0.s8 %v2563
  %v2565 = vlaneseq
  %v2566 = vshrl.u32 %v2565, 7
  %v2567 = vsub.s32 %v2564, %v2566
  %v2568 = vrot.slane %v2554, %v2567
  %v2569 = vcombine.low %v2189, %v2229
  %v2570 = vcombine.high %v2189, %v2229
  %v2572 = vunpack.c.l.s4 1983009808
  %v2573 = vunpack.c.0.s8 %v2572
  %v2574 = vlaneseq
  %v2575 = vshrl.u32 %v2574, 7
  %v2576 = vsub.s32 %v2573, %v2575
  %v2577 = vrot.slane %v2569, %v2576
  %v2579 = vunpack.c.l.s4 1983009808
  %v2580 = vunpack.c.0.s8 %v2579
  %v2581 = vlaneseq
  %v2582 = vshrl.u32 %v2581, 7
  %v2583 = vsub.s32 %v2580, %v2582
  %v2584 = vrot.slane %v2570, %v2583
  %v2585 = vcombine.low %v2529, %v2545
  %v2586 = vcombine.high %v2529, %v2545
  %v2588 = vunpack.c.l.s4 1934713408
  %v2589 = vunpack.c.0.s8 %v2588
  %v2590 = vlaneseq
  %v2591 = vshrl.u32 %v2590, 7
  %v2592 = vsub.s32 %v2589, %v2591
  %v2593 = vrot.slane %v2585, %v2592
  %v2595 = vunpack.c.l.s4 1934713408
  %v2596 = vunpack.c.0.s8 %v2595
  %v2597 = vlaneseq
  %v2598 = vshrl.u32 %v2597, 7
  %v2599 = vsub.s32 %v2596, %v2598
  %v2600 = vrot.slane %v2586, %v2599
  %v2601 = vcombine.low %v2536, %v2552
  %v2602 = vcombine.high %v2536, %v2552
  %v2604 = vunpack.c.l.s4 1934713408
  %v2605 = vunpack.c.0.s8 %v2604
  %v2606 = vlaneseq
  %v2607 = vshrl.u32 %v2606, 7
  %v2608 = vsub.s32 %v2605, %v2607
  %v2609 = vrot.slane %v2601, %v2608
  %v2611 = vunpack.c.l.s4 1934713408
  %v2612 = vunpack.c.0.s8 %v2611
  %v2613 = vlaneseq
  %v2614 = vshrl.u32 %v2613, 7
  %v2615 = vsub.s32 %v2612, %v2614
  %v2616 = vrot.slane %v2602, %v2615
  %v2617 = vcombine.low %v2561, %v2577
  %v2618 = vcombine.high %v2561, %v2577
  %v2620 = vunpack.c.l.s4 1934713408
  %v2621 = vunpack.c.0.s8 %v2620
  %v2622 = vlaneseq
  %v2623 = vshrl.u32 %v2622, 7
  %v2624 = vsub.s32 %v2621, %v2623
  %v2625 = vrot.slane %v2617, %v2624
  %v2627 = vunpack.c.l.s4 1934713408
  %v2628 = vunpack.c.0.s8 %v2627
  %v2629 = vlaneseq
  %v2630 = vshrl.u32 %v2629, 7
  %v2631 = vsub.s32 %v2628, %v2630
  %v2632 = vrot.slane %v2618, %v2631
  %v2633 = vcombine.low %v2568, %v2584
  %v2634 = vcombine.high %v2568, %v2584
  %v2636 = vunpack.c.l.s4 1934713408
  %v2637 = vunpack.c.0.s8 %v2636
  %v2638 = vlaneseq
  %v2639 = vshrl.u32 %v2638, 7
  %v2640 = vsub.s32 %v2637, %v2639
  %v2641 = vrot.slane %v2633, %v2640
  %v2643 = vunpack.c.l.s4 1934713408
  %v2644 = vunpack.c.0.s8 %v2643
  %v2645 = vlaneseq
  %v2646 = vshrl.u32 %v2645, 7
  %v2647 = vsub.s32 %v2644, %v2646
  %v2648 = vrot.slane %v2634, %v2647
  %v2649 = vcombine.low %v2593, %v2625
  %v2650 = vcombine.high %v2593, %v2625
  %v2651 = vcombine.low %v2600, %v2632
  %v2652 = vcombine.high %v2600, %v2632
  %v2653 = vcombine.low %v2609, %v2641
  %v2654 = vcombine.high %v2609, %v2641
  %v2655 = vcombine.low %v2616, %v2648
  %v2656 = vcombine.high %v2616, %v2648
  %v2657 = vcombine.low %v2094, %v2134
  %v2658 = vcombine.high %v2094, %v2134
  %v2660 = vunpack.c.l.s4 1983009808
  %v2661 = vunpack.c.0.s8 %v2660
  %v2662 = vlaneseq
  %v2663 = vshrl.u32 %v2662, 7
  %v2664 = vsub.s32 %v2661, %v2663
  %v2665 = vrot.slane %v2657, %v2664
  %v2667 = vunpack.c.l.s4 1983009808
  %v2668 = vunpack.c.0.s8 %v2667
  %v2669 = vlaneseq
  %v2670 = vshrl.u32 %v2669, 7
  %v2671 = vsub.s32 %v2668, %v2670
  %v2672 = vrot.slane %v2658, %v2671
  %v2673 = vcombine.low %v2114, %v2154
  %v2674 = vcombine.high %v2114, %v2154
  %v2676 = vunpack.c.l.s4 1983009808
  %v2677 = vunpack.c.0.s8 %v2676
  %v2678 = vlaneseq
  %v2679 = vshrl.u32 %v2678, 7
  %v2680 = vsub.s32 %v2677, %v2679
  %v2681 = vrot.slane %v2673, %v2680
  %v2683 = vunpack.c.l.s4 1983009808
  %v2684 = vunpack.c.0.s8 %v2683
  %v2685 = vlaneseq
  %v2686 = vshrl.u32 %v2685, 7
  %v2687 = vsub.s32 %v2684, %v2686
  %v2688 = vrot.slane %v2674, %v2687
  %v2689 = vcombine.low %v2174, %v2214
  %v2690 = vcombine.high %v2174, %v2214
  %v2692 = vunpack.c.l.s4 1983009808
  %v2693 = vunpack.c.0.s8 %v2692
  %v2694 = vlaneseq
  %v2695 = vshrl.u32 %v2694, 7
  %v2696 = vsub.s32 %v2693, %v2695
  %v2697 = vrot.slane %v2689, %v2696
  %v2699 = vunpack.c.l.s4 1983009808
  %v2700 = vunpack.c.0.s8 %v2699
  %v2701 = vlaneseq
  %v2702 = vshrl.u32 %v2701, 7
  %v2703 = vsub.s32 %v2700, %v2702
  %v2704 = vrot.slane %v2690, %v2703
  %v2705 = vcombine.low %v2194, %v2234
  %v2706 = vcombine.high %v2194, %v2234
  %v2708 = vunpack.c.l.s4 1983009808
  %v2709 = vunpack.c.0.s8 %v2708
  %v2710 = vlaneseq
  %v2711 = vshrl.u32 %v2710, 7
  %v2712 = vsub.s32 %v2709, %v2711
  %v2713 = vrot.slane %v2705, %v2712
  %v2715 = vunpack.c.l.s4 1983009808
  %v2716 = vunpack.c.0.s8 %v2715
  %v2717 = vlaneseq
  %v2718 = vshrl.u32 %v2717, 7
  %v2719 = vsub.s32 %v2716, %v2718
  %v2720 = vrot.slane %v2706, %v2719
  %v2721 = vcombine.low %v2665, %v2681
  %v2722 = vcombine.high %v2665, %v2681
  %v2724 = vunpack.c.l.s4 1934713408
  %v2725 = vunpack.c.0.s8 %v2724
  %v2726 = vlaneseq
  %v2727 = vshrl.u32 %v2726, 7
  %v2728 = vsub.s32 %v2725, %v2727
  %v2729 = vrot.slane %v2721, %v2728
  %v2731 = vunpack.c.l.s4 1934713408
  %v2732 = vunpack.c.0.s8 %v2731
  %v2733 = vlaneseq
  %v2734 = vshrl.u32 %v2733, 7
  %v2735 = vsub.s32 %v2732, %v2734
  %v2736 = vrot.slane %v2722, %v2735
  %v2737 = vcombine.low %v2672, %v2688
  %v2738 = vcombine.high %v2672, %v2688
  %v2740 = vunpack.c.l.s4 1934713408
  %v2741 = vunpack.c.0.s8 %v2740
  %v2742 = vlaneseq
  %v2743 = vshrl.u32 %v2742, 7
  %v2744 = vsub.s32 %v2741, %v2743
  %v2745 = vrot.slane %v2737, %v2744
  %v2747 = vunpack.c.l.s4 1934713408
  %v2748 = vunpack.c.0.s8 %v2747
  %v2749 = vlaneseq
  %v2750 = vshrl.u32 %v2749, 7
  %v2751 = vsub.s32 %v2748, %v2750
  %v2752 = vrot.slane %v2738, %v2751
  %v2753 = vcombine.low %v2697, %v2713
  %v2754 = vcombine.high %v2697, %v2713
  %v2756 = vunpack.c.l.s4 1934713408
  %v2757 = vunpack.c.0.s8 %v2756
  %v2758 = vlaneseq
  %v2759 = vshrl.u32 %v2758, 7
  %v2760 = vsub.s32 %v2757, %v2759
  %v2761 = vrot.slane %v2753, %v2760
  %v2763 = vunpack.c.l.s4 1934713408
  %v2764 = vunpack.c.0.s8 %v2763
  %v2765 = vlaneseq
  %v2766 = vshrl.u32 %v2765, 7
  %v2767 = vsub.s32 %v2764, %v2766
  %v2768 = vrot.slane %v2754, %v2767
  %v2769 = vcombine.low %v2704, %v2720
  %v2770 = vcombine.high %v2704, %v2720
  %v2772 = vunpack.c.l.s4 1934713408
  %v2773 = vunpack.c.0.s8 %v2772
  %v2774 = vlaneseq
  %v2775 = vshrl.u32 %v2774, 7
  %v2776 = vsub.s32 %v2773, %v2775
  %v2777 = vrot.slane %v2769, %v2776
  %v2779 = vunpack.c.l.s4 1934713408
  %v2780 = vunpack.c.0.s8 %v2779
  %v2781 = vlaneseq
  %v2782 = vshrl.u32 %v2781, 7
  %v2783 = vsub.s32 %v2780, %v2782
  %v2784 = vrot.slane %v2770, %v2783
  %v2785 = vcombine.low %v2729, %v2761
  %v2786 = vcombine.high %v2729, %v2761
  %v2787 = vcombine.low %v2736, %v2768
  %v2788 = vcombine.high %v2736, %v2768
  %v2789 = vcombine.low %v2745, %v2777
  %v2790 = vcombine.high %v2745, %v2777
  %v2791 = vcombine.low %v2752, %v2784
  %v2792 = vcombine.high %v2752, %v2784
  %v2793 = vld [vmem:[%s5] sm:$0x3]
  %v2795 = vlaneseq
  %v2796 = vshrl.u32 %v2795, 7
  %v2797 = vsub.s32 0, %v2796
  %v2798 = vrot.slane %v2793, %v2797
  %v2799 = vlaneseq
  %v2800 = vshrl.u32 %v2799, 7
  %v2801 = vsub.s32 1, %v2800
  %v2802 = vrot.slane %v2793, %v2801
  %vm2805 = vcmask 261120
  %v2807 = vsel %vm2805, %v2377, 0
  %v2810 = vsel %vm2805, %v2378, 0
  %v2813 = vsel %vm2805, %v2379, 0
  %v2816 = vsel %vm2805, %v2380, 0
  %v2819 = vsel %vm2805, %v2381, 0
  %v2822 = vsel %vm2805, %v2382, 0
  %v2825 = vsel %vm2805, %v2383, 0
  %v2828 = vsel %vm2805, %v2384, 0
  %v2831 = vsel %vm2805, %v2513, 0
  %v2834 = vsel %vm2805, %v2514, 0
  %v2837 = vsel %vm2805, %v2515, 0
  %v2840 = vsel %vm2805, %v2516, 0
  %v2843 = vsel %vm2805, %v2517, 0
  %v2846 = vsel %vm2805, %v2518, 0
  %v2849 = vsel %vm2805, %v2519, 0
  %v2852 = vsel %vm2805, %v2520, 0
  %v2855 = vsel %vm2805, %v2649, 0
  %v2858 = vsel %vm2805, %v2650, 0
  %v2861 = vsel %vm2805, %v2651, 0
  %v2864 = vsel %vm2805, %v2652, 0
  %v2867 = vsel %vm2805, %v2653, 0
  %v2870 = vsel %vm2805, %v2654, 0
  %v2873 = vsel %vm2805, %v2655, 0
  %v2876 = vsel %vm2805, %v2656, 0
  %v2879 = vsel %vm2805, %v2785, 0
  %v2882 = vsel %vm2805, %v2786, 0
  %v2885 = vsel %vm2805, %v2787, 0
  %v2888 = vsel %vm2805, %v2788, 0
  %v2891 = vsel %vm2805, %v2789, 0
  %v2894 = vsel %vm2805, %v2790, 0
  %v2897 = vsel %vm2805, %v2791, 0
  %v2900 = vsel %vm2805, %v2792, 0
  %2902 = vmatprep.subr.mxu0 %v2238
  %2903 = vmatpush1.msra.mxu0 %v2237
  %2904 = vmatprep.subr.mxu0 %v2240
  %2905 = vmatpush1.msra.mxu0 %v2239
  %2906 = vmatprep.subr.mxu0 %v2242
  %2907 = vmatpush1.msra.mxu0 %v2241
  %2908 = vmatprep.subr.mxu0 %v2244
  %2909 = vmatpush1.msra.mxu0 %v2243
  %2910 = vmatprep.subr.mxu0 0.0
  %2911 = vmatpush1.msra.mxu0 0.0
  %2912 = vmatprep.subr.mxu0 0.0
  %2913 = vmatpush1.msra.mxu0 0.0
  %2914 = vmatprep.subr.mxu0 0.0
  %2915 = vmatpush1.msra.mxu0 0.0
  %2916 = vmatprep.subr.mxu0 0.0
  %2917 = vmatpush1.msra.mxu0 0.0
  %2918 = vmatprep.subr.mxu0 0.0
  %2919 = vmatpush1.msra.mxu0 0.0
  %2920 = vmatprep.subr.mxu0 0.0
  %2921 = vmatpush1.msra.mxu0 0.0
  %2922 = vmatprep.subr.mxu0 0.0
  %2923 = vmatpush1.msra.mxu0 0.0
  %2924 = vmatprep.subr.mxu0 0.0
  %2925 = vmatpush1.msra.mxu0 0.0
  %2926 = vmatprep.subr.mxu0 0.0
  %2927 = vmatpush1.msra.mxu0 0.0
  %2928 = vmatprep.subr.mxu0 0.0
  %2929 = vmatpush1.msra.mxu0 0.0
  %2930 = vmatprep.subr.mxu0 0.0
  %2931 = vmatpush1.msra.mxu0 0.0
  %2932 = vmatprep.subr.mxu0 0.0
  %2933 = vmatpush1.msra.mxu0 0.0
  %2934 = vmatprep.subr.mxu0 0.0
  %2935 = vmatpush1.msra.mxu0 0.0
  %2936 = vmatprep.subr.mxu0 0.0
  %2937 = vmatpush1.msra.mxu0 0.0
  %2938 = vmatprep.subr.mxu0 0.0
  %2939 = vmatpush1.msra.mxu0 0.0
  %2940 = vmatprep.subr.mxu0 0.0
  %2941 = vmatpush1.msra.mxu0 0.0
  %2942 = vmatprep.subr.mxu0 0.0
  %2943 = vmatpush1.msra.mxu0 0.0
  %2944 = vmatprep.subr.mxu0 0.0
  %2945 = vmatpush1.msra.mxu0 0.0
  %2946 = vmatprep.subr.mxu0 0.0
  %2947 = vmatpush1.msra.mxu0 0.0
  %2948 = vmatprep.subr.mxu0 0.0
  %2949 = vmatpush1.msra.mxu0 0.0
  %2950 = vmatprep.subr.mxu0 0.0
  %2951 = vmatpush1.msra.mxu0 0.0
  %2952 = vmatprep.subr.mxu0 0.0
  %2953 = vmatpush1.msra.mxu0 0.0
  %2954 = vmatprep.subr.mxu0 0.0
  %2955 = vmatpush1.msra.mxu0 0.0
  %2956 = vmatprep.subr.mxu0 0.0
  %2957 = vmatpush1.msra.mxu0 0.0
  %2958 = vmatprep.subr.mxu0 0.0
  %2959 = vmatpush1.msra.mxu0 0.0
  %2960 = vmatprep.subr.mxu0 0.0
  %2961 = vmatpush1.msra.mxu0 0.0
  %2962 = vmatprep.subr.mxu0 0.0
  %2963 = vmatpush1.msra.mxu0 0.0
  %2964 = vmatprep.subr.mxu0 0.0
  %2965 = vmatpush1.msra.mxu0 0.0
  %2966 = vmatprep.mubr.f32.mxu0 0.0
  %2967 = vmatmul.mubr.f32.gmra.mrb[0].mxu0 %v2807
  %v2968 = vpop.f32.mrb[0].mxu0
  %v2969 = vadd.f32 %v2798, %v2968
  %v2970 = vpop.f32.mrb[0].mxu0
  %v2971 = vadd.f32 %v2802, %v2970
  %2972 = vmatprep.mubr.f32.mxu0 0.0
  %2973 = vmatmul.mubr.f32.gmra.mrb[0].mxu0 %v2810
  %v2974 = vpop.f32.mrb[0].mxu0
  %v2975 = vadd.f32 %v2798, %v2974
  %v2976 = vpop.f32.mrb[0].mxu0
  %v2977 = vadd.f32 %v2802, %v2976
  %2978 = vmatprep.mubr.f32.mxu0 0.0
  %2979 = vmatmul.mubr.f32.gmra.mrb[0].mxu0 %v2813
  %v2980 = vpop.f32.mrb[0].mxu0
  %v2981 = vadd.f32 %v2798, %v2980
  %v2982 = vpop.f32.mrb[0].mxu0
  %v2983 = vadd.f32 %v2802, %v2982
  %2984 = vmatprep.mubr.f32.mxu0 0.0
  %2985 = vmatmul.mubr.f32.gmra.mrb[0].mxu0 %v2816
  %v2986 = vpop.f32.mrb[0].mxu0
  %v2987 = vadd.f32 %v2798, %v2986
  %v2988 = vpop.f32.mrb[0].mxu0
  %v2989 = vadd.f32 %v2802, %v2988
  %2990 = vmatprep.mubr.f32.mxu0 0.0
  %2991 = vmatmul.mubr.f32.gmra.mrb[0].mxu0 %v2819
  %v2992 = vpop.f32.mrb[0].mxu0
  %v2993 = vadd.f32 %v2798, %v2992
  %v2994 = vpop.f32.mrb[0].mxu0
  %v2995 = vadd.f32 %v2802, %v2994
  %2996 = vmatprep.mubr.f32.mxu0 0.0
  %2997 = vmatmul.mubr.f32.gmra.mrb[0].mxu0 %v2822
  %v2998 = vpop.f32.mrb[0].mxu0
  %v2999 = vadd.f32 %v2798, %v2998
  %v3000 = vpop.f32.mrb[0].mxu0
  %v3001 = vadd.f32 %v2802, %v3000
  %3002 = vmatprep.mubr.f32.mxu0 0.0
  %3003 = vmatmul.mubr.f32.gmra.mrb[0].mxu0 %v2825
  %v3004 = vpop.f32.mrb[0].mxu0
  %v3005 = vadd.f32 %v2798, %v3004
  %v3006 = vpop.f32.mrb[0].mxu0
  %v3007 = vadd.f32 %v2802, %v3006
  %3008 = vmatprep.mubr.f32.mxu0 0.0
  %3009 = vmatmul.mubr.f32.gmra.mrb[0].mxu0 %v2828
  %v3010 = vpop.f32.mrb[0].mxu0
  %v3011 = vadd.f32 %v2798, %v3010
  %v3012 = vpop.f32.mrb[0].mxu0
  %v3013 = vadd.f32 %v2802, %v3012
  %3014 = vmatprep.mubr.f32.mxu0 0.0
  %3015 = vmatmul.mubr.f32.gmra.mrb[0].mxu0 %v2831
  %v3016 = vpop.f32.mrb[0].mxu0
  %v3017 = vadd.f32 %v2798, %v3016
  %v3018 = vpop.f32.mrb[0].mxu0
  %v3019 = vadd.f32 %v2802, %v3018
  %3020 = vmatprep.mubr.f32.mxu0 0.0
  %3021 = vmatmul.mubr.f32.gmra.mrb[0].mxu0 %v2834
  %v3022 = vpop.f32.mrb[0].mxu0
  %v3023 = vadd.f32 %v2798, %v3022
  %v3024 = vpop.f32.mrb[0].mxu0
  %v3025 = vadd.f32 %v2802, %v3024
  %3026 = vmatprep.mubr.f32.mxu0 0.0
  %3027 = vmatmul.mubr.f32.gmra.mrb[0].mxu0 %v2837
  %v3028 = vpop.f32.mrb[0].mxu0
  %v3029 = vadd.f32 %v2798, %v3028
  %v3030 = vpop.f32.mrb[0].mxu0
  %v3031 = vadd.f32 %v2802, %v3030
  %3032 = vmatprep.mubr.f32.mxu0 0.0
  %3033 = vmatmul.mubr.f32.gmra.mrb[0].mxu0 %v2840
  %v3034 = vpop.f32.mrb[0].mxu0
  %v3035 = vadd.f32 %v2798, %v3034
  %v3036 = vpop.f32.mrb[0].mxu0
  %v3037 = vadd.f32 %v2802, %v3036
  %3038 = vmatprep.mubr.f32.mxu0 0.0
  %3039 = vmatmul.mubr.f32.gmra.mrb[0].mxu0 %v2843
  %v3040 = vpop.f32.mrb[0].mxu0
  %v3041 = vadd.f32 %v2798, %v3040
  %v3042 = vpop.f32.mrb[0].mxu0
  %v3043 = vadd.f32 %v2802, %v3042
  %3044 = vmatprep.mubr.f32.mxu0 0.0
  %3045 = vmatmul.mubr.f32.gmra.mrb[0].mxu0 %v2846
  %v3046 = vpop.f32.mrb[0].mxu0
  %v3047 = vadd.f32 %v2798, %v3046
  %v3048 = vpop.f32.mrb[0].mxu0
  %v3049 = vadd.f32 %v2802, %v3048
  %3050 = vmatprep.mubr.f32.mxu0 0.0
  %3051 = vmatmul.mubr.f32.gmra.mrb[0].mxu0 %v2849
  %v3052 = vpop.f32.mrb[0].mxu0
  %v3053 = vadd.f32 %v2798, %v3052
  %v3054 = vpop.f32.mrb[0].mxu0
  %v3055 = vadd.f32 %v2802, %v3054
  %3056 = vmatprep.mubr.f32.mxu0 0.0
  %3057 = vmatmul.mubr.f32.gmra.mrb[0].mxu0 %v2852
  %v3058 = vpop.f32.mrb[0].mxu0
  %v3059 = vadd.f32 %v2798, %v3058
  %v3060 = vpop.f32.mrb[0].mxu0
  %v3061 = vadd.f32 %v2802, %v3060
  %3062 = vmatprep.mubr.f32.mxu0 0.0
  %3063 = vmatmul.mubr.f32.gmra.mrb[0].mxu0 %v2855
  %v3064 = vpop.f32.mrb[0].mxu0
  %v3065 = vadd.f32 %v2798, %v3064
  %v3066 = vpop.f32.mrb[0].mxu0
  %v3067 = vadd.f32 %v2802, %v3066
  %3068 = vmatprep.mubr.f32.mxu0 0.0
  %3069 = vmatmul.mubr.f32.gmra.mrb[0].mxu0 %v2858
  %v3070 = vpop.f32.mrb[0].mxu0
  %v3071 = vadd.f32 %v2798, %v3070
  %v3072 = vpop.f32.mrb[0].mxu0
  %v3073 = vadd.f32 %v2802, %v3072
  %3074 = vmatprep.mubr.f32.mxu0 0.0
  %3075 = vmatmul.mubr.f32.gmra.mrb[0].mxu0 %v2861
  %v3076 = vpop.f32.mrb[0].mxu0
  %v3077 = vadd.f32 %v2798, %v3076
  %v3078 = vpop.f32.mrb[0].mxu0
  %v3079 = vadd.f32 %v2802, %v3078
  %3080 = vmatprep.mubr.f32.mxu0 0.0
  %3081 = vmatmul.mubr.f32.gmra.mrb[0].mxu0 %v2864
  %v3082 = vpop.f32.mrb[0].mxu0
  %v3083 = vadd.f32 %v2798, %v3082
  %v3084 = vpop.f32.mrb[0].mxu0
  %v3085 = vadd.f32 %v2802, %v3084
  %3086 = vmatprep.mubr.f32.mxu0 0.0
  %3087 = vmatmul.mubr.f32.gmra.mrb[0].mxu0 %v2867
  %v3088 = vpop.f32.mrb[0].mxu0
  %v3089 = vadd.f32 %v2798, %v3088
  %v3090 = vpop.f32.mrb[0].mxu0
  %v3091 = vadd.f32 %v2802, %v3090
  %3092 = vmatprep.mubr.f32.mxu0 0.0
  %3093 = vmatmul.mubr.f32.gmra.mrb[0].mxu0 %v2870
  %v3094 = vpop.f32.mrb[0].mxu0
  %v3095 = vadd.f32 %v2798, %v3094
  %v3096 = vpop.f32.mrb[0].mxu0
  %v3097 = vadd.f32 %v2802, %v3096
  %3098 = vmatprep.mubr.f32.mxu0 0.0
  %3099 = vmatmul.mubr.f32.gmra.mrb[0].mxu0 %v2873
  %v3100 = vpop.f32.mrb[0].mxu0
  %v3101 = vadd.f32 %v2798, %v3100
  %v3102 = vpop.f32.mrb[0].mxu0
  %v3103 = vadd.f32 %v2802, %v3102
  %3104 = vmatprep.mubr.f32.mxu0 0.0
  %3105 = vmatmul.mubr.f32.gmra.mrb[0].mxu0 %v2876
  %v3106 = vpop.f32.mrb[0].mxu0
  %v3107 = vadd.f32 %v2798, %v3106
  %v3108 = vpop.f32.mrb[0].mxu0
  %v3109 = vadd.f32 %v2802, %v3108
  %3110 = vmatprep.mubr.f32.mxu0 0.0
  %3111 = vmatmul.mubr.f32.gmra.mrb[0].mxu0 %v2879
  %v3112 = vpop.f32.mrb[0].mxu0
  %v3113 = vadd.f32 %v2798, %v3112
  %v3114 = vpop.f32.mrb[0].mxu0
  %v3115 = vadd.f32 %v2802, %v3114
  %3116 = vmatprep.mubr.f32.mxu0 0.0
  %3117 = vmatmul.mubr.f32.gmra.mrb[0].mxu0 %v2882
  %v3118 = vpop.f32.mrb[0].mxu0
  %v3119 = vadd.f32 %v2798, %v3118
  %v3120 = vpop.f32.mrb[0].mxu0
  %v3121 = vadd.f32 %v2802, %v3120
  %3122 = vmatprep.mubr.f32.mxu0 0.0
  %3123 = vmatmul.mubr.f32.gmra.mrb[0].mxu0 %v2885
  %v3124 = vpop.f32.mrb[0].mxu0
  %v3125 = vadd.f32 %v2798, %v3124
  %v3126 = vpop.f32.mrb[0].mxu0
  %v3127 = vadd.f32 %v2802, %v3126
  %3128 = vmatprep.mubr.f32.mxu0 0.0
  %3129 = vmatmul.mubr.f32.gmra.mrb[0].mxu0 %v2888
  %v3130 = vpop.f32.mrb[0].mxu0
  %v3131 = vadd.f32 %v2798, %v3130
  %v3132 = vpop.f32.mrb[0].mxu0
  %v3133 = vadd.f32 %v2802, %v3132
  %3134 = vmatprep.mubr.f32.mxu0 0.0
  %3135 = vmatmul.mubr.f32.gmra.mrb[0].mxu0 %v2891
  %v3136 = vpop.f32.mrb[0].mxu0
  %v3137 = vadd.f32 %v2798, %v3136
  %v3138 = vpop.f32.mrb[0].mxu0
  %v3139 = vadd.f32 %v2802, %v3138
  %3140 = vmatprep.mubr.f32.mxu0 0.0
  %3141 = vmatmul.mubr.f32.gmra.mrb[0].mxu0 %v2894
  %v3142 = vpop.f32.mrb[0].mxu0
  %v3143 = vadd.f32 %v2798, %v3142
  %v3144 = vpop.f32.mrb[0].mxu0
  %v3145 = vadd.f32 %v2802, %v3144
  %3146 = vmatprep.mubr.f32.mxu0 0.0
  %3147 = vmatmul.mubr.f32.gmra.mrb[0].mxu0 %v2897
  %v3148 = vpop.f32.mrb[0].mxu0
  %v3149 = vadd.f32 %v2798, %v3148
  %v3150 = vpop.f32.mrb[0].mxu0
  %v3151 = vadd.f32 %v2802, %v3150
  %3152 = vmatprep.mubr.f32.mxu0 0.0
  %3153 = vmatmul.mubr.f32.gmra.mrb[0].mxu0 %v2900
  %v3154 = vpop.f32.mrb[0].mxu0
  %v3155 = vadd.f32 %v2798, %v3154
  %v3156 = vpop.f32.mrb[0].mxu0
  %v3157 = vadd.f32 %v2802, %v3156
  %3158 = vdwg.mxu0
  %3159 = vst [vmem:[#allocation2] sm:$0xff] %v2969
  %3160 = vst [vmem:[#allocation2 + $0x8] sm:$0xff] %v2971
  %3161 = vst [vmem:[#allocation2 + $0x10] sm:$0xff] %v2975
  %3162 = vst [vmem:[#allocation2 + $0x18] sm:$0xff] %v2977
  %3163 = vst [vmem:[#allocation2 + $0x20] sm:$0xff] %v2981
  %3164 = vst [vmem:[#allocation2 + $0x28] sm:$0xff] %v2983
  %3165 = vst [vmem:[#allocation2 + $0x30] sm:$0xff] %v2987
  %3166 = vst [vmem:[#allocation2 + $0x38] sm:$0xff] %v2989
  %3167 = vst [vmem:[#allocation2 + $0x40] sm:$0xff] %v2993
  %3168 = vst [vmem:[#allocation2 + $0x48] sm:$0xff] %v2995
  %3169 = vst [vmem:[#allocation2 + $0x50] sm:$0xff] %v2999
  %3170 = vst [vmem:[#allocation2 + $0x58] sm:$0xff] %v3001
  %3171 = vst [vmem:[#allocation2 + $0x60] sm:$0xff] %v3005
  %3172 = vst [vmem:[#allocation2 + $0x68] sm:$0xff] %v3007
  %3173 = vst [vmem:[#allocation2 + $0x70] sm:$0xff] %v3011
  %3174 = vst [vmem:[#allocation2 + $0x78] sm:$0xff] %v3013
  %3175 = vst [vmem:[#allocation2 + $0x80] sm:$0xff] %v3017
  %3176 = vst [vmem:[#allocation2 + $0x88] sm:$0xff] %v3019
  %3177 = vst [vmem:[#allocation2 + $0x90] sm:$0xff] %v3023
  %3178 = vst [vmem:[#allocation2 + $0x98] sm:$0xff] %v3025
  %3179 = vst [vmem:[#allocation2 + $0xa0] sm:$0xff] %v3029
  %3180 = vst [vmem:[#allocation2 + $0xa8] sm:$0xff] %v3031
  %3181 = vst [vmem:[#allocation2 + $0xb0] sm:$0xff] %v3035
  %3182 = vst [vmem:[#allocation2 + $0xb8] sm:$0xff] %v3037
  %3183 = vst [vmem:[#allocation2 + $0xc0] sm:$0xff] %v3041
  %3184 = vst [vmem:[#allocation2 + $0xc8] sm:$0xff] %v3043
  %3185 = vst [vmem:[#allocation2 + $0xd0] sm:$0xff] %v3047
  %3186 = vst [vmem:[#allocation2 + $0xd8] sm:$0xff] %v3049
  %3187 = vst [vmem:[#allocation2 + $0xe0] sm:$0xff] %v3053
  %3188 = vst [vmem:[#allocation2 + $0xe8] sm:$0xff] %v3055
  %3189 = vst [vmem:[#allocation2 + $0xf0] sm:$0xff] %v3059
  %3190 = vst [vmem:[#allocation2 + $0xf8] sm:$0xff] %v3061
  %3191 = vst [vmem:[#allocation2 + $0x100] sm:$0xff] %v3065
  %3192 = vst [vmem:[#allocation2 + $0x108] sm:$0xff] %v3067
  %3193 = vst [vmem:[#allocation2 + $0x110] sm:$0xff] %v3071
  %3194 = vst [vmem:[#allocation2 + $0x118] sm:$0xff] %v3073
  %3195 = vst [vmem:[#allocation2 + $0x120] sm:$0xff] %v3077
  %3196 = vst [vmem:[#allocation2 + $0x128] sm:$0xff] %v3079
  %3197 = vst [vmem:[#allocation2 + $0x130] sm:$0xff] %v3083
  %3198 = vst [vmem:[#allocation2 + $0x138] sm:$0xff] %v3085
  %3199 = vst [vmem:[#allocation2 + $0x140] sm:$0xff] %v3089
  %3200 = vst [vmem:[#allocation2 + $0x148] sm:$0xff] %v3091
  %3201 = vst [vmem:[#allocation2 + $0x150] sm:$0xff] %v3095
  %3202 = vst [vmem:[#allocation2 + $0x158] sm:$0xff] %v3097
  %3203 = vst [vmem:[#allocation2 + $0x160] sm:$0xff] %v3101
  %3204 = vst [vmem:[#allocation2 + $0x168] sm:$0xff] %v3103
  %3205 = vst [vmem:[#allocation2 + $0x170] sm:$0xff] %v3107
  %3206 = vst [vmem:[#allocation2 + $0x178] sm:$0xff] %v3109
  %3207 = vst [vmem:[#allocation2 + $0x180] sm:$0xff] %v3113
  %3208 = vst [vmem:[#allocation2 + $0x188] sm:$0xff] %v3115
  %3209 = vst [vmem:[#allocation2 + $0x190] sm:$0xff] %v3119
  %3210 = vst [vmem:[#allocation2 + $0x198] sm:$0xff] %v3121
  %3211 = vst [vmem:[#allocation2 + $0x1a0] sm:$0xff] %v3125
  %3212 = vst [vmem:[#allocation2 + $0x1a8] sm:$0xff] %v3127
  %3213 = vst [vmem:[#allocation2 + $0x1b0] sm:$0xff] %v3131
  %3214 = vst [vmem:[#allocation2 + $0x1b8] sm:$0xff] %v3133
  %3215 = vst [vmem:[#allocation2 + $0x1c0] sm:$0xff] %v3137
  %3216 = vst [vmem:[#allocation2 + $0x1c8] sm:$0xff] %v3139
  %3217 = vst [vmem:[#allocation2 + $0x1d0] sm:$0xff] %v3143
  %3218 = vst [vmem:[#allocation2 + $0x1d8] sm:$0xff] %v3145
  %3219 = vst [vmem:[#allocation2 + $0x1e0] sm:$0xff] %v3149
  %3220 = vst [vmem:[#allocation2 + $0x1e8] sm:$0xff] %v3151
  %3221 = vst [vmem:[#allocation2 + $0x1f0] sm:$0xff] %v3155
  %3222 = vst [vmem:[#allocation2 + $0x1f8] sm:$0xff] %v3157
  %v3223 = vld [vmem:[#allocation2] sm:$0xff]
  %v3225 = vsel %vm2805, 0.0, 0
  %3227 = vmatprep.subr.mxu0 0.0
  %3228 = vmatpush1.msra.mxu0 %v2245
  %3229 = vmatprep.subr.mxu0 0.0
  %3230 = vmatpush1.msra.mxu0 %v2246
  %3231 = vmatprep.subr.mxu0 0.0
  %3232 = vmatpush1.msra.mxu0 %v2247
  %3233 = vmatprep.subr.mxu0 0.0
  %3234 = vmatpush1.msra.mxu0 %v2248
  %3235 = vmatprep.subr.mxu0 0.0
  %3236 = vmatpush1.msra.mxu0 0.0
  %3237 = vmatprep.subr.mxu0 0.0
  %3238 = vmatpush1.msra.mxu0 0.0
  %3239 = vmatprep.subr.mxu0 0.0
  %3240 = vmatpush1.msra.mxu0 0.0
  %3241 = vmatprep.subr.mxu0 0.0
  %3242 = vmatpush1.msra.mxu0 0.0
  %3243 = vmatprep.subr.mxu0 0.0
  %3244 = vmatpush1.msra.mxu0 0.0
  %3245 = vmatprep.subr.mxu0 0.0
  %3246 = vmatpush1.msra.mxu0 0.0
  %3247 = vmatprep.subr.mxu0 0.0
  %3248 = vmatpush1.msra.mxu0 0.0
  %3249 = vmatprep.subr.mxu0 0.0
  %3250 = vmatpush1.msra.mxu0 0.0
  %3251 = vmatprep.subr.mxu0 0.0
  %3252 = vmatpush1.msra.mxu0 0.0
  %3253 = vmatprep.subr.mxu0 0.0
  %3254 = vmatpush1.msra.mxu0 0.0
  %3255 = vmatprep.subr.mxu0 0.0
  %3256 = vmatpush1.msra.mxu0 0.0
  %3257 = vmatprep.subr.mxu0 0.0
  %3258 = vmatpush1.msra.mxu0 0.0
  %3259 = vmatprep.subr.mxu0 0.0
  %3260 = vmatpush1.msra.mxu0 0.0
  %3261 = vmatprep.subr.mxu0 0.0
  %3262 = vmatpush1.msra.mxu0 0.0
  %3263 = vmatprep.subr.mxu0 0.0
  %3264 = vmatpush1.msra.mxu0 0.0
  %3265 = vmatprep.subr.mxu0 0.0
  %3266 = vmatpush1.msra.mxu0 0.0
  %3267 = vmatprep.subr.mxu0 0.0
  %3268 = vmatpush1.msra.mxu0 0.0
  %3269 = vmatprep.subr.mxu0 0.0
  %3270 = vmatpush1.msra.mxu0 0.0
  %3271 = vmatprep.subr.mxu0 0.0
  %3272 = vmatpush1.msra.mxu0 0.0
  %3273 = vmatprep.subr.mxu0 0.0
  %3274 = vmatpush1.msra.mxu0 0.0
  %3275 = vmatprep.subr.mxu0 0.0
  %3276 = vmatpush1.msra.mxu0 0.0
  %3277 = vmatprep.subr.mxu0 0.0
  %3278 = vmatpush1.msra.mxu0 0.0
  %3279 = vmatprep.subr.mxu0 0.0
  %3280 = vmatpush1.msra.mxu0 0.0
  %3281 = vmatprep.subr.mxu0 0.0
  %3282 = vmatpush1.msra.mxu0 0.0
  %3283 = vmatprep.subr.mxu0 0.0
  %3284 = vmatpush1.msra.mxu0 0.0
  %3285 = vmatprep.subr.mxu0 0.0
  %3286 = vmatpush1.msra.mxu0 0.0
  %3287 = vmatprep.subr.mxu0 0.0
  %3288 = vmatpush1.msra.mxu0 0.0
  %3289 = vmatprep.subr.mxu0 0.0
  %3290 = vmatpush1.msra.mxu0 0.0
  %3291 = vmatprep.mubr.f32.mxu0 0.0
  %3292 = vmatmul.mubr.f32.gmra.mrb[0].mxu0 %v3225
  %v3293 = vpop.f32.mrb[0].mxu0
  %v3294 = vadd.f32 0.0, %v3293
  %v3295 = vpop.f32.mrb[0].mxu0
  %3296 = vdwg.mxu0
  %v3297 = vadd.f32 %v3223, %v3294
  %v3298 = vxor.u32 %v3297, 2147483648
  %v3299 = vmul.f32 %v3298, 1.442695
  %v3300 = vpow.pop %v3299
  %v3301 = vadd.f32 %v3300, 1.0
  %v3302 = vrcp.pop %v3301
  %v3303 = vmul.f32 1.0, %v3302
  %v3304 = vtanh.pop %v3297
  %v3305 = vmul.f32 %v3303, 0.0
  %3307 = vrot.lane.b32.xlu0 %v3304, 64
  %v3308 = vpop.permute.xlu0 %3307
  %v3310 = vmul.f32 %v3303, %v3308
  %3312 = vrot.lane.b32.xlu0 %v3310, 32
  %v3313 = vpop.permute.xlu0 %3312
  %v3315 = vadd.f32 %v3305, %v3313
  %v3316 = vtanh.pop %v3315
  %3318 = vrot.lane.b32.xlu0 %v3316, 64
  %v3319 = vpop.permute.xlu0 %3318
  %v3321 = vmul.f32 %v3303, %v3319
  %v3322 = vld [vmem:[#allocation2 + $0x10] sm:$0xff]
  %3324 = vrot.lane.b32.xlu0 %v3321, 32
  %v3325 = vpop.permute.xlu0 %3324
  %v3326 = vsel %vm2805, %v3325, 0
  %3328 = vmatprep.subr.mxu0 0.0
  %3329 = vmatpush1.msra.mxu0 %v2245
  %3330 = vmatprep.subr.mxu0 0.0
  %3331 = vmatpush1.msra.mxu0 %v2246
  %3332 = vmatprep.subr.mxu0 0.0
  %3333 = vmatpush1.msra.mxu0 %v2247
  %3334 = vmatprep.subr.mxu0 0.0
  %3335 = vmatpush1.msra.mxu0 %v2248
  %3336 = vmatprep.subr.mxu0 0.0
  %3337 = vmatpush1.msra.mxu0 0.0
  %3338 = vmatprep.subr.mxu0 0.0
  %3339 = vmatpush1.msra.mxu0 0.0
  %3340 = vmatprep.subr.mxu0 0.0
  %3341 = vmatpush1.msra.mxu0 0.0
  %3342 = vmatprep.subr.mxu0 0.0
  %3343 = vmatpush1.msra.mxu0 0.0
  %3344 = vmatprep.subr.mxu0 0.0
  %3345 = vmatpush1.msra.mxu0 0.0
  %3346 = vmatprep.subr.mxu0 0.0
  %3347 = vmatpush1.msra.mxu0 0.0
  %3348 = vmatprep.subr.mxu0 0.0
  %3349 = vmatpush1.msra.mxu0 0.0
  %3350 = vmatprep.subr.mxu0 0.0
  %3351 = vmatpush1.msra.mxu0 0.0
  %3352 = vmatprep.subr.mxu0 0.0
  %3353 = vmatpush1.msra.mxu0 0.0
  %3354 = vmatprep.subr.mxu0 0.0
  %3355 = vmatpush1.msra.mxu0 0.0
  %3356 = vmatprep.subr.mxu0 0.0
  %3357 = vmatpush1.msra.mxu0 0.0
  %3358 = vmatprep.subr.mxu0 0.0
  %3359 = vmatpush1.msra.mxu0 0.0
  %3360 = vmatprep.subr.mxu0 0.0
  %3361 = vmatpush1.msra.mxu0 0.0
  %3362 = vmatprep.subr.mxu0 0.0
  %3363 = vmatpush1.msra.mxu0 0.0
  %3364 = vmatprep.subr.mxu0 0.0
  %3365 = vmatpush1.msra.mxu0 0.0
  %3366 = vmatprep.subr.mxu0 0.0
  %3367 = vmatpush1.msra.mxu0 0.0
  %3368 = vmatprep.subr.mxu0 0.0
  %3369 = vmatpush1.msra.mxu0 0.0
  %3370 = vmatprep.subr.mxu0 0.0
  %3371 = vmatpush1.msra.mxu0 0.0
  %3372 = vmatprep.subr.mxu0 0.0
  %3373 = vmatpush1.msra.mxu0 0.0
  %3374 = vmatprep.subr.mxu0 0.0
  %3375 = vmatpush1.msra.mxu0 0.0
  %3376 = vmatprep.subr.mxu0 0.0
  %3377 = vmatpush1.msra.mxu0 0.0
  %3378 = vmatprep.subr.mxu0 0.0
  %3379 = vmatpush1.msra.mxu0 0.0
  %3380 = vmatprep.subr.mxu0 0.0
  %3381 = vmatpush1.msra.mxu0 0.0
  %3382 = vmatprep.subr.mxu0 0.0
  %3383 = vmatpush1.msra.mxu0 0.0
  %3384 = vmatprep.subr.mxu0 0.0
  %3385 = vmatpush1.msra.mxu0 0.0
  %3386 = vmatprep.subr.mxu0 0.0
  %3387 = vmatpush1.msra.mxu0 0.0
  %3388 = vmatprep.subr.mxu0 0.0
  %3389 = vmatpush1.msra.mxu0 0.0
  %3390 = vmatprep.subr.mxu0 0.0
  %3391 = vmatpush1.msra.mxu0 0.0
  %3392 = vmatprep.mubr.f32.mxu0 0.0
  %3393 = vmatmul.mubr.f32.gmra.mrb[0].mxu0 %v3326
  %v3394 = vpop.f32.mrb[0].mxu0
  %v3395 = vadd.f32 0.0, %v3394
  %v3396 = vpop.f32.mrb[0].mxu0
  %3397 = vdwg.mxu0
  %v3398 = vadd.f32 %v3322, %v3395
  %v3399 = vxor.u32 %v3398, 2147483648
  %v3400 = vmul.f32 %v3399, 1.442695
  %v3401 = vpow.pop %v3400
  %v3402 = vadd.f32 %v3401, 1.0
  %v3403 = vrcp.pop %v3402
  %v3404 = vmul.f32 1.0, %v3403
  %v3405 = vtanh.pop %v3398
  %v3406 = vmul.f32 %v3404, %v3315
  %3408 = vrot.lane.b32.xlu0 %v3405, 64
  %v3409 = vpop.permute.xlu0 %3408
  %v3411 = vmul.f32 %v3404, %v3409
  %3413 = vrot.lane.b32.xlu0 %v3411, 32
  %v3414 = vpop.permute.xlu0 %3413
  %v3416 = vadd.f32 %v3406, %v3414
  %v3417 = vtanh.pop %v3416
  %3419 = vrot.lane.b32.xlu0 %v3417, 64
  %v3420 = vpop.permute.xlu0 %3419
  %v3422 = vmul.f32 %v3404, %v3420
  %v3423 = vld [vmem:[#allocation2 + $0x20] sm:$0xff]
  %3425 = vrot.lane.b32.xlu0 %v3422, 32
  %v3426 = vpop.permute.xlu0 %3425
  %v3427 = vsel %vm2805, %v3426, 0
  %3429 = vmatprep.subr.mxu0 0.0
  %3430 = vmatpush1.msra.mxu0 %v2245
  %3431 = vmatprep.subr.mxu0 0.0
  %3432 = vmatpush1.msra.mxu0 %v2246
  %3433 = vmatprep.subr.mxu0 0.0
  %3434 = vmatpush1.msra.mxu0 %v2247
  %3435 = vmatprep.subr.mxu0 0.0
  %3436 = vmatpush1.msra.mxu0 %v2248
  %3437 = vmatprep.subr.mxu0 0.0
  %3438 = vmatpush1.msra.mxu0 0.0
  %3439 = vmatprep.subr.mxu0 0.0
  %3440 = vmatpush1.msra.mxu0 0.0
  %3441 = vmatprep.subr.mxu0 0.0
  %3442 = vmatpush1.msra.mxu0 0.0
  %3443 = vmatprep.subr.mxu0 0.0
  %3444 = vmatpush1.msra.mxu0 0.0
  %3445 = vmatprep.subr.mxu0 0.0
  %3446 = vmatpush1.msra.mxu0 0.0
  %3447 = vmatprep.subr.mxu0 0.0
  %3448 = vmatpush1.msra.mxu0 0.0
  %3449 = vmatprep.subr.mxu0 0.0
  %3450 = vmatpush1.msra.mxu0 0.0
  %3451 = vmatprep.subr.mxu0 0.0
  %3452 = vmatpush1.msra.mxu0 0.0
  %3453 = vmatprep.subr.mxu0 0.0
  %3454 = vmatpush1.msra.mxu0 0.0
  %3455 = vmatprep.subr.mxu0 0.0
  %3456 = vmatpush1.msra.mxu0 0.0
  %3457 = vmatprep.subr.mxu0 0.0
  %3458 = vmatpush1.msra.mxu0 0.0
  %3459 = vmatprep.subr.mxu0 0.0
  %3460 = vmatpush1.msra.mxu0 0.0
  %3461 = vmatprep.subr.mxu0 0.0
  %3462 = vmatpush1.msra.mxu0 0.0
  %3463 = vmatprep.subr.mxu0 0.0
  %3464 = vmatpush1.msra.mxu0 0.0
  %3465 = vmatprep.subr.mxu0 0.0
  %3466 = vmatpush1.msra.mxu0 0.0
  %3467 = vmatprep.subr.mxu0 0.0
  %3468 = vmatpush1.msra.mxu0 0.0
  %3469 = vmatprep.subr.mxu0 0.0
  %3470 = vmatpush1.msra.mxu0 0.0
  %3471 = vmatprep.subr.mxu0 0.0
  %3472 = vmatpush1.msra.mxu0 0.0
  %3473 = vmatprep.subr.mxu0 0.0
  %3474 = vmatpush1.msra.mxu0 0.0
  %3475 = vmatprep.subr.mxu0 0.0
  %3476 = vmatpush1.msra.mxu0 0.0
  %3477 = vmatprep.subr.mxu0 0.0
  %3478 = vmatpush1.msra.mxu0 0.0
  %3479 = vmatprep.subr.mxu0 0.0
  %3480 = vmatpush1.msra.mxu0 0.0
  %3481 = vmatprep.subr.mxu0 0.0
  %3482 = vmatpush1.msra.mxu0 0.0
  %3483 = vmatprep.subr.mxu0 0.0
  %3484 = vmatpush1.msra.mxu0 0.0
  %3485 = vmatprep.subr.mxu0 0.0
  %3486 = vmatpush1.msra.mxu0 0.0
  %3487 = vmatprep.subr.mxu0 0.0
  %3488 = vmatpush1.msra.mxu0 0.0
  %3489 = vmatprep.subr.mxu0 0.0
  %3490 = vmatpush1.msra.mxu0 0.0
  %3491 = vmatprep.subr.mxu0 0.0
  %3492 = vmatpush1.msra.mxu0 0.0
  %3493 = vmatprep.mubr.f32.mxu0 0.0
  %3494 = vmatmul.mubr.f32.gmra.mrb[0].mxu0 %v3427
  %v3495 = vpop.f32.mrb[0].mxu0
  %v3496 = vadd.f32 0.0, %v3495
  %v3497 = vpop.f32.mrb[0].mxu0
  %3498 = vdwg.mxu0
  %v3499 = vadd.f32 %v3423, %v3496
  %v3500 = vxor.u32 %v3499, 2147483648
  %v3501 = vmul.f32 %v3500, 1.442695
  %v3502 = vpow.pop %v3501
  %v3503 = vadd.f32 %v3502, 1.0
  %v3504 = vrcp.pop %v3503
  %v3505 = vmul.f32 1.0, %v3504
  %v3506 = vtanh.pop %v3499
  %v3507 = vmul.f32 %v3505, %v3416
  %3509 = vrot.lane.b32.xlu0 %v3506, 64
  %v3510 = vpop.permute.xlu0 %3509
  %v3512 = vmul.f32 %v3505, %v3510
  %3514 = vrot.lane.b32.xlu0 %v3512, 32
  %v3515 = vpop.permute.xlu0 %3514
  %v3517 = vadd.f32 %v3507, %v3515
  %v3518 = vtanh.pop %v3517
  %3520 = vrot.lane.b32.xlu0 %v3518, 64
  %v3521 = vpop.permute.xlu0 %3520
  %v3523 = vmul.f32 %v3505, %v3521
  %v3524 = vld [vmem:[#allocation2 + $0x30] sm:$0xff]
  %3526 = vrot.lane.b32.xlu0 %v3523, 32
  %v3527 = vpop.permute.xlu0 %3526
  %v3528 = vsel %vm2805, %v3527, 0
  %3530 = vmatprep.subr.mxu0 0.0
  %3531 = vmatpush1.msra.mxu0 %v2245
  %3532 = vmatprep.subr.mxu0 0.0
  %3533 = vmatpush1.msra.mxu0 %v2246
  %3534 = vmatprep.subr.mxu0 0.0
  %3535 = vmatpush1.msra.mxu0 %v2247
  %3536 = vmatprep.subr.mxu0 0.0
  %3537 = vmatpush1.msra.mxu0 %v2248
  %3538 = vmatprep.subr.mxu0 0.0
  %3539 = vmatpush1.msra.mxu0 0.0
  %3540 = vmatprep.subr.mxu0 0.0
  %3541 = vmatpush1.msra.mxu0 0.0
  %3542 = vmatprep.subr.mxu0 0.0
  %3543 = vmatpush1.msra.mxu0 0.0
  %3544 = vmatprep.subr.mxu0 0.0
  %3545 = vmatpush1.msra.mxu0 0.0
  %3546 = vmatprep.subr.mxu0 0.0
  %3547 = vmatpush1.msra.mxu0 0.0
  %3548 = vmatprep.subr.mxu0 0.0
  %3549 = vmatpush1.msra.mxu0 0.0
  %3550 = vmatprep.subr.mxu0 0.0
  %3551 = vmatpush1.msra.mxu0 0.0
  %3552 = vmatprep.subr.mxu0 0.0
  %3553 = vmatpush1.msra.mxu0 0.0
  %3554 = vmatprep.subr.mxu0 0.0
  %3555 = vmatpush1.msra.mxu0 0.0
  %3556 = vmatprep.subr.mxu0 0.0
  %3557 = vmatpush1.msra.mxu0 0.0
  %3558 = vmatprep.subr.mxu0 0.0
  %3559 = vmatpush1.msra.mxu0 0.0
  %3560 = vmatprep.subr.mxu0 0.0
  %3561 = vmatpush1.msra.mxu0 0.0
  %3562 = vmatprep.subr.mxu0 0.0
  %3563 = vmatpush1.msra.mxu0 0.0
  %3564 = vmatprep.subr.mxu0 0.0
  %3565 = vmatpush1.msra.mxu0 0.0
  %3566 = vmatprep.subr.mxu0 0.0
  %3567 = vmatpush1.msra.mxu0 0.0
  %3568 = vmatprep.subr.mxu0 0.0
  %3569 = vmatpush1.msra.mxu0 0.0
  %3570 = vmatprep.subr.mxu0 0.0
  %3571 = vmatpush1.msra.mxu0 0.0
  %3572 = vmatprep.subr.mxu0 0.0
  %3573 = vmatpush1.msra.mxu0 0.0
  %3574 = vmatprep.subr.mxu0 0.0
  %3575 = vmatpush1.msra.mxu0 0.0
  %3576 = vmatprep.subr.mxu0 0.0
  %3577 = vmatpush1.msra.mxu0 0.0
  %3578 = vmatprep.subr.mxu0 0.0
  %3579 = vmatpush1.msra.mxu0 0.0
  %3580 = vmatprep.subr.mxu0 0.0
  %3581 = vmatpush1.msra.mxu0 0.0
  %3582 = vmatprep.subr.mxu0 0.0
  %3583 = vmatpush1.msra.mxu0 0.0
  %3584 = vmatprep.subr.mxu0 0.0
  %3585 = vmatpush1.msra.mxu0 0.0
  %3586 = vmatprep.subr.mxu0 0.0
  %3587 = vmatpush1.msra.mxu0 0.0
  %3588 = vmatprep.subr.mxu0 0.0
  %3589 = vmatpush1.msra.mxu0 0.0
  %3590 = vmatprep.subr.mxu0 0.0
  %3591 = vmatpush1.msra.mxu0 0.0
  %3592 = vmatprep.subr.mxu0 0.0
  %3593 = vmatpush1.msra.mxu0 0.0
  %3594 = vmatprep.mubr.f32.mxu0 0.0
  %3595 = vmatmul.mubr.f32.gmra.mrb[0].mxu0 %v3528
  %v3596 = vpop.f32.mrb[0].mxu0
  %v3597 = vadd.f32 0.0, %v3596
  %v3598 = vpop.f32.mrb[0].mxu0
  %3599 = vdwg.mxu0
  %v3600 = vadd.f32 %v3524, %v3597
  %v3601 = vxor.u32 %v3600, 2147483648
  %v3602 = vmul.f32 %v3601, 1.442695
  %v3603 = vpow.pop %v3602
  %v3604 = vadd.f32 %v3603, 1.0
  %v3605 = vrcp.pop %v3604
  %v3606 = vmul.f32 1.0, %v3605
  %v3607 = vtanh.pop %v3600
  %v3608 = vmul.f32 %v3606, %v3517
  %3610 = vrot.lane.b32.xlu0 %v3607, 64
  %v3611 = vpop.permute.xlu0 %3610
  %v3613 = vmul.f32 %v3606, %v3611
  %3615 = vrot.lane.b32.xlu0 %v3613, 32
  %v3616 = vpop.permute.xlu0 %3615
  %v3618 = vadd.f32 %v3608, %v3616
  %v3619 = vtanh.pop %v3618
  %3621 = vrot.lane.b32.xlu0 %v3619, 64
  %v3622 = vpop.permute.xlu0 %3621
  %v3624 = vmul.f32 %v3606, %v3622
  %v3625 = vld [vmem:[#allocation2 + $0x40] sm:$0xff]
  %3627 = vrot.lane.b32.xlu0 %v3624, 32
  %v3628 = vpop.permute.xlu0 %3627
  %v3629 = vsel %vm2805, %v3628, 0
  %3631 = vmatprep.subr.mxu0 0.0
  %3632 = vmatpush1.msra.mxu0 %v2245
  %3633 = vmatprep.subr.mxu0 0.0
  %3634 = vmatpush1.msra.mxu0 %v2246
  %3635 = vmatprep.subr.mxu0 0.0
  %3636 = vmatpush1.msra.mxu0 %v2247
  %3637 = vmatprep.subr.mxu0 0.0
  %3638 = vmatpush1.msra.mxu0 %v2248
  %3639 = vmatprep.subr.mxu0 0.0
  %3640 = vmatpush1.msra.mxu0 0.0
  %3641 = vmatprep.subr.mxu0 0.0
  %3642 = vmatpush1.msra.mxu0 0.0
  %3643 = vmatprep.subr.mxu0 0.0
  %3644 = vmatpush1.msra.mxu0 0.0
  %3645 = vmatprep.subr.mxu0 0.0
  %3646 = vmatpush1.msra.mxu0 0.0
  %3647 = vmatprep.subr.mxu0 0.0
  %3648 = vmatpush1.msra.mxu0 0.0
  %3649 = vmatprep.subr.mxu0 0.0
  %3650 = vmatpush1.msra.mxu0 0.0
  %3651 = vmatprep.subr.mxu0 0.0
  %3652 = vmatpush1.msra.mxu0 0.0
  %3653 = vmatprep.subr.mxu0 0.0
  %3654 = vmatpush1.msra.mxu0 0.0
  %3655 = vmatprep.subr.mxu0 0.0
  %3656 = vmatpush1.msra.mxu0 0.0
  %3657 = vmatprep.subr.mxu0 0.0
  %3658 = vmatpush1.msra.mxu0 0.0
  %3659 = vmatprep.subr.mxu0 0.0
  %3660 = vmatpush1.msra.mxu0 0.0
  %3661 = vmatprep.subr.mxu0 0.0
  %3662 = vmatpush1.msra.mxu0 0.0
  %3663 = vmatprep.subr.mxu0 0.0
  %3664 = vmatpush1.msra.mxu0 0.0
  %3665 = vmatprep.subr.mxu0 0.0
  %3666 = vmatpush1.msra.mxu0 0.0
  %3667 = vmatprep.subr.mxu0 0.0
  %3668 = vmatpush1.msra.mxu0 0.0
  %3669 = vmatprep.subr.mxu0 0.0
  %3670 = vmatpush1.msra.mxu0 0.0
  %3671 = vmatprep.subr.mxu0 0.0
  %3672 = vmatpush1.msra.mxu0 0.0
  %3673 = vmatprep.subr.mxu0 0.0
  %3674 = vmatpush1.msra.mxu0 0.0
  %3675 = vmatprep.subr.mxu0 0.0
  %3676 = vmatpush1.msra.mxu0 0.0
  %3677 = vmatprep.subr.mxu0 0.0
  %3678 = vmatpush1.msra.mxu0 0.0
  %3679 = vmatprep.subr.mxu0 0.0
  %3680 = vmatpush1.msra.mxu0 0.0
  %3681 = vmatprep.subr.mxu0 0.0
  %3682 = vmatpush1.msra.mxu0 0.0
  %3683 = vmatprep.subr.mxu0 0.0
  %3684 = vmatpush1.msra.mxu0 0.0
  %3685 = vmatprep.subr.mxu0 0.0
  %3686 = vmatpush1.msra.mxu0 0.0
  %3687 = vmatprep.subr.mxu0 0.0
  %3688 = vmatpush1.msra.mxu0 0.0
  %3689 = vmatprep.subr.mxu0 0.0
  %3690 = vmatpush1.msra.mxu0 0.0
  %3691 = vmatprep.subr.mxu0 0.0
  %3692 = vmatpush1.msra.mxu0 0.0
  %3693 = vmatprep.subr.mxu0 0.0
  %3694 = vmatpush1.msra.mxu0 0.0
  %3695 = vmatprep.mubr.f32.mxu0 0.0
  %3696 = vmatmul.mubr.f32.gmra.mrb[0].mxu0 %v3629
  %v3697 = vpop.f32.mrb[0].mxu0
  %v3698 = vadd.f32 0.0, %v3697
  %v3699 = vpop.f32.mrb[0].mxu0
  %3700 = vdwg.mxu0
  %v3701 = vadd.f32 %v3625, %v3698
  %v3702 = vxor.u32 %v3701, 2147483648
  %v3703 = vmul.f32 %v3702, 1.442695
  %v3704 = vpow.pop %v3703
  %v3705 = vadd.f32 %v3704, 1.0
  %v3706 = vrcp.pop %v3705
  %v3707 = vmul.f32 1.0, %v3706
  %v3708 = vtanh.pop %v3701
  %v3709 = vmul.f32 %v3707, %v3618
  %3711 = vrot.lane.b32.xlu0 %v3708, 64
  %v3712 = vpop.permute.xlu0 %3711
  %v3714 = vmul.f32 %v3707, %v3712
  %3716 = vrot.lane.b32.xlu0 %v3714, 32
  %v3717 = vpop.permute.xlu0 %3716
  %v3719 = vadd.f32 %v3709, %v3717
  %v3720 = vtanh.pop %v3719
  %3722 = vrot.lane.b32.xlu0 %v3720, 64
  %v3723 = vpop.permute.xlu0 %3722
  %v3725 = vmul.f32 %v3707, %v3723
  %v3726 = vld [vmem:[#allocation2 + $0x50] sm:$0xff]
  %3728 = vrot.lane.b32.xlu0 %v3725, 32
  %v3729 = vpop.permute.xlu0 %3728
  %v3730 = vsel %vm2805, %v3729, 0
  %3732 = vmatprep.subr.mxu0 0.0
  %3733 = vmatpush1.msra.mxu0 %v2245
  %3734 = vmatprep.subr.mxu0 0.0
  %3735 = vmatpush1.msra.mxu0 %v2246
  %3736 = vmatprep.subr.mxu0 0.0
  %3737 = vmatpush1.msra.mxu0 %v2247
  %3738 = vmatprep.subr.mxu0 0.0
  %3739 = vmatpush1.msra.mxu0 %v2248
  %3740 = vmatprep.subr.mxu0 0.0
  %3741 = vmatpush1.msra.mxu0 0.0
  %3742 = vmatprep.subr.mxu0 0.0
  %3743 = vmatpush1.msra.mxu0 0.0
  %3744 = vmatprep.subr.mxu0 0.0
  %3745 = vmatpush1.msra.mxu0 0.0
  %3746 = vmatprep.subr.mxu0 0.0
  %3747 = vmatpush1.msra.mxu0 0.0
  %3748 = vmatprep.subr.mxu0 0.0
  %3749 = vmatpush1.msra.mxu0 0.0
  %3750 = vmatprep.subr.mxu0 0.0
  %3751 = vmatpush1.msra.mxu0 0.0
  %3752 = vmatprep.subr.mxu0 0.0
  %3753 = vmatpush1.msra.mxu0 0.0
  %3754 = vmatprep.subr.mxu0 0.0
  %3755 = vmatpush1.msra.mxu0 0.0
  %3756 = vmatprep.subr.mxu0 0.0
  %3757 = vmatpush1.msra.mxu0 0.0
  %3758 = vmatprep.subr.mxu0 0.0
  %3759 = vmatpush1.msra.mxu0 0.0
  %3760 = vmatprep.subr.mxu0 0.0
  %3761 = vmatpush1.msra.mxu0 0.0
  %3762 = vmatprep.subr.mxu0 0.0
  %3763 = vmatpush1.msra.mxu0 0.0
  %3764 = vmatprep.subr.mxu0 0.0
  %3765 = vmatpush1.msra.mxu0 0.0
  %3766 = vmatprep.subr.mxu0 0.0
  %3767 = vmatpush1.msra.mxu0 0.0
  %3768 = vmatprep.subr.mxu0 0.0
  %3769 = vmatpush1.msra.mxu0 0.0
  %3770 = vmatprep.subr.mxu0 0.0
  %3771 = vmatpush1.msra.mxu0 0.0
  %3772 = vmatprep.subr.mxu0 0.0
  %3773 = vmatpush1.msra.mxu0 0.0
  %3774 = vmatprep.subr.mxu0 0.0
  %3775 = vmatpush1.msra.mxu0 0.0
  %3776 = vmatprep.subr.mxu0 0.0
  %3777 = vmatpush1.msra.mxu0 0.0
  %3778 = vmatprep.subr.mxu0 0.0
  %3779 = vmatpush1.msra.mxu0 0.0
  %3780 = vmatprep.subr.mxu0 0.0
  %3781 = vmatpush1.msra.mxu0 0.0
  %3782 = vmatprep.subr.mxu0 0.0
  %3783 = vmatpush1.msra.mxu0 0.0
  %3784 = vmatprep.subr.mxu0 0.0
  %3785 = vmatpush1.msra.mxu0 0.0
  %3786 = vmatprep.subr.mxu0 0.0
  %3787 = vmatpush1.msra.mxu0 0.0
  %3788 = vmatprep.subr.mxu0 0.0
  %3789 = vmatpush1.msra.mxu0 0.0
  %3790 = vmatprep.subr.mxu0 0.0
  %3791 = vmatpush1.msra.mxu0 0.0
  %3792 = vmatprep.subr.mxu0 0.0
  %3793 = vmatpush1.msra.mxu0 0.0
  %3794 = vmatprep.subr.mxu0 0.0
  %3795 = vmatpush1.msra.mxu0 0.0
  %3796 = vmatprep.mubr.f32.mxu0 0.0
  %3797 = vmatmul.mubr.f32.gmra.mrb[0].mxu0 %v3730
  %v3798 = vpop.f32.mrb[0].mxu0
  %v3799 = vadd.f32 0.0, %v3798
  %v3800 = vpop.f32.mrb[0].mxu0
  %3801 = vdwg.mxu0
  %v3802 = vadd.f32 %v3726, %v3799
  %v3803 = vxor.u32 %v3802, 2147483648
  %v3804 = vmul.f32 %v3803, 1.442695
  %v3805 = vpow.pop %v3804
  %v3806 = vadd.f32 %v3805, 1.0
  %v3807 = vrcp.pop %v3806
  %v3808 = vmul.f32 1.0, %v3807
  %v3809 = vtanh.pop %v3802
  %v3810 = vmul.f32 %v3808, %v3719
  %3812 = vrot.lane.b32.xlu0 %v3809, 64
  %v3813 = vpop.permute.xlu0 %3812
  %v3815 = vmul.f32 %v3808, %v3813
  %3817 = vrot.lane.b32.xlu0 %v3815, 32
  %v3818 = vpop.permute.xlu0 %3817
  %v3820 = vadd.f32 %v3810, %v3818
  %v3821 = vtanh.pop %v3820
  %3823 = vrot.lane.b32.xlu0 %v3821, 64
  %v3824 = vpop.permute.xlu0 %3823
  %v3826 = vmul.f32 %v3808, %v3824
  %v3827 = vld [vmem:[#allocation2 + $0x60] sm:$0xff]
  %3829 = vrot.lane.b32.xlu0 %v3826, 32
  %v3830 = vpop.permute.xlu0 %3829
  %v3831 = vsel %vm2805, %v3830, 0
  %3833 = vmatprep.subr.mxu0 0.0
  %3834 = vmatpush1.msra.mxu0 %v2245
  %3835 = vmatprep.subr.mxu0 0.0
  %3836 = vmatpush1.msra.mxu0 %v2246
  %3837 = vmatprep.subr.mxu0 0.0
  %3838 = vmatpush1.msra.mxu0 %v2247
  %3839 = vmatprep.subr.mxu0 0.0
  %3840 = vmatpush1.msra.mxu0 %v2248
  %3841 = vmatprep.subr.mxu0 0.0
  %3842 = vmatpush1.msra.mxu0 0.0
  %3843 = vmatprep.subr.mxu0 0.0
  %3844 = vmatpush1.msra.mxu0 0.0
  %3845 = vmatprep.subr.mxu0 0.0
  %3846 = vmatpush1.msra.mxu0 0.0
  %3847 = vmatprep.subr.mxu0 0.0
  %3848 = vmatpush1.msra.mxu0 0.0
  %3849 = vmatprep.subr.mxu0 0.0
  %3850 = vmatpush1.msra.mxu0 0.0
  %3851 = vmatprep.subr.mxu0 0.0
  %3852 = vmatpush1.msra.mxu0 0.0
  %3853 = vmatprep.subr.mxu0 0.0
  %3854 = vmatpush1.msra.mxu0 0.0
  %3855 = vmatprep.subr.mxu0 0.0
  %3856 = vmatpush1.msra.mxu0 0.0
  %3857 = vmatprep.subr.mxu0 0.0
  %3858 = vmatpush1.msra.mxu0 0.0
  %3859 = vmatprep.subr.mxu0 0.0
  %3860 = vmatpush1.msra.mxu0 0.0
  %3861 = vmatprep.subr.mxu0 0.0
  %3862 = vmatpush1.msra.mxu0 0.0
  %3863 = vmatprep.subr.mxu0 0.0
  %3864 = vmatpush1.msra.mxu0 0.0
  %3865 = vmatprep.subr.mxu0 0.0
  %3866 = vmatpush1.msra.mxu0 0.0
  %3867 = vmatprep.subr.mxu0 0.0
  %3868 = vmatpush1.msra.mxu0 0.0
  %3869 = vmatprep.subr.mxu0 0.0
  %3870 = vmatpush1.msra.mxu0 0.0
  %3871 = vmatprep.subr.mxu0 0.0
  %3872 = vmatpush1.msra.mxu0 0.0
  %3873 = vmatprep.subr.mxu0 0.0
  %3874 = vmatpush1.msra.mxu0 0.0
  %3875 = vmatprep.subr.mxu0 0.0
  %3876 = vmatpush1.msra.mxu0 0.0
  %3877 = vmatprep.subr.mxu0 0.0
  %3878 = vmatpush1.msra.mxu0 0.0
  %3879 = vmatprep.subr.mxu0 0.0
  %3880 = vmatpush1.msra.mxu0 0.0
  %3881 = vmatprep.subr.mxu0 0.0
  %3882 = vmatpush1.msra.mxu0 0.0
  %3883 = vmatprep.subr.mxu0 0.0
  %3884 = vmatpush1.msra.mxu0 0.0
  %3885 = vmatprep.subr.mxu0 0.0
  %3886 = vmatpush1.msra.mxu0 0.0
  %3887 = vmatprep.subr.mxu0 0.0
  %3888 = vmatpush1.msra.mxu0 0.0
  %3889 = vmatprep.subr.mxu0 0.0
  %3890 = vmatpush1.msra.mxu0 0.0
  %3891 = vmatprep.subr.mxu0 0.0
  %3892 = vmatpush1.msra.mxu0 0.0
  %3893 = vmatprep.subr.mxu0 0.0
  %3894 = vmatpush1.msra.mxu0 0.0
  %3895 = vmatprep.subr.mxu0 0.0
  %3896 = vmatpush1.msra.mxu0 0.0
  %3897 = vmatprep.mubr.f32.mxu0 0.0
  %3898 = vmatmul.mubr.f32.gmra.mrb[0].mxu0 %v3831
  %v3899 = vpop.f32.mrb[0].mxu0
  %v3900 = vadd.f32 0.0, %v3899
  %v3901 = vpop.f32.mrb[0].mxu0
  %3902 = vdwg.mxu0
  %v3903 = vadd.f32 %v3827, %v3900
  %v3904 = vxor.u32 %v3903, 2147483648
  %v3905 = vmul.f32 %v3904, 1.442695
  %v3906 = vpow.pop %v3905
  %v3907 = vadd.f32 %v3906, 1.0
  %v3908 = vrcp.pop %v3907
  %v3909 = vmul.f32 1.0, %v3908
  %v3910 = vtanh.pop %v3903
  %v3911 = vmul.f32 %v3909, %v3820
  %3913 = vrot.lane.b32.xlu0 %v3910, 64
  %v3914 = vpop.permute.xlu0 %3913
  %v3916 = vmul.f32 %v3909, %v3914
  %3918 = vrot.lane.b32.xlu0 %v3916, 32
  %v3919 = vpop.permute.xlu0 %3918
  %v3921 = vadd.f32 %v3911, %v3919
  %v3922 = vtanh.pop %v3921
  %3924 = vrot.lane.b32.xlu0 %v3922, 64
  %v3925 = vpop.permute.xlu0 %3924
  %v3927 = vmul.f32 %v3909, %v3925
  %v3928 = vld [vmem:[#allocation2 + $0x70] sm:$0xff]
  %3930 = vrot.lane.b32.xlu0 %v3927, 32
  %v3931 = vpop.permute.xlu0 %3930
  %v3932 = vsel %vm2805, %v3931, 0
  %3934 = vmatprep.subr.mxu0 0.0
  %3935 = vmatpush1.msra.mxu0 %v2245
  %3936 = vmatprep.subr.mxu0 0.0
  %3937 = vmatpush1.msra.mxu0 %v2246
  %3938 = vmatprep.subr.mxu0 0.0
  %3939 = vmatpush1.msra.mxu0 %v2247
  %3940 = vmatprep.subr.mxu0 0.0
  %3941 = vmatpush1.msra.mxu0 %v2248
  %3942 = vmatprep.subr.mxu0 0.0
  %3943 = vmatpush1.msra.mxu0 0.0
  %3944 = vmatprep.subr.mxu0 0.0
  %3945 = vmatpush1.msra.mxu0 0.0
  %3946 = vmatprep.subr.mxu0 0.0
  %3947 = vmatpush1.msra.mxu0 0.0
  %3948 = vmatprep.subr.mxu0 0.0
  %3949 = vmatpush1.msra.mxu0 0.0
  %3950 = vmatprep.subr.mxu0 0.0
  %3951 = vmatpush1.msra.mxu0 0.0
  %3952 = vmatprep.subr.mxu0 0.0
  %3953 = vmatpush1.msra.mxu0 0.0
  %3954 = vmatprep.subr.mxu0 0.0
  %3955 = vmatpush1.msra.mxu0 0.0
  %3956 = vmatprep.subr.mxu0 0.0
  %3957 = vmatpush1.msra.mxu0 0.0
  %3958 = vmatprep.subr.mxu0 0.0
  %3959 = vmatpush1.msra.mxu0 0.0
  %3960 = vmatprep.subr.mxu0 0.0
  %3961 = vmatpush1.msra.mxu0 0.0
  %3962 = vmatprep.subr.mxu0 0.0
  %3963 = vmatpush1.msra.mxu0 0.0
  %3964 = vmatprep.subr.mxu0 0.0
  %3965 = vmatpush1.msra.mxu0 0.0
  %3966 = vmatprep.subr.mxu0 0.0
  %3967 = vmatpush1.msra.mxu0 0.0
  %3968 = vmatprep.subr.mxu0 0.0
  %3969 = vmatpush1.msra.mxu0 0.0
  %3970 = vmatprep.subr.mxu0 0.0
  %3971 = vmatpush1.msra.mxu0 0.0
  %3972 = vmatprep.subr.mxu0 0.0
  %3973 = vmatpush1.msra.mxu0 0.0
  %3974 = vmatprep.subr.mxu0 0.0
  %3975 = vmatpush1.msra.mxu0 0.0
  %3976 = vmatprep.subr.mxu0 0.0
  %3977 = vmatpush1.msra.mxu0 0.0
  %3978 = vmatprep.subr.mxu0 0.0
  %3979 = vmatpush1.msra.mxu0 0.0
  %3980 = vmatprep.subr.mxu0 0.0
  %3981 = vmatpush1.msra.mxu0 0.0
  %3982 = vmatprep.subr.mxu0 0.0
  %3983 = vmatpush1.msra.mxu0 0.0
  %3984 = vmatprep.subr.mxu0 0.0
  %3985 = vmatpush1.msra.mxu0 0.0
  %3986 = vmatprep.subr.mxu0 0.0
  %3987 = vmatpush1.msra.mxu0 0.0
  %3988 = vmatprep.subr.mxu0 0.0
  %3989 = vmatpush1.msra.mxu0 0.0
  %3990 = vmatprep.subr.mxu0 0.0
  %3991 = vmatpush1.msra.mxu0 0.0
  %3992 = vmatprep.subr.mxu0 0.0
  %3993 = vmatpush1.msra.mxu0 0.0
  %3994 = vmatprep.subr.mxu0 0.0
  %3995 = vmatpush1.msra.mxu0 0.0
  %3996 = vmatprep.subr.mxu0 0.0
  %3997 = vmatpush1.msra.mxu0 0.0
  %3998 = vmatprep.mubr.f32.mxu0 0.0
  %3999 = vmatmul.mubr.f32.gmra.mrb[0].mxu0 %v3932
  %v4000 = vpop.f32.mrb[0].mxu0
  %v4001 = vadd.f32 0.0, %v4000
  %v4002 = vpop.f32.mrb[0].mxu0
  %4003 = vdwg.mxu0
  %v4004 = vadd.f32 %v3928, %v4001
  %v4005 = vxor.u32 %v4004, 2147483648
  %v4006 = vmul.f32 %v4005, 1.442695
  %v4007 = vpow.pop %v4006
  %v4008 = vadd.f32 %v4007, 1.0
  %v4009 = vrcp.pop %v4008
  %v4010 = vmul.f32 1.0, %v4009
  %v4011 = vtanh.pop %v4004
  %v4012 = vmul.f32 %v4010, %v3921
  %4014 = vrot.lane.b32.xlu0 %v4011, 64
  %v4015 = vpop.permute.xlu0 %4014
  %v4017 = vmul.f32 %v4010, %v4015
  %4019 = vrot.lane.b32.xlu0 %v4017, 32
  %v4020 = vpop.permute.xlu0 %4019
  %v4022 = vadd.f32 %v4012, %v4020
  %v4023 = vtanh.pop %v4022
  %4025 = vrot.lane.b32.xlu0 %v4023, 64
  %v4026 = vpop.permute.xlu0 %4025
  %v4028 = vmul.f32 %v4010, %v4026
  %v4029 = vld [vmem:[#allocation2 + $0x80] sm:$0xff]
  %4031 = vrot.lane.b32.xlu0 %v4028, 32
  %v4032 = vpop.permute.xlu0 %4031
  %v4033 = vsel %vm2805, %v4032, 0
  %4035 = vmatprep.subr.mxu0 0.0
  %4036 = vmatpush1.msra.mxu0 %v2245
  %4037 = vmatprep.subr.mxu0 0.0
  %4038 = vmatpush1.msra.mxu0 %v2246
  %4039 = vmatprep.subr.mxu0 0.0
  %4040 = vmatpush1.msra.mxu0 %v2247
  %4041 = vmatprep.subr.mxu0 0.0
  %4042 = vmatpush1.msra.mxu0 %v2248
  %4043 = vmatprep.subr.mxu0 0.0
  %4044 = vmatpush1.msra.mxu0 0.0
  %4045 = vmatprep.subr.mxu0 0.0
  %4046 = vmatpush1.msra.mxu0 0.0
  %4047 = vmatprep.subr.mxu0 0.0
  %4048 = vmatpush1.msra.mxu0 0.0
  %4049 = vmatprep.subr.mxu0 0.0
  %4050 = vmatpush1.msra.mxu0 0.0
  %4051 = vmatprep.subr.mxu0 0.0
  %4052 = vmatpush1.msra.mxu0 0.0
  %4053 = vmatprep.subr.mxu0 0.0
  %4054 = vmatpush1.msra.mxu0 0.0
  %4055 = vmatprep.subr.mxu0 0.0
  %4056 = vmatpush1.msra.mxu0 0.0
  %4057 = vmatprep.subr.mxu0 0.0
  %4058 = vmatpush1.msra.mxu0 0.0
  %4059 = vmatprep.subr.mxu0 0.0
  %4060 = vmatpush1.msra.mxu0 0.0
  %4061 = vmatprep.subr.mxu0 0.0
  %4062 = vmatpush1.msra.mxu0 0.0
  %4063 = vmatprep.subr.mxu0 0.0
  %4064 = vmatpush1.msra.mxu0 0.0
  %4065 = vmatprep.subr.mxu0 0.0
  %4066 = vmatpush1.msra.mxu0 0.0
  %4067 = vmatprep.subr.mxu0 0.0
  %4068 = vmatpush1.msra.mxu0 0.0
  %4069 = vmatprep.subr.mxu0 0.0
  %4070 = vmatpush1.msra.mxu0 0.0
  %4071 = vmatprep.subr.mxu0 0.0
  %4072 = vmatpush1.msra.mxu0 0.0
  %4073 = vmatprep.subr.mxu0 0.0
  %4074 = vmatpush1.msra.mxu0 0.0
  %4075 = vmatprep.subr.mxu0 0.0
  %4076 = vmatpush1.msra.mxu0 0.0
  %4077 = vmatprep.subr.mxu0 0.0
  %4078 = vmatpush1.msra.mxu0 0.0
  %4079 = vmatprep.subr.mxu0 0.0
  %4080 = vmatpush1.msra.mxu0 0.0
  %4081 = vmatprep.subr.mxu0 0.0
  %4082 = vmatpush1.msra.mxu0 0.0
  %4083 = vmatprep.subr.mxu0 0.0
  %4084 = vmatpush1.msra.mxu0 0.0
  %4085 = vmatprep.subr.mxu0 0.0
  %4086 = vmatpush1.msra.mxu0 0.0
  %4087 = vmatprep.subr.mxu0 0.0
  %4088 = vmatpush1.msra.mxu0 0.0
  %4089 = vmatprep.subr.mxu0 0.0
  %4090 = vmatpush1.msra.mxu0 0.0
  %4091 = vmatprep.subr.mxu0 0.0
  %4092 = vmatpush1.msra.mxu0 0.0
  %4093 = vmatprep.subr.mxu0 0.0
  %4094 = vmatpush1.msra.mxu0 0.0
  %4095 = vmatprep.subr.mxu0 0.0
  %4096 = vmatpush1.msra.mxu0 0.0
  %4097 = vmatprep.subr.mxu0 0.0
  %4098 = vmatpush1.msra.mxu0 0.0
  %4099 = vmatprep.mubr.f32.mxu0 0.0
  %4100 = vmatmul.mubr.f32.gmra.mrb[0].mxu0 %v4033
  %v4101 = vpop.f32.mrb[0].mxu0
  %v4102 = vadd.f32 0.0, %v4101
  %v4103 = vpop.f32.mrb[0].mxu0
  %4104 = vdwg.mxu0
  %v4105 = vadd.f32 %v4029, %v4102
  %v4106 = vxor.u32 %v4105, 2147483648
  %v4107 = vmul.f32 %v4106, 1.442695
  %v4108 = vpow.pop %v4107
  %v4109 = vadd.f32 %v4108, 1.0
  %v4110 = vrcp.pop %v4109
  %v4111 = vmul.f32 1.0, %v4110
  %v4112 = vtanh.pop %v4105
  %v4113 = vmul.f32 %v4111, %v4022
  %4115 = vrot.lane.b32.xlu0 %v4112, 64
  %v4116 = vpop.permute.xlu0 %4115
  %v4118 = vmul.f32 %v4111, %v4116
  %4120 = vrot.lane.b32.xlu0 %v4118, 32
  %v4121 = vpop.permute.xlu0 %4120
  %v4123 = vadd.f32 %v4113, %v4121
  %v4124 = vtanh.pop %v4123
  %4126 = vrot.lane.b32.xlu0 %v4124, 64
  %v4127 = vpop.permute.xlu0 %4126
  %v4129 = vmul.f32 %v4111, %v4127
  %v4130 = vld [vmem:[#allocation2 + $0x90] sm:$0xff]
  %4132 = vrot.lane.b32.xlu0 %v4129, 32
  %v4133 = vpop.permute.xlu0 %4132
  %v4134 = vsel %vm2805, %v4133, 0
  %4136 = vmatprep.subr.mxu0 0.0
  %4137 = vmatpush1.msra.mxu0 %v2245
  %4138 = vmatprep.subr.mxu0 0.0
  %4139 = vmatpush1.msra.mxu0 %v2246
  %4140 = vmatprep.subr.mxu0 0.0
  %4141 = vmatpush1.msra.mxu0 %v2247
  %4142 = vmatprep.subr.mxu0 0.0
  %4143 = vmatpush1.msra.mxu0 %v2248
  %4144 = vmatprep.subr.mxu0 0.0
  %4145 = vmatpush1.msra.mxu0 0.0
  %4146 = vmatprep.subr.mxu0 0.0
  %4147 = vmatpush1.msra.mxu0 0.0
  %4148 = vmatprep.subr.mxu0 0.0
  %4149 = vmatpush1.msra.mxu0 0.0
  %4150 = vmatprep.subr.mxu0 0.0
  %4151 = vmatpush1.msra.mxu0 0.0
  %4152 = vmatprep.subr.mxu0 0.0
  %4153 = vmatpush1.msra.mxu0 0.0
  %4154 = vmatprep.subr.mxu0 0.0
  %4155 = vmatpush1.msra.mxu0 0.0
  %4156 = vmatprep.subr.mxu0 0.0
  %4157 = vmatpush1.msra.mxu0 0.0
  %4158 = vmatprep.subr.mxu0 0.0
  %4159 = vmatpush1.msra.mxu0 0.0
  %4160 = vmatprep.subr.mxu0 0.0
  %4161 = vmatpush1.msra.mxu0 0.0
  %4162 = vmatprep.subr.mxu0 0.0
  %4163 = vmatpush1.msra.mxu0 0.0
  %4164 = vmatprep.subr.mxu0 0.0
  %4165 = vmatpush1.msra.mxu0 0.0
  %4166 = vmatprep.subr.mxu0 0.0
  %4167 = vmatpush1.msra.mxu0 0.0
  %4168 = vmatprep.subr.mxu0 0.0
  %4169 = vmatpush1.msra.mxu0 0.0
  %4170 = vmatprep.subr.mxu0 0.0
  %4171 = vmatpush1.msra.mxu0 0.0
  %4172 = vmatprep.subr.mxu0 0.0
  %4173 = vmatpush1.msra.mxu0 0.0
  %4174 = vmatprep.subr.mxu0 0.0
  %4175 = vmatpush1.msra.mxu0 0.0
  %4176 = vmatprep.subr.mxu0 0.0
  %4177 = vmatpush1.msra.mxu0 0.0
  %4178 = vmatprep.subr.mxu0 0.0
  %4179 = vmatpush1.msra.mxu0 0.0
  %4180 = vmatprep.subr.mxu0 0.0
  %4181 = vmatpush1.msra.mxu0 0.0
  %4182 = vmatprep.subr.mxu0 0.0
  %4183 = vmatpush1.msra.mxu0 0.0
  %4184 = vmatprep.subr.mxu0 0.0
  %4185 = vmatpush1.msra.mxu0 0.0
  %4186 = vmatprep.subr.mxu0 0.0
  %4187 = vmatpush1.msra.mxu0 0.0
  %4188 = vmatprep.subr.mxu0 0.0
  %4189 = vmatpush1.msra.mxu0 0.0
  %4190 = vmatprep.subr.mxu0 0.0
  %4191 = vmatpush1.msra.mxu0 0.0
  %4192 = vmatprep.subr.mxu0 0.0
  %4193 = vmatpush1.msra.mxu0 0.0
  %4194 = vmatprep.subr.mxu0 0.0
  %4195 = vmatpush1.msra.mxu0 0.0
  %4196 = vmatprep.subr.mxu0 0.0
  %4197 = vmatpush1.msra.mxu0 0.0
  %4198 = vmatprep.subr.mxu0 0.0
  %4199 = vmatpush1.msra.mxu0 0.0
  %4200 = vmatprep.mubr.f32.mxu0 0.0
  %4201 = vmatmul.mubr.f32.gmra.mrb[0].mxu0 %v4134
  %v4202 = vpop.f32.mrb[0].mxu0
  %v4203 = vadd.f32 0.0, %v4202
  %v4204 = vpop.f32.mrb[0].mxu0
  %4205 = vdwg.mxu0
  %v4206 = vadd.f32 %v4130, %v4203
  %v4207 = vxor.u32 %v4206, 2147483648
  %v4208 = vmul.f32 %v4207, 1.442695
  %v4209 = vpow.pop %v4208
  %v4210 = vadd.f32 %v4209, 1.0
  %v4211 = vrcp.pop %v4210
  %v4212 = vmul.f32 1.0, %v4211
  %v4213 = vtanh.pop %v4206
  %v4214 = vmul.f32 %v4212, %v4123
  %4216 = vrot.lane.b32.xlu0 %v4213, 64
  %v4217 = vpop.permute.xlu0 %4216
  %v4219 = vmul.f32 %v4212, %v4217
  %4221 = vrot.lane.b32.xlu0 %v4219, 32
  %v4222 = vpop.permute.xlu0 %4221
  %v4224 = vadd.f32 %v4214, %v4222
  %v4225 = vtanh.pop %v4224
  %4227 = vrot.lane.b32.xlu0 %v4225, 64
  %v4228 = vpop.permute.xlu0 %4227
  %v4230 = vmul.f32 %v4212, %v4228
  %v4231 = vld [vmem:[#allocation2 + $0xa0] sm:$0xff]
  %4233 = vrot.lane.b32.xlu0 %v4230, 32
  %v4234 = vpop.permute.xlu0 %4233
  %v4235 = vsel %vm2805, %v4234, 0
  %4237 = vmatprep.subr.mxu0 0.0
  %4238 = vmatpush1.msra.mxu0 %v2245
  %4239 = vmatprep.subr.mxu0 0.0
  %4240 = vmatpush1.msra.mxu0 %v2246
  %4241 = vmatprep.subr.mxu0 0.0
  %4242 = vmatpush1.msra.mxu0 %v2247
  %4243 = vmatprep.subr.mxu0 0.0
  %4244 = vmatpush1.msra.mxu0 %v2248
  %4245 = vmatprep.subr.mxu0 0.0
  %4246 = vmatpush1.msra.mxu0 0.0
  %4247 = vmatprep.subr.mxu0 0.0
  %4248 = vmatpush1.msra.mxu0 0.0
  %4249 = vmatprep.subr.mxu0 0.0
  %4250 = vmatpush1.msra.mxu0 0.0
  %4251 = vmatprep.subr.mxu0 0.0
  %4252 = vmatpush1.msra.mxu0 0.0
  %4253 = vmatprep.subr.mxu0 0.0
  %4254 = vmatpush1.msra.mxu0 0.0
  %4255 = vmatprep.subr.mxu0 0.0
  %4256 = vmatpush1.msra.mxu0 0.0
  %4257 = vmatprep.subr.mxu0 0.0
  %4258 = vmatpush1.msra.mxu0 0.0
  %4259 = vmatprep.subr.mxu0 0.0
  %4260 = vmatpush1.msra.mxu0 0.0
  %4261 = vmatprep.subr.mxu0 0.0
  %4262 = vmatpush1.msra.mxu0 0.0
  %4263 = vmatprep.subr.mxu0 0.0
  %4264 = vmatpush1.msra.mxu0 0.0
  %4265 = vmatprep.subr.mxu0 0.0
  %4266 = vmatpush1.msra.mxu0 0.0
  %4267 = vmatprep.subr.mxu0 0.0
  %4268 = vmatpush1.msra.mxu0 0.0
  %4269 = vmatprep.subr.mxu0 0.0
  %4270 = vmatpush1.msra.mxu0 0.0
  %4271 = vmatprep.subr.mxu0 0.0
  %4272 = vmatpush1.msra.mxu0 0.0
  %4273 = vmatprep.subr.mxu0 0.0
  %4274 = vmatpush1.msra.mxu0 0.0
  %4275 = vmatprep.subr.mxu0 0.0
  %4276 = vmatpush1.msra.mxu0 0.0
  %4277 = vmatprep.subr.mxu0 0.0
  %4278 = vmatpush1.msra.mxu0 0.0
  %4279 = vmatprep.subr.mxu0 0.0
  %4280 = vmatpush1.msra.mxu0 0.0
  %4281 = vmatprep.subr.mxu0 0.0
  %4282 = vmatpush1.msra.mxu0 0.0
  %4283 = vmatprep.subr.mxu0 0.0
  %4284 = vmatpush1.msra.mxu0 0.0
  %4285 = vmatprep.subr.mxu0 0.0
  %4286 = vmatpush1.msra.mxu0 0.0
  %4287 = vmatprep.subr.mxu0 0.0
  %4288 = vmatpush1.msra.mxu0 0.0
  %4289 = vmatprep.subr.mxu0 0.0
  %4290 = vmatpush1.msra.mxu0 0.0
  %4291 = vmatprep.subr.mxu0 0.0
  %4292 = vmatpush1.msra.mxu0 0.0
  %4293 = vmatprep.subr.mxu0 0.0
  %4294 = vmatpush1.msra.mxu0 0.0
  %4295 = vmatprep.subr.mxu0 0.0
  %4296 = vmatpush1.msra.mxu0 0.0
  %4297 = vmatprep.subr.mxu0 0.0
  %4298 = vmatpush1.msra.mxu0 0.0
  %4299 = vmatprep.subr.mxu0 0.0
  %4300 = vmatpush1.msra.mxu0 0.0
  %4301 = vmatprep.mubr.f32.mxu0 0.0
  %4302 = vmatmul.mubr.f32.gmra.mrb[0].mxu0 %v4235
  %v4303 = vpop.f32.mrb[0].mxu0
  %v4304 = vadd.f32 0.0, %v4303
  %v4305 = vpop.f32.mrb[0].mxu0
  %4306 = vdwg.mxu0
  %v4307 = vadd.f32 %v4231, %v4304
  %v4308 = vxor.u32 %v4307, 2147483648
  %v4309 = vmul.f32 %v4308, 1.442695
  %v4310 = vpow.pop %v4309
  %v4311 = vadd.f32 %v4310, 1.0
  %v4312 = vrcp.pop %v4311
  %v4313 = vmul.f32 1.0, %v4312
  %v4314 = vtanh.pop %v4307
  %v4315 = vmul.f32 %v4313, %v4224
  %4317 = vrot.lane.b32.xlu0 %v4314, 64
  %v4318 = vpop.permute.xlu0 %4317
  %v4320 = vmul.f32 %v4313, %v4318
  %4322 = vrot.lane.b32.xlu0 %v4320, 32
  %v4323 = vpop.permute.xlu0 %4322
  %v4325 = vadd.f32 %v4315, %v4323
  %v4326 = vtanh.pop %v4325
  %4328 = vrot.lane.b32.xlu0 %v4326, 64
  %v4329 = vpop.permute.xlu0 %4328
  %v4331 = vmul.f32 %v4313, %v4329
  %v4332 = vld [vmem:[#allocation2 + $0xb0] sm:$0xff]
  %4334 = vrot.lane.b32.xlu0 %v4331, 32
  %v4335 = vpop.permute.xlu0 %4334
  %v4336 = vsel %vm2805, %v4335, 0
  %4338 = vmatprep.subr.mxu0 0.0
  %4339 = vmatpush1.msra.mxu0 %v2245
  %4340 = vmatprep.subr.mxu0 0.0
  %4341 = vmatpush1.msra.mxu0 %v2246
  %4342 = vmatprep.subr.mxu0 0.0
  %4343 = vmatpush1.msra.mxu0 %v2247
  %4344 = vmatprep.subr.mxu0 0.0
  %4345 = vmatpush1.msra.mxu0 %v2248
  %4346 = vmatprep.subr.mxu0 0.0
  %4347 = vmatpush1.msra.mxu0 0.0
  %4348 = vmatprep.subr.mxu0 0.0
  %4349 = vmatpush1.msra.mxu0 0.0
  %4350 = vmatprep.subr.mxu0 0.0
  %4351 = vmatpush1.msra.mxu0 0.0
  %4352 = vmatprep.subr.mxu0 0.0
  %4353 = vmatpush1.msra.mxu0 0.0
  %4354 = vmatprep.subr.mxu0 0.0
  %4355 = vmatpush1.msra.mxu0 0.0
  %4356 = vmatprep.subr.mxu0 0.0
  %4357 = vmatpush1.msra.mxu0 0.0
  %4358 = vmatprep.subr.mxu0 0.0
  %4359 = vmatpush1.msra.mxu0 0.0
  %4360 = vmatprep.subr.mxu0 0.0
  %4361 = vmatpush1.msra.mxu0 0.0
  %4362 = vmatprep.subr.mxu0 0.0
  %4363 = vmatpush1.msra.mxu0 0.0
  %4364 = vmatprep.subr.mxu0 0.0
  %4365 = vmatpush1.msra.mxu0 0.0
  %4366 = vmatprep.subr.mxu0 0.0
  %4367 = vmatpush1.msra.mxu0 0.0
  %4368 = vmatprep.subr.mxu0 0.0
  %4369 = vmatpush1.msra.mxu0 0.0
  %4370 = vmatprep.subr.mxu0 0.0
  %4371 = vmatpush1.msra.mxu0 0.0
  %4372 = vmatprep.subr.mxu0 0.0
  %4373 = vmatpush1.msra.mxu0 0.0
  %4374 = vmatprep.subr.mxu0 0.0
  %4375 = vmatpush1.msra.mxu0 0.0
  %4376 = vmatprep.subr.mxu0 0.0
  %4377 = vmatpush1.msra.mxu0 0.0
  %4378 = vmatprep.subr.mxu0 0.0
  %4379 = vmatpush1.msra.mxu0 0.0
  %4380 = vmatprep.subr.mxu0 0.0
  %4381 = vmatpush1.msra.mxu0 0.0
  %4382 = vmatprep.subr.mxu0 0.0
  %4383 = vmatpush1.msra.mxu0 0.0
  %4384 = vmatprep.subr.mxu0 0.0
  %4385 = vmatpush1.msra.mxu0 0.0
  %4386 = vmatprep.subr.mxu0 0.0
  %4387 = vmatpush1.msra.mxu0 0.0
  %4388 = vmatprep.subr.mxu0 0.0
  %4389 = vmatpush1.msra.mxu0 0.0
  %4390 = vmatprep.subr.mxu0 0.0
  %4391 = vmatpush1.msra.mxu0 0.0
  %4392 = vmatprep.subr.mxu0 0.0
  %4393 = vmatpush1.msra.mxu0 0.0
  %4394 = vmatprep.subr.mxu0 0.0
  %4395 = vmatpush1.msra.mxu0 0.0
  %4396 = vmatprep.subr.mxu0 0.0
  %4397 = vmatpush1.msra.mxu0 0.0
  %4398 = vmatprep.subr.mxu0 0.0
  %4399 = vmatpush1.msra.mxu0 0.0
  %4400 = vmatprep.subr.mxu0 0.0
  %4401 = vmatpush1.msra.mxu0 0.0
  %4402 = vmatprep.mubr.f32.mxu0 0.0
  %4403 = vmatmul.mubr.f32.gmra.mrb[0].mxu0 %v4336
  %v4404 = vpop.f32.mrb[0].mxu0
  %v4405 = vadd.f32 0.0, %v4404
  %v4406 = vpop.f32.mrb[0].mxu0
  %4407 = vdwg.mxu0
  %v4408 = vadd.f32 %v4332, %v4405
  %v4409 = vxor.u32 %v4408, 2147483648
  %v4410 = vmul.f32 %v4409, 1.442695
  %v4411 = vpow.pop %v4410
  %v4412 = vadd.f32 %v4411, 1.0
  %v4413 = vrcp.pop %v4412
  %v4414 = vmul.f32 1.0, %v4413
  %v4415 = vtanh.pop %v4408
  %v4416 = vmul.f32 %v4414, %v4325
  %4418 = vrot.lane.b32.xlu0 %v4415, 64
  %v4419 = vpop.permute.xlu0 %4418
  %v4421 = vmul.f32 %v4414, %v4419
  %4423 = vrot.lane.b32.xlu0 %v4421, 32
  %v4424 = vpop.permute.xlu0 %4423
  %v4426 = vadd.f32 %v4416, %v4424
  %v4427 = vtanh.pop %v4426
  %4429 = vrot.lane.b32.xlu0 %v4427, 64
  %v4430 = vpop.permute.xlu0 %4429
  %v4432 = vmul.f32 %v4414, %v4430
  %v4433 = vld [vmem:[#allocation2 + $0xc0] sm:$0xff]
  %4435 = vrot.lane.b32.xlu0 %v4432, 32
  %v4436 = vpop.permute.xlu0 %4435
  %v4437 = vsel %vm2805, %v4436, 0
  %4439 = vmatprep.subr.mxu0 0.0
  %4440 = vmatpush1.msra.mxu0 %v2245
  %4441 = vmatprep.subr.mxu0 0.0
  %4442 = vmatpush1.msra.mxu0 %v2246
  %4443 = vmatprep.subr.mxu0 0.0
  %4444 = vmatpush1.msra.mxu0 %v2247
  %4445 = vmatprep.subr.mxu0 0.0
  %4446 = vmatpush1.msra.mxu0 %v2248
  %4447 = vmatprep.subr.mxu0 0.0
  %4448 = vmatpush1.msra.mxu0 0.0
  %4449 = vmatprep.subr.mxu0 0.0
  %4450 = vmatpush1.msra.mxu0 0.0
  %4451 = vmatprep.subr.mxu0 0.0
  %4452 = vmatpush1.msra.mxu0 0.0
  %4453 = vmatprep.subr.mxu0 0.0
  %4454 = vmatpush1.msra.mxu0 0.0
  %4455 = vmatprep.subr.mxu0 0.0
  %4456 = vmatpush1.msra.mxu0 0.0
  %4457 = vmatprep.subr.mxu0 0.0
  %4458 = vmatpush1.msra.mxu0 0.0
  %4459 = vmatprep.subr.mxu0 0.0
  %4460 = vmatpush1.msra.mxu0 0.0
  %4461 = vmatprep.subr.mxu0 0.0
  %4462 = vmatpush1.msra.mxu0 0.0
  %4463 = vmatprep.subr.mxu0 0.0
  %4464 = vmatpush1.msra.mxu0 0.0
  %4465 = vmatprep.subr.mxu0 0.0
  %4466 = vmatpush1.msra.mxu0 0.0
  %4467 = vmatprep.subr.mxu0 0.0
  %4468 = vmatpush1.msra.mxu0 0.0
  %4469 = vmatprep.subr.mxu0 0.0
  %4470 = vmatpush1.msra.mxu0 0.0
  %4471 = vmatprep.subr.mxu0 0.0
  %4472 = vmatpush1.msra.mxu0 0.0
  %4473 = vmatprep.subr.mxu0 0.0
  %4474 = vmatpush1.msra.mxu0 0.0
  %4475 = vmatprep.subr.mxu0 0.0
  %4476 = vmatpush1.msra.mxu0 0.0
  %4477 = vmatprep.subr.mxu0 0.0
  %4478 = vmatpush1.msra.mxu0 0.0
  %4479 = vmatprep.subr.mxu0 0.0
  %4480 = vmatpush1.msra.mxu0 0.0
  %4481 = vmatprep.subr.mxu0 0.0
  %4482 = vmatpush1.msra.mxu0 0.0
  %4483 = vmatprep.subr.mxu0 0.0
  %4484 = vmatpush1.msra.mxu0 0.0
  %4485 = vmatprep.subr.mxu0 0.0
  %4486 = vmatpush1.msra.mxu0 0.0
  %4487 = vmatprep.subr.mxu0 0.0
  %4488 = vmatpush1.msra.mxu0 0.0
  %4489 = vmatprep.subr.mxu0 0.0
  %4490 = vmatpush1.msra.mxu0 0.0
  %4491 = vmatprep.subr.mxu0 0.0
  %4492 = vmatpush1.msra.mxu0 0.0
  %4493 = vmatprep.subr.mxu0 0.0
  %4494 = vmatpush1.msra.mxu0 0.0
  %4495 = vmatprep.subr.mxu0 0.0
  %4496 = vmatpush1.msra.mxu0 0.0
  %4497 = vmatprep.subr.mxu0 0.0
  %4498 = vmatpush1.msra.mxu0 0.0
  %4499 = vmatprep.subr.mxu0 0.0
  %4500 = vmatpush1.msra.mxu0 0.0
  %4501 = vmatprep.subr.mxu0 0.0
  %4502 = vmatpush1.msra.mxu0 0.0
  %4503 = vmatprep.mubr.f32.mxu0 0.0
  %4504 = vmatmul.mubr.f32.gmra.mrb[0].mxu0 %v4437
  %v4505 = vpop.f32.mrb[0].mxu0
  %v4506 = vadd.f32 0.0, %v4505
  %v4507 = vpop.f32.mrb[0].mxu0
  %4508 = vdwg.mxu0
  %v4509 = vadd.f32 %v4433, %v4506
  %v4510 = vxor.u32 %v4509, 2147483648
  %v4511 = vmul.f32 %v4510, 1.442695
  %v4512 = vpow.pop %v4511
  %v4513 = vadd.f32 %v4512, 1.0
  %v4514 = vrcp.pop %v4513
  %v4515 = vmul.f32 1.0, %v4514
  %v4516 = vtanh.pop %v4509
  %v4517 = vmul.f32 %v4515, %v4426
  %4519 = vrot.lane.b32.xlu0 %v4516, 64
  %v4520 = vpop.permute.xlu0 %4519
  %v4522 = vmul.f32 %v4515, %v4520
  %4524 = vrot.lane.b32.xlu0 %v4522, 32
  %v4525 = vpop.permute.xlu0 %4524
  %v4527 = vadd.f32 %v4517, %v4525
  %v4528 = vtanh.pop %v4527
  %4530 = vrot.lane.b32.xlu0 %v4528, 64
  %v4531 = vpop.permute.xlu0 %4530
  %v4533 = vmul.f32 %v4515, %v4531
  %v4534 = vld [vmem:[#allocation2 + $0xd0] sm:$0xff]
  %4536 = vrot.lane.b32.xlu0 %v4533, 32
  %v4537 = vpop.permute.xlu0 %4536
  %v4538 = vsel %vm2805, %v4537, 0
  %4540 = vmatprep.subr.mxu0 0.0
  %4541 = vmatpush1.msra.mxu0 %v2245
  %4542 = vmatprep.subr.mxu0 0.0
  %4543 = vmatpush1.msra.mxu0 %v2246
  %4544 = vmatprep.subr.mxu0 0.0
  %4545 = vmatpush1.msra.mxu0 %v2247
  %4546 = vmatprep.subr.mxu0 0.0
  %4547 = vmatpush1.msra.mxu0 %v2248
  %4548 = vmatprep.subr.mxu0 0.0
  %4549 = vmatpush1.msra.mxu0 0.0
  %4550 = vmatprep.subr.mxu0 0.0
  %4551 = vmatpush1.msra.mxu0 0.0
  %4552 = vmatprep.subr.mxu0 0.0
  %4553 = vmatpush1.msra.mxu0 0.0
  %4554 = vmatprep.subr.mxu0 0.0
  %4555 = vmatpush1.msra.mxu0 0.0
  %4556 = vmatprep.subr.mxu0 0.0
  %4557 = vmatpush1.msra.mxu0 0.0
  %4558 = vmatprep.subr.mxu0 0.0
  %4559 = vmatpush1.msra.mxu0 0.0
  %4560 = vmatprep.subr.mxu0 0.0
  %4561 = vmatpush1.msra.mxu0 0.0
  %4562 = vmatprep.subr.mxu0 0.0
  %4563 = vmatpush1.msra.mxu0 0.0
  %4564 = vmatprep.subr.mxu0 0.0
  %4565 = vmatpush1.msra.mxu0 0.0
  %4566 = vmatprep.subr.mxu0 0.0
  %4567 = vmatpush1.msra.mxu0 0.0
  %4568 = vmatprep.subr.mxu0 0.0
  %4569 = vmatpush1.msra.mxu0 0.0
  %4570 = vmatprep.subr.mxu0 0.0
  %4571 = vmatpush1.msra.mxu0 0.0
  %4572 = vmatprep.subr.mxu0 0.0
  %4573 = vmatpush1.msra.mxu0 0.0
  %4574 = vmatprep.subr.mxu0 0.0
  %4575 = vmatpush1.msra.mxu0 0.0
  %4576 = vmatprep.subr.mxu0 0.0
  %4577 = vmatpush1.msra.mxu0 0.0
  %4578 = vmatprep.subr.mxu0 0.0
  %4579 = vmatpush1.msra.mxu0 0.0
  %4580 = vmatprep.subr.mxu0 0.0
  %4581 = vmatpush1.msra.mxu0 0.0
  %4582 = vmatprep.subr.mxu0 0.0
  %4583 = vmatpush1.msra.mxu0 0.0
  %4584 = vmatprep.subr.mxu0 0.0
  %4585 = vmatpush1.msra.mxu0 0.0
  %4586 = vmatprep.subr.mxu0 0.0
  %4587 = vmatpush1.msra.mxu0 0.0
  %4588 = vmatprep.subr.mxu0 0.0
  %4589 = vmatpush1.msra.mxu0 0.0
  %4590 = vmatprep.subr.mxu0 0.0
  %4591 = vmatpush1.msra.mxu0 0.0
  %4592 = vmatprep.subr.mxu0 0.0
  %4593 = vmatpush1.msra.mxu0 0.0
  %4594 = vmatprep.subr.mxu0 0.0
  %4595 = vmatpush1.msra.mxu0 0.0
  %4596 = vmatprep.subr.mxu0 0.0
  %4597 = vmatpush1.msra.mxu0 0.0
  %4598 = vmatprep.subr.mxu0 0.0
  %4599 = vmatpush1.msra.mxu0 0.0
  %4600 = vmatprep.subr.mxu0 0.0
  %4601 = vmatpush1.msra.mxu0 0.0
  %4602 = vmatprep.subr.mxu0 0.0
  %4603 = vmatpush1.msra.mxu0 0.0
  %4604 = vmatprep.mubr.f32.mxu0 0.0
  %4605 = vmatmul.mubr.f32.gmra.mrb[0].mxu0 %v4538
  %v4606 = vpop.f32.mrb[0].mxu0
  %v4607 = vadd.f32 0.0, %v4606
  %v4608 = vpop.f32.mrb[0].mxu0
  %4609 = vdwg.mxu0
  %v4610 = vadd.f32 %v4534, %v4607
  %v4611 = vxor.u32 %v4610, 2147483648
  %v4612 = vmul.f32 %v4611, 1.442695
  %v4613 = vpow.pop %v4612
  %v4614 = vadd.f32 %v4613, 1.0
  %v4615 = vrcp.pop %v4614
  %v4616 = vmul.f32 1.0, %v4615
  %v4617 = vtanh.pop %v4610
  %v4618 = vmul.f32 %v4616, %v4527
  %4620 = vrot.lane.b32.xlu0 %v4617, 64
  %v4621 = vpop.permute.xlu0 %4620
  %v4623 = vmul.f32 %v4616, %v4621
  %4625 = vrot.lane.b32.xlu0 %v4623, 32
  %v4626 = vpop.permute.xlu0 %4625
  %v4628 = vadd.f32 %v4618, %v4626
  %v4629 = vtanh.pop %v4628
  %4631 = vrot.lane.b32.xlu0 %v4629, 64
  %v4632 = vpop.permute.xlu0 %4631
  %v4634 = vmul.f32 %v4616, %v4632
  %v4635 = vld [vmem:[#allocation2 + $0xe0] sm:$0xff]
  %4637 = vrot.lane.b32.xlu0 %v4634, 32
  %v4638 = vpop.permute.xlu0 %4637
  %v4639 = vsel %vm2805, %v4638, 0
  %4641 = vmatprep.subr.mxu0 0.0
  %4642 = vmatpush1.msra.mxu0 %v2245
  %4643 = vmatprep.subr.mxu0 0.0
  %4644 = vmatpush1.msra.mxu0 %v2246
  %4645 = vmatprep.subr.mxu0 0.0
  %4646 = vmatpush1.msra.mxu0 %v2247
  %4647 = vmatprep.subr.mxu0 0.0
  %4648 = vmatpush1.msra.mxu0 %v2248
  %4649 = vmatprep.subr.mxu0 0.0
  %4650 = vmatpush1.msra.mxu0 0.0
  %4651 = vmatprep.subr.mxu0 0.0
  %4652 = vmatpush1.msra.mxu0 0.0
  %4653 = vmatprep.subr.mxu0 0.0
  %4654 = vmatpush1.msra.mxu0 0.0
  %4655 = vmatprep.subr.mxu0 0.0
  %4656 = vmatpush1.msra.mxu0 0.0
  %4657 = vmatprep.subr.mxu0 0.0
  %4658 = vmatpush1.msra.mxu0 0.0
  %4659 = vmatprep.subr.mxu0 0.0
  %4660 = vmatpush1.msra.mxu0 0.0
  %4661 = vmatprep.subr.mxu0 0.0
  %4662 = vmatpush1.msra.mxu0 0.0
  %4663 = vmatprep.subr.mxu0 0.0
  %4664 = vmatpush1.msra.mxu0 0.0
  %4665 = vmatprep.subr.mxu0 0.0
  %4666 = vmatpush1.msra.mxu0 0.0
  %4667 = vmatprep.subr.mxu0 0.0
  %4668 = vmatpush1.msra.mxu0 0.0
  %4669 = vmatprep.subr.mxu0 0.0
  %4670 = vmatpush1.msra.mxu0 0.0
  %4671 = vmatprep.subr.mxu0 0.0
  %4672 = vmatpush1.msra.mxu0 0.0
  %4673 = vmatprep.subr.mxu0 0.0
  %4674 = vmatpush1.msra.mxu0 0.0
  %4675 = vmatprep.subr.mxu0 0.0
  %4676 = vmatpush1.msra.mxu0 0.0
  %4677 = vmatprep.subr.mxu0 0.0
  %4678 = vmatpush1.msra.mxu0 0.0
  %4679 = vmatprep.subr.mxu0 0.0
  %4680 = vmatpush1.msra.mxu0 0.0
  %4681 = vmatprep.subr.mxu0 0.0
  %4682 = vmatpush1.msra.mxu0 0.0
  %4683 = vmatprep.subr.mxu0 0.0
  %4684 = vmatpush1.msra.mxu0 0.0
  %4685 = vmatprep.subr.mxu0 0.0
  %4686 = vmatpush1.msra.mxu0 0.0
  %4687 = vmatprep.subr.mxu0 0.0
  %4688 = vmatpush1.msra.mxu0 0.0
  %4689 = vmatprep.subr.mxu0 0.0
  %4690 = vmatpush1.msra.mxu0 0.0
  %4691 = vmatprep.subr.mxu0 0.0
  %4692 = vmatpush1.msra.mxu0 0.0
  %4693 = vmatprep.subr.mxu0 0.0
  %4694 = vmatpush1.msra.mxu0 0.0
  %4695 = vmatprep.subr.mxu0 0.0
  %4696 = vmatpush1.msra.mxu0 0.0
  %4697 = vmatprep.subr.mxu0 0.0
  %4698 = vmatpush1.msra.mxu0 0.0
  %4699 = vmatprep.subr.mxu0 0.0
  %4700 = vmatpush1.msra.mxu0 0.0
  %4701 = vmatprep.subr.mxu0 0.0
  %4702 = vmatpush1.msra.mxu0 0.0
  %4703 = vmatprep.subr.mxu0 0.0
  %4704 = vmatpush1.msra.mxu0 0.0
  %4705 = vmatprep.mubr.f32.mxu0 0.0
  %4706 = vmatmul.mubr.f32.gmra.mrb[0].mxu0 %v4639
  %v4707 = vpop.f32.mrb[0].mxu0
  %v4708 = vadd.f32 0.0, %v4707
  %v4709 = vpop.f32.mrb[0].mxu0
  %4710 = vdwg.mxu0
  %v4711 = vadd.f32 %v4635, %v4708
  %v4712 = vxor.u32 %v4711, 2147483648
  %v4713 = vmul.f32 %v4712, 1.442695
  %v4714 = vpow.pop %v4713
  %v4715 = vadd.f32 %v4714, 1.0
  %v4716 = vrcp.pop %v4715
  %v4717 = vmul.f32 1.0, %v4716
  %v4718 = vtanh.pop %v4711
  %v4719 = vmul.f32 %v4717, %v4628
  %4721 = vrot.lane.b32.xlu0 %v4718, 64
  %v4722 = vpop.permute.xlu0 %4721
  %v4724 = vmul.f32 %v4717, %v4722
  %4726 = vrot.lane.b32.xlu0 %v4724, 32
  %v4727 = vpop.permute.xlu0 %4726
  %v4729 = vadd.f32 %v4719, %v4727
  %v4730 = vtanh.pop %v4729
  %4732 = vrot.lane.b32.xlu0 %v4730, 64
  %v4733 = vpop.permute.xlu0 %4732
  %v4735 = vmul.f32 %v4717, %v4733
  %v4736 = vld [vmem:[#allocation2 + $0xf0] sm:$0xff]
  %4738 = vrot.lane.b32.xlu0 %v4735, 32
  %v4739 = vpop.permute.xlu0 %4738
  %v4740 = vsel %vm2805, %v4739, 0
  %4742 = vmatprep.subr.mxu0 0.0
  %4743 = vmatpush1.msra.mxu0 %v2245
  %4744 = vmatprep.subr.mxu0 0.0
  %4745 = vmatpush1.msra.mxu0 %v2246
  %4746 = vmatprep.subr.mxu0 0.0
  %4747 = vmatpush1.msra.mxu0 %v2247
  %4748 = vmatprep.subr.mxu0 0.0
  %4749 = vmatpush1.msra.mxu0 %v2248
  %4750 = vmatprep.subr.mxu0 0.0
  %4751 = vmatpush1.msra.mxu0 0.0
  %4752 = vmatprep.subr.mxu0 0.0
  %4753 = vmatpush1.msra.mxu0 0.0
  %4754 = vmatprep.subr.mxu0 0.0
  %4755 = vmatpush1.msra.mxu0 0.0
  %4756 = vmatprep.subr.mxu0 0.0
  %4757 = vmatpush1.msra.mxu0 0.0
  %4758 = vmatprep.subr.mxu0 0.0
  %4759 = vmatpush1.msra.mxu0 0.0
  %4760 = vmatprep.subr.mxu0 0.0
  %4761 = vmatpush1.msra.mxu0 0.0
  %4762 = vmatprep.subr.mxu0 0.0
  %4763 = vmatpush1.msra.mxu0 0.0
  %4764 = vmatprep.subr.mxu0 0.0
  %4765 = vmatpush1.msra.mxu0 0.0
  %4766 = vmatprep.subr.mxu0 0.0
  %4767 = vmatpush1.msra.mxu0 0.0
  %4768 = vmatprep.subr.mxu0 0.0
  %4769 = vmatpush1.msra.mxu0 0.0
  %4770 = vmatprep.subr.mxu0 0.0
  %4771 = vmatpush1.msra.mxu0 0.0
  %4772 = vmatprep.subr.mxu0 0.0
  %4773 = vmatpush1.msra.mxu0 0.0
  %4774 = vmatprep.subr.mxu0 0.0
  %4775 = vmatpush1.msra.mxu0 0.0
  %4776 = vmatprep.subr.mxu0 0.0
  %4777 = vmatpush1.msra.mxu0 0.0
  %4778 = vmatprep.subr.mxu0 0.0
  %4779 = vmatpush1.msra.mxu0 0.0
  %4780 = vmatprep.subr.mxu0 0.0
  %4781 = vmatpush1.msra.mxu0 0.0
  %4782 = vmatprep.subr.mxu0 0.0
  %4783 = vmatpush1.msra.mxu0 0.0
  %4784 = vmatprep.subr.mxu0 0.0
  %4785 = vmatpush1.msra.mxu0 0.0
  %4786 = vmatprep.subr.mxu0 0.0
  %4787 = vmatpush1.msra.mxu0 0.0
  %4788 = vmatprep.subr.mxu0 0.0
  %4789 = vmatpush1.msra.mxu0 0.0
  %4790 = vmatprep.subr.mxu0 0.0
  %4791 = vmatpush1.msra.mxu0 0.0
  %4792 = vmatprep.subr.mxu0 0.0
  %4793 = vmatpush1.msra.mxu0 0.0
  %4794 = vmatprep.subr.mxu0 0.0
  %4795 = vmatpush1.msra.mxu0 0.0
  %4796 = vmatprep.subr.mxu0 0.0
  %4797 = vmatpush1.msra.mxu0 0.0
  %4798 = vmatprep.subr.mxu0 0.0
  %4799 = vmatpush1.msra.mxu0 0.0
  %4800 = vmatprep.subr.mxu0 0.0
  %4801 = vmatpush1.msra.mxu0 0.0
  %4802 = vmatprep.subr.mxu0 0.0
  %4803 = vmatpush1.msra.mxu0 0.0
  %4804 = vmatprep.subr.mxu0 0.0
  %4805 = vmatpush1.msra.mxu0 0.0
  %4806 = vmatprep.mubr.f32.mxu0 0.0
  %4807 = vmatmul.mubr.f32.gmra.mrb[0].mxu0 %v4740
  %v4808 = vpop.f32.mrb[0].mxu0
  %v4809 = vadd.f32 0.0, %v4808
  %v4810 = vpop.f32.mrb[0].mxu0
  %4811 = vdwg.mxu0
  %v4812 = vadd.f32 %v4736, %v4809
  %v4813 = vxor.u32 %v4812, 2147483648
  %v4814 = vmul.f32 %v4813, 1.442695
  %v4815 = vpow.pop %v4814
  %v4816 = vadd.f32 %v4815, 1.0
  %v4817 = vrcp.pop %v4816
  %v4818 = vmul.f32 1.0, %v4817
  %v4819 = vtanh.pop %v4812
  %v4820 = vmul.f32 %v4818, %v4729
  %4822 = vrot.lane.b32.xlu0 %v4819, 64
  %v4823 = vpop.permute.xlu0 %4822
  %v4825 = vmul.f32 %v4818, %v4823
  %4827 = vrot.lane.b32.xlu0 %v4825, 32
  %v4828 = vpop.permute.xlu0 %4827
  %v4830 = vadd.f32 %v4820, %v4828
  %v4831 = vtanh.pop %v4830
  %4833 = vrot.lane.b32.xlu0 %v4831, 64
  %v4834 = vpop.permute.xlu0 %4833
  %v4836 = vmul.f32 %v4818, %v4834
  %v4837 = vld [vmem:[#allocation2 + $0x100] sm:$0xff]
  %4839 = vrot.lane.b32.xlu0 %v4836, 32
  %v4840 = vpop.permute.xlu0 %4839
  %v4841 = vsel %vm2805, %v4840, 0
  %4843 = vmatprep.subr.mxu0 0.0
  %4844 = vmatpush1.msra.mxu0 %v2245
  %4845 = vmatprep.subr.mxu0 0.0
  %4846 = vmatpush1.msra.mxu0 %v2246
  %4847 = vmatprep.subr.mxu0 0.0
  %4848 = vmatpush1.msra.mxu0 %v2247
  %4849 = vmatprep.subr.mxu0 0.0
  %4850 = vmatpush1.msra.mxu0 %v2248
  %4851 = vmatprep.subr.mxu0 0.0
  %4852 = vmatpush1.msra.mxu0 0.0
  %4853 = vmatprep.subr.mxu0 0.0
  %4854 = vmatpush1.msra.mxu0 0.0
  %4855 = vmatprep.subr.mxu0 0.0
  %4856 = vmatpush1.msra.mxu0 0.0
  %4857 = vmatprep.subr.mxu0 0.0
  %4858 = vmatpush1.msra.mxu0 0.0
  %4859 = vmatprep.subr.mxu0 0.0
  %4860 = vmatpush1.msra.mxu0 0.0
  %4861 = vmatprep.subr.mxu0 0.0
  %4862 = vmatpush1.msra.mxu0 0.0
  %4863 = vmatprep.subr.mxu0 0.0
  %4864 = vmatpush1.msra.mxu0 0.0
  %4865 = vmatprep.subr.mxu0 0.0
  %4866 = vmatpush1.msra.mxu0 0.0
  %4867 = vmatprep.subr.mxu0 0.0
  %4868 = vmatpush1.msra.mxu0 0.0
  %4869 = vmatprep.subr.mxu0 0.0
  %4870 = vmatpush1.msra.mxu0 0.0
  %4871 = vmatprep.subr.mxu0 0.0
  %4872 = vmatpush1.msra.mxu0 0.0
  %4873 = vmatprep.subr.mxu0 0.0
  %4874 = vmatpush1.msra.mxu0 0.0
  %4875 = vmatprep.subr.mxu0 0.0
  %4876 = vmatpush1.msra.mxu0 0.0
  %4877 = vmatprep.subr.mxu0 0.0
  %4878 = vmatpush1.msra.mxu0 0.0
  %4879 = vmatprep.subr.mxu0 0.0
  %4880 = vmatpush1.msra.mxu0 0.0
  %4881 = vmatprep.subr.mxu0 0.0
  %4882 = vmatpush1.msra.mxu0 0.0
  %4883 = vmatprep.subr.mxu0 0.0
  %4884 = vmatpush1.msra.mxu0 0.0
  %4885 = vmatprep.subr.mxu0 0.0
  %4886 = vmatpush1.msra.mxu0 0.0
  %4887 = vmatprep.subr.mxu0 0.0
  %4888 = vmatpush1.msra.mxu0 0.0
  %4889 = vmatprep.subr.mxu0 0.0
  %4890 = vmatpush1.msra.mxu0 0.0
  %4891 = vmatprep.subr.mxu0 0.0
  %4892 = vmatpush1.msra.mxu0 0.0
  %4893 = vmatprep.subr.mxu0 0.0
  %4894 = vmatpush1.msra.mxu0 0.0
  %4895 = vmatprep.subr.mxu0 0.0
  %4896 = vmatpush1.msra.mxu0 0.0
  %4897 = vmatprep.subr.mxu0 0.0
  %4898 = vmatpush1.msra.mxu0 0.0
  %4899 = vmatprep.subr.mxu0 0.0
  %4900 = vmatpush1.msra.mxu0 0.0
  %4901 = vmatprep.subr.mxu0 0.0
  %4902 = vmatpush1.msra.mxu0 0.0
  %4903 = vmatprep.subr.mxu0 0.0
  %4904 = vmatpush1.msra.mxu0 0.0
  %4905 = vmatprep.subr.mxu0 0.0
  %4906 = vmatpush1.msra.mxu0 0.0
  %4907 = vmatprep.mubr.f32.mxu0 0.0
  %4908 = vmatmul.mubr.f32.gmra.mrb[0].mxu0 %v4841
  %v4909 = vpop.f32.mrb[0].mxu0
  %v4910 = vadd.f32 0.0, %v4909
  %v4911 = vpop.f32.mrb[0].mxu0
  %4912 = vdwg.mxu0
  %v4913 = vadd.f32 %v4837, %v4910
  %v4914 = vxor.u32 %v4913, 2147483648
  %v4915 = vmul.f32 %v4914, 1.442695
  %v4916 = vpow.pop %v4915
  %v4917 = vadd.f32 %v4916, 1.0
  %v4918 = vrcp.pop %v4917
  %v4919 = vmul.f32 1.0, %v4918
  %v4920 = vtanh.pop %v4913
  %v4921 = vmul.f32 %v4919, %v4830
  %4923 = vrot.lane.b32.xlu0 %v4920, 64
  %v4924 = vpop.permute.xlu0 %4923
  %v4926 = vmul.f32 %v4919, %v4924
  %4928 = vrot.lane.b32.xlu0 %v4926, 32
  %v4929 = vpop.permute.xlu0 %4928
  %v4931 = vadd.f32 %v4921, %v4929
  %v4932 = vtanh.pop %v4931
  %4934 = vrot.lane.b32.xlu0 %v4932, 64
  %v4935 = vpop.permute.xlu0 %4934
  %v4937 = vmul.f32 %v4919, %v4935
  %v4938 = vld [vmem:[#allocation2 + $0x110] sm:$0xff]
  %4940 = vrot.lane.b32.xlu0 %v4937, 32
  %v4941 = vpop.permute.xlu0 %4940
  %v4942 = vsel %vm2805, %v4941, 0
  %4944 = vmatprep.subr.mxu0 0.0
  %4945 = vmatpush1.msra.mxu0 %v2245
  %4946 = vmatprep.subr.mxu0 0.0
  %4947 = vmatpush1.msra.mxu0 %v2246
  %4948 = vmatprep.subr.mxu0 0.0
  %4949 = vmatpush1.msra.mxu0 %v2247
  %4950 = vmatprep.subr.mxu0 0.0
  %4951 = vmatpush1.msra.mxu0 %v2248
  %4952 = vmatprep.subr.mxu0 0.0
  %4953 = vmatpush1.msra.mxu0 0.0
  %4954 = vmatprep.subr.mxu0 0.0
  %4955 = vmatpush1.msra.mxu0 0.0
  %4956 = vmatprep.subr.mxu0 0.0
  %4957 = vmatpush1.msra.mxu0 0.0
  %4958 = vmatprep.subr.mxu0 0.0
  %4959 = vmatpush1.msra.mxu0 0.0
  %4960 = vmatprep.subr.mxu0 0.0
  %4961 = vmatpush1.msra.mxu0 0.0
  %4962 = vmatprep.subr.mxu0 0.0
  %4963 = vmatpush1.msra.mxu0 0.0
  %4964 = vmatprep.subr.mxu0 0.0
  %4965 = vmatpush1.msra.mxu0 0.0
  %4966 = vmatprep.subr.mxu0 0.0
  %4967 = vmatpush1.msra.mxu0 0.0
  %4968 = vmatprep.subr.mxu0 0.0
  %4969 = vmatpush1.msra.mxu0 0.0
  %4970 = vmatprep.subr.mxu0 0.0
  %4971 = vmatpush1.msra.mxu0 0.0
  %4972 = vmatprep.subr.mxu0 0.0
  %4973 = vmatpush1.msra.mxu0 0.0
  %4974 = vmatprep.subr.mxu0 0.0
  %4975 = vmatpush1.msra.mxu0 0.0
  %4976 = vmatprep.subr.mxu0 0.0
  %4977 = vmatpush1.msra.mxu0 0.0
  %4978 = vmatprep.subr.mxu0 0.0
  %4979 = vmatpush1.msra.mxu0 0.0
  %4980 = vmatprep.subr.mxu0 0.0
  %4981 = vmatpush1.msra.mxu0 0.0
  %4982 = vmatprep.subr.mxu0 0.0
  %4983 = vmatpush1.msra.mxu0 0.0
  %4984 = vmatprep.subr.mxu0 0.0
  %4985 = vmatpush1.msra.mxu0 0.0
  %4986 = vmatprep.subr.mxu0 0.0
  %4987 = vmatpush1.msra.mxu0 0.0
  %4988 = vmatprep.subr.mxu0 0.0
  %4989 = vmatpush1.msra.mxu0 0.0
  %4990 = vmatprep.subr.mxu0 0.0
  %4991 = vmatpush1.msra.mxu0 0.0
  %4992 = vmatprep.subr.mxu0 0.0
  %4993 = vmatpush1.msra.mxu0 0.0
  %4994 = vmatprep.subr.mxu0 0.0
  %4995 = vmatpush1.msra.mxu0 0.0
  %4996 = vmatprep.subr.mxu0 0.0
  %4997 = vmatpush1.msra.mxu0 0.0
  %4998 = vmatprep.subr.mxu0 0.0
  %4999 = vmatpush1.msra.mxu0 0.0
  %5000 = vmatprep.subr.mxu0 0.0
  %5001 = vmatpush1.msra.mxu0 0.0
  %5002 = vmatprep.subr.mxu0 0.0
  %5003 = vmatpush1.msra.mxu0 0.0
  %5004 = vmatprep.subr.mxu0 0.0
  %5005 = vmatpush1.msra.mxu0 0.0
  %5006 = vmatprep.subr.mxu0 0.0
  %5007 = vmatpush1.msra.mxu0 0.0
  %5008 = vmatprep.mubr.f32.mxu0 0.0
  %5009 = vmatmul.mubr.f32.gmra.mrb[0].mxu0 %v4942
  %v5010 = vpop.f32.mrb[0].mxu0
  %v5011 = vadd.f32 0.0, %v5010
  %v5012 = vpop.f32.mrb[0].mxu0
  %5013 = vdwg.mxu0
  %v5014 = vadd.f32 %v4938, %v5011
  %v5015 = vxor.u32 %v5014, 2147483648
  %v5016 = vmul.f32 %v5015, 1.442695
  %v5017 = vpow.pop %v5016
  %v5018 = vadd.f32 %v5017, 1.0
  %v5019 = vrcp.pop %v5018
  %v5020 = vmul.f32 1.0, %v5019
  %v5021 = vtanh.pop %v5014
  %v5022 = vmul.f32 %v5020, %v4931
  %5024 = vrot.lane.b32.xlu0 %v5021, 64
  %v5025 = vpop.permute.xlu0 %5024
  %v5027 = vmul.f32 %v5020, %v5025
  %5029 = vrot.lane.b32.xlu0 %v5027, 32
  %v5030 = vpop.permute.xlu0 %5029
  %v5032 = vadd.f32 %v5022, %v5030
  %v5033 = vtanh.pop %v5032
  %5035 = vrot.lane.b32.xlu0 %v5033, 64
  %v5036 = vpop.permute.xlu0 %5035
  %v5038 = vmul.f32 %v5020, %v5036
  %v5039 = vld [vmem:[#allocation2 + $0x120] sm:$0xff]
  %5041 = vrot.lane.b32.xlu0 %v5038, 32
  %v5042 = vpop.permute.xlu0 %5041
  %v5043 = vsel %vm2805, %v5042, 0
  %5045 = vmatprep.subr.mxu0 0.0
  %5046 = vmatpush1.msra.mxu0 %v2245
  %5047 = vmatprep.subr.mxu0 0.0
  %5048 = vmatpush1.msra.mxu0 %v2246
  %5049 = vmatprep.subr.mxu0 0.0
  %5050 = vmatpush1.msra.mxu0 %v2247
  %5051 = vmatprep.subr.mxu0 0.0
  %5052 = vmatpush1.msra.mxu0 %v2248
  %5053 = vmatprep.subr.mxu0 0.0
  %5054 = vmatpush1.msra.mxu0 0.0
  %5055 = vmatprep.subr.mxu0 0.0
  %5056 = vmatpush1.msra.mxu0 0.0
  %5057 = vmatprep.subr.mxu0 0.0
  %5058 = vmatpush1.msra.mxu0 0.0
  %5059 = vmatprep.subr.mxu0 0.0
  %5060 = vmatpush1.msra.mxu0 0.0
  %5061 = vmatprep.subr.mxu0 0.0
  %5062 = vmatpush1.msra.mxu0 0.0
  %5063 = vmatprep.subr.mxu0 0.0
  %5064 = vmatpush1.msra.mxu0 0.0
  %5065 = vmatprep.subr.mxu0 0.0
  %5066 = vmatpush1.msra.mxu0 0.0
  %5067 = vmatprep.subr.mxu0 0.0
  %5068 = vmatpush1.msra.mxu0 0.0
  %5069 = vmatprep.subr.mxu0 0.0
  %5070 = vmatpush1.msra.mxu0 0.0
  %5071 = vmatprep.subr.mxu0 0.0
  %5072 = vmatpush1.msra.mxu0 0.0
  %5073 = vmatprep.subr.mxu0 0.0
  %5074 = vmatpush1.msra.mxu0 0.0
  %5075 = vmatprep.subr.mxu0 0.0
  %5076 = vmatpush1.msra.mxu0 0.0
  %5077 = vmatprep.subr.mxu0 0.0
  %5078 = vmatpush1.msra.mxu0 0.0
  %5079 = vmatprep.subr.mxu0 0.0
  %5080 = vmatpush1.msra.mxu0 0.0
  %5081 = vmatprep.subr.mxu0 0.0
  %5082 = vmatpush1.msra.mxu0 0.0
  %5083 = vmatprep.subr.mxu0 0.0
  %5084 = vmatpush1.msra.mxu0 0.0
  %5085 = vmatprep.subr.mxu0 0.0
  %5086 = vmatpush1.msra.mxu0 0.0
  %5087 = vmatprep.subr.mxu0 0.0
  %5088 = vmatpush1.msra.mxu0 0.0
  %5089 = vmatprep.subr.mxu0 0.0
  %5090 = vmatpush1.msra.mxu0 0.0
  %5091 = vmatprep.subr.mxu0 0.0
  %5092 = vmatpush1.msra.mxu0 0.0
  %5093 = vmatprep.subr.mxu0 0.0
  %5094 = vmatpush1.msra.mxu0 0.0
  %5095 = vmatprep.subr.mxu0 0.0
  %5096 = vmatpush1.msra.mxu0 0.0
  %5097 = vmatprep.subr.mxu0 0.0
  %5098 = vmatpush1.msra.mxu0 0.0
  %5099 = vmatprep.subr.mxu0 0.0
  %5100 = vmatpush1.msra.mxu0 0.0
  %5101 = vmatprep.subr.mxu0 0.0
  %5102 = vmatpush1.msra.mxu0 0.0
  %5103 = vmatprep.subr.mxu0 0.0
  %5104 = vmatpush1.msra.mxu0 0.0
  %5105 = vmatprep.subr.mxu0 0.0
  %5106 = vmatpush1.msra.mxu0 0.0
  %5107 = vmatprep.subr.mxu0 0.0
  %5108 = vmatpush1.msra.mxu0 0.0
  %5109 = vmatprep.mubr.f32.mxu0 0.0
  %5110 = vmatmul.mubr.f32.gmra.mrb[0].mxu0 %v5043
  %v5111 = vpop.f32.mrb[0].mxu0
  %v5112 = vadd.f32 0.0, %v5111
  %v5113 = vpop.f32.mrb[0].mxu0
  %5114 = vdwg.mxu0
  %v5115 = vadd.f32 %v5039, %v5112
  %v5116 = vxor.u32 %v5115, 2147483648
  %v5117 = vmul.f32 %v5116, 1.442695
  %v5118 = vpow.pop %v5117
  %v5119 = vadd.f32 %v5118, 1.0
  %v5120 = vrcp.pop %v5119
  %v5121 = vmul.f32 1.0, %v5120
  %v5122 = vtanh.pop %v5115
  %v5123 = vmul.f32 %v5121, %v5032
  %5125 = vrot.lane.b32.xlu0 %v5122, 64
  %v5126 = vpop.permute.xlu0 %5125
  %v5128 = vmul.f32 %v5121, %v5126
  %5130 = vrot.lane.b32.xlu0 %v5128, 32
  %v5131 = vpop.permute.xlu0 %5130
  %v5133 = vadd.f32 %v5123, %v5131
  %v5134 = vtanh.pop %v5133
  %5136 = vrot.lane.b32.xlu0 %v5134, 64
  %v5137 = vpop.permute.xlu0 %5136
  %v5139 = vmul.f32 %v5121, %v5137
  %v5140 = vld [vmem:[#allocation2 + $0x130] sm:$0xff]
  %5142 = vrot.lane.b32.xlu0 %v5139, 32
  %v5143 = vpop.permute.xlu0 %5142
  %v5144 = vsel %vm2805, %v5143, 0
  %5146 = vmatprep.subr.mxu0 0.0
  %5147 = vmatpush1.msra.mxu0 %v2245
  %5148 = vmatprep.subr.mxu0 0.0
  %5149 = vmatpush1.msra.mxu0 %v2246
  %5150 = vmatprep.subr.mxu0 0.0
  %5151 = vmatpush1.msra.mxu0 %v2247
  %5152 = vmatprep.subr.mxu0 0.0
  %5153 = vmatpush1.msra.mxu0 %v2248
  %5154 = vmatprep.subr.mxu0 0.0
  %5155 = vmatpush1.msra.mxu0 0.0
  %5156 = vmatprep.subr.mxu0 0.0
  %5157 = vmatpush1.msra.mxu0 0.0
  %5158 = vmatprep.subr.mxu0 0.0
  %5159 = vmatpush1.msra.mxu0 0.0
  %5160 = vmatprep.subr.mxu0 0.0
  %5161 = vmatpush1.msra.mxu0 0.0
  %5162 = vmatprep.subr.mxu0 0.0
  %5163 = vmatpush1.msra.mxu0 0.0
  %5164 = vmatprep.subr.mxu0 0.0
  %5165 = vmatpush1.msra.mxu0 0.0
  %5166 = vmatprep.subr.mxu0 0.0
  %5167 = vmatpush1.msra.mxu0 0.0
  %5168 = vmatprep.subr.mxu0 0.0
  %5169 = vmatpush1.msra.mxu0 0.0
  %5170 = vmatprep.subr.mxu0 0.0
  %5171 = vmatpush1.msra.mxu0 0.0
  %5172 = vmatprep.subr.mxu0 0.0
  %5173 = vmatpush1.msra.mxu0 0.0
  %5174 = vmatprep.subr.mxu0 0.0
  %5175 = vmatpush1.msra.mxu0 0.0
  %5176 = vmatprep.subr.mxu0 0.0
  %5177 = vmatpush1.msra.mxu0 0.0
  %5178 = vmatprep.subr.mxu0 0.0
  %5179 = vmatpush1.msra.mxu0 0.0
  %5180 = vmatprep.subr.mxu0 0.0
  %5181 = vmatpush1.msra.mxu0 0.0
  %5182 = vmatprep.subr.mxu0 0.0
  %5183 = vmatpush1.msra.mxu0 0.0
  %5184 = vmatprep.subr.mxu0 0.0
  %5185 = vmatpush1.msra.mxu0 0.0
  %5186 = vmatprep.subr.mxu0 0.0
  %5187 = vmatpush1.msra.mxu0 0.0
  %5188 = vmatprep.subr.mxu0 0.0
  %5189 = vmatpush1.msra.mxu0 0.0
  %5190 = vmatprep.subr.mxu0 0.0
  %5191 = vmatpush1.msra.mxu0 0.0
  %5192 = vmatprep.subr.mxu0 0.0
  %5193 = vmatpush1.msra.mxu0 0.0
  %5194 = vmatprep.subr.mxu0 0.0
  %5195 = vmatpush1.msra.mxu0 0.0
  %5196 = vmatprep.subr.mxu0 0.0
  %5197 = vmatpush1.msra.mxu0 0.0
  %5198 = vmatprep.subr.mxu0 0.0
  %5199 = vmatpush1.msra.mxu0 0.0
  %5200 = vmatprep.subr.mxu0 0.0
  %5201 = vmatpush1.msra.mxu0 0.0
  %5202 = vmatprep.subr.mxu0 0.0
  %5203 = vmatpush1.msra.mxu0 0.0
  %5204 = vmatprep.subr.mxu0 0.0
  %5205 = vmatpush1.msra.mxu0 0.0
  %5206 = vmatprep.subr.mxu0 0.0
  %5207 = vmatpush1.msra.mxu0 0.0
  %5208 = vmatprep.subr.mxu0 0.0
  %5209 = vmatpush1.msra.mxu0 0.0
  %5210 = vmatprep.mubr.f32.mxu0 0.0
  %5211 = vmatmul.mubr.f32.gmra.mrb[0].mxu0 %v5144
  %v5212 = vpop.f32.mrb[0].mxu0
  %v5213 = vadd.f32 0.0, %v5212
  %v5214 = vpop.f32.mrb[0].mxu0
  %5215 = vdwg.mxu0
  %v5216 = vadd.f32 %v5140, %v5213
  %v5217 = vxor.u32 %v5216, 2147483648
  %v5218 = vmul.f32 %v5217, 1.442695
  %v5219 = vpow.pop %v5218
  %v5220 = vadd.f32 %v5219, 1.0
  %v5221 = vrcp.pop %v5220
  %v5222 = vmul.f32 1.0, %v5221
  %v5223 = vtanh.pop %v5216
  %v5224 = vmul.f32 %v5222, %v5133
  %5226 = vrot.lane.b32.xlu0 %v5223, 64
  %v5227 = vpop.permute.xlu0 %5226
  %v5229 = vmul.f32 %v5222, %v5227
  %5231 = vrot.lane.b32.xlu0 %v5229, 32
  %v5232 = vpop.permute.xlu0 %5231
  %v5234 = vadd.f32 %v5224, %v5232
  %v5235 = vtanh.pop %v5234
  %5237 = vrot.lane.b32.xlu0 %v5235, 64
  %v5238 = vpop.permute.xlu0 %5237
  %v5240 = vmul.f32 %v5222, %v5238
  %v5241 = vld [vmem:[#allocation2 + $0x140] sm:$0xff]
  %5243 = vrot.lane.b32.xlu0 %v5240, 32
  %v5244 = vpop.permute.xlu0 %5243
  %v5245 = vsel %vm2805, %v5244, 0
  %5247 = vmatprep.subr.mxu0 0.0
  %5248 = vmatpush1.msra.mxu0 %v2245
  %5249 = vmatprep.subr.mxu0 0.0
  %5250 = vmatpush1.msra.mxu0 %v2246
  %5251 = vmatprep.subr.mxu0 0.0
  %5252 = vmatpush1.msra.mxu0 %v2247
  %5253 = vmatprep.subr.mxu0 0.0
  %5254 = vmatpush1.msra.mxu0 %v2248
  %5255 = vmatprep.subr.mxu0 0.0
  %5256 = vmatpush1.msra.mxu0 0.0
  %5257 = vmatprep.subr.mxu0 0.0
  %5258 = vmatpush1.msra.mxu0 0.0
  %5259 = vmatprep.subr.mxu0 0.0
  %5260 = vmatpush1.msra.mxu0 0.0
  %5261 = vmatprep.subr.mxu0 0.0
  %5262 = vmatpush1.msra.mxu0 0.0
  %5263 = vmatprep.subr.mxu0 0.0
  %5264 = vmatpush1.msra.mxu0 0.0
  %5265 = vmatprep.subr.mxu0 0.0
  %5266 = vmatpush1.msra.mxu0 0.0
  %5267 = vmatprep.subr.mxu0 0.0
  %5268 = vmatpush1.msra.mxu0 0.0
  %5269 = vmatprep.subr.mxu0 0.0
  %5270 = vmatpush1.msra.mxu0 0.0
  %5271 = vmatprep.subr.mxu0 0.0
  %5272 = vmatpush1.msra.mxu0 0.0
  %5273 = vmatprep.subr.mxu0 0.0
  %5274 = vmatpush1.msra.mxu0 0.0
  %5275 = vmatprep.subr.mxu0 0.0
  %5276 = vmatpush1.msra.mxu0 0.0
  %5277 = vmatprep.subr.mxu0 0.0
  %5278 = vmatpush1.msra.mxu0 0.0
  %5279 = vmatprep.subr.mxu0 0.0
  %5280 = vmatpush1.msra.mxu0 0.0
  %5281 = vmatprep.subr.mxu0 0.0
  %5282 = vmatpush1.msra.mxu0 0.0
  %5283 = vmatprep.subr.mxu0 0.0
  %5284 = vmatpush1.msra.mxu0 0.0
  %5285 = vmatprep.subr.mxu0 0.0
  %5286 = vmatpush1.msra.mxu0 0.0
  %5287 = vmatprep.subr.mxu0 0.0
  %5288 = vmatpush1.msra.mxu0 0.0
  %5289 = vmatprep.subr.mxu0 0.0
  %5290 = vmatpush1.msra.mxu0 0.0
  %5291 = vmatprep.subr.mxu0 0.0
  %5292 = vmatpush1.msra.mxu0 0.0
  %5293 = vmatprep.subr.mxu0 0.0
  %5294 = vmatpush1.msra.mxu0 0.0
  %5295 = vmatprep.subr.mxu0 0.0
  %5296 = vmatpush1.msra.mxu0 0.0
  %5297 = vmatprep.subr.mxu0 0.0
  %5298 = vmatpush1.msra.mxu0 0.0
  %5299 = vmatprep.subr.mxu0 0.0
  %5300 = vmatpush1.msra.mxu0 0.0
  %5301 = vmatprep.subr.mxu0 0.0
  %5302 = vmatpush1.msra.mxu0 0.0
  %5303 = vmatprep.subr.mxu0 0.0
  %5304 = vmatpush1.msra.mxu0 0.0
  %5305 = vmatprep.subr.mxu0 0.0
  %5306 = vmatpush1.msra.mxu0 0.0
  %5307 = vmatprep.subr.mxu0 0.0
  %5308 = vmatpush1.msra.mxu0 0.0
  %5309 = vmatprep.subr.mxu0 0.0
  %5310 = vmatpush1.msra.mxu0 0.0
  %5311 = vmatprep.mubr.f32.mxu0 0.0
  %5312 = vmatmul.mubr.f32.gmra.mrb[0].mxu0 %v5245
  %v5313 = vpop.f32.mrb[0].mxu0
  %v5314 = vadd.f32 0.0, %v5313
  %v5315 = vpop.f32.mrb[0].mxu0
  %5316 = vdwg.mxu0
  %v5317 = vadd.f32 %v5241, %v5314
  %v5318 = vxor.u32 %v5317, 2147483648
  %v5319 = vmul.f32 %v5318, 1.442695
  %v5320 = vpow.pop %v5319
  %v5321 = vadd.f32 %v5320, 1.0
  %v5322 = vrcp.pop %v5321
  %v5323 = vmul.f32 1.0, %v5322
  %v5324 = vtanh.pop %v5317
  %v5325 = vmul.f32 %v5323, %v5234
  %5327 = vrot.lane.b32.xlu0 %v5324, 64
  %v5328 = vpop.permute.xlu0 %5327
  %v5330 = vmul.f32 %v5323, %v5328
  %5332 = vrot.lane.b32.xlu0 %v5330, 32
  %v5333 = vpop.permute.xlu0 %5332
  %v5335 = vadd.f32 %v5325, %v5333
  %v5336 = vtanh.pop %v5335
  %5338 = vrot.lane.b32.xlu0 %v5336, 64
  %v5339 = vpop.permute.xlu0 %5338
  %v5341 = vmul.f32 %v5323, %v5339
  %v5342 = vld [vmem:[#allocation2 + $0x150] sm:$0xff]
  %5344 = vrot.lane.b32.xlu0 %v5341, 32
  %v5345 = vpop.permute.xlu0 %5344
  %v5346 = vsel %vm2805, %v5345, 0
  %5348 = vmatprep.subr.mxu0 0.0
  %5349 = vmatpush1.msra.mxu0 %v2245
  %5350 = vmatprep.subr.mxu0 0.0
  %5351 = vmatpush1.msra.mxu0 %v2246
  %5352 = vmatprep.subr.mxu0 0.0
  %5353 = vmatpush1.msra.mxu0 %v2247
  %5354 = vmatprep.subr.mxu0 0.0
  %5355 = vmatpush1.msra.mxu0 %v2248
  %5356 = vmatprep.subr.mxu0 0.0
  %5357 = vmatpush1.msra.mxu0 0.0
  %5358 = vmatprep.subr.mxu0 0.0
  %5359 = vmatpush1.msra.mxu0 0.0
  %5360 = vmatprep.subr.mxu0 0.0
  %5361 = vmatpush1.msra.mxu0 0.0
  %5362 = vmatprep.subr.mxu0 0.0
  %5363 = vmatpush1.msra.mxu0 0.0
  %5364 = vmatprep.subr.mxu0 0.0
  %5365 = vmatpush1.msra.mxu0 0.0
  %5366 = vmatprep.subr.mxu0 0.0
  %5367 = vmatpush1.msra.mxu0 0.0
  %5368 = vmatprep.subr.mxu0 0.0
  %5369 = vmatpush1.msra.mxu0 0.0
  %5370 = vmatprep.subr.mxu0 0.0
  %5371 = vmatpush1.msra.mxu0 0.0
  %5372 = vmatprep.subr.mxu0 0.0
  %5373 = vmatpush1.msra.mxu0 0.0
  %5374 = vmatprep.subr.mxu0 0.0
  %5375 = vmatpush1.msra.mxu0 0.0
  %5376 = vmatprep.subr.mxu0 0.0
  %5377 = vmatpush1.msra.mxu0 0.0
  %5378 = vmatprep.subr.mxu0 0.0
  %5379 = vmatpush1.msra.mxu0 0.0
  %5380 = vmatprep.subr.mxu0 0.0
  %5381 = vmatpush1.msra.mxu0 0.0
  %5382 = vmatprep.subr.mxu0 0.0
  %5383 = vmatpush1.msra.mxu0 0.0
  %5384 = vmatprep.subr.mxu0 0.0
  %5385 = vmatpush1.msra.mxu0 0.0
  %5386 = vmatprep.subr.mxu0 0.0
  %5387 = vmatpush1.msra.mxu0 0.0
  %5388 = vmatprep.subr.mxu0 0.0
  %5389 = vmatpush1.msra.mxu0 0.0
  %5390 = vmatprep.subr.mxu0 0.0
  %5391 = vmatpush1.msra.mxu0 0.0
  %5392 = vmatprep.subr.mxu0 0.0
  %5393 = vmatpush1.msra.mxu0 0.0
  %5394 = vmatprep.subr.mxu0 0.0
  %5395 = vmatpush1.msra.mxu0 0.0
  %5396 = vmatprep.subr.mxu0 0.0
  %5397 = vmatpush1.msra.mxu0 0.0
  %5398 = vmatprep.subr.mxu0 0.0
  %5399 = vmatpush1.msra.mxu0 0.0
  %5400 = vmatprep.subr.mxu0 0.0
  %5401 = vmatpush1.msra.mxu0 0.0
  %5402 = vmatprep.subr.mxu0 0.0
  %5403 = vmatpush1.msra.mxu0 0.0
  %5404 = vmatprep.subr.mxu0 0.0
  %5405 = vmatpush1.msra.mxu0 0.0
  %5406 = vmatprep.subr.mxu0 0.0
  %5407 = vmatpush1.msra.mxu0 0.0
  %5408 = vmatprep.subr.mxu0 0.0
  %5409 = vmatpush1.msra.mxu0 0.0
  %5410 = vmatprep.subr.mxu0 0.0
  %5411 = vmatpush1.msra.mxu0 0.0
  %5412 = vmatprep.mubr.f32.mxu0 0.0
  %5413 = vmatmul.mubr.f32.gmra.mrb[0].mxu0 %v5346
  %v5414 = vpop.f32.mrb[0].mxu0
  %v5415 = vadd.f32 0.0, %v5414
  %v5416 = vpop.f32.mrb[0].mxu0
  %5417 = vdwg.mxu0
  %v5418 = vadd.f32 %v5342, %v5415
  %v5419 = vxor.u32 %v5418, 2147483648
  %v5420 = vmul.f32 %v5419, 1.442695
  %v5421 = vpow.pop %v5420
  %v5422 = vadd.f32 %v5421, 1.0
  %v5423 = vrcp.pop %v5422
  %v5424 = vmul.f32 1.0, %v5423
  %v5425 = vtanh.pop %v5418
  %v5426 = vmul.f32 %v5424, %v5335
  %5428 = vrot.lane.b32.xlu0 %v5425, 64
  %v5429 = vpop.permute.xlu0 %5428
  %v5431 = vmul.f32 %v5424, %v5429
  %5433 = vrot.lane.b32.xlu0 %v5431, 32
  %v5434 = vpop.permute.xlu0 %5433
  %v5436 = vadd.f32 %v5426, %v5434
  %v5437 = vtanh.pop %v5436
  %5439 = vrot.lane.b32.xlu0 %v5437, 64
  %v5440 = vpop.permute.xlu0 %5439
  %v5442 = vmul.f32 %v5424, %v5440
  %v5443 = vld [vmem:[#allocation2 + $0x160] sm:$0xff]
  %5445 = vrot.lane.b32.xlu0 %v5442, 32
  %v5446 = vpop.permute.xlu0 %5445
  %v5447 = vsel %vm2805, %v5446, 0
  %5449 = vmatprep.subr.mxu0 0.0
  %5450 = vmatpush1.msra.mxu0 %v2245
  %5451 = vmatprep.subr.mxu0 0.0
  %5452 = vmatpush1.msra.mxu0 %v2246
  %5453 = vmatprep.subr.mxu0 0.0
  %5454 = vmatpush1.msra.mxu0 %v2247
  %5455 = vmatprep.subr.mxu0 0.0
  %5456 = vmatpush1.msra.mxu0 %v2248
  %5457 = vmatprep.subr.mxu0 0.0
  %5458 = vmatpush1.msra.mxu0 0.0
  %5459 = vmatprep.subr.mxu0 0.0
  %5460 = vmatpush1.msra.mxu0 0.0
  %5461 = vmatprep.subr.mxu0 0.0
  %5462 = vmatpush1.msra.mxu0 0.0
  %5463 = vmatprep.subr.mxu0 0.0
  %5464 = vmatpush1.msra.mxu0 0.0
  %5465 = vmatprep.subr.mxu0 0.0
  %5466 = vmatpush1.msra.mxu0 0.0
  %5467 = vmatprep.subr.mxu0 0.0
  %5468 = vmatpush1.msra.mxu0 0.0
  %5469 = vmatprep.subr.mxu0 0.0
  %5470 = vmatpush1.msra.mxu0 0.0
  %5471 = vmatprep.subr.mxu0 0.0
  %5472 = vmatpush1.msra.mxu0 0.0
  %5473 = vmatprep.subr.mxu0 0.0
  %5474 = vmatpush1.msra.mxu0 0.0
  %5475 = vmatprep.subr.mxu0 0.0
  %5476 = vmatpush1.msra.mxu0 0.0
  %5477 = vmatprep.subr.mxu0 0.0
  %5478 = vmatpush1.msra.mxu0 0.0
  %5479 = vmatprep.subr.mxu0 0.0
  %5480 = vmatpush1.msra.mxu0 0.0
  %5481 = vmatprep.subr.mxu0 0.0
  %5482 = vmatpush1.msra.mxu0 0.0
  %5483 = vmatprep.subr.mxu0 0.0
  %5484 = vmatpush1.msra.mxu0 0.0
  %5485 = vmatprep.subr.mxu0 0.0
  %5486 = vmatpush1.msra.mxu0 0.0
  %5487 = vmatprep.subr.mxu0 0.0
  %5488 = vmatpush1.msra.mxu0 0.0
  %5489 = vmatprep.subr.mxu0 0.0
  %5490 = vmatpush1.msra.mxu0 0.0
  %5491 = vmatprep.subr.mxu0 0.0
  %5492 = vmatpush1.msra.mxu0 0.0
  %5493 = vmatprep.subr.mxu0 0.0
  %5494 = vmatpush1.msra.mxu0 0.0
  %5495 = vmatprep.subr.mxu0 0.0
  %5496 = vmatpush1.msra.mxu0 0.0
  %5497 = vmatprep.subr.mxu0 0.0
  %5498 = vmatpush1.msra.mxu0 0.0
  %5499 = vmatprep.subr.mxu0 0.0
  %5500 = vmatpush1.msra.mxu0 0.0
  %5501 = vmatprep.subr.mxu0 0.0
  %5502 = vmatpush1.msra.mxu0 0.0
  %5503 = vmatprep.subr.mxu0 0.0
  %5504 = vmatpush1.msra.mxu0 0.0
  %5505 = vmatprep.subr.mxu0 0.0
  %5506 = vmatpush1.msra.mxu0 0.0
  %5507 = vmatprep.subr.mxu0 0.0
  %5508 = vmatpush1.msra.mxu0 0.0
  %5509 = vmatprep.subr.mxu0 0.0
  %5510 = vmatpush1.msra.mxu0 0.0
  %5511 = vmatprep.subr.mxu0 0.0
  %5512 = vmatpush1.msra.mxu0 0.0
  %5513 = vmatprep.mubr.f32.mxu0 0.0
  %5514 = vmatmul.mubr.f32.gmra.mrb[0].mxu0 %v5447
  %v5515 = vpop.f32.mrb[0].mxu0
  %v5516 = vadd.f32 0.0, %v5515
  %v5517 = vpop.f32.mrb[0].mxu0
  %5518 = vdwg.mxu0
  %v5519 = vadd.f32 %v5443, %v5516
  %v5520 = vxor.u32 %v5519, 2147483648
  %v5521 = vmul.f32 %v5520, 1.442695
  %v5522 = vpow.pop %v5521
  %v5523 = vadd.f32 %v5522, 1.0
  %v5524 = vrcp.pop %v5523
  %v5525 = vmul.f32 1.0, %v5524
  %v5526 = vtanh.pop %v5519
  %v5527 = vmul.f32 %v5525, %v5436
  %5529 = vrot.lane.b32.xlu0 %v5526, 64
  %v5530 = vpop.permute.xlu0 %5529
  %v5532 = vmul.f32 %v5525, %v5530
  %5534 = vrot.lane.b32.xlu0 %v5532, 32
  %v5535 = vpop.permute.xlu0 %5534
  %v5537 = vadd.f32 %v5527, %v5535
  %v5538 = vtanh.pop %v5537
  %5540 = vrot.lane.b32.xlu0 %v5538, 64
  %v5541 = vpop.permute.xlu0 %5540
  %v5543 = vmul.f32 %v5525, %v5541
  %v5544 = vld [vmem:[#allocation2 + $0x170] sm:$0xff]
  %5546 = vrot.lane.b32.xlu0 %v5543, 32
  %v5547 = vpop.permute.xlu0 %5546
  %v5548 = vsel %vm2805, %v5547, 0
  %5550 = vmatprep.subr.mxu0 0.0
  %5551 = vmatpush1.msra.mxu0 %v2245
  %5552 = vmatprep.subr.mxu0 0.0
  %5553 = vmatpush1.msra.mxu0 %v2246
  %5554 = vmatprep.subr.mxu0 0.0
  %5555 = vmatpush1.msra.mxu0 %v2247
  %5556 = vmatprep.subr.mxu0 0.0
  %5557 = vmatpush1.msra.mxu0 %v2248
  %5558 = vmatprep.subr.mxu0 0.0
  %5559 = vmatpush1.msra.mxu0 0.0
  %5560 = vmatprep.subr.mxu0 0.0
  %5561 = vmatpush1.msra.mxu0 0.0
  %5562 = vmatprep.subr.mxu0 0.0
  %5563 = vmatpush1.msra.mxu0 0.0
  %5564 = vmatprep.subr.mxu0 0.0
  %5565 = vmatpush1.msra.mxu0 0.0
  %5566 = vmatprep.subr.mxu0 0.0
  %5567 = vmatpush1.msra.mxu0 0.0
  %5568 = vmatprep.subr.mxu0 0.0
  %5569 = vmatpush1.msra.mxu0 0.0
  %5570 = vmatprep.subr.mxu0 0.0
  %5571 = vmatpush1.msra.mxu0 0.0
  %5572 = vmatprep.subr.mxu0 0.0
  %5573 = vmatpush1.msra.mxu0 0.0
  %5574 = vmatprep.subr.mxu0 0.0
  %5575 = vmatpush1.msra.mxu0 0.0
  %5576 = vmatprep.subr.mxu0 0.0
  %5577 = vmatpush1.msra.mxu0 0.0
  %5578 = vmatprep.subr.mxu0 0.0
  %5579 = vmatpush1.msra.mxu0 0.0
  %5580 = vmatprep.subr.mxu0 0.0
  %5581 = vmatpush1.msra.mxu0 0.0
  %5582 = vmatprep.subr.mxu0 0.0
  %5583 = vmatpush1.msra.mxu0 0.0
  %5584 = vmatprep.subr.mxu0 0.0
  %5585 = vmatpush1.msra.mxu0 0.0
  %5586 = vmatprep.subr.mxu0 0.0
  %5587 = vmatpush1.msra.mxu0 0.0
  %5588 = vmatprep.subr.mxu0 0.0
  %5589 = vmatpush1.msra.mxu0 0.0
  %5590 = vmatprep.subr.mxu0 0.0
  %5591 = vmatpush1.msra.mxu0 0.0
  %5592 = vmatprep.subr.mxu0 0.0
  %5593 = vmatpush1.msra.mxu0 0.0
  %5594 = vmatprep.subr.mxu0 0.0
  %5595 = vmatpush1.msra.mxu0 0.0
  %5596 = vmatprep.subr.mxu0 0.0
  %5597 = vmatpush1.msra.mxu0 0.0
  %5598 = vmatprep.subr.mxu0 0.0
  %5599 = vmatpush1.msra.mxu0 0.0
  %5600 = vmatprep.subr.mxu0 0.0
  %5601 = vmatpush1.msra.mxu0 0.0
  %5602 = vmatprep.subr.mxu0 0.0
  %5603 = vmatpush1.msra.mxu0 0.0
  %5604 = vmatprep.subr.mxu0 0.0
  %5605 = vmatpush1.msra.mxu0 0.0
  %5606 = vmatprep.subr.mxu0 0.0
  %5607 = vmatpush1.msra.mxu0 0.0
  %5608 = vmatprep.subr.mxu0 0.0
  %5609 = vmatpush1.msra.mxu0 0.0
  %5610 = vmatprep.subr.mxu0 0.0
  %5611 = vmatpush1.msra.mxu0 0.0
  %5612 = vmatprep.subr.mxu0 0.0
  %5613 = vmatpush1.msra.mxu0 0.0
  %5614 = vmatprep.mubr.f32.mxu0 0.0
  %5615 = vmatmul.mubr.f32.gmra.mrb[0].mxu0 %v5548
  %v5616 = vpop.f32.mrb[0].mxu0
  %v5617 = vadd.f32 0.0, %v5616
  %v5618 = vpop.f32.mrb[0].mxu0
  %5619 = vdwg.mxu0
  %v5620 = vadd.f32 %v5544, %v5617
  %v5621 = vxor.u32 %v5620, 2147483648
  %v5622 = vmul.f32 %v5621, 1.442695
  %v5623 = vpow.pop %v5622
  %v5624 = vadd.f32 %v5623, 1.0
  %v5625 = vrcp.pop %v5624
  %v5626 = vmul.f32 1.0, %v5625
  %v5627 = vtanh.pop %v5620
  %v5628 = vmul.f32 %v5626, %v5537
  %5630 = vrot.lane.b32.xlu0 %v5627, 64
  %v5631 = vpop.permute.xlu0 %5630
  %v5633 = vmul.f32 %v5626, %v5631
  %5635 = vrot.lane.b32.xlu0 %v5633, 32
  %v5636 = vpop.permute.xlu0 %5635
  %v5638 = vadd.f32 %v5628, %v5636
  %v5639 = vtanh.pop %v5638
  %5641 = vrot.lane.b32.xlu0 %v5639, 64
  %v5642 = vpop.permute.xlu0 %5641
  %v5644 = vmul.f32 %v5626, %v5642
  %v5645 = vld [vmem:[#allocation2 + $0x180] sm:$0xff]
  %5647 = vrot.lane.b32.xlu0 %v5644, 32
  %v5648 = vpop.permute.xlu0 %5647
  %v5649 = vsel %vm2805, %v5648, 0
  %5651 = vmatprep.subr.mxu0 0.0
  %5652 = vmatpush1.msra.mxu0 %v2245
  %5653 = vmatprep.subr.mxu0 0.0
  %5654 = vmatpush1.msra.mxu0 %v2246
  %5655 = vmatprep.subr.mxu0 0.0
  %5656 = vmatpush1.msra.mxu0 %v2247
  %5657 = vmatprep.subr.mxu0 0.0
  %5658 = vmatpush1.msra.mxu0 %v2248
  %5659 = vmatprep.subr.mxu0 0.0
  %5660 = vmatpush1.msra.mxu0 0.0
  %5661 = vmatprep.subr.mxu0 0.0
  %5662 = vmatpush1.msra.mxu0 0.0
  %5663 = vmatprep.subr.mxu0 0.0
  %5664 = vmatpush1.msra.mxu0 0.0
  %5665 = vmatprep.subr.mxu0 0.0
  %5666 = vmatpush1.msra.mxu0 0.0
  %5667 = vmatprep.subr.mxu0 0.0
  %5668 = vmatpush1.msra.mxu0 0.0
  %5669 = vmatprep.subr.mxu0 0.0
  %5670 = vmatpush1.msra.mxu0 0.0
  %5671 = vmatprep.subr.mxu0 0.0
  %5672 = vmatpush1.msra.mxu0 0.0
  %5673 = vmatprep.subr.mxu0 0.0
  %5674 = vmatpush1.msra.mxu0 0.0
  %5675 = vmatprep.subr.mxu0 0.0
  %5676 = vmatpush1.msra.mxu0 0.0
  %5677 = vmatprep.subr.mxu0 0.0
  %5678 = vmatpush1.msra.mxu0 0.0
  %5679 = vmatprep.subr.mxu0 0.0
  %5680 = vmatpush1.msra.mxu0 0.0
  %5681 = vmatprep.subr.mxu0 0.0
  %5682 = vmatpush1.msra.mxu0 0.0
  %5683 = vmatprep.subr.mxu0 0.0
  %5684 = vmatpush1.msra.mxu0 0.0
  %5685 = vmatprep.subr.mxu0 0.0
  %5686 = vmatpush1.msra.mxu0 0.0
  %5687 = vmatprep.subr.mxu0 0.0
  %5688 = vmatpush1.msra.mxu0 0.0
  %5689 = vmatprep.subr.mxu0 0.0
  %5690 = vmatpush1.msra.mxu0 0.0
  %5691 = vmatprep.subr.mxu0 0.0
  %5692 = vmatpush1.msra.mxu0 0.0
  %5693 = vmatprep.subr.mxu0 0.0
  %5694 = vmatpush1.msra.mxu0 0.0
  %5695 = vmatprep.subr.mxu0 0.0
  %5696 = vmatpush1.msra.mxu0 0.0
  %5697 = vmatprep.subr.mxu0 0.0
  %5698 = vmatpush1.msra.mxu0 0.0
  %5699 = vmatprep.subr.mxu0 0.0
  %5700 = vmatpush1.msra.mxu0 0.0
  %5701 = vmatprep.subr.mxu0 0.0
  %5702 = vmatpush1.msra.mxu0 0.0
  %5703 = vmatprep.subr.mxu0 0.0
  %5704 = vmatpush1.msra.mxu0 0.0
  %5705 = vmatprep.subr.mxu0 0.0
  %5706 = vmatpush1.msra.mxu0 0.0
  %5707 = vmatprep.subr.mxu0 0.0
  %5708 = vmatpush1.msra.mxu0 0.0
  %5709 = vmatprep.subr.mxu0 0.0
  %5710 = vmatpush1.msra.mxu0 0.0
  %5711 = vmatprep.subr.mxu0 0.0
  %5712 = vmatpush1.msra.mxu0 0.0
  %5713 = vmatprep.subr.mxu0 0.0
  %5714 = vmatpush1.msra.mxu0 0.0
  %5715 = vmatprep.mubr.f32.mxu0 0.0
  %5716 = vmatmul.mubr.f32.gmra.mrb[0].mxu0 %v5649
  %v5717 = vpop.f32.mrb[0].mxu0
  %v5718 = vadd.f32 0.0, %v5717
  %v5719 = vpop.f32.mrb[0].mxu0
  %5720 = vdwg.mxu0
  %v5721 = vadd.f32 %v5645, %v5718
  %v5722 = vxor.u32 %v5721, 2147483648
  %v5723 = vmul.f32 %v5722, 1.442695
  %v5724 = vpow.pop %v5723
  %v5725 = vadd.f32 %v5724, 1.0
  %v5726 = vrcp.pop %v5725
  %v5727 = vmul.f32 1.0, %v5726
  %v5728 = vtanh.pop %v5721
  %v5729 = vmul.f32 %v5727, %v5638
  %5731 = vrot.lane.b32.xlu0 %v5728, 64
  %v5732 = vpop.permute.xlu0 %5731
  %v5734 = vmul.f32 %v5727, %v5732
  %5736 = vrot.lane.b32.xlu0 %v5734, 32
  %v5737 = vpop.permute.xlu0 %5736
  %v5739 = vadd.f32 %v5729, %v5737
  %v5740 = vtanh.pop %v5739
  %5742 = vrot.lane.b32.xlu0 %v5740, 64
  %v5743 = vpop.permute.xlu0 %5742
  %v5745 = vmul.f32 %v5727, %v5743
  %v5746 = vld [vmem:[#allocation2 + $0x190] sm:$0xff]
  %5748 = vrot.lane.b32.xlu0 %v5745, 32
  %v5749 = vpop.permute.xlu0 %5748
  %v5750 = vsel %vm2805, %v5749, 0
  %5752 = vmatprep.subr.mxu0 0.0
  %5753 = vmatpush1.msra.mxu0 %v2245
  %5754 = vmatprep.subr.mxu0 0.0
  %5755 = vmatpush1.msra.mxu0 %v2246
  %5756 = vmatprep.subr.mxu0 0.0
  %5757 = vmatpush1.msra.mxu0 %v2247
  %5758 = vmatprep.subr.mxu0 0.0
  %5759 = vmatpush1.msra.mxu0 %v2248
  %5760 = vmatprep.subr.mxu0 0.0
  %5761 = vmatpush1.msra.mxu0 0.0
  %5762 = vmatprep.subr.mxu0 0.0
  %5763 = vmatpush1.msra.mxu0 0.0
  %5764 = vmatprep.subr.mxu0 0.0
  %5765 = vmatpush1.msra.mxu0 0.0
  %5766 = vmatprep.subr.mxu0 0.0
  %5767 = vmatpush1.msra.mxu0 0.0
  %5768 = vmatprep.subr.mxu0 0.0
  %5769 = vmatpush1.msra.mxu0 0.0
  %5770 = vmatprep.subr.mxu0 0.0
  %5771 = vmatpush1.msra.mxu0 0.0
  %5772 = vmatprep.subr.mxu0 0.0
  %5773 = vmatpush1.msra.mxu0 0.0
  %5774 = vmatprep.subr.mxu0 0.0
  %5775 = vmatpush1.msra.mxu0 0.0
  %5776 = vmatprep.subr.mxu0 0.0
  %5777 = vmatpush1.msra.mxu0 0.0
  %5778 = vmatprep.subr.mxu0 0.0
  %5779 = vmatpush1.msra.mxu0 0.0
  %5780 = vmatprep.subr.mxu0 0.0
  %5781 = vmatpush1.msra.mxu0 0.0
  %5782 = vmatprep.subr.mxu0 0.0
  %5783 = vmatpush1.msra.mxu0 0.0
  %5784 = vmatprep.subr.mxu0 0.0
  %5785 = vmatpush1.msra.mxu0 0.0
  %5786 = vmatprep.subr.mxu0 0.0
  %5787 = vmatpush1.msra.mxu0 0.0
  %5788 = vmatprep.subr.mxu0 0.0
  %5789 = vmatpush1.msra.mxu0 0.0
  %5790 = vmatprep.subr.mxu0 0.0
  %5791 = vmatpush1.msra.mxu0 0.0
  %5792 = vmatprep.subr.mxu0 0.0
  %5793 = vmatpush1.msra.mxu0 0.0
  %5794 = vmatprep.subr.mxu0 0.0
  %5795 = vmatpush1.msra.mxu0 0.0
  %5796 = vmatprep.subr.mxu0 0.0
  %5797 = vmatpush1.msra.mxu0 0.0
  %5798 = vmatprep.subr.mxu0 0.0
  %5799 = vmatpush1.msra.mxu0 0.0
  %5800 = vmatprep.subr.mxu0 0.0
  %5801 = vmatpush1.msra.mxu0 0.0
  %5802 = vmatprep.subr.mxu0 0.0
  %5803 = vmatpush1.msra.mxu0 0.0
  %5804 = vmatprep.subr.mxu0 0.0
  %5805 = vmatpush1.msra.mxu0 0.0
  %5806 = vmatprep.subr.mxu0 0.0
  %5807 = vmatpush1.msra.mxu0 0.0
  %5808 = vmatprep.subr.mxu0 0.0
  %5809 = vmatpush1.msra.mxu0 0.0
  %5810 = vmatprep.subr.mxu0 0.0
  %5811 = vmatpush1.msra.mxu0 0.0
  %5812 = vmatprep.subr.mxu0 0.0
  %5813 = vmatpush1.msra.mxu0 0.0
  %5814 = vmatprep.subr.mxu0 0.0
  %5815 = vmatpush1.msra.mxu0 0.0
  %5816 = vmatprep.mubr.f32.mxu0 0.0
  %5817 = vmatmul.mubr.f32.gmra.mrb[0].mxu0 %v5750
  %v5818 = vpop.f32.mrb[0].mxu0
  %v5819 = vadd.f32 0.0, %v5818
  %v5820 = vpop.f32.mrb[0].mxu0
  %5821 = vdwg.mxu0
  %v5822 = vadd.f32 %v5746, %v5819
  %v5823 = vxor.u32 %v5822, 2147483648
  %v5824 = vmul.f32 %v5823, 1.442695
  %v5825 = vpow.pop %v5824
  %v5826 = vadd.f32 %v5825, 1.0
  %v5827 = vrcp.pop %v5826
  %v5828 = vmul.f32 1.0, %v5827
  %v5829 = vtanh.pop %v5822
  %v5830 = vmul.f32 %v5828, %v5739
  %5832 = vrot.lane.b32.xlu0 %v5829, 64
  %v5833 = vpop.permute.xlu0 %5832
  %v5835 = vmul.f32 %v5828, %v5833
  %5837 = vrot.lane.b32.xlu0 %v5835, 32
  %v5838 = vpop.permute.xlu0 %5837
  %v5840 = vadd.f32 %v5830, %v5838
  %v5841 = vtanh.pop %v5840
  %5843 = vrot.lane.b32.xlu0 %v5841, 64
  %v5844 = vpop.permute.xlu0 %5843
  %v5846 = vmul.f32 %v5828, %v5844
  %v5847 = vld [vmem:[#allocation2 + $0x1a0] sm:$0xff]
  %5849 = vrot.lane.b32.xlu0 %v5846, 32
  %v5850 = vpop.permute.xlu0 %5849
  %v5851 = vsel %vm2805, %v5850, 0
  %5853 = vmatprep.subr.mxu0 0.0
  %5854 = vmatpush1.msra.mxu0 %v2245
  %5855 = vmatprep.subr.mxu0 0.0
  %5856 = vmatpush1.msra.mxu0 %v2246
  %5857 = vmatprep.subr.mxu0 0.0
  %5858 = vmatpush1.msra.mxu0 %v2247
  %5859 = vmatprep.subr.mxu0 0.0
  %5860 = vmatpush1.msra.mxu0 %v2248
  %5861 = vmatprep.subr.mxu0 0.0
  %5862 = vmatpush1.msra.mxu0 0.0
  %5863 = vmatprep.subr.mxu0 0.0
  %5864 = vmatpush1.msra.mxu0 0.0
  %5865 = vmatprep.subr.mxu0 0.0
  %5866 = vmatpush1.msra.mxu0 0.0
  %5867 = vmatprep.subr.mxu0 0.0
  %5868 = vmatpush1.msra.mxu0 0.0
  %5869 = vmatprep.subr.mxu0 0.0
  %5870 = vmatpush1.msra.mxu0 0.0
  %5871 = vmatprep.subr.mxu0 0.0
  %5872 = vmatpush1.msra.mxu0 0.0
  %5873 = vmatprep.subr.mxu0 0.0
  %5874 = vmatpush1.msra.mxu0 0.0
  %5875 = vmatprep.subr.mxu0 0.0
  %5876 = vmatpush1.msra.mxu0 0.0
  %5877 = vmatprep.subr.mxu0 0.0
  %5878 = vmatpush1.msra.mxu0 0.0
  %5879 = vmatprep.subr.mxu0 0.0
  %5880 = vmatpush1.msra.mxu0 0.0
  %5881 = vmatprep.subr.mxu0 0.0
  %5882 = vmatpush1.msra.mxu0 0.0
  %5883 = vmatprep.subr.mxu0 0.0
  %5884 = vmatpush1.msra.mxu0 0.0
  %5885 = vmatprep.subr.mxu0 0.0
  %5886 = vmatpush1.msra.mxu0 0.0
  %5887 = vmatprep.subr.mxu0 0.0
  %5888 = vmatpush1.msra.mxu0 0.0
  %5889 = vmatprep.subr.mxu0 0.0
  %5890 = vmatpush1.msra.mxu0 0.0
  %5891 = vmatprep.subr.mxu0 0.0
  %5892 = vmatpush1.msra.mxu0 0.0
  %5893 = vmatprep.subr.mxu0 0.0
  %5894 = vmatpush1.msra.mxu0 0.0
  %5895 = vmatprep.subr.mxu0 0.0
  %5896 = vmatpush1.msra.mxu0 0.0
  %5897 = vmatprep.subr.mxu0 0.0
  %5898 = vmatpush1.msra.mxu0 0.0
  %5899 = vmatprep.subr.mxu0 0.0
  %5900 = vmatpush1.msra.mxu0 0.0
  %5901 = vmatprep.subr.mxu0 0.0
  %5902 = vmatpush1.msra.mxu0 0.0
  %5903 = vmatprep.subr.mxu0 0.0
  %5904 = vmatpush1.msra.mxu0 0.0
  %5905 = vmatprep.subr.mxu0 0.0
  %5906 = vmatpush1.msra.mxu0 0.0
  %5907 = vmatprep.subr.mxu0 0.0
  %5908 = vmatpush1.msra.mxu0 0.0
  %5909 = vmatprep.subr.mxu0 0.0
  %5910 = vmatpush1.msra.mxu0 0.0
  %5911 = vmatprep.subr.mxu0 0.0
  %5912 = vmatpush1.msra.mxu0 0.0
  %5913 = vmatprep.subr.mxu0 0.0
  %5914 = vmatpush1.msra.mxu0 0.0
  %5915 = vmatprep.subr.mxu0 0.0
  %5916 = vmatpush1.msra.mxu0 0.0
  %5917 = vmatprep.mubr.f32.mxu0 0.0
  %5918 = vmatmul.mubr.f32.gmra.mrb[0].mxu0 %v5851
  %v5919 = vpop.f32.mrb[0].mxu0
  %v5920 = vadd.f32 0.0, %v5919
  %v5921 = vpop.f32.mrb[0].mxu0
  %5922 = vdwg.mxu0
  %v5923 = vadd.f32 %v5847, %v5920
  %v5924 = vxor.u32 %v5923, 2147483648
  %v5925 = vmul.f32 %v5924, 1.442695
  %v5926 = vpow.pop %v5925
  %v5927 = vadd.f32 %v5926, 1.0
  %v5928 = vrcp.pop %v5927
  %v5929 = vmul.f32 1.0, %v5928
  %v5930 = vtanh.pop %v5923
  %v5931 = vmul.f32 %v5929, %v5840
  %5933 = vrot.lane.b32.xlu0 %v5930, 64
  %v5934 = vpop.permute.xlu0 %5933
  %v5936 = vmul.f32 %v5929, %v5934
  %5938 = vrot.lane.b32.xlu0 %v5936, 32
  %v5939 = vpop.permute.xlu0 %5938
  %v5941 = vadd.f32 %v5931, %v5939
  %v5942 = vtanh.pop %v5941
  %5944 = vrot.lane.b32.xlu0 %v5942, 64
  %v5945 = vpop.permute.xlu0 %5944
  %v5947 = vmul.f32 %v5929, %v5945
  %v5948 = vld [vmem:[#allocation2 + $0x1b0] sm:$0xff]
  %5950 = vrot.lane.b32.xlu0 %v5947, 32
  %v5951 = vpop.permute.xlu0 %5950
  %v5952 = vsel %vm2805, %v5951, 0
  %5954 = vmatprep.subr.mxu0 0.0
  %5955 = vmatpush1.msra.mxu0 %v2245
  %5956 = vmatprep.subr.mxu0 0.0
  %5957 = vmatpush1.msra.mxu0 %v2246
  %5958 = vmatprep.subr.mxu0 0.0
  %5959 = vmatpush1.msra.mxu0 %v2247
  %5960 = vmatprep.subr.mxu0 0.0
  %5961 = vmatpush1.msra.mxu0 %v2248
  %5962 = vmatprep.subr.mxu0 0.0
  %5963 = vmatpush1.msra.mxu0 0.0
  %5964 = vmatprep.subr.mxu0 0.0
  %5965 = vmatpush1.msra.mxu0 0.0
  %5966 = vmatprep.subr.mxu0 0.0
  %5967 = vmatpush1.msra.mxu0 0.0
  %5968 = vmatprep.subr.mxu0 0.0
  %5969 = vmatpush1.msra.mxu0 0.0
  %5970 = vmatprep.subr.mxu0 0.0
  %5971 = vmatpush1.msra.mxu0 0.0
  %5972 = vmatprep.subr.mxu0 0.0
  %5973 = vmatpush1.msra.mxu0 0.0
  %5974 = vmatprep.subr.mxu0 0.0
  %5975 = vmatpush1.msra.mxu0 0.0
  %5976 = vmatprep.subr.mxu0 0.0
  %5977 = vmatpush1.msra.mxu0 0.0
  %5978 = vmatprep.subr.mxu0 0.0
  %5979 = vmatpush1.msra.mxu0 0.0
  %5980 = vmatprep.subr.mxu0 0.0
  %5981 = vmatpush1.msra.mxu0 0.0
  %5982 = vmatprep.subr.mxu0 0.0
  %5983 = vmatpush1.msra.mxu0 0.0
  %5984 = vmatprep.subr.mxu0 0.0
  %5985 = vmatpush1.msra.mxu0 0.0
  %5986 = vmatprep.subr.mxu0 0.0
  %5987 = vmatpush1.msra.mxu0 0.0
  %5988 = vmatprep.subr.mxu0 0.0
  %5989 = vmatpush1.msra.mxu0 0.0
  %5990 = vmatprep.subr.mxu0 0.0
  %5991 = vmatpush1.msra.mxu0 0.0
  %5992 = vmatprep.subr.mxu0 0.0
  %5993 = vmatpush1.msra.mxu0 0.0
  %5994 = vmatprep.subr.mxu0 0.0
  %5995 = vmatpush1.msra.mxu0 0.0
  %5996 = vmatprep.subr.mxu0 0.0
  %5997 = vmatpush1.msra.mxu0 0.0
  %5998 = vmatprep.subr.mxu0 0.0
  %5999 = vmatpush1.msra.mxu0 0.0
  %6000 = vmatprep.subr.mxu0 0.0
  %6001 = vmatpush1.msra.mxu0 0.0
  %6002 = vmatprep.subr.mxu0 0.0
  %6003 = vmatpush1.msra.mxu0 0.0
  %6004 = vmatprep.subr.mxu0 0.0
  %6005 = vmatpush1.msra.mxu0 0.0
  %6006 = vmatprep.subr.mxu0 0.0
  %6007 = vmatpush1.msra.mxu0 0.0
  %6008 = vmatprep.subr.mxu0 0.0
  %6009 = vmatpush1.msra.mxu0 0.0
  %6010 = vmatprep.subr.mxu0 0.0
  %6011 = vmatpush1.msra.mxu0 0.0
  %6012 = vmatprep.subr.mxu0 0.0
  %6013 = vmatpush1.msra.mxu0 0.0
  %6014 = vmatprep.subr.mxu0 0.0
  %6015 = vmatpush1.msra.mxu0 0.0
  %6016 = vmatprep.subr.mxu0 0.0
  %6017 = vmatpush1.msra.mxu0 0.0
  %6018 = vmatprep.mubr.f32.mxu0 0.0
  %6019 = vmatmul.mubr.f32.gmra.mrb[0].mxu0 %v5952
  %v6020 = vpop.f32.mrb[0].mxu0
  %v6021 = vadd.f32 0.0, %v6020
  %v6022 = vpop.f32.mrb[0].mxu0
  %6023 = vdwg.mxu0
  %v6024 = vadd.f32 %v5948, %v6021
  %v6025 = vxor.u32 %v6024, 2147483648
  %v6026 = vmul.f32 %v6025, 1.442695
  %v6027 = vpow.pop %v6026
  %v6028 = vadd.f32 %v6027, 1.0
  %v6029 = vrcp.pop %v6028
  %v6030 = vmul.f32 1.0, %v6029
  %v6031 = vtanh.pop %v6024
  %v6032 = vmul.f32 %v6030, %v5941
  %6034 = vrot.lane.b32.xlu0 %v6031, 64
  %v6035 = vpop.permute.xlu0 %6034
  %v6037 = vmul.f32 %v6030, %v6035
  %6039 = vrot.lane.b32.xlu0 %v6037, 32
  %v6040 = vpop.permute.xlu0 %6039
  %v6042 = vadd.f32 %v6032, %v6040
  %v6043 = vtanh.pop %v6042
  %6045 = vrot.lane.b32.xlu0 %v6043, 64
  %v6046 = vpop.permute.xlu0 %6045
  %v6048 = vmul.f32 %v6030, %v6046
  %v6049 = vld [vmem:[#allocation2 + $0x1c0] sm:$0xff]
  %6051 = vrot.lane.b32.xlu0 %v6048, 32
  %v6052 = vpop.permute.xlu0 %6051
  %v6053 = vsel %vm2805, %v6052, 0
  %6055 = vmatprep.subr.mxu0 0.0
  %6056 = vmatpush1.msra.mxu0 %v2245
  %6057 = vmatprep.subr.mxu0 0.0
  %6058 = vmatpush1.msra.mxu0 %v2246
  %6059 = vmatprep.subr.mxu0 0.0
  %6060 = vmatpush1.msra.mxu0 %v2247
  %6061 = vmatprep.subr.mxu0 0.0
  %6062 = vmatpush1.msra.mxu0 %v2248
  %6063 = vmatprep.subr.mxu0 0.0
  %6064 = vmatpush1.msra.mxu0 0.0
  %6065 = vmatprep.subr.mxu0 0.0
  %6066 = vmatpush1.msra.mxu0 0.0
  %6067 = vmatprep.subr.mxu0 0.0
  %6068 = vmatpush1.msra.mxu0 0.0
  %6069 = vmatprep.subr.mxu0 0.0
  %6070 = vmatpush1.msra.mxu0 0.0
  %6071 = vmatprep.subr.mxu0 0.0
  %6072 = vmatpush1.msra.mxu0 0.0
  %6073 = vmatprep.subr.mxu0 0.0
  %6074 = vmatpush1.msra.mxu0 0.0
  %6075 = vmatprep.subr.mxu0 0.0
  %6076 = vmatpush1.msra.mxu0 0.0
  %6077 = vmatprep.subr.mxu0 0.0
  %6078 = vmatpush1.msra.mxu0 0.0
  %6079 = vmatprep.subr.mxu0 0.0
  %6080 = vmatpush1.msra.mxu0 0.0
  %6081 = vmatprep.subr.mxu0 0.0
  %6082 = vmatpush1.msra.mxu0 0.0
  %6083 = vmatprep.subr.mxu0 0.0
  %6084 = vmatpush1.msra.mxu0 0.0
  %6085 = vmatprep.subr.mxu0 0.0
  %6086 = vmatpush1.msra.mxu0 0.0
  %6087 = vmatprep.subr.mxu0 0.0
  %6088 = vmatpush1.msra.mxu0 0.0
  %6089 = vmatprep.subr.mxu0 0.0
  %6090 = vmatpush1.msra.mxu0 0.0
  %6091 = vmatprep.subr.mxu0 0.0
  %6092 = vmatpush1.msra.mxu0 0.0
  %6093 = vmatprep.subr.mxu0 0.0
  %6094 = vmatpush1.msra.mxu0 0.0
  %6095 = vmatprep.subr.mxu0 0.0
  %6096 = vmatpush1.msra.mxu0 0.0
  %6097 = vmatprep.subr.mxu0 0.0
  %6098 = vmatpush1.msra.mxu0 0.0
  %6099 = vmatprep.subr.mxu0 0.0
  %6100 = vmatpush1.msra.mxu0 0.0
  %6101 = vmatprep.subr.mxu0 0.0
  %6102 = vmatpush1.msra.mxu0 0.0
  %6103 = vmatprep.subr.mxu0 0.0
  %6104 = vmatpush1.msra.mxu0 0.0
  %6105 = vmatprep.subr.mxu0 0.0
  %6106 = vmatpush1.msra.mxu0 0.0
  %6107 = vmatprep.subr.mxu0 0.0
  %6108 = vmatpush1.msra.mxu0 0.0
  %6109 = vmatprep.subr.mxu0 0.0
  %6110 = vmatpush1.msra.mxu0 0.0
  %6111 = vmatprep.subr.mxu0 0.0
  %6112 = vmatpush1.msra.mxu0 0.0
  %6113 = vmatprep.subr.mxu0 0.0
  %6114 = vmatpush1.msra.mxu0 0.0
  %6115 = vmatprep.subr.mxu0 0.0
  %6116 = vmatpush1.msra.mxu0 0.0
  %6117 = vmatprep.subr.mxu0 0.0
  %6118 = vmatpush1.msra.mxu0 0.0
  %6119 = vmatprep.mubr.f32.mxu0 0.0
  %6120 = vmatmul.mubr.f32.gmra.mrb[0].mxu0 %v6053
  %v6121 = vpop.f32.mrb[0].mxu0
  %v6122 = vadd.f32 0.0, %v6121
  %v6123 = vpop.f32.mrb[0].mxu0
  %6124 = vdwg.mxu0
  %v6125 = vadd.f32 %v6049, %v6122
  %v6126 = vxor.u32 %v6125, 2147483648
  %v6127 = vmul.f32 %v6126, 1.442695
  %v6128 = vpow.pop %v6127
  %v6129 = vadd.f32 %v6128, 1.0
  %v6130 = vrcp.pop %v6129
  %v6131 = vmul.f32 1.0, %v6130
  %v6132 = vtanh.pop %v6125
  %v6133 = vmul.f32 %v6131, %v6042
  %6135 = vrot.lane.b32.xlu0 %v6132, 64
  %v6136 = vpop.permute.xlu0 %6135
  %v6138 = vmul.f32 %v6131, %v6136
  %6140 = vrot.lane.b32.xlu0 %v6138, 32
  %v6141 = vpop.permute.xlu0 %6140
  %v6143 = vadd.f32 %v6133, %v6141
  %v6144 = vtanh.pop %v6143
  %6146 = vrot.lane.b32.xlu0 %v6144, 64
  %v6147 = vpop.permute.xlu0 %6146
  %v6149 = vmul.f32 %v6131, %v6147
  %v6150 = vld [vmem:[#allocation2 + $0x1d0] sm:$0xff]
  %6152 = vrot.lane.b32.xlu0 %v6149, 32
  %v6153 = vpop.permute.xlu0 %6152
  %v6154 = vsel %vm2805, %v6153, 0
  %6156 = vmatprep.subr.mxu0 0.0
  %6157 = vmatpush1.msra.mxu0 %v2245
  %6158 = vmatprep.subr.mxu0 0.0
  %6159 = vmatpush1.msra.mxu0 %v2246
  %6160 = vmatprep.subr.mxu0 0.0
  %6161 = vmatpush1.msra.mxu0 %v2247
  %6162 = vmatprep.subr.mxu0 0.0
  %6163 = vmatpush1.msra.mxu0 %v2248
  %6164 = vmatprep.subr.mxu0 0.0
  %6165 = vmatpush1.msra.mxu0 0.0
  %6166 = vmatprep.subr.mxu0 0.0
  %6167 = vmatpush1.msra.mxu0 0.0
  %6168 = vmatprep.subr.mxu0 0.0
  %6169 = vmatpush1.msra.mxu0 0.0
  %6170 = vmatprep.subr.mxu0 0.0
  %6171 = vmatpush1.msra.mxu0 0.0
  %6172 = vmatprep.subr.mxu0 0.0
  %6173 = vmatpush1.msra.mxu0 0.0
  %6174 = vmatprep.subr.mxu0 0.0
  %6175 = vmatpush1.msra.mxu0 0.0
  %6176 = vmatprep.subr.mxu0 0.0
  %6177 = vmatpush1.msra.mxu0 0.0
  %6178 = vmatprep.subr.mxu0 0.0
  %6179 = vmatpush1.msra.mxu0 0.0
  %6180 = vmatprep.subr.mxu0 0.0
  %6181 = vmatpush1.msra.mxu0 0.0
  %6182 = vmatprep.subr.mxu0 0.0
  %6183 = vmatpush1.msra.mxu0 0.0
  %6184 = vmatprep.subr.mxu0 0.0
  %6185 = vmatpush1.msra.mxu0 0.0
  %6186 = vmatprep.subr.mxu0 0.0
  %6187 = vmatpush1.msra.mxu0 0.0
  %6188 = vmatprep.subr.mxu0 0.0
  %6189 = vmatpush1.msra.mxu0 0.0
  %6190 = vmatprep.subr.mxu0 0.0
  %6191 = vmatpush1.msra.mxu0 0.0
  %6192 = vmatprep.subr.mxu0 0.0
  %6193 = vmatpush1.msra.mxu0 0.0
  %6194 = vmatprep.subr.mxu0 0.0
  %6195 = vmatpush1.msra.mxu0 0.0
  %6196 = vmatprep.subr.mxu0 0.0
  %6197 = vmatpush1.msra.mxu0 0.0
  %6198 = vmatprep.subr.mxu0 0.0
  %6199 = vmatpush1.msra.mxu0 0.0
  %6200 = vmatprep.subr.mxu0 0.0
  %6201 = vmatpush1.msra.mxu0 0.0
  %6202 = vmatprep.subr.mxu0 0.0
  %6203 = vmatpush1.msra.mxu0 0.0
  %6204 = vmatprep.subr.mxu0 0.0
  %6205 = vmatpush1.msra.mxu0 0.0
  %6206 = vmatprep.subr.mxu0 0.0
  %6207 = vmatpush1.msra.mxu0 0.0
  %6208 = vmatprep.subr.mxu0 0.0
  %6209 = vmatpush1.msra.mxu0 0.0
  %6210 = vmatprep.subr.mxu0 0.0
  %6211 = vmatpush1.msra.mxu0 0.0
  %6212 = vmatprep.subr.mxu0 0.0
  %6213 = vmatpush1.msra.mxu0 0.0
  %6214 = vmatprep.subr.mxu0 0.0
  %6215 = vmatpush1.msra.mxu0 0.0
  %6216 = vmatprep.subr.mxu0 0.0
  %6217 = vmatpush1.msra.mxu0 0.0
  %6218 = vmatprep.subr.mxu0 0.0
  %6219 = vmatpush1.msra.mxu0 0.0
  %6220 = vmatprep.mubr.f32.mxu0 0.0
  %6221 = vmatmul.mubr.f32.gmra.mrb[0].mxu0 %v6154
  %v6222 = vpop.f32.mrb[0].mxu0
  %v6223 = vadd.f32 0.0, %v6222
  %v6224 = vpop.f32.mrb[0].mxu0
  %6225 = vdwg.mxu0
  %v6226 = vadd.f32 %v6150, %v6223
  %v6227 = vxor.u32 %v6226, 2147483648
  %v6228 = vmul.f32 %v6227, 1.442695
  %v6229 = vpow.pop %v6228
  %v6230 = vadd.f32 %v6229, 1.0
  %v6231 = vrcp.pop %v6230
  %v6232 = vmul.f32 1.0, %v6231
  %v6233 = vtanh.pop %v6226
  %v6234 = vmul.f32 %v6232, %v6143
  %6236 = vrot.lane.b32.xlu0 %v6233, 64
  %v6237 = vpop.permute.xlu0 %6236
  %v6239 = vmul.f32 %v6232, %v6237
  %6241 = vrot.lane.b32.xlu0 %v6239, 32
  %v6242 = vpop.permute.xlu0 %6241
  %v6244 = vadd.f32 %v6234, %v6242
  %v6245 = vtanh.pop %v6244
  %6247 = vrot.lane.b32.xlu0 %v6245, 64
  %v6248 = vpop.permute.xlu0 %6247
  %v6250 = vmul.f32 %v6232, %v6248
  %v6251 = vld [vmem:[#allocation2 + $0x1e0] sm:$0xff]
  %6253 = vrot.lane.b32.xlu0 %v6250, 32
  %v6254 = vpop.permute.xlu0 %6253
  %v6255 = vsel %vm2805, %v6254, 0
  %6257 = vmatprep.subr.mxu0 0.0
  %6258 = vmatpush1.msra.mxu0 %v2245
  %6259 = vmatprep.subr.mxu0 0.0
  %6260 = vmatpush1.msra.mxu0 %v2246
  %6261 = vmatprep.subr.mxu0 0.0
  %6262 = vmatpush1.msra.mxu0 %v2247
  %6263 = vmatprep.subr.mxu0 0.0
  %6264 = vmatpush1.msra.mxu0 %v2248
  %6265 = vmatprep.subr.mxu0 0.0
  %6266 = vmatpush1.msra.mxu0 0.0
  %6267 = vmatprep.subr.mxu0 0.0
  %6268 = vmatpush1.msra.mxu0 0.0
  %6269 = vmatprep.subr.mxu0 0.0
  %6270 = vmatpush1.msra.mxu0 0.0
  %6271 = vmatprep.subr.mxu0 0.0
  %6272 = vmatpush1.msra.mxu0 0.0
  %6273 = vmatprep.subr.mxu0 0.0
  %6274 = vmatpush1.msra.mxu0 0.0
  %6275 = vmatprep.subr.mxu0 0.0
  %6276 = vmatpush1.msra.mxu0 0.0
  %6277 = vmatprep.subr.mxu0 0.0
  %6278 = vmatpush1.msra.mxu0 0.0
  %6279 = vmatprep.subr.mxu0 0.0
  %6280 = vmatpush1.msra.mxu0 0.0
  %6281 = vmatprep.subr.mxu0 0.0
  %6282 = vmatpush1.msra.mxu0 0.0
  %6283 = vmatprep.subr.mxu0 0.0
  %6284 = vmatpush1.msra.mxu0 0.0
  %6285 = vmatprep.subr.mxu0 0.0
  %6286 = vmatpush1.msra.mxu0 0.0
  %6287 = vmatprep.subr.mxu0 0.0
  %6288 = vmatpush1.msra.mxu0 0.0
  %6289 = vmatprep.subr.mxu0 0.0
  %6290 = vmatpush1.msra.mxu0 0.0
  %6291 = vmatprep.subr.mxu0 0.0
  %6292 = vmatpush1.msra.mxu0 0.0
  %6293 = vmatprep.subr.mxu0 0.0
  %6294 = vmatpush1.msra.mxu0 0.0
  %6295 = vmatprep.subr.mxu0 0.0
  %6296 = vmatpush1.msra.mxu0 0.0
  %6297 = vmatprep.subr.mxu0 0.0
  %6298 = vmatpush1.msra.mxu0 0.0
  %6299 = vmatprep.subr.mxu0 0.0
  %6300 = vmatpush1.msra.mxu0 0.0
  %6301 = vmatprep.subr.mxu0 0.0
  %6302 = vmatpush1.msra.mxu0 0.0
  %6303 = vmatprep.subr.mxu0 0.0
  %6304 = vmatpush1.msra.mxu0 0.0
  %6305 = vmatprep.subr.mxu0 0.0
  %6306 = vmatpush1.msra.mxu0 0.0
  %6307 = vmatprep.subr.mxu0 0.0
  %6308 = vmatpush1.msra.mxu0 0.0
  %6309 = vmatprep.subr.mxu0 0.0
  %6310 = vmatpush1.msra.mxu0 0.0
  %6311 = vmatprep.subr.mxu0 0.0
  %6312 = vmatpush1.msra.mxu0 0.0
  %6313 = vmatprep.subr.mxu0 0.0
  %6314 = vmatpush1.msra.mxu0 0.0
  %6315 = vmatprep.subr.mxu0 0.0
  %6316 = vmatpush1.msra.mxu0 0.0
  %6317 = vmatprep.subr.mxu0 0.0
  %6318 = vmatpush1.msra.mxu0 0.0
  %6319 = vmatprep.subr.mxu0 0.0
  %6320 = vmatpush1.msra.mxu0 0.0
  %6321 = vmatprep.mubr.f32.mxu0 0.0
  %6322 = vmatmul.mubr.f32.gmra.mrb[0].mxu0 %v6255
  %v6323 = vpop.f32.mrb[0].mxu0
  %v6324 = vadd.f32 0.0, %v6323
  %v6325 = vpop.f32.mrb[0].mxu0
  %6326 = vdwg.mxu0
  %v6327 = vadd.f32 %v6251, %v6324
  %v6328 = vxor.u32 %v6327, 2147483648
  %v6329 = vmul.f32 %v6328, 1.442695
  %v6330 = vpow.pop %v6329
  %v6331 = vadd.f32 %v6330, 1.0
  %v6332 = vrcp.pop %v6331
  %v6333 = vmul.f32 1.0, %v6332
  %v6334 = vtanh.pop %v6327
  %v6335 = vmul.f32 %v6333, %v6244
  %6337 = vrot.lane.b32.xlu0 %v6334, 64
  %v6338 = vpop.permute.xlu0 %6337
  %v6340 = vmul.f32 %v6333, %v6338
  %6342 = vrot.lane.b32.xlu0 %v6340, 32
  %v6343 = vpop.permute.xlu0 %6342
  %v6345 = vadd.f32 %v6335, %v6343
  %v6346 = vtanh.pop %v6345
  %6348 = vrot.lane.b32.xlu0 %v6346, 64
  %v6349 = vpop.permute.xlu0 %6348
  %v6351 = vmul.f32 %v6333, %v6349
  %v6352 = vld [vmem:[#allocation2 + $0x1f0] sm:$0xff]
  %6354 = vrot.lane.b32.xlu0 %v6351, 32
  %v6355 = vpop.permute.xlu0 %6354
  %v6356 = vsel %vm2805, %v6355, 0
  %6358 = vmatprep.subr.mxu0 0.0
  %6359 = vmatpush1.msra.mxu0 %v2245
  %6360 = vmatprep.subr.mxu0 0.0
  %6361 = vmatpush1.msra.mxu0 %v2246
  %6362 = vmatprep.subr.mxu0 0.0
  %6363 = vmatpush1.msra.mxu0 %v2247
  %6364 = vmatprep.subr.mxu0 0.0
  %6365 = vmatpush1.msra.mxu0 %v2248
  %6366 = vmatprep.subr.mxu0 0.0
  %6367 = vmatpush1.msra.mxu0 0.0
  %6368 = vmatprep.subr.mxu0 0.0
  %6369 = vmatpush1.msra.mxu0 0.0
  %6370 = vmatprep.subr.mxu0 0.0
  %6371 = vmatpush1.msra.mxu0 0.0
  %6372 = vmatprep.subr.mxu0 0.0
  %6373 = vmatpush1.msra.mxu0 0.0
  %6374 = vmatprep.subr.mxu0 0.0
  %6375 = vmatpush1.msra.mxu0 0.0
  %6376 = vmatprep.subr.mxu0 0.0
  %6377 = vmatpush1.msra.mxu0 0.0
  %6378 = vmatprep.subr.mxu0 0.0
  %6379 = vmatpush1.msra.mxu0 0.0
  %6380 = vmatprep.subr.mxu0 0.0
  %6381 = vmatpush1.msra.mxu0 0.0
  %6382 = vmatprep.subr.mxu0 0.0
  %6383 = vmatpush1.msra.mxu0 0.0
  %6384 = vmatprep.subr.mxu0 0.0
  %6385 = vmatpush1.msra.mxu0 0.0
  %6386 = vmatprep.subr.mxu0 0.0
  %6387 = vmatpush1.msra.mxu0 0.0
  %6388 = vmatprep.subr.mxu0 0.0
  %6389 = vmatpush1.msra.mxu0 0.0
  %6390 = vmatprep.subr.mxu0 0.0
  %6391 = vmatpush1.msra.mxu0 0.0
  %6392 = vmatprep.subr.mxu0 0.0
  %6393 = vmatpush1.msra.mxu0 0.0
  %6394 = vmatprep.subr.mxu0 0.0
  %6395 = vmatpush1.msra.mxu0 0.0
  %6396 = vmatprep.subr.mxu0 0.0
  %6397 = vmatpush1.msra.mxu0 0.0
  %6398 = vmatprep.subr.mxu0 0.0
  %6399 = vmatpush1.msra.mxu0 0.0
  %6400 = vmatprep.subr.mxu0 0.0
  %6401 = vmatpush1.msra.mxu0 0.0
  %6402 = vmatprep.subr.mxu0 0.0
  %6403 = vmatpush1.msra.mxu0 0.0
  %6404 = vmatprep.subr.mxu0 0.0
  %6405 = vmatpush1.msra.mxu0 0.0
  %6406 = vmatprep.subr.mxu0 0.0
  %6407 = vmatpush1.msra.mxu0 0.0
  %6408 = vmatprep.subr.mxu0 0.0
  %6409 = vmatpush1.msra.mxu0 0.0
  %6410 = vmatprep.subr.mxu0 0.0
  %6411 = vmatpush1.msra.mxu0 0.0
  %6412 = vmatprep.subr.mxu0 0.0
  %6413 = vmatpush1.msra.mxu0 0.0
  %6414 = vmatprep.subr.mxu0 0.0
  %6415 = vmatpush1.msra.mxu0 0.0
  %6416 = vmatprep.subr.mxu0 0.0
  %6417 = vmatpush1.msra.mxu0 0.0
  %6418 = vmatprep.subr.mxu0 0.0
  %6419 = vmatpush1.msra.mxu0 0.0
  %6420 = vmatprep.subr.mxu0 0.0
  %6421 = vmatpush1.msra.mxu0 0.0
  %6422 = vmatprep.mubr.f32.mxu0 0.0
  %6423 = vmatmul.mubr.f32.gmra.mrb[0].mxu0 %v6356
  %v6424 = vpop.f32.mrb[0].mxu0
  %v6425 = vadd.f32 0.0, %v6424
  %v6426 = vpop.f32.mrb[0].mxu0
  %6427 = vdwg.mxu0
  %v6428 = vadd.f32 %v6352, %v6425
  %v6429 = vxor.u32 %v6428, 2147483648
  %v6430 = vmul.f32 %v6429, 1.442695
  %v6431 = vpow.pop %v6430
  %v6432 = vadd.f32 %v6431, 1.0
  %v6433 = vrcp.pop %v6432
  %v6434 = vmul.f32 1.0, %v6433
  %v6435 = vtanh.pop %v6428
  %v6436 = vmul.f32 %v6434, %v6345
  %6438 = vrot.lane.b32.xlu0 %v6435, 64
  %v6439 = vpop.permute.xlu0 %6438
  %v6441 = vmul.f32 %v6434, %v6439
  %6443 = vrot.lane.b32.xlu0 %v6441, 32
  %v6444 = vpop.permute.xlu0 %6443
  %v6446 = vadd.f32 %v6436, %v6444
  %v6447 = vtanh.pop %v6446
  %6449 = vrot.lane.b32.xlu0 %v6447, 64
  %v6450 = vpop.permute.xlu0 %6449
  %v6452 = vmul.f32 %v6434, %v6450
  %v6453 = vld [vmem:[#allocation2 + $0x1f8] sm:$0xff]
  %v6454 = vxor.u32 %v6453, 2147483648
  %v6455 = vmul.f32 %v6454, 1.442695
  %v6456 = vpow.pop %v6455
  %v6457 = vadd.f32 %v6456, 1.0
  %v6458 = vrcp.pop %v6457
  %v6459 = vmul.f32 1.0, %v6458
  %v6460 = vtanh.pop %v6453
  %6462 = vrot.lane.b32.xlu0 %v6460, 64
  %v6463 = vpop.permute.xlu0 %6462
  %v6465 = vmul.f32 %v6459, %v6463
  %v6466 = vtanh.pop %v6465
  %6468 = vrot.lane.b32.xlu0 %v6466, 96
  %v6469 = vpop.permute.xlu0 %6468
  %v6471 = vmul.f32 %v6459, %v6469
  %v6472 = vld [vmem:[%s4] sm:$0xff]
  %v6473 = vld [vmem:[%s4 + $0x8] sm:$0xff]
  %v6474 = vld [vmem:[%s4 + $0x10] sm:$0xff]
  %v6475 = vld [vmem:[%s4 + $0x18] sm:$0xff]
  %6477 = vrot.lane.b32.xlu0 %v6471, 32
  %v6478 = vpop.permute.xlu0 %6477
  %6483 = vrot.lane.b32.xlu0 %v6472, 96
  %v6484 = vpop.permute.xlu0 %6483
  %6485 = vrot.lane.b32.xlu0 %v6473, 96
  %v6486 = vpop.permute.xlu0 %6485
  %6487 = vrot.lane.b32.xlu0 %v6474, 96
  %v6488 = vpop.permute.xlu0 %6487
  %6489 = vrot.lane.b32.xlu0 %v6475, 96
  %v6490 = vpop.permute.xlu0 %6489
  %v6495 = vsel %vm2805, %v6478, 0
  %6497 = vmatprep.subr.mxu0 0.0
  %6498 = vmatpush1.msra.mxu0 %v6484
  %6499 = vmatprep.subr.mxu0 0.0
  %6500 = vmatpush1.msra.mxu0 %v6486
  %6501 = vmatprep.subr.mxu0 0.0
  %6502 = vmatpush1.msra.mxu0 %v6488
  %6503 = vmatprep.subr.mxu0 0.0
  %6504 = vmatpush1.msra.mxu0 %v6490
  %6505 = vmatprep.subr.mxu0 0.0
  %6506 = vmatpush1.msra.mxu0 0.0
  %6507 = vmatprep.subr.mxu0 0.0
  %6508 = vmatpush1.msra.mxu0 0.0
  %6509 = vmatprep.subr.mxu0 0.0
  %6510 = vmatpush1.msra.mxu0 0.0
  %6511 = vmatprep.subr.mxu0 0.0
  %6512 = vmatpush1.msra.mxu0 0.0
  %6513 = vmatprep.subr.mxu0 0.0
  %6514 = vmatpush1.msra.mxu0 0.0
  %6515 = vmatprep.subr.mxu0 0.0
  %6516 = vmatpush1.msra.mxu0 0.0
  %6517 = vmatprep.subr.mxu0 0.0
  %6518 = vmatpush1.msra.mxu0 0.0
  %6519 = vmatprep.subr.mxu0 0.0
  %6520 = vmatpush1.msra.mxu0 0.0
  %6521 = vmatprep.subr.mxu0 0.0
  %6522 = vmatpush1.msra.mxu0 0.0
  %6523 = vmatprep.subr.mxu0 0.0
  %6524 = vmatpush1.msra.mxu0 0.0
  %6525 = vmatprep.subr.mxu0 0.0
  %6526 = vmatpush1.msra.mxu0 0.0
  %6527 = vmatprep.subr.mxu0 0.0
  %6528 = vmatpush1.msra.mxu0 0.0
  %6529 = vmatprep.subr.mxu0 0.0
  %6530 = vmatpush1.msra.mxu0 0.0
  %6531 = vmatprep.subr.mxu0 0.0
  %6532 = vmatpush1.msra.mxu0 0.0
  %6533 = vmatprep.subr.mxu0 0.0
  %6534 = vmatpush1.msra.mxu0 0.0
  %6535 = vmatprep.subr.mxu0 0.0
  %6536 = vmatpush1.msra.mxu0 0.0
  %6537 = vmatprep.subr.mxu0 0.0
  %6538 = vmatpush1.msra.mxu0 0.0
  %6539 = vmatprep.subr.mxu0 0.0
  %6540 = vmatpush1.msra.mxu0 0.0
  %6541 = vmatprep.subr.mxu0 0.0
  %6542 = vmatpush1.msra.mxu0 0.0
  %6543 = vmatprep.subr.mxu0 0.0
  %6544 = vmatpush1.msra.mxu0 0.0
  %6545 = vmatprep.subr.mxu0 0.0
  %6546 = vmatpush1.msra.mxu0 0.0
  %6547 = vmatprep.subr.mxu0 0.0
  %6548 = vmatpush1.msra.mxu0 0.0
  %6549 = vmatprep.subr.mxu0 0.0
  %6550 = vmatpush1.msra.mxu0 0.0
  %6551 = vmatprep.subr.mxu0 0.0
  %6552 = vmatpush1.msra.mxu0 0.0
  %6553 = vmatprep.subr.mxu0 0.0
  %6554 = vmatpush1.msra.mxu0 0.0
  %6555 = vmatprep.subr.mxu0 0.0
  %6556 = vmatpush1.msra.mxu0 0.0
  %6557 = vmatprep.subr.mxu0 0.0
  %6558 = vmatpush1.msra.mxu0 0.0
  %6559 = vmatprep.subr.mxu0 0.0
  %6560 = vmatpush1.msra.mxu0 0.0
  %6561 = vmatprep.mubr.f32.mxu0 0.0
  %6562 = vmatmul.mubr.f32.gmra.mrb[0].mxu0 %v6495
  %v6563 = vpop.f32.mrb[0].mxu0
  %v6564 = vadd.f32 0.0, %v6563
  %v6565 = vpop.f32.mrb[0].mxu0
  %6566 = vdwg.mxu0
  %6568 = vrot.lane.b32.xlu0 %v6452, 32
  %v6569 = vpop.permute.xlu0 %6568
  %v6570 = vsel %vm2805, %v6569, 0
  %6572 = vmatprep.subr.mxu0 0.0
  %6573 = vmatpush1.msra.mxu0 %v6472
  %6574 = vmatprep.subr.mxu0 0.0
  %6575 = vmatpush1.msra.mxu0 %v6473
  %6576 = vmatprep.subr.mxu0 0.0
  %6577 = vmatpush1.msra.mxu0 %v6474
  %6578 = vmatprep.subr.mxu0 0.0
  %6579 = vmatpush1.msra.mxu0 %v6475
  %6580 = vmatprep.subr.mxu0 0.0
  %6581 = vmatpush1.msra.mxu0 0.0
  %6582 = vmatprep.subr.mxu0 0.0
  %6583 = vmatpush1.msra.mxu0 0.0
  %6584 = vmatprep.subr.mxu0 0.0
  %6585 = vmatpush1.msra.mxu0 0.0
  %6586 = vmatprep.subr.mxu0 0.0
  %6587 = vmatpush1.msra.mxu0 0.0
  %6588 = vmatprep.subr.mxu0 0.0
  %6589 = vmatpush1.msra.mxu0 0.0
  %6590 = vmatprep.subr.mxu0 0.0
  %6591 = vmatpush1.msra.mxu0 0.0
  %6592 = vmatprep.subr.mxu0 0.0
  %6593 = vmatpush1.msra.mxu0 0.0
  %6594 = vmatprep.subr.mxu0 0.0
  %6595 = vmatpush1.msra.mxu0 0.0
  %6596 = vmatprep.subr.mxu0 0.0
  %6597 = vmatpush1.msra.mxu0 0.0
  %6598 = vmatprep.subr.mxu0 0.0
  %6599 = vmatpush1.msra.mxu0 0.0
  %6600 = vmatprep.subr.mxu0 0.0
  %6601 = vmatpush1.msra.mxu0 0.0
  %6602 = vmatprep.subr.mxu0 0.0
  %6603 = vmatpush1.msra.mxu0 0.0
  %6604 = vmatprep.subr.mxu0 0.0
  %6605 = vmatpush1.msra.mxu0 0.0
  %6606 = vmatprep.subr.mxu0 0.0
  %6607 = vmatpush1.msra.mxu0 0.0
  %6608 = vmatprep.subr.mxu0 0.0
  %6609 = vmatpush1.msra.mxu0 0.0
  %6610 = vmatprep.subr.mxu0 0.0
  %6611 = vmatpush1.msra.mxu0 0.0
  %6612 = vmatprep.subr.mxu0 0.0
  %6613 = vmatpush1.msra.mxu0 0.0
  %6614 = vmatprep.subr.mxu0 0.0
  %6615 = vmatpush1.msra.mxu0 0.0
  %6616 = vmatprep.subr.mxu0 0.0
  %6617 = vmatpush1.msra.mxu0 0.0
  %6618 = vmatprep.subr.mxu0 0.0
  %6619 = vmatpush1.msra.mxu0 0.0
  %6620 = vmatprep.subr.mxu0 0.0
  %6621 = vmatpush1.msra.mxu0 0.0
  %6622 = vmatprep.subr.mxu0 0.0
  %6623 = vmatpush1.msra.mxu0 0.0
  %6624 = vmatprep.subr.mxu0 0.0
  %6625 = vmatpush1.msra.mxu0 0.0
  %6626 = vmatprep.subr.mxu0 0.0
  %6627 = vmatpush1.msra.mxu0 0.0
  %6628 = vmatprep.subr.mxu0 0.0
  %6629 = vmatpush1.msra.mxu0 0.0
  %6630 = vmatprep.subr.mxu0 0.0
  %6631 = vmatpush1.msra.mxu0 0.0
  %6632 = vmatprep.subr.mxu0 0.0
  %6633 = vmatpush1.msra.mxu0 0.0
  %6634 = vmatprep.subr.mxu0 0.0
  %6635 = vmatpush1.msra.mxu0 0.0
  %6636 = vmatprep.mubr.f32.mxu0 0.0
  %6637 = vmatmul.mubr.f32.gmra.mrb[0].mxu0 %v6570
  %v6638 = vpop.f32.mrb[0].mxu0
  %v6639 = vadd.f32 %v6564, %v6638
  %v6640 = vpop.f32.mrb[0].mxu0
  %6641 = vdwg.mxu0
  %v6642 = vld [vmem:[%s5 + $0x2] sm:$0x1]
  %v6644 = vlaneseq
  %v6645 = vshrl.u32 %v6644, 7
  %v6646 = vsub.s32 0, %v6645
  %v6647 = vrot.slane %v6642, %v6646
  %6648 = vrot.lane.b32.xlu0 %v6647, 64
  %v6649 = vpop.permute.xlu0 %6648
  %v6651 = vadd.f32 %v6639, %v6649
  %v6652 = vmax.f32 %v6651, 0.0
  %6653 = vrot.lane.b32.xlu0 %v6472, 64
  %v6654 = vpop.permute.xlu0 %6653
  %6655 = vrot.lane.b32.xlu0 %v6473, 64
  %v6656 = vpop.permute.xlu0 %6655
  %6657 = vrot.lane.b32.xlu0 %v6474, 64
  %v6658 = vpop.permute.xlu0 %6657
  %6659 = vrot.lane.b32.xlu0 %v6475, 64
  %v6660 = vpop.permute.xlu0 %6659
  %6665 = vrot.lane.b32.xlu0 %v6647, 32
  %v6666 = vpop.permute.xlu0 %6665
  %v6669 = vsel %vm2805, %v6652, 0
  %6671 = vmatprep.subr.mxu0 0.0
  %6672 = vmatpush1.msra.mxu0 %v6654
  %6673 = vmatprep.subr.mxu0 0.0
  %6674 = vmatpush1.msra.mxu0 %v6656
  %6675 = vmatprep.subr.mxu0 0.0
  %6676 = vmatpush1.msra.mxu0 %v6658
  %6677 = vmatprep.subr.mxu0 0.0
  %6678 = vmatpush1.msra.mxu0 %v6660
  %6679 = vmatprep.subr.mxu0 0.0
  %6680 = vmatpush1.msra.mxu0 0.0
  %6681 = vmatprep.subr.mxu0 0.0
  %6682 = vmatpush1.msra.mxu0 0.0
  %6683 = vmatprep.subr.mxu0 0.0
  %6684 = vmatpush1.msra.mxu0 0.0
  %6685 = vmatprep.subr.mxu0 0.0
  %6686 = vmatpush1.msra.mxu0 0.0
  %6687 = vmatprep.subr.mxu0 0.0
  %6688 = vmatpush1.msra.mxu0 0.0
  %6689 = vmatprep.subr.mxu0 0.0
  %6690 = vmatpush1.msra.mxu0 0.0
  %6691 = vmatprep.subr.mxu0 0.0
  %6692 = vmatpush1.msra.mxu0 0.0
  %6693 = vmatprep.subr.mxu0 0.0
  %6694 = vmatpush1.msra.mxu0 0.0
  %6695 = vmatprep.subr.mxu0 0.0
  %6696 = vmatpush1.msra.mxu0 0.0
  %6697 = vmatprep.subr.mxu0 0.0
  %6698 = vmatpush1.msra.mxu0 0.0
  %6699 = vmatprep.subr.mxu0 0.0
  %6700 = vmatpush1.msra.mxu0 0.0
  %6701 = vmatprep.subr.mxu0 0.0
  %6702 = vmatpush1.msra.mxu0 0.0
  %6703 = vmatprep.subr.mxu0 0.0
  %6704 = vmatpush1.msra.mxu0 0.0
  %6705 = vmatprep.subr.mxu0 0.0
  %6706 = vmatpush1.msra.mxu0 0.0
  %6707 = vmatprep.subr.mxu0 0.0
  %6708 = vmatpush1.msra.mxu0 0.0
  %6709 = vmatprep.subr.mxu0 0.0
  %6710 = vmatpush1.msra.mxu0 0.0
  %6711 = vmatprep.subr.mxu0 0.0
  %6712 = vmatpush1.msra.mxu0 0.0
  %6713 = vmatprep.subr.mxu0 0.0
  %6714 = vmatpush1.msra.mxu0 0.0
  %6715 = vmatprep.subr.mxu0 0.0
  %6716 = vmatpush1.msra.mxu0 0.0
  %6717 = vmatprep.subr.mxu0 0.0
  %6718 = vmatpush1.msra.mxu0 0.0
  %6719 = vmatprep.subr.mxu0 0.0
  %6720 = vmatpush1.msra.mxu0 0.0
  %6721 = vmatprep.subr.mxu0 0.0
  %6722 = vmatpush1.msra.mxu0 0.0
  %6723 = vmatprep.subr.mxu0 0.0
  %6724 = vmatpush1.msra.mxu0 0.0
  %6725 = vmatprep.subr.mxu0 0.0
  %6726 = vmatpush1.msra.mxu0 0.0
  %6727 = vmatprep.subr.mxu0 0.0
  %6728 = vmatpush1.msra.mxu0 0.0
  %6729 = vmatprep.subr.mxu0 0.0
  %6730 = vmatpush1.msra.mxu0 0.0
  %6731 = vmatprep.subr.mxu0 0.0
  %6732 = vmatpush1.msra.mxu0 0.0
  %6733 = vmatprep.subr.mxu0 0.0
  %6734 = vmatpush1.msra.mxu0 0.0
  %6735 = vmatprep.mubr.f32.mxu0 0.0
  %6736 = vmatmul.mubr.f32.gmra.mrb[0].mxu0 %v6669
  %v6737 = vpop.f32.mrb[0].mxu0
  %v6738 = vadd.f32 %v6666, %v6737
  %v6739 = vpop.f32.mrb[0].mxu0
  %6740 = vdwg.mxu0
  %v6741 = vmax.f32 %v6738, 0.0
  %v6742 = vld [vmem:[%s4] sm:$0xff]
  %v6743 = vld [vmem:[%s4 + $0x8] sm:$0xff]
  %6746 = vrot.lane.b32.xlu0 %v6742, 48
  %v6747 = vpop.permute.xlu0 %6746
  %6748 = vrot.lane.b32.xlu0 %v6743, 48
  %v6749 = vpop.permute.xlu0 %6748
  %6752 = vrot.lane.b32.xlu0 %v6647, 16
  %v6753 = vpop.permute.xlu0 %6752
  %vm6755 = vcmask 130048
  %v6757 = vsel %vm6755, %v6741, 0
  %6759 = vmatprep.subr.mxu0 0.0
  %6760 = vmatpush1.msra.mxu0 %v6747
  %6761 = vmatprep.subr.mxu0 0.0
  %6762 = vmatpush1.msra.mxu0 %v6749
  %6763 = vmatprep.subr.mxu0 0.0
  %6764 = vmatpush1.msra.mxu0 0.0
  %6765 = vmatprep.subr.mxu0 0.0
  %6766 = vmatpush1.msra.mxu0 0.0
  %6767 = vmatprep.subr.mxu0 0.0
  %6768 = vmatpush1.msra.mxu0 0.0
  %6769 = vmatprep.subr.mxu0 0.0
  %6770 = vmatpush1.msra.mxu0 0.0
  %6771 = vmatprep.subr.mxu0 0.0
  %6772 = vmatpush1.msra.mxu0 0.0
  %6773 = vmatprep.subr.mxu0 0.0
  %6774 = vmatpush1.msra.mxu0 0.0
  %6775 = vmatprep.subr.mxu0 0.0
  %6776 = vmatpush1.msra.mxu0 0.0
  %6777 = vmatprep.subr.mxu0 0.0
  %6778 = vmatpush1.msra.mxu0 0.0
  %6779 = vmatprep.subr.mxu0 0.0
  %6780 = vmatpush1.msra.mxu0 0.0
  %6781 = vmatprep.subr.mxu0 0.0
  %6782 = vmatpush1.msra.mxu0 0.0
  %6783 = vmatprep.subr.mxu0 0.0
  %6784 = vmatpush1.msra.mxu0 0.0
  %6785 = vmatprep.subr.mxu0 0.0
  %6786 = vmatpush1.msra.mxu0 0.0
  %6787 = vmatprep.subr.mxu0 0.0
  %6788 = vmatpush1.msra.mxu0 0.0
  %6789 = vmatprep.subr.mxu0 0.0
  %6790 = vmatpush1.msra.mxu0 0.0
  %6791 = vmatprep.subr.mxu0 0.0
  %6792 = vmatpush1.msra.mxu0 0.0
  %6793 = vmatprep.subr.mxu0 0.0
  %6794 = vmatpush1.msra.mxu0 0.0
  %6795 = vmatprep.subr.mxu0 0.0
  %6796 = vmatpush1.msra.mxu0 0.0
  %6797 = vmatprep.subr.mxu0 0.0
  %6798 = vmatpush1.msra.mxu0 0.0
  %6799 = vmatprep.subr.mxu0 0.0
  %6800 = vmatpush1.msra.mxu0 0.0
  %6801 = vmatprep.subr.mxu0 0.0
  %6802 = vmatpush1.msra.mxu0 0.0
  %6803 = vmatprep.subr.mxu0 0.0
  %6804 = vmatpush1.msra.mxu0 0.0
  %6805 = vmatprep.subr.mxu0 0.0
  %6806 = vmatpush1.msra.mxu0 0.0
  %6807 = vmatprep.subr.mxu0 0.0
  %6808 = vmatpush1.msra.mxu0 0.0
  %6809 = vmatprep.subr.mxu0 0.0
  %6810 = vmatpush1.msra.mxu0 0.0
  %6811 = vmatprep.subr.mxu0 0.0
  %6812 = vmatpush1.msra.mxu0 0.0
  %6813 = vmatprep.subr.mxu0 0.0
  %6814 = vmatpush1.msra.mxu0 0.0
  %6815 = vmatprep.subr.mxu0 0.0
  %6816 = vmatpush1.msra.mxu0 0.0
  %6817 = vmatprep.subr.mxu0 0.0
  %6818 = vmatpush1.msra.mxu0 0.0
  %6819 = vmatprep.subr.mxu0 0.0
  %6820 = vmatpush1.msra.mxu0 0.0
  %6821 = vmatprep.subr.mxu0 0.0
  %6822 = vmatpush1.msra.mxu0 0.0
  %6823 = vmatprep.mubr.f32.mxu0 0.0
  %6824 = vmatmul.mubr.f32.gmra.mrb[0].mxu0 %v6757
  %v6825 = vpop.f32.mrb[0].mxu0
  %v6826 = vadd.f32 %v6753, %v6825
  %v6827 = vpop.f32.mrb[0].mxu0
  %6828 = vdwg.mxu0
  %v6829 = vmax.f32 %v6826, 0.0
  %6830 = vrot.lane.b32.xlu0 %v6647, 8
  %v6831 = vpop.permute.xlu0 %6830
  %v6833 = vmul.f32 %v6829, %v6831
  %v6834 = vsel %vm1915, %v6833, 0.0
  %6835 = vadd.xlane.f32.xlu0 %v6834
  %v6836 = vpop.xlane.xlu0 %6835
  %v6837 = vld [vmem:[%s5 + $0x3] sm:$0x1]
  %v6839 = vlaneseq
  %v6840 = vshrl.u32 %v6839, 7
  %v6841 = vsub.s32 0, %v6840
  %v6842 = vrot.slane %v6837, %v6841
  %v6844 = vadd.f32 %v6836, %v6842
  %v6845 = vxor.u32 %v6844, 2147483648
  %v6846 = vmul.f32 %v6845, 1.442695
  %v6847 = vpow.pop %v6846
  %v6848 = vadd.f32 %v6847, 1.0
  %v6849 = vrcp.pop %v6848
  %v6850 = vmul.f32 1.0, %v6849
  %vm6851 = vcmask 7168
  %6852 = vst.msk [vmem:[%s6] sm:$0xff] %vm6851, %v6850
  // Predicated region
  $region26: #{sentiment_forward.1} parent=0 // pred_check
    _
  $region27: #{sentiment_forward.1} parent=0 // pred_check_branch
    %6854 = sbr.rel (0) target = $region29
  $region28: #{sentiment_forward.1} parent=0 // pred_region
    _
  $region29: #{sentiment_forward.1} parent=0 // pred_fallthru
    _
  // Predicated region
  $region30: #{sentiment_forward.1} parent=0 // pred_check
    _
  $region31: #{sentiment_forward.1} parent=0 // pred_check_branch
    %6856 = sbr.rel (0) target = $region33
  $region32: #{sentiment_forward.1} parent=0 // pred_region
    _
  $region33: #{sentiment_forward.1} parent=0 // pred_fallthru
    _

</llo_original>
